<compile_context>
chip_gen: v7x
topology: tpu7x:2x2x1
jax: 0.10.0
libtpu: 0.0.40
codegen_flags: <defaults>
</compile_context>

<pallas_src>
import jax
import jax.numpy as jnp
from jax.experimental import pallas as pl
from jax.experimental.pallas import tpu as pltpu

IN_FEATURES = 196608           # 3 * 256 * 256, fixed by the module definition
OUT_FEATURES = 10
LANE = 128
SUB = 8
C = IN_FEATURES // LANE        # 1536 sublane-chunks of 128 lanes
TOTAL_KSTEPS = 4               # total K tiles (across cores) -> TC = 384 chunks
TC = C // TOTAL_KSTEPS         # 384 chunks = 49152 elements per K tile
assert C % TOTAL_KSTEPS == 0 and TC % SUB == 0


def _num_tensorcores() -> int:
    """2 TensorCores/chip on v7x; 1 on v5e/v6e.  Device-kind string check keeps
    this robust across libtpu versions (no reliance on experimental info APIs)."""
    try:
        kind = jax.devices()[0].device_kind.lower()
    except Exception:
        return 1
    return 2 if ("v7" in kind or "tpu7" in kind) else 1


NUM_PAR = _num_tensorcores()         # leading grid axis (real core split on v7x)
KSTEPS = TOTAL_KSTEPS // NUM_PAR     # K-reduction steps per core
assert NUM_PAR * KSTEPS * TC == C


def linear_kernel(x_ref, w_ref, o_ref, acc_ref):
    """One K-tile of y[b, n] = sum_k x[b, k] * w[n, k] on the VPU."""
    k = pl.program_id(1)

    @pl.when(k == 0)
    def _():
        acc_ref[...] = jnp.zeros_like(acc_ref)

    b, tc, lane = x_ref.shape
    n = w_ref.shape[0]
    # vreg-aligned views: trailing (8, 128) is exactly one vreg; the reshape
    # only splits the sublane axis so it is relayout-free.
    x = x_ref[...].reshape(b, tc // SUB, SUB, lane)      # (B, TC//8, 8, 128)
    w = w_ref[...].reshape(n, tc // SUB, SUB, lane)      # (N, TC//8, 8, 128)
    # Broadcast-mul + reduce only over the chunk-group axis -> pure vreg adds,
    # W vregs reused across batch rows, no per-step XLU / masked layouts.
    acc_ref[...] += jnp.sum(x[:, None] * w[None], axis=2)   # (B, N, 8, 128)

    @pl.when(k == pl.num_programs(1) - 1)
    def _():
        # Cross-sublane then cross-lane reduction, once per kernel invocation.
        part = jnp.sum(acc_ref[...], axis=-2)            # (B, N, 128)
        o_ref[0] = jnp.sum(part, axis=-1)                # (B, N)


@jax.jit
def linear_pallas(x, w, b):
    """x: (B, K) f32, w: (N, K) f32 (torch orientation), b: (N,) f32 -> (B, N)."""
    B, K = x.shape
    N, Kw = w.shape
    assert K == IN_FEATURES and Kw == K and N == OUT_FEATURES

    # Lane-dense views (metadata-only under jit; store W this way in production).
    x3 = x.reshape(B, C, LANE)
    w3 = w.reshape(N, C, LANE)

    if NUM_PAR > 1:
        # Guarantee the 2-way K split lands on both TensorCores (v7x).
        semantics = (pltpu.CORE_PARALLEL, pltpu.ARBITRARY)
    else:
        semantics = (pltpu.ARBITRARY, pltpu.ARBITRARY)

    cost = pl.CostEstimate(
        flops=2 * B * N * K,
        transcendentals=0,
        bytes_accessed=(B * K + N * K) * 4 + NUM_PAR * B * N * 4,
    )

    partials = pl.pallas_call(
        linear_kernel,
        out_shape=jax.ShapeDtypeStruct((NUM_PAR, B, N), jnp.float32),
        grid_spec=pltpu.PrefetchScalarGridSpec(
            num_scalar_prefetch=0,
            grid=(NUM_PAR, KSTEPS),
            in_specs=[
                pl.BlockSpec((B, TC, LANE), lambda p, k: (0, p * KSTEPS + k, 0)),
                pl.BlockSpec((N, TC, LANE), lambda p, k: (0, p * KSTEPS + k, 0)),
            ],
            out_specs=pl.BlockSpec((1, B, N), lambda p, k: (p, 0, 0)),
            scratch_shapes=[pltpu.VMEM((B, N, SUB, LANE), jnp.float32)],
        ),
        compiler_params=pltpu.CompilerParams(
            dimension_semantics=semantics,
            # ~9 MB actual usage; 48 MiB cap is safe on every generation
            # (<= 64 MiB physical per TC on v7x) and leaves margin for temps.
            vmem_limit_bytes=48 * 1024 * 1024,
        ),
        cost_estimate=cost,
    )(x3, w3)

    # Sum the per-core partials (trivial when NUM_PAR == 1) and add the bias;
    # this tiny epilogue fuses under jit.
    return partials.sum(axis=0) + b


def init_params(key):
    """nn.Linear default init: uniform(+/- 1/sqrt(fan_in)), torch (out, in) layout."""
    kw, kb = jax.random.split(key)
    bound = 1.0 / jnp.sqrt(jnp.float32(IN_FEATURES))
    w = jax.random.uniform(
        kw, (OUT_FEATURES, IN_FEATURES), jnp.float32, minval=-bound, maxval=bound
    )
    b = jax.random.uniform(
        kb, (OUT_FEATURES,), jnp.float32, minval=-bound, maxval=bound
    )
    return w, b


if __name__ == "__main__":
    key = jax.random.PRNGKey(0)
    k_in, k_par = jax.random.split(key)

    batch = 2
    x = jax.random.normal(k_in, (batch, IN_FEATURES), jnp.float32)
    w, b = init_params(k_par)

    y = jax.block_until_ready(linear_pallas(x, w, b))

    # Reference: exact-f32 x @ W.T + b.
    y_ref = jax.lax.dot_general(
        x, w, (((1,), (1,)), ((), ())), precision=jax.lax.Precision.HIGHEST
    ) + b

    assert y.shape == (batch, OUT_FEATURES)
    assert jnp.allclose(y, y_ref, atol=1e-3, rtol=1e-3)

    print("KERNEL_OK")
</pallas_src>

<mosaic_0001>
module attributes {stable_mosaic.version = 11 : i64} {
  func.func @linear_kernel(%arg0: i32, %arg1: i32, %arg2: memref<2x384x128xf32, #tpu.memory_space<vmem>>, %arg3: memref<10x384x128xf32, #tpu.memory_space<vmem>>, %arg4: memref<1x2x10xf32, #tpu.memory_space<vmem>>, %arg5: memref<2x10x8x128xf32, #tpu.memory_space<vmem>>) attributes {dimension_semantics = [#tpu.dimension_semantics<arbitrary>, #tpu.dimension_semantics<arbitrary>], iteration_bounds = array<i64: 1, 4>, scalar_prefetch = 0 : i64, scratch_operands = 1 : i64, tpu.core_type = #tpu.core_type<tc>, window_params = [{transform_indices = @transform_0, window_bounds = array<i64: 2, 384, 128>}, {transform_indices = @transform_1, window_bounds = array<i64: 10, 384, 128>}, {transform_indices = @transform_2, window_bounds = array<i64: 1, 2, 10>}]} {
    %c0_i32 = arith.constant 0 : i32
    %0 = arith.cmpi eq, %arg1, %c0_i32 : i32
    %1 = arith.extui %0 : i1 to i32
    %c0_i32_0 = arith.constant 0 : i32
    %2 = arith.cmpi ne, %1, %c0_i32_0 : i32
    scf.if %2 {
      %cst_15 = arith.constant 0.000000e+00 : f32
      %19 = vector.broadcast %cst_15 : f32 to vector<2x10x8x128xf32>
      %c0_16 = arith.constant 0 : index
      %c0_17 = arith.constant 0 : index
      %c0_18 = arith.constant 0 : index
      %c0_19 = arith.constant 0 : index
      %20 = vector.load %arg5[%c0_16, %c0_17, %c0_18, %c0_19] : memref<2x10x8x128xf32, #tpu.memory_space<vmem>>, vector<2x10x8x128xf32>
      tpu.vector_store %arg5[%c0_16, %c0_17, %c0_18, %c0_19], %19 {strides = array<i32>} : memref<2x10x8x128xf32, #tpu.memory_space<vmem>>, vector<2x10x8x128xf32>,
    } else {
    }
    %c0 = arith.constant 0 : index
    %c0_1 = arith.constant 0 : index
    %c0_2 = arith.constant 0 : index
    %3 = vector.load %arg2[%c0, %c0_1, %c0_2] : memref<2x384x128xf32, #tpu.memory_space<vmem>>, vector<2x384x128xf32>
    %4 = vector.shape_cast %3 : vector<2x384x128xf32> to vector<2x48x8x128xf32>
    %c0_3 = arith.constant 0 : index
    %c0_4 = arith.constant 0 : index
    %c0_5 = arith.constant 0 : index
    %5 = vector.load %arg3[%c0_3, %c0_4, %c0_5] : memref<10x384x128xf32, #tpu.memory_space<vmem>>, vector<10x384x128xf32>
    %6 = vector.shape_cast %5 : vector<10x384x128xf32> to vector<10x48x8x128xf32>
    %c0_6 = arith.constant 0 : index
    %c0_7 = arith.constant 0 : index
    %c0_8 = arith.constant 0 : index
    %c0_9 = arith.constant 0 : index
    %7 = vector.load %arg5[%c0_6, %c0_7, %c0_8, %c0_9] : memref<2x10x8x128xf32, #tpu.memory_space<vmem>>, vector<2x10x8x128xf32>
    %8 = vector.shape_cast %4 : vector<2x48x8x128xf32> to vector<2x1x48x8x128xf32>
    %9 = vector.shape_cast %6 : vector<10x48x8x128xf32> to vector<1x10x48x8x128xf32>
    %10 = vector.broadcast %8 : vector<2x1x48x8x128xf32> to vector<2x10x48x8x128xf32>
    %11 = vector.broadcast %9 : vector<1x10x48x8x128xf32> to vector<2x10x48x8x128xf32>
    %12 = arith.mulf %10, %11 : vector<2x10x48x8x128xf32>
    %cst = arith.constant dense<0.000000e+00> : vector<2x10x8x128xf32>
    %13 = vector.multi_reduction <add>, %12, %cst [2] : vector<2x10x48x8x128xf32> to vector<2x10x8x128xf32>
    %14 = arith.addf %7, %13 : vector<2x10x8x128xf32>
    %c0_10 = arith.constant 0 : index
    %c0_11 = arith.constant 0 : index
    %c0_12 = arith.constant 0 : index
    %c0_13 = arith.constant 0 : index
    %15 = vector.load %arg5[%c0_10, %c0_11, %c0_12, %c0_13] : memref<2x10x8x128xf32, #tpu.memory_space<vmem>>, vector<2x10x8x128xf32>
    tpu.vector_store %arg5[%c0_10, %c0_11, %c0_12, %c0_13], %14 {strides = array<i32>} : memref<2x10x8x128xf32, #tpu.memory_space<vmem>>, vector<2x10x8x128xf32>,
    %c3_i32 = arith.constant 3 : i32
    %16 = arith.cmpi eq, %arg1, %c3_i32 : i32
    %17 = arith.extui %16 : i1 to i32
    %c0_i32_14 = arith.constant 0 : i32
    %18 = arith.cmpi ne, %17, %c0_i32_14 : i32
    scf.if %18 {
      %c0_15 = arith.constant 0 : index
      %c0_16 = arith.constant 0 : index
      %c0_17 = arith.constant 0 : index
      %c0_18 = arith.constant 0 : index
      %19 = vector.load %arg5[%c0_15, %c0_16, %c0_17, %c0_18] : memref<2x10x8x128xf32, #tpu.memory_space<vmem>>, vector<2x10x8x128xf32>
      %cst_19 = arith.constant dense<0.000000e+00> : vector<2x10x128xf32>
      %20 = vector.multi_reduction <add>, %19, %cst_19 [2] : vector<2x10x8x128xf32> to vector<2x10x128xf32>
      %cst_20 = arith.constant dense<0.000000e+00> : vector<2x10xf32>
      %21 = vector.multi_reduction <add>, %20, %cst_20 [2] : vector<2x10x128xf32> to vector<2x10xf32>
      %c0_21 = arith.constant 0 : index
      %c0_22 = arith.constant 0 : index
      %c0_23 = arith.constant 0 : index
      %22 = vector.load %arg4[%c0_21, %c0_22, %c0_23] : memref<1x2x10xf32, #tpu.memory_space<vmem>>, vector<1x2x10xf32>
      %23 = vector.shape_cast %22 : vector<1x2x10xf32> to vector<2x10xf32>
      %24 = vector.shape_cast %21 : vector<2x10xf32> to vector<1x2x10xf32>
      tpu.vector_store %arg4[%c0_21, %c0_22, %c0_23], %24 {strides = array<i32>} : memref<1x2x10xf32, #tpu.memory_space<vmem>>, vector<1x2x10xf32>,
    } else {
    }
    return
  }
  func.func @transform_0(%arg0: i32, %arg1: i32) -> (i32, i32, i32) {
    %c4_i32 = arith.constant 4 : i32
    %0 = arith.muli %arg0, %c4_i32 : i32
    %1 = arith.addi %0, %arg1 : i32
    %c0_i32 = arith.constant 0 : i32
    %c0_i32_0 = arith.constant 0 : i32
    %c0_i32_1 = arith.constant 0 : i32
    return %c0_i32, %1, %c0_i32_0 : i32, i32, i32
  }
  func.func @transform_1(%arg0: i32, %arg1: i32) -> (i32, i32, i32) {
    %c4_i32 = arith.constant 4 : i32
    %0 = arith.muli %arg0, %c4_i32 : i32
    %1 = arith.addi %0, %arg1 : i32
    %c0_i32 = arith.constant 0 : i32
    %c0_i32_0 = arith.constant 0 : i32
    %c0_i32_1 = arith.constant 0 : i32
    return %c0_i32, %1, %c0_i32_0 : i32, i32, i32
  }
  func.func @transform_2(%arg0: i32, %arg1: i32) -> (i32, i32, i32) {
    %c0_i32 = arith.constant 0 : i32
    %c0_i32_0 = arith.constant 0 : i32
    %c0_i32_1 = arith.constant 0 : i32
    return %arg0, %c0_i32, %c0_i32_0 : i32, i32, i32
  }
}

</mosaic_0001>

<llo_original>
// kernel: linear_pallas.1
$region0: #{linear_pallas.1}
  #allocation0 [shape = 'u32[]', space=smem, size = 0x4, offset = 0x4, fixed_abs, tag = 'smem constant byte address 0x4 - core index']
  #allocation1 [shape = 'u32[144,128]{1,0:T(1,128)}', space=vmem, size = 0x12000, scoped, tag = 'internal scratch']
  #allocation2 [shape = 'f32[2,10,8,128]{3,2,1,0:T(8,128)}', space=vmem, size = 0x14000, scoped, tag = 'scratch operand']
  %s0 = inlined_call_operand.vmem [shape: f32[2,1536,128], index: 0, kind: input, shape index: {}]
  %s1 = inlined_call_operand.vmem [shape: f32[10,1536,128], index: 1, kind: input, shape index: {}]
  %s2 = inlined_call_operand.vmem [shape: f32[1,2,10], index: 2, kind: output, shape index: {}]
  %s3 = sld [smem:[#allocation0]]
  $region125: #{linear_pallas.1} parent=0
    _
  %s5 = ssub.s32 1, %s3
  %s6 = scalar_select 0, %s5, %s3
  $region1: #{linear_pallas.1} parent=0
    #allocation3 [shape = 'u8[786432]{0}', space=vmem, size = 0xc0000, scoped, tag = 'input window, operand 0']
    #allocation4 [shape = 'u8[3932160]{0}', space=vmem, size = 0x3c0000, scoped, tag = 'input window, operand 1']
    loop: start=0, step=1, limit=6
    $region2: #{linear_pallas.1} parent=1 // loop_pre_header
      _
    $region3: #{linear_pallas.1} parent=1 // loop_header
      %s8 = sphi 0, %s12
      %p9 = scmp.ge.s32.totalorder %s8, 6
      %s15 = sphi 0, %s27
      %s16 = sphi 0, %s23
      %s17 = sphi 0, %s15
      %s18 = sphi 0, %s16
      %s19 = sphi 0, %s17
      %s20 = sphi 0, %s18
      %s34 = sphi 0, %s36
      %s37 = sphi 0, %s34
      %s38 = sphi 0, %s37
      %s54 = sphi 0, %s38
      %s64 = sphi 0, %s66
      %s67 = sphi 0, %s64
      %s68 = sphi 0, %s67
      %s84 = sphi 0, %s68
      %s90 = sphi 0, %s92
      %s93 = sphi 0, %s90
      %s94 = sphi 0, %s93
      %s110 = sphi 0, %s94
    $region4: #{linear_pallas.1} parent=1 // loop_header_branch
      %11 = sbr.rel (%p9) target = $region8
    $region5: #{linear_pallas.1} parent=1 // loop_body
      %s13 = ssub.s32 %s8, 1
      %s14 = ssub.s32 %s8, 2
      %s21 = sadd.s32 1, %s16
      %p22 = scmp.ge.s32.totalorder %s21, 4
      %s23 = scalar_select %p22, 0, %s21
      %s24 = sadd.s32 1, %s15
      %s25 = scalar_select %p22, %s24, %s15
      %p26 = scmp.ge.s32.totalorder %s25, 1
      %s27 = scalar_select %p26, 0, %s25
      %s28 = smul.u32 %s15, 4
      %s29 = sadd.s32 %s28, %s16
      %s30 = smul.u32 %s27, 4
      %s31 = sadd.s32 %s30, %s23
      %s32 = ssub.s32 %s29, %s31
      %p33 = scmp.eq.s32.totalorder %s32, 0
      %s35 = sadd.s32 %s34, 1
      %s36 = scalar_select %p33, %s34, %s35
      %p39 = pneg %p33
      %p40 = scmp.eq.s32.totalorder %s8, 3
      %p41 = por %p39, %p40
      %p42 = scmp.ne.s32.totalorder %s34, %s37
      %p43 = scmp.eq.s32.totalorder %s8, 0
      %p44 = por %p42, %p43
      %p45 = scmp.ne.s32.totalorder %s34, %s37
      %p46 = scmp.eq.s32.totalorder %s13, 3
      %p47 = por %p45, %p46
      %p48 = scmp.ne.s32.totalorder %s37, %s38
      %p49 = scmp.eq.s32.totalorder %s13, 0
      %p50 = por %p48, %p49
      %p51 = scmp.ne.s32.totalorder %s37, %s38
      %p52 = scmp.eq.s32.totalorder %s14, 3
      %p53 = por %p51, %p52
      %p55 = scmp.ne.s32.totalorder %s38, %s54
      %p56 = scmp.eq.s32.totalorder %s14, 0
      %p57 = por %p55, %p56
      %s58 = smul.u32 %s15, 4
      %s59 = sadd.s32 %s58, %s16
      %s60 = smul.u32 %s27, 4
      %s61 = sadd.s32 %s60, %s23
      %s62 = ssub.s32 %s59, %s61
      %p63 = scmp.eq.s32.totalorder %s62, 0
      %s65 = sadd.s32 %s64, 1
      %s66 = scalar_select %p63, %s64, %s65
      %p69 = pneg %p63
      %p70 = scmp.eq.s32.totalorder %s8, 3
      %p71 = por %p69, %p70
      %p72 = scmp.ne.s32.totalorder %s64, %s67
      %p73 = scmp.eq.s32.totalorder %s8, 0
      %p74 = por %p72, %p73
      %p75 = scmp.ne.s32.totalorder %s64, %s67
      %p76 = scmp.eq.s32.totalorder %s13, 3
      %p77 = por %p75, %p76
      %p78 = scmp.ne.s32.totalorder %s67, %s68
      %p79 = scmp.eq.s32.totalorder %s13, 0
      %p80 = por %p78, %p79
      %p81 = scmp.ne.s32.totalorder %s67, %s68
      %p82 = scmp.eq.s32.totalorder %s14, 3
      %p83 = por %p81, %p82
      %p85 = scmp.ne.s32.totalorder %s68, %s84
      %p86 = scmp.eq.s32.totalorder %s14, 0
      %p87 = por %p85, %p86
      %s88 = ssub.s32 %s15, %s27
      %p89 = scmp.eq.s32.totalorder %s88, 0
      %s91 = sadd.s32 %s90, 1
      %s92 = scalar_select %p89, %s90, %s91
      %p95 = pneg %p89
      %p96 = scmp.eq.s32.totalorder %s8, 3
      %p97 = por %p95, %p96
      %p98 = scmp.ne.s32.totalorder %s90, %s93
      %p99 = scmp.eq.s32.totalorder %s8, 0
      %p100 = por %p98, %p99
      %p101 = scmp.ne.s32.totalorder %s90, %s93
      %p102 = scmp.eq.s32.totalorder %s13, 3
      %p103 = por %p101, %p102
      %p104 = scmp.ne.s32.totalorder %s93, %s94
      %p105 = scmp.eq.s32.totalorder %s13, 0
      %p106 = por %p104, %p105
      %p107 = scmp.ne.s32.totalorder %s93, %s94
      %p108 = scmp.eq.s32.totalorder %s14, 3
      %p109 = por %p107, %p108
      %p111 = scmp.ne.s32.totalorder %s94, %s110
      %p112 = scmp.eq.s32.totalorder %s14, 0
      %p113 = por %p111, %p112
      %p114 = scmp.le.s32.totalorder 1, %s8
      %p115 = scmp.lt.s32.totalorder %s8, 5
      %p116 = pnand %p114, %p115
      %p117 = pneg %p116
      // Predicated region
      $region9: #{linear_pallas.1} parent=5 // pred_check
        _
      $region10: #{linear_pallas.1} parent=5 // pred_check_branch
        %119 = sbr.rel (%p116) target = $region12
      $region11: #{linear_pallas.1} parent=5 // pred_region
        %s120 = ssub.s32 %s8, 1
      $region12: #{linear_pallas.1} parent=5 // pred_fallthru
        _
      %p121 = scmp.lt.s32.totalorder %s8, 4
      // Predicated region
      $region13: #{linear_pallas.1} parent=5 // pred_check
        %p122 = pneg %p121
      $region14: #{linear_pallas.1} parent=5 // pred_check_branch
        %124 = sbr.rel (%p122) target = $region16
      $region15: #{linear_pallas.1} parent=5 // pred_region
        // Predicated region
        $region17: #{linear_pallas.1} parent=15 // pred_check
          %p125 = pneg %p44
        $region18: #{linear_pallas.1} parent=15 // pred_check_branch
          %127 = sbr.rel (%p125) target = $region20
        $region19: #{linear_pallas.1} parent=15 // pred_region
          %s128 = sand.u32 %s34, 1
          %s129 = sand.u32 %s34, 1
          %s130 = smul.addr %s129, 768
          %s131 = scalar_lea.vmem [#allocation3], %s130
          %s132 = smul.u32 %s15, 4
          %s133 = sadd.s32 %s132, %s16
          %s134 = smul.u32 48, %s133
          %s135 = smul.addr %s134, 8
          %s136 = scalar_lea.vmem %s0, %s135
          // Predicated region
          $region21: #{linear_pallas.1} parent=19 // pred_check
            _
          $region22: #{linear_pallas.1} parent=19 // pred_check_branch
            %138 = sbr.rel (0) target = $region24
          $region23: #{linear_pallas.1} parent=19 // pred_region
            // Predicated region
            $region25: #{linear_pallas.1} parent=23 // pred_check
              _
            $region26: #{linear_pallas.1} parent=23 // pred_check_branch
              %140 = sbr.rel (0) target = $region28
            $region27: #{linear_pallas.1} parent=23 // pred_region
              // Predicated region
              $region40: #{linear_pallas.1} parent=27 // pred_check
                _
              $region41: #{linear_pallas.1} parent=27 // pred_check_branch
                %345 = sbr.rel (0) target = $region43
              $region42: #{linear_pallas.1} parent=27 // pred_region
                loop: start=0, step=1, limit=1
                $region44: #{linear_pallas.1} parent=42 // loop_pre_header
                  _
                $region45: #{linear_pallas.1} parent=42 // loop_header
                  %s347 = sphi 0, %s351
                  %p348 = scmp.ge.s32.totalorder %s347, 1
                  %s352 = sphi %s136, %s136
                  %s353 = sphi %s131, %s131
                $region46: #{linear_pallas.1} parent=42 // loop_header_branch
                  %350 = sbr.rel (%p348) target = $region50
                $region47: #{linear_pallas.1} parent=42 // loop_body
                  %v354 = vld [vmem:[%s352] sm:$0xff]
                  %355 = vst [vmem:[%s353] sm:$0xff] %v354
                  %v356 = vld [vmem:[%s352 + $0x8] sm:$0xff]
                  %357 = vst [vmem:[%s353 + $0x8] sm:$0xff] %v356
                  %v358 = vld [vmem:[%s352 + $0x10] sm:$0xff]
                  %359 = vst [vmem:[%s353 + $0x10] sm:$0xff] %v358
                  %v360 = vld [vmem:[%s352 + $0x18] sm:$0xff]
                  %361 = vst [vmem:[%s353 + $0x18] sm:$0xff] %v360
                  %v362 = vld [vmem:[%s352 + $0x20] sm:$0xff]
                  %363 = vst [vmem:[%s353 + $0x20] sm:$0xff] %v362
                  %v364 = vld [vmem:[%s352 + $0x28] sm:$0xff]
                  %365 = vst [vmem:[%s353 + $0x28] sm:$0xff] %v364
                  %v366 = vld [vmem:[%s352 + $0x30] sm:$0xff]
                  %367 = vst [vmem:[%s353 + $0x30] sm:$0xff] %v366
                  %v368 = vld [vmem:[%s352 + $0x38] sm:$0xff]
                  %369 = vst [vmem:[%s353 + $0x38] sm:$0xff] %v368
                  %v370 = vld [vmem:[%s352 + $0x40] sm:$0xff]
                  %371 = vst [vmem:[%s353 + $0x40] sm:$0xff] %v370
                  %v372 = vld [vmem:[%s352 + $0x48] sm:$0xff]
                  %373 = vst [vmem:[%s353 + $0x48] sm:$0xff] %v372
                  %v374 = vld [vmem:[%s352 + $0x50] sm:$0xff]
                  %375 = vst [vmem:[%s353 + $0x50] sm:$0xff] %v374
                  %v376 = vld [vmem:[%s352 + $0x58] sm:$0xff]
                  %377 = vst [vmem:[%s353 + $0x58] sm:$0xff] %v376
                  %v378 = vld [vmem:[%s352 + $0x60] sm:$0xff]
                  %379 = vst [vmem:[%s353 + $0x60] sm:$0xff] %v378
                  %v380 = vld [vmem:[%s352 + $0x68] sm:$0xff]
                  %381 = vst [vmem:[%s353 + $0x68] sm:$0xff] %v380
                  %v382 = vld [vmem:[%s352 + $0x70] sm:$0xff]
                  %383 = vst [vmem:[%s353 + $0x70] sm:$0xff] %v382
                  %v384 = vld [vmem:[%s352 + $0x78] sm:$0xff]
                  %385 = vst [vmem:[%s353 + $0x78] sm:$0xff] %v384
                  %v386 = vld [vmem:[%s352 + $0x80] sm:$0xff]
                  %387 = vst [vmem:[%s353 + $0x80] sm:$0xff] %v386
                  %v388 = vld [vmem:[%s352 + $0x88] sm:$0xff]
                  %389 = vst [vmem:[%s353 + $0x88] sm:$0xff] %v388
                  %v390 = vld [vmem:[%s352 + $0x90] sm:$0xff]
                  %391 = vst [vmem:[%s353 + $0x90] sm:$0xff] %v390
                  %v392 = vld [vmem:[%s352 + $0x98] sm:$0xff]
                  %393 = vst [vmem:[%s353 + $0x98] sm:$0xff] %v392
                  %v394 = vld [vmem:[%s352 + $0xa0] sm:$0xff]
                  %395 = vst [vmem:[%s353 + $0xa0] sm:$0xff] %v394
                  %v396 = vld [vmem:[%s352 + $0xa8] sm:$0xff]
                  %397 = vst [vmem:[%s353 + $0xa8] sm:$0xff] %v396
                  %v398 = vld [vmem:[%s352 + $0xb0] sm:$0xff]
                  %399 = vst [vmem:[%s353 + $0xb0] sm:$0xff] %v398
                  %v400 = vld [vmem:[%s352 + $0xb8] sm:$0xff]
                  %401 = vst [vmem:[%s353 + $0xb8] sm:$0xff] %v400
                  %v402 = vld [vmem:[%s352 + $0xc0] sm:$0xff]
                  %403 = vst [vmem:[%s353 + $0xc0] sm:$0xff] %v402
                  %v404 = vld [vmem:[%s352 + $0xc8] sm:$0xff]
                  %405 = vst [vmem:[%s353 + $0xc8] sm:$0xff] %v404
                  %v406 = vld [vmem:[%s352 + $0xd0] sm:$0xff]
                  %407 = vst [vmem:[%s353 + $0xd0] sm:$0xff] %v406
                  %v408 = vld [vmem:[%s352 + $0xd8] sm:$0xff]
                  %409 = vst [vmem:[%s353 + $0xd8] sm:$0xff] %v408
                  %v410 = vld [vmem:[%s352 + $0xe0] sm:$0xff]
                  %411 = vst [vmem:[%s353 + $0xe0] sm:$0xff] %v410
                  %v412 = vld [vmem:[%s352 + $0xe8] sm:$0xff]
                  %413 = vst [vmem:[%s353 + $0xe8] sm:$0xff] %v412
                  %v414 = vld [vmem:[%s352 + $0xf0] sm:$0xff]
                  %415 = vst [vmem:[%s353 + $0xf0] sm:$0xff] %v414
                  %v416 = vld [vmem:[%s352 + $0xf8] sm:$0xff]
                  %417 = vst [vmem:[%s353 + $0xf8] sm:$0xff] %v416
                  %v418 = vld [vmem:[%s352 + $0x100] sm:$0xff]
                  %419 = vst [vmem:[%s353 + $0x100] sm:$0xff] %v418
                  %v420 = vld [vmem:[%s352 + $0x108] sm:$0xff]
                  %421 = vst [vmem:[%s353 + $0x108] sm:$0xff] %v420
                  %v422 = vld [vmem:[%s352 + $0x110] sm:$0xff]
                  %423 = vst [vmem:[%s353 + $0x110] sm:$0xff] %v422
                  %v424 = vld [vmem:[%s352 + $0x118] sm:$0xff]
                  %425 = vst [vmem:[%s353 + $0x118] sm:$0xff] %v424
                  %v426 = vld [vmem:[%s352 + $0x120] sm:$0xff]
                  %427 = vst [vmem:[%s353 + $0x120] sm:$0xff] %v426
                  %v428 = vld [vmem:[%s352 + $0x128] sm:$0xff]
                  %429 = vst [vmem:[%s353 + $0x128] sm:$0xff] %v428
                  %v430 = vld [vmem:[%s352 + $0x130] sm:$0xff]
                  %431 = vst [vmem:[%s353 + $0x130] sm:$0xff] %v430
                  %v432 = vld [vmem:[%s352 + $0x138] sm:$0xff]
                  %433 = vst [vmem:[%s353 + $0x138] sm:$0xff] %v432
                  %v434 = vld [vmem:[%s352 + $0x140] sm:$0xff]
                  %435 = vst [vmem:[%s353 + $0x140] sm:$0xff] %v434
                  %v436 = vld [vmem:[%s352 + $0x148] sm:$0xff]
                  %437 = vst [vmem:[%s353 + $0x148] sm:$0xff] %v436
                  %v438 = vld [vmem:[%s352 + $0x150] sm:$0xff]
                  %439 = vst [vmem:[%s353 + $0x150] sm:$0xff] %v438
                  %v440 = vld [vmem:[%s352 + $0x158] sm:$0xff]
                  %441 = vst [vmem:[%s353 + $0x158] sm:$0xff] %v440
                  %v442 = vld [vmem:[%s352 + $0x160] sm:$0xff]
                  %443 = vst [vmem:[%s353 + $0x160] sm:$0xff] %v442
                  %v444 = vld [vmem:[%s352 + $0x168] sm:$0xff]
                  %445 = vst [vmem:[%s353 + $0x168] sm:$0xff] %v444
                  %v446 = vld [vmem:[%s352 + $0x170] sm:$0xff]
                  %447 = vst [vmem:[%s353 + $0x170] sm:$0xff] %v446
                  %v448 = vld [vmem:[%s352 + $0x178] sm:$0xff]
                  %449 = vst [vmem:[%s353 + $0x178] sm:$0xff] %v448
                  %v450 = vld [vmem:[%s352 + $0x600] sm:$0xff]
                  %451 = vst [vmem:[%s353 + $0x180] sm:$0xff] %v450
                  %v452 = vld [vmem:[%s352 + $0x608] sm:$0xff]
                  %453 = vst [vmem:[%s353 + $0x188] sm:$0xff] %v452
                  %v454 = vld [vmem:[%s352 + $0x610] sm:$0xff]
                  %455 = vst [vmem:[%s353 + $0x190] sm:$0xff] %v454
                  %v456 = vld [vmem:[%s352 + $0x618] sm:$0xff]
                  %457 = vst [vmem:[%s353 + $0x198] sm:$0xff] %v456
                  %v458 = vld [vmem:[%s352 + $0x620] sm:$0xff]
                  %459 = vst [vmem:[%s353 + $0x1a0] sm:$0xff] %v458
                  %v460 = vld [vmem:[%s352 + $0x628] sm:$0xff]
                  %461 = vst [vmem:[%s353 + $0x1a8] sm:$0xff] %v460
                  %v462 = vld [vmem:[%s352 + $0x630] sm:$0xff]
                  %463 = vst [vmem:[%s353 + $0x1b0] sm:$0xff] %v462
                  %v464 = vld [vmem:[%s352 + $0x638] sm:$0xff]
                  %465 = vst [vmem:[%s353 + $0x1b8] sm:$0xff] %v464
                  %v466 = vld [vmem:[%s352 + $0x640] sm:$0xff]
                  %467 = vst [vmem:[%s353 + $0x1c0] sm:$0xff] %v466
                  %v468 = vld [vmem:[%s352 + $0x648] sm:$0xff]
                  %469 = vst [vmem:[%s353 + $0x1c8] sm:$0xff] %v468
                  %v470 = vld [vmem:[%s352 + $0x650] sm:$0xff]
                  %471 = vst [vmem:[%s353 + $0x1d0] sm:$0xff] %v470
                  %v472 = vld [vmem:[%s352 + $0x658] sm:$0xff]
                  %473 = vst [vmem:[%s353 + $0x1d8] sm:$0xff] %v472
                  %v474 = vld [vmem:[%s352 + $0x660] sm:$0xff]
                  %475 = vst [vmem:[%s353 + $0x1e0] sm:$0xff] %v474
                  %v476 = vld [vmem:[%s352 + $0x668] sm:$0xff]
                  %477 = vst [vmem:[%s353 + $0x1e8] sm:$0xff] %v476
                  %v478 = vld [vmem:[%s352 + $0x670] sm:$0xff]
                  %479 = vst [vmem:[%s353 + $0x1f0] sm:$0xff] %v478
                  %v480 = vld [vmem:[%s352 + $0x678] sm:$0xff]
                  %481 = vst [vmem:[%s353 + $0x1f8] sm:$0xff] %v480
                  %v482 = vld [vmem:[%s352 + $0x680] sm:$0xff]
                  %483 = vst [vmem:[%s353 + $0x200] sm:$0xff] %v482
                  %v484 = vld [vmem:[%s352 + $0x688] sm:$0xff]
                  %485 = vst [vmem:[%s353 + $0x208] sm:$0xff] %v484
                  %v486 = vld [vmem:[%s352 + $0x690] sm:$0xff]
                  %487 = vst [vmem:[%s353 + $0x210] sm:$0xff] %v486
                  %v488 = vld [vmem:[%s352 + $0x698] sm:$0xff]
                  %489 = vst [vmem:[%s353 + $0x218] sm:$0xff] %v488
                  %v490 = vld [vmem:[%s352 + $0x6a0] sm:$0xff]
                  %491 = vst [vmem:[%s353 + $0x220] sm:$0xff] %v490
                  %v492 = vld [vmem:[%s352 + $0x6a8] sm:$0xff]
                  %493 = vst [vmem:[%s353 + $0x228] sm:$0xff] %v492
                  %v494 = vld [vmem:[%s352 + $0x6b0] sm:$0xff]
                  %495 = vst [vmem:[%s353 + $0x230] sm:$0xff] %v494
                  %v496 = vld [vmem:[%s352 + $0x6b8] sm:$0xff]
                  %497 = vst [vmem:[%s353 + $0x238] sm:$0xff] %v496
                  %v498 = vld [vmem:[%s352 + $0x6c0] sm:$0xff]
                  %499 = vst [vmem:[%s353 + $0x240] sm:$0xff] %v498
                  %v500 = vld [vmem:[%s352 + $0x6c8] sm:$0xff]
                  %501 = vst [vmem:[%s353 + $0x248] sm:$0xff] %v500
                  %v502 = vld [vmem:[%s352 + $0x6d0] sm:$0xff]
                  %503 = vst [vmem:[%s353 + $0x250] sm:$0xff] %v502
                  %v504 = vld [vmem:[%s352 + $0x6d8] sm:$0xff]
                  %505 = vst [vmem:[%s353 + $0x258] sm:$0xff] %v504
                  %v506 = vld [vmem:[%s352 + $0x6e0] sm:$0xff]
                  %507 = vst [vmem:[%s353 + $0x260] sm:$0xff] %v506
                  %v508 = vld [vmem:[%s352 + $0x6e8] sm:$0xff]
                  %509 = vst [vmem:[%s353 + $0x268] sm:$0xff] %v508
                  %v510 = vld [vmem:[%s352 + $0x6f0] sm:$0xff]
                  %511 = vst [vmem:[%s353 + $0x270] sm:$0xff] %v510
                  %v512 = vld [vmem:[%s352 + $0x6f8] sm:$0xff]
                  %513 = vst [vmem:[%s353 + $0x278] sm:$0xff] %v512
                  %v514 = vld [vmem:[%s352 + $0x700] sm:$0xff]
                  %515 = vst [vmem:[%s353 + $0x280] sm:$0xff] %v514
                  %v516 = vld [vmem:[%s352 + $0x708] sm:$0xff]
                  %517 = vst [vmem:[%s353 + $0x288] sm:$0xff] %v516
                  %v518 = vld [vmem:[%s352 + $0x710] sm:$0xff]
                  %519 = vst [vmem:[%s353 + $0x290] sm:$0xff] %v518
                  %v520 = vld [vmem:[%s352 + $0x718] sm:$0xff]
                  %521 = vst [vmem:[%s353 + $0x298] sm:$0xff] %v520
                  %v522 = vld [vmem:[%s352 + $0x720] sm:$0xff]
                  %523 = vst [vmem:[%s353 + $0x2a0] sm:$0xff] %v522
                  %v524 = vld [vmem:[%s352 + $0x728] sm:$0xff]
                  %525 = vst [vmem:[%s353 + $0x2a8] sm:$0xff] %v524
                  %v526 = vld [vmem:[%s352 + $0x730] sm:$0xff]
                  %527 = vst [vmem:[%s353 + $0x2b0] sm:$0xff] %v526
                  %v528 = vld [vmem:[%s352 + $0x738] sm:$0xff]
                  %529 = vst [vmem:[%s353 + $0x2b8] sm:$0xff] %v528
                  %v530 = vld [vmem:[%s352 + $0x740] sm:$0xff]
                  %531 = vst [vmem:[%s353 + $0x2c0] sm:$0xff] %v530
                  %v532 = vld [vmem:[%s352 + $0x748] sm:$0xff]
                  %533 = vst [vmem:[%s353 + $0x2c8] sm:$0xff] %v532
                  %v534 = vld [vmem:[%s352 + $0x750] sm:$0xff]
                  %535 = vst [vmem:[%s353 + $0x2d0] sm:$0xff] %v534
                  %v536 = vld [vmem:[%s352 + $0x758] sm:$0xff]
                  %537 = vst [vmem:[%s353 + $0x2d8] sm:$0xff] %v536
                  %v538 = vld [vmem:[%s352 + $0x760] sm:$0xff]
                  %539 = vst [vmem:[%s353 + $0x2e0] sm:$0xff] %v538
                  %v540 = vld [vmem:[%s352 + $0x768] sm:$0xff]
                  %541 = vst [vmem:[%s353 + $0x2e8] sm:$0xff] %v540
                  %v542 = vld [vmem:[%s352 + $0x770] sm:$0xff]
                  %543 = vst [vmem:[%s353 + $0x2f0] sm:$0xff] %v542
                  %v544 = vld [vmem:[%s352 + $0x778] sm:$0xff]
                  %545 = vst [vmem:[%s353 + $0x2f8] sm:$0xff] %v544
                $region48: #{linear_pallas.1} parent=42 // loop_footer
                  %s351 = sadd.s32 1, %s347
                $region49: #{linear_pallas.1} parent=42 // loop_footer_branch
                  %346 = sbr.rel target = $region45
                $region50: #{linear_pallas.1} parent=42 // loop_exit
                  _
              $region43: #{linear_pallas.1} parent=27 // pred_fallthru
                _
              // Predicated region
              $region51: #{linear_pallas.1} parent=27 // pred_check
                _
              $region52: #{linear_pallas.1} parent=27 // pred_check_branch
                %547 = sbr.rel target = $region54
              $region53: #{linear_pallas.1} parent=27 // pred_region
                _
              $region54: #{linear_pallas.1} parent=27 // pred_fallthru
                _
            $region28: #{linear_pallas.1} parent=23 // pred_fallthru
              _
            // Predicated region
            $region29: #{linear_pallas.1} parent=23 // pred_check
              _
            $region30: #{linear_pallas.1} parent=23 // pred_check_branch
              %142 = sbr.rel target = $region32
            $region31: #{linear_pallas.1} parent=23 // pred_region
              loop: start=0, step=1, limit=1
              $region33: #{linear_pallas.1} parent=31 // loop_pre_header
                _
              $region34: #{linear_pallas.1} parent=31 // loop_header
                %s145 = sphi 0, %s149
                %p146 = scmp.ge.s32.totalorder %s145, 1
                %s150 = sphi %s136, %s136
                %s151 = sphi %s131, %s131
              $region35: #{linear_pallas.1} parent=31 // loop_header_branch
                %148 = sbr.rel (%p146) target = $region39
              $region36: #{linear_pallas.1} parent=31 // loop_body
                %v152 = vld [vmem:[%s150] sm:$0xff]
                %153 = vst [vmem:[%s151] sm:$0xff] %v152
                %v154 = vld [vmem:[%s150 + $0x8] sm:$0xff]
                %155 = vst [vmem:[%s151 + $0x8] sm:$0xff] %v154
                %v156 = vld [vmem:[%s150 + $0x10] sm:$0xff]
                %157 = vst [vmem:[%s151 + $0x10] sm:$0xff] %v156
                %v158 = vld [vmem:[%s150 + $0x18] sm:$0xff]
                %159 = vst [vmem:[%s151 + $0x18] sm:$0xff] %v158
                %v160 = vld [vmem:[%s150 + $0x20] sm:$0xff]
                %161 = vst [vmem:[%s151 + $0x20] sm:$0xff] %v160
                %v162 = vld [vmem:[%s150 + $0x28] sm:$0xff]
                %163 = vst [vmem:[%s151 + $0x28] sm:$0xff] %v162
                %v164 = vld [vmem:[%s150 + $0x30] sm:$0xff]
                %165 = vst [vmem:[%s151 + $0x30] sm:$0xff] %v164
                %v166 = vld [vmem:[%s150 + $0x38] sm:$0xff]
                %167 = vst [vmem:[%s151 + $0x38] sm:$0xff] %v166
                %v168 = vld [vmem:[%s150 + $0x40] sm:$0xff]
                %169 = vst [vmem:[%s151 + $0x40] sm:$0xff] %v168
                %v170 = vld [vmem:[%s150 + $0x48] sm:$0xff]
                %171 = vst [vmem:[%s151 + $0x48] sm:$0xff] %v170
                %v172 = vld [vmem:[%s150 + $0x50] sm:$0xff]
                %173 = vst [vmem:[%s151 + $0x50] sm:$0xff] %v172
                %v174 = vld [vmem:[%s150 + $0x58] sm:$0xff]
                %175 = vst [vmem:[%s151 + $0x58] sm:$0xff] %v174
                %v176 = vld [vmem:[%s150 + $0x60] sm:$0xff]
                %177 = vst [vmem:[%s151 + $0x60] sm:$0xff] %v176
                %v178 = vld [vmem:[%s150 + $0x68] sm:$0xff]
                %179 = vst [vmem:[%s151 + $0x68] sm:$0xff] %v178
                %v180 = vld [vmem:[%s150 + $0x70] sm:$0xff]
                %181 = vst [vmem:[%s151 + $0x70] sm:$0xff] %v180
                %v182 = vld [vmem:[%s150 + $0x78] sm:$0xff]
                %183 = vst [vmem:[%s151 + $0x78] sm:$0xff] %v182
                %v184 = vld [vmem:[%s150 + $0x80] sm:$0xff]
                %185 = vst [vmem:[%s151 + $0x80] sm:$0xff] %v184
                %v186 = vld [vmem:[%s150 + $0x88] sm:$0xff]
                %187 = vst [vmem:[%s151 + $0x88] sm:$0xff] %v186
                %v188 = vld [vmem:[%s150 + $0x90] sm:$0xff]
                %189 = vst [vmem:[%s151 + $0x90] sm:$0xff] %v188
                %v190 = vld [vmem:[%s150 + $0x98] sm:$0xff]
                %191 = vst [vmem:[%s151 + $0x98] sm:$0xff] %v190
                %v192 = vld [vmem:[%s150 + $0xa0] sm:$0xff]
                %193 = vst [vmem:[%s151 + $0xa0] sm:$0xff] %v192
                %v194 = vld [vmem:[%s150 + $0xa8] sm:$0xff]
                %195 = vst [vmem:[%s151 + $0xa8] sm:$0xff] %v194
                %v196 = vld [vmem:[%s150 + $0xb0] sm:$0xff]
                %197 = vst [vmem:[%s151 + $0xb0] sm:$0xff] %v196
                %v198 = vld [vmem:[%s150 + $0xb8] sm:$0xff]
                %199 = vst [vmem:[%s151 + $0xb8] sm:$0xff] %v198
                %v200 = vld [vmem:[%s150 + $0xc0] sm:$0xff]
                %201 = vst [vmem:[%s151 + $0xc0] sm:$0xff] %v200
                %v202 = vld [vmem:[%s150 + $0xc8] sm:$0xff]
                %203 = vst [vmem:[%s151 + $0xc8] sm:$0xff] %v202
                %v204 = vld [vmem:[%s150 + $0xd0] sm:$0xff]
                %205 = vst [vmem:[%s151 + $0xd0] sm:$0xff] %v204
                %v206 = vld [vmem:[%s150 + $0xd8] sm:$0xff]
                %207 = vst [vmem:[%s151 + $0xd8] sm:$0xff] %v206
                %v208 = vld [vmem:[%s150 + $0xe0] sm:$0xff]
                %209 = vst [vmem:[%s151 + $0xe0] sm:$0xff] %v208
                %v210 = vld [vmem:[%s150 + $0xe8] sm:$0xff]
                %211 = vst [vmem:[%s151 + $0xe8] sm:$0xff] %v210
                %v212 = vld [vmem:[%s150 + $0xf0] sm:$0xff]
                %213 = vst [vmem:[%s151 + $0xf0] sm:$0xff] %v212
                %v214 = vld [vmem:[%s150 + $0xf8] sm:$0xff]
                %215 = vst [vmem:[%s151 + $0xf8] sm:$0xff] %v214
                %v216 = vld [vmem:[%s150 + $0x100] sm:$0xff]
                %217 = vst [vmem:[%s151 + $0x100] sm:$0xff] %v216
                %v218 = vld [vmem:[%s150 + $0x108] sm:$0xff]
                %219 = vst [vmem:[%s151 + $0x108] sm:$0xff] %v218
                %v220 = vld [vmem:[%s150 + $0x110] sm:$0xff]
                %221 = vst [vmem:[%s151 + $0x110] sm:$0xff] %v220
                %v222 = vld [vmem:[%s150 + $0x118] sm:$0xff]
                %223 = vst [vmem:[%s151 + $0x118] sm:$0xff] %v222
                %v224 = vld [vmem:[%s150 + $0x120] sm:$0xff]
                %225 = vst [vmem:[%s151 + $0x120] sm:$0xff] %v224
                %v226 = vld [vmem:[%s150 + $0x128] sm:$0xff]
                %227 = vst [vmem:[%s151 + $0x128] sm:$0xff] %v226
                %v228 = vld [vmem:[%s150 + $0x130] sm:$0xff]
                %229 = vst [vmem:[%s151 + $0x130] sm:$0xff] %v228
                %v230 = vld [vmem:[%s150 + $0x138] sm:$0xff]
                %231 = vst [vmem:[%s151 + $0x138] sm:$0xff] %v230
                %v232 = vld [vmem:[%s150 + $0x140] sm:$0xff]
                %233 = vst [vmem:[%s151 + $0x140] sm:$0xff] %v232
                %v234 = vld [vmem:[%s150 + $0x148] sm:$0xff]
                %235 = vst [vmem:[%s151 + $0x148] sm:$0xff] %v234
                %v236 = vld [vmem:[%s150 + $0x150] sm:$0xff]
                %237 = vst [vmem:[%s151 + $0x150] sm:$0xff] %v236
                %v238 = vld [vmem:[%s150 + $0x158] sm:$0xff]
                %239 = vst [vmem:[%s151 + $0x158] sm:$0xff] %v238
                %v240 = vld [vmem:[%s150 + $0x160] sm:$0xff]
                %241 = vst [vmem:[%s151 + $0x160] sm:$0xff] %v240
                %v242 = vld [vmem:[%s150 + $0x168] sm:$0xff]
                %243 = vst [vmem:[%s151 + $0x168] sm:$0xff] %v242
                %v244 = vld [vmem:[%s150 + $0x170] sm:$0xff]
                %245 = vst [vmem:[%s151 + $0x170] sm:$0xff] %v244
                %v246 = vld [vmem:[%s150 + $0x178] sm:$0xff]
                %247 = vst [vmem:[%s151 + $0x178] sm:$0xff] %v246
                %v248 = vld [vmem:[%s150 + $0x600] sm:$0xff]
                %249 = vst [vmem:[%s151 + $0x180] sm:$0xff] %v248
                %v250 = vld [vmem:[%s150 + $0x608] sm:$0xff]
                %251 = vst [vmem:[%s151 + $0x188] sm:$0xff] %v250
                %v252 = vld [vmem:[%s150 + $0x610] sm:$0xff]
                %253 = vst [vmem:[%s151 + $0x190] sm:$0xff] %v252
                %v254 = vld [vmem:[%s150 + $0x618] sm:$0xff]
                %255 = vst [vmem:[%s151 + $0x198] sm:$0xff] %v254
                %v256 = vld [vmem:[%s150 + $0x620] sm:$0xff]
                %257 = vst [vmem:[%s151 + $0x1a0] sm:$0xff] %v256
                %v258 = vld [vmem:[%s150 + $0x628] sm:$0xff]
                %259 = vst [vmem:[%s151 + $0x1a8] sm:$0xff] %v258
                %v260 = vld [vmem:[%s150 + $0x630] sm:$0xff]
                %261 = vst [vmem:[%s151 + $0x1b0] sm:$0xff] %v260
                %v262 = vld [vmem:[%s150 + $0x638] sm:$0xff]
                %263 = vst [vmem:[%s151 + $0x1b8] sm:$0xff] %v262
                %v264 = vld [vmem:[%s150 + $0x640] sm:$0xff]
                %265 = vst [vmem:[%s151 + $0x1c0] sm:$0xff] %v264
                %v266 = vld [vmem:[%s150 + $0x648] sm:$0xff]
                %267 = vst [vmem:[%s151 + $0x1c8] sm:$0xff] %v266
                %v268 = vld [vmem:[%s150 + $0x650] sm:$0xff]
                %269 = vst [vmem:[%s151 + $0x1d0] sm:$0xff] %v268
                %v270 = vld [vmem:[%s150 + $0x658] sm:$0xff]
                %271 = vst [vmem:[%s151 + $0x1d8] sm:$0xff] %v270
                %v272 = vld [vmem:[%s150 + $0x660] sm:$0xff]
                %273 = vst [vmem:[%s151 + $0x1e0] sm:$0xff] %v272
                %v274 = vld [vmem:[%s150 + $0x668] sm:$0xff]
                %275 = vst [vmem:[%s151 + $0x1e8] sm:$0xff] %v274
                %v276 = vld [vmem:[%s150 + $0x670] sm:$0xff]
                %277 = vst [vmem:[%s151 + $0x1f0] sm:$0xff] %v276
                %v278 = vld [vmem:[%s150 + $0x678] sm:$0xff]
                %279 = vst [vmem:[%s151 + $0x1f8] sm:$0xff] %v278
                %v280 = vld [vmem:[%s150 + $0x680] sm:$0xff]
                %281 = vst [vmem:[%s151 + $0x200] sm:$0xff] %v280
                %v282 = vld [vmem:[%s150 + $0x688] sm:$0xff]
                %283 = vst [vmem:[%s151 + $0x208] sm:$0xff] %v282
                %v284 = vld [vmem:[%s150 + $0x690] sm:$0xff]
                %285 = vst [vmem:[%s151 + $0x210] sm:$0xff] %v284
                %v286 = vld [vmem:[%s150 + $0x698] sm:$0xff]
                %287 = vst [vmem:[%s151 + $0x218] sm:$0xff] %v286
                %v288 = vld [vmem:[%s150 + $0x6a0] sm:$0xff]
                %289 = vst [vmem:[%s151 + $0x220] sm:$0xff] %v288
                %v290 = vld [vmem:[%s150 + $0x6a8] sm:$0xff]
                %291 = vst [vmem:[%s151 + $0x228] sm:$0xff] %v290
                %v292 = vld [vmem:[%s150 + $0x6b0] sm:$0xff]
                %293 = vst [vmem:[%s151 + $0x230] sm:$0xff] %v292
                %v294 = vld [vmem:[%s150 + $0x6b8] sm:$0xff]
                %295 = vst [vmem:[%s151 + $0x238] sm:$0xff] %v294
                %v296 = vld [vmem:[%s150 + $0x6c0] sm:$0xff]
                %297 = vst [vmem:[%s151 + $0x240] sm:$0xff] %v296
                %v298 = vld [vmem:[%s150 + $0x6c8] sm:$0xff]
                %299 = vst [vmem:[%s151 + $0x248] sm:$0xff] %v298
                %v300 = vld [vmem:[%s150 + $0x6d0] sm:$0xff]
                %301 = vst [vmem:[%s151 + $0x250] sm:$0xff] %v300
                %v302 = vld [vmem:[%s150 + $0x6d8] sm:$0xff]
                %303 = vst [vmem:[%s151 + $0x258] sm:$0xff] %v302
                %v304 = vld [vmem:[%s150 + $0x6e0] sm:$0xff]
                %305 = vst [vmem:[%s151 + $0x260] sm:$0xff] %v304
                %v306 = vld [vmem:[%s150 + $0x6e8] sm:$0xff]
                %307 = vst [vmem:[%s151 + $0x268] sm:$0xff] %v306
                %v308 = vld [vmem:[%s150 + $0x6f0] sm:$0xff]
                %309 = vst [vmem:[%s151 + $0x270] sm:$0xff] %v308
                %v310 = vld [vmem:[%s150 + $0x6f8] sm:$0xff]
                %311 = vst [vmem:[%s151 + $0x278] sm:$0xff] %v310
                %v312 = vld [vmem:[%s150 + $0x700] sm:$0xff]
                %313 = vst [vmem:[%s151 + $0x280] sm:$0xff] %v312
                %v314 = vld [vmem:[%s150 + $0x708] sm:$0xff]
                %315 = vst [vmem:[%s151 + $0x288] sm:$0xff] %v314
                %v316 = vld [vmem:[%s150 + $0x710] sm:$0xff]
                %317 = vst [vmem:[%s151 + $0x290] sm:$0xff] %v316
                %v318 = vld [vmem:[%s150 + $0x718] sm:$0xff]
                %319 = vst [vmem:[%s151 + $0x298] sm:$0xff] %v318
                %v320 = vld [vmem:[%s150 + $0x720] sm:$0xff]
                %321 = vst [vmem:[%s151 + $0x2a0] sm:$0xff] %v320
                %v322 = vld [vmem:[%s150 + $0x728] sm:$0xff]
                %323 = vst [vmem:[%s151 + $0x2a8] sm:$0xff] %v322
                %v324 = vld [vmem:[%s150 + $0x730] sm:$0xff]
                %325 = vst [vmem:[%s151 + $0x2b0] sm:$0xff] %v324
                %v326 = vld [vmem:[%s150 + $0x738] sm:$0xff]
                %327 = vst [vmem:[%s151 + $0x2b8] sm:$0xff] %v326
                %v328 = vld [vmem:[%s150 + $0x740] sm:$0xff]
                %329 = vst [vmem:[%s151 + $0x2c0] sm:$0xff] %v328
                %v330 = vld [vmem:[%s150 + $0x748] sm:$0xff]
                %331 = vst [vmem:[%s151 + $0x2c8] sm:$0xff] %v330
                %v332 = vld [vmem:[%s150 + $0x750] sm:$0xff]
                %333 = vst [vmem:[%s151 + $0x2d0] sm:$0xff] %v332
                %v334 = vld [vmem:[%s150 + $0x758] sm:$0xff]
                %335 = vst [vmem:[%s151 + $0x2d8] sm:$0xff] %v334
                %v336 = vld [vmem:[%s150 + $0x760] sm:$0xff]
                %337 = vst [vmem:[%s151 + $0x2e0] sm:$0xff] %v336
                %v338 = vld [vmem:[%s150 + $0x768] sm:$0xff]
                %339 = vst [vmem:[%s151 + $0x2e8] sm:$0xff] %v338
                %v340 = vld [vmem:[%s150 + $0x770] sm:$0xff]
                %341 = vst [vmem:[%s151 + $0x2f0] sm:$0xff] %v340
                %v342 = vld [vmem:[%s150 + $0x778] sm:$0xff]
                %343 = vst [vmem:[%s151 + $0x2f8] sm:$0xff] %v342
              $region37: #{linear_pallas.1} parent=31 // loop_footer
                %s149 = sadd.s32 1, %s145
              $region38: #{linear_pallas.1} parent=31 // loop_footer_branch
                %144 = sbr.rel target = $region34
              $region39: #{linear_pallas.1} parent=31 // loop_exit
                _
            $region32: #{linear_pallas.1} parent=23 // pred_fallthru
              _
          $region24: #{linear_pallas.1} parent=19 // pred_fallthru
            _
          %548 = vnop
        $region20: #{linear_pallas.1} parent=15 // pred_fallthru
          _
        // Predicated region
        $region55: #{linear_pallas.1} parent=15 // pred_check
          %p549 = pneg %p74
        $region56: #{linear_pallas.1} parent=15 // pred_check_branch
          %551 = sbr.rel (%p549) target = $region58
        $region57: #{linear_pallas.1} parent=15 // pred_region
          %s552 = sand.u32 %s64, 1
          %s553 = sand.u32 %s64, 1
          %s554 = smul.addr %s553, 3840
          %s555 = scalar_lea.vmem [#allocation4], %s554
          %s556 = smul.u32 %s15, 4
          %s557 = sadd.s32 %s556, %s16
          %s558 = smul.u32 48, %s557
          %s559 = smul.addr %s558, 8
          %s560 = scalar_lea.vmem %s1, %s559
          // Predicated region
          $region59: #{linear_pallas.1} parent=57 // pred_check
            _
          $region60: #{linear_pallas.1} parent=57 // pred_check_branch
            %562 = sbr.rel (0) target = $region62
          $region61: #{linear_pallas.1} parent=57 // pred_region
            // Predicated region
            $region63: #{linear_pallas.1} parent=61 // pred_check
              _
            $region64: #{linear_pallas.1} parent=61 // pred_check_branch
              %564 = sbr.rel (0) target = $region66
            $region65: #{linear_pallas.1} parent=61 // pred_region
              // Predicated region
              $region78: #{linear_pallas.1} parent=65 // pred_check
                _
              $region79: #{linear_pallas.1} parent=65 // pred_check_branch
                %1537 = sbr.rel (0) target = $region81
              $region80: #{linear_pallas.1} parent=65 // pred_region
                loop: start=0, step=1, limit=1
                $region82: #{linear_pallas.1} parent=80 // loop_pre_header
                  _
                $region83: #{linear_pallas.1} parent=80 // loop_header
                  %s1539 = sphi 0, %s1543
                  %p1540 = scmp.ge.s32.totalorder %s1539, 1
                  %s1544 = sphi %s560, %s560
                  %s1545 = sphi %s555, %s555
                $region84: #{linear_pallas.1} parent=80 // loop_header_branch
                  %1542 = sbr.rel (%p1540) target = $region88
                $region85: #{linear_pallas.1} parent=80 // loop_body
                  %v1546 = vld [vmem:[%s1544] sm:$0xff]
                  %1547 = vst [vmem:[%s1545] sm:$0xff] %v1546
                  %v1548 = vld [vmem:[%s1544 + $0x8] sm:$0xff]
                  %1549 = vst [vmem:[%s1545 + $0x8] sm:$0xff] %v1548
                  %v1550 = vld [vmem:[%s1544 + $0x10] sm:$0xff]
                  %1551 = vst [vmem:[%s1545 + $0x10] sm:$0xff] %v1550
                  %v1552 = vld [vmem:[%s1544 + $0x18] sm:$0xff]
                  %1553 = vst [vmem:[%s1545 + $0x18] sm:$0xff] %v1552
                  %v1554 = vld [vmem:[%s1544 + $0x20] sm:$0xff]
                  %1555 = vst [vmem:[%s1545 + $0x20] sm:$0xff] %v1554
                  %v1556 = vld [vmem:[%s1544 + $0x28] sm:$0xff]
                  %1557 = vst [vmem:[%s1545 + $0x28] sm:$0xff] %v1556
                  %v1558 = vld [vmem:[%s1544 + $0x30] sm:$0xff]
                  %1559 = vst [vmem:[%s1545 + $0x30] sm:$0xff] %v1558
                  %v1560 = vld [vmem:[%s1544 + $0x38] sm:$0xff]
                  %1561 = vst [vmem:[%s1545 + $0x38] sm:$0xff] %v1560
                  %v1562 = vld [vmem:[%s1544 + $0x40] sm:$0xff]
                  %1563 = vst [vmem:[%s1545 + $0x40] sm:$0xff] %v1562
                  %v1564 = vld [vmem:[%s1544 + $0x48] sm:$0xff]
                  %1565 = vst [vmem:[%s1545 + $0x48] sm:$0xff] %v1564
                  %v1566 = vld [vmem:[%s1544 + $0x50] sm:$0xff]
                  %1567 = vst [vmem:[%s1545 + $0x50] sm:$0xff] %v1566
                  %v1568 = vld [vmem:[%s1544 + $0x58] sm:$0xff]
                  %1569 = vst [vmem:[%s1545 + $0x58] sm:$0xff] %v1568
                  %v1570 = vld [vmem:[%s1544 + $0x60] sm:$0xff]
                  %1571 = vst [vmem:[%s1545 + $0x60] sm:$0xff] %v1570
                  %v1572 = vld [vmem:[%s1544 + $0x68] sm:$0xff]
                  %1573 = vst [vmem:[%s1545 + $0x68] sm:$0xff] %v1572
                  %v1574 = vld [vmem:[%s1544 + $0x70] sm:$0xff]
                  %1575 = vst [vmem:[%s1545 + $0x70] sm:$0xff] %v1574
                  %v1576 = vld [vmem:[%s1544 + $0x78] sm:$0xff]
                  %1577 = vst [vmem:[%s1545 + $0x78] sm:$0xff] %v1576
                  %v1578 = vld [vmem:[%s1544 + $0x80] sm:$0xff]
                  %1579 = vst [vmem:[%s1545 + $0x80] sm:$0xff] %v1578
                  %v1580 = vld [vmem:[%s1544 + $0x88] sm:$0xff]
                  %1581 = vst [vmem:[%s1545 + $0x88] sm:$0xff] %v1580
                  %v1582 = vld [vmem:[%s1544 + $0x90] sm:$0xff]
                  %1583 = vst [vmem:[%s1545 + $0x90] sm:$0xff] %v1582
                  %v1584 = vld [vmem:[%s1544 + $0x98] sm:$0xff]
                  %1585 = vst [vmem:[%s1545 + $0x98] sm:$0xff] %v1584
                  %v1586 = vld [vmem:[%s1544 + $0xa0] sm:$0xff]
                  %1587 = vst [vmem:[%s1545 + $0xa0] sm:$0xff] %v1586
                  %v1588 = vld [vmem:[%s1544 + $0xa8] sm:$0xff]
                  %1589 = vst [vmem:[%s1545 + $0xa8] sm:$0xff] %v1588
                  %v1590 = vld [vmem:[%s1544 + $0xb0] sm:$0xff]
                  %1591 = vst [vmem:[%s1545 + $0xb0] sm:$0xff] %v1590
                  %v1592 = vld [vmem:[%s1544 + $0xb8] sm:$0xff]
                  %1593 = vst [vmem:[%s1545 + $0xb8] sm:$0xff] %v1592
                  %v1594 = vld [vmem:[%s1544 + $0xc0] sm:$0xff]
                  %1595 = vst [vmem:[%s1545 + $0xc0] sm:$0xff] %v1594
                  %v1596 = vld [vmem:[%s1544 + $0xc8] sm:$0xff]
                  %1597 = vst [vmem:[%s1545 + $0xc8] sm:$0xff] %v1596
                  %v1598 = vld [vmem:[%s1544 + $0xd0] sm:$0xff]
                  %1599 = vst [vmem:[%s1545 + $0xd0] sm:$0xff] %v1598
                  %v1600 = vld [vmem:[%s1544 + $0xd8] sm:$0xff]
                  %1601 = vst [vmem:[%s1545 + $0xd8] sm:$0xff] %v1600
                  %v1602 = vld [vmem:[%s1544 + $0xe0] sm:$0xff]
                  %1603 = vst [vmem:[%s1545 + $0xe0] sm:$0xff] %v1602
                  %v1604 = vld [vmem:[%s1544 + $0xe8] sm:$0xff]
                  %1605 = vst [vmem:[%s1545 + $0xe8] sm:$0xff] %v1604
                  %v1606 = vld [vmem:[%s1544 + $0xf0] sm:$0xff]
                  %1607 = vst [vmem:[%s1545 + $0xf0] sm:$0xff] %v1606
                  %v1608 = vld [vmem:[%s1544 + $0xf8] sm:$0xff]
                  %1609 = vst [vmem:[%s1545 + $0xf8] sm:$0xff] %v1608
                  %v1610 = vld [vmem:[%s1544 + $0x100] sm:$0xff]
                  %1611 = vst [vmem:[%s1545 + $0x100] sm:$0xff] %v1610
                  %v1612 = vld [vmem:[%s1544 + $0x108] sm:$0xff]
                  %1613 = vst [vmem:[%s1545 + $0x108] sm:$0xff] %v1612
                  %v1614 = vld [vmem:[%s1544 + $0x110] sm:$0xff]
                  %1615 = vst [vmem:[%s1545 + $0x110] sm:$0xff] %v1614
                  %v1616 = vld [vmem:[%s1544 + $0x118] sm:$0xff]
                  %1617 = vst [vmem:[%s1545 + $0x118] sm:$0xff] %v1616
                  %v1618 = vld [vmem:[%s1544 + $0x120] sm:$0xff]
                  %1619 = vst [vmem:[%s1545 + $0x120] sm:$0xff] %v1618
                  %v1620 = vld [vmem:[%s1544 + $0x128] sm:$0xff]
                  %1621 = vst [vmem:[%s1545 + $0x128] sm:$0xff] %v1620
                  %v1622 = vld [vmem:[%s1544 + $0x130] sm:$0xff]
                  %1623 = vst [vmem:[%s1545 + $0x130] sm:$0xff] %v1622
                  %v1624 = vld [vmem:[%s1544 + $0x138] sm:$0xff]
                  %1625 = vst [vmem:[%s1545 + $0x138] sm:$0xff] %v1624
                  %v1626 = vld [vmem:[%s1544 + $0x140] sm:$0xff]
                  %1627 = vst [vmem:[%s1545 + $0x140] sm:$0xff] %v1626
                  %v1628 = vld [vmem:[%s1544 + $0x148] sm:$0xff]
                  %1629 = vst [vmem:[%s1545 + $0x148] sm:$0xff] %v1628
                  %v1630 = vld [vmem:[%s1544 + $0x150] sm:$0xff]
                  %1631 = vst [vmem:[%s1545 + $0x150] sm:$0xff] %v1630
                  %v1632 = vld [vmem:[%s1544 + $0x158] sm:$0xff]
                  %1633 = vst [vmem:[%s1545 + $0x158] sm:$0xff] %v1632
                  %v1634 = vld [vmem:[%s1544 + $0x160] sm:$0xff]
                  %1635 = vst [vmem:[%s1545 + $0x160] sm:$0xff] %v1634
                  %v1636 = vld [vmem:[%s1544 + $0x168] sm:$0xff]
                  %1637 = vst [vmem:[%s1545 + $0x168] sm:$0xff] %v1636
                  %v1638 = vld [vmem:[%s1544 + $0x170] sm:$0xff]
                  %1639 = vst [vmem:[%s1545 + $0x170] sm:$0xff] %v1638
                  %v1640 = vld [vmem:[%s1544 + $0x178] sm:$0xff]
                  %1641 = vst [vmem:[%s1545 + $0x178] sm:$0xff] %v1640
                  %v1642 = vld [vmem:[%s1544 + $0x600] sm:$0xff]
                  %1643 = vst [vmem:[%s1545 + $0x180] sm:$0xff] %v1642
                  %v1644 = vld [vmem:[%s1544 + $0x608] sm:$0xff]
                  %1645 = vst [vmem:[%s1545 + $0x188] sm:$0xff] %v1644
                  %v1646 = vld [vmem:[%s1544 + $0x610] sm:$0xff]
                  %1647 = vst [vmem:[%s1545 + $0x190] sm:$0xff] %v1646
                  %v1648 = vld [vmem:[%s1544 + $0x618] sm:$0xff]
                  %1649 = vst [vmem:[%s1545 + $0x198] sm:$0xff] %v1648
                  %v1650 = vld [vmem:[%s1544 + $0x620] sm:$0xff]
                  %1651 = vst [vmem:[%s1545 + $0x1a0] sm:$0xff] %v1650
                  %v1652 = vld [vmem:[%s1544 + $0x628] sm:$0xff]
                  %1653 = vst [vmem:[%s1545 + $0x1a8] sm:$0xff] %v1652
                  %v1654 = vld [vmem:[%s1544 + $0x630] sm:$0xff]
                  %1655 = vst [vmem:[%s1545 + $0x1b0] sm:$0xff] %v1654
                  %v1656 = vld [vmem:[%s1544 + $0x638] sm:$0xff]
                  %1657 = vst [vmem:[%s1545 + $0x1b8] sm:$0xff] %v1656
                  %v1658 = vld [vmem:[%s1544 + $0x640] sm:$0xff]
                  %1659 = vst [vmem:[%s1545 + $0x1c0] sm:$0xff] %v1658
                  %v1660 = vld [vmem:[%s1544 + $0x648] sm:$0xff]
                  %1661 = vst [vmem:[%s1545 + $0x1c8] sm:$0xff] %v1660
                  %v1662 = vld [vmem:[%s1544 + $0x650] sm:$0xff]
                  %1663 = vst [vmem:[%s1545 + $0x1d0] sm:$0xff] %v1662
                  %v1664 = vld [vmem:[%s1544 + $0x658] sm:$0xff]
                  %1665 = vst [vmem:[%s1545 + $0x1d8] sm:$0xff] %v1664
                  %v1666 = vld [vmem:[%s1544 + $0x660] sm:$0xff]
                  %1667 = vst [vmem:[%s1545 + $0x1e0] sm:$0xff] %v1666
                  %v1668 = vld [vmem:[%s1544 + $0x668] sm:$0xff]
                  %1669 = vst [vmem:[%s1545 + $0x1e8] sm:$0xff] %v1668
                  %v1670 = vld [vmem:[%s1544 + $0x670] sm:$0xff]
                  %1671 = vst [vmem:[%s1545 + $0x1f0] sm:$0xff] %v1670
                  %v1672 = vld [vmem:[%s1544 + $0x678] sm:$0xff]
                  %1673 = vst [vmem:[%s1545 + $0x1f8] sm:$0xff] %v1672
                  %v1674 = vld [vmem:[%s1544 + $0x680] sm:$0xff]
                  %1675 = vst [vmem:[%s1545 + $0x200] sm:$0xff] %v1674
                  %v1676 = vld [vmem:[%s1544 + $0x688] sm:$0xff]
                  %1677 = vst [vmem:[%s1545 + $0x208] sm:$0xff] %v1676
                  %v1678 = vld [vmem:[%s1544 + $0x690] sm:$0xff]
                  %1679 = vst [vmem:[%s1545 + $0x210] sm:$0xff] %v1678
                  %v1680 = vld [vmem:[%s1544 + $0x698] sm:$0xff]
                  %1681 = vst [vmem:[%s1545 + $0x218] sm:$0xff] %v1680
                  %v1682 = vld [vmem:[%s1544 + $0x6a0] sm:$0xff]
                  %1683 = vst [vmem:[%s1545 + $0x220] sm:$0xff] %v1682
                  %v1684 = vld [vmem:[%s1544 + $0x6a8] sm:$0xff]
                  %1685 = vst [vmem:[%s1545 + $0x228] sm:$0xff] %v1684
                  %v1686 = vld [vmem:[%s1544 + $0x6b0] sm:$0xff]
                  %1687 = vst [vmem:[%s1545 + $0x230] sm:$0xff] %v1686
                  %v1688 = vld [vmem:[%s1544 + $0x6b8] sm:$0xff]
                  %1689 = vst [vmem:[%s1545 + $0x238] sm:$0xff] %v1688
                  %v1690 = vld [vmem:[%s1544 + $0x6c0] sm:$0xff]
                  %1691 = vst [vmem:[%s1545 + $0x240] sm:$0xff] %v1690
                  %v1692 = vld [vmem:[%s1544 + $0x6c8] sm:$0xff]
                  %1693 = vst [vmem:[%s1545 + $0x248] sm:$0xff] %v1692
                  %v1694 = vld [vmem:[%s1544 + $0x6d0] sm:$0xff]
                  %1695 = vst [vmem:[%s1545 + $0x250] sm:$0xff] %v1694
                  %v1696 = vld [vmem:[%s1544 + $0x6d8] sm:$0xff]
                  %1697 = vst [vmem:[%s1545 + $0x258] sm:$0xff] %v1696
                  %v1698 = vld [vmem:[%s1544 + $0x6e0] sm:$0xff]
                  %1699 = vst [vmem:[%s1545 + $0x260] sm:$0xff] %v1698
                  %v1700 = vld [vmem:[%s1544 + $0x6e8] sm:$0xff]
                  %1701 = vst [vmem:[%s1545 + $0x268] sm:$0xff] %v1700
                  %v1702 = vld [vmem:[%s1544 + $0x6f0] sm:$0xff]
                  %1703 = vst [vmem:[%s1545 + $0x270] sm:$0xff] %v1702
                  %v1704 = vld [vmem:[%s1544 + $0x6f8] sm:$0xff]
                  %1705 = vst [vmem:[%s1545 + $0x278] sm:$0xff] %v1704
                  %v1706 = vld [vmem:[%s1544 + $0x700] sm:$0xff]
                  %1707 = vst [vmem:[%s1545 + $0x280] sm:$0xff] %v1706
                  %v1708 = vld [vmem:[%s1544 + $0x708] sm:$0xff]
                  %1709 = vst [vmem:[%s1545 + $0x288] sm:$0xff] %v1708
                  %v1710 = vld [vmem:[%s1544 + $0x710] sm:$0xff]
                  %1711 = vst [vmem:[%s1545 + $0x290] sm:$0xff] %v1710
                  %v1712 = vld [vmem:[%s1544 + $0x718] sm:$0xff]
                  %1713 = vst [vmem:[%s1545 + $0x298] sm:$0xff] %v1712
                  %v1714 = vld [vmem:[%s1544 + $0x720] sm:$0xff]
                  %1715 = vst [vmem:[%s1545 + $0x2a0] sm:$0xff] %v1714
                  %v1716 = vld [vmem:[%s1544 + $0x728] sm:$0xff]
                  %1717 = vst [vmem:[%s1545 + $0x2a8] sm:$0xff] %v1716
                  %v1718 = vld [vmem:[%s1544 + $0x730] sm:$0xff]
                  %1719 = vst [vmem:[%s1545 + $0x2b0] sm:$0xff] %v1718
                  %v1720 = vld [vmem:[%s1544 + $0x738] sm:$0xff]
                  %1721 = vst [vmem:[%s1545 + $0x2b8] sm:$0xff] %v1720
                  %v1722 = vld [vmem:[%s1544 + $0x740] sm:$0xff]
                  %1723 = vst [vmem:[%s1545 + $0x2c0] sm:$0xff] %v1722
                  %v1724 = vld [vmem:[%s1544 + $0x748] sm:$0xff]
                  %1725 = vst [vmem:[%s1545 + $0x2c8] sm:$0xff] %v1724
                  %v1726 = vld [vmem:[%s1544 + $0x750] sm:$0xff]
                  %1727 = vst [vmem:[%s1545 + $0x2d0] sm:$0xff] %v1726
                  %v1728 = vld [vmem:[%s1544 + $0x758] sm:$0xff]
                  %1729 = vst [vmem:[%s1545 + $0x2d8] sm:$0xff] %v1728
                  %v1730 = vld [vmem:[%s1544 + $0x760] sm:$0xff]
                  %1731 = vst [vmem:[%s1545 + $0x2e0] sm:$0xff] %v1730
                  %v1732 = vld [vmem:[%s1544 + $0x768] sm:$0xff]
                  %1733 = vst [vmem:[%s1545 + $0x2e8] sm:$0xff] %v1732
                  %v1734 = vld [vmem:[%s1544 + $0x770] sm:$0xff]
                  %1735 = vst [vmem:[%s1545 + $0x2f0] sm:$0xff] %v1734
                  %v1736 = vld [vmem:[%s1544 + $0x778] sm:$0xff]
                  %1737 = vst [vmem:[%s1545 + $0x2f8] sm:$0xff] %v1736
                  %v1738 = vld [vmem:[%s1544 + $0xc00] sm:$0xff]
                  %1739 = vst [vmem:[%s1545 + $0x300] sm:$0xff] %v1738
                  %v1740 = vld [vmem:[%s1544 + $0xc08] sm:$0xff]
                  %1741 = vst [vmem:[%s1545 + $0x308] sm:$0xff] %v1740
                  %v1742 = vld [vmem:[%s1544 + $0xc10] sm:$0xff]
                  %1743 = vst [vmem:[%s1545 + $0x310] sm:$0xff] %v1742
                  %v1744 = vld [vmem:[%s1544 + $0xc18] sm:$0xff]
                  %1745 = vst [vmem:[%s1545 + $0x318] sm:$0xff] %v1744
                  %v1746 = vld [vmem:[%s1544 + $0xc20] sm:$0xff]
                  %1747 = vst [vmem:[%s1545 + $0x320] sm:$0xff] %v1746
                  %v1748 = vld [vmem:[%s1544 + $0xc28] sm:$0xff]
                  %1749 = vst [vmem:[%s1545 + $0x328] sm:$0xff] %v1748
                  %v1750 = vld [vmem:[%s1544 + $0xc30] sm:$0xff]
                  %1751 = vst [vmem:[%s1545 + $0x330] sm:$0xff] %v1750
                  %v1752 = vld [vmem:[%s1544 + $0xc38] sm:$0xff]
                  %1753 = vst [vmem:[%s1545 + $0x338] sm:$0xff] %v1752
                  %v1754 = vld [vmem:[%s1544 + $0xc40] sm:$0xff]
                  %1755 = vst [vmem:[%s1545 + $0x340] sm:$0xff] %v1754
                  %v1756 = vld [vmem:[%s1544 + $0xc48] sm:$0xff]
                  %1757 = vst [vmem:[%s1545 + $0x348] sm:$0xff] %v1756
                  %v1758 = vld [vmem:[%s1544 + $0xc50] sm:$0xff]
                  %1759 = vst [vmem:[%s1545 + $0x350] sm:$0xff] %v1758
                  %v1760 = vld [vmem:[%s1544 + $0xc58] sm:$0xff]
                  %1761 = vst [vmem:[%s1545 + $0x358] sm:$0xff] %v1760
                  %v1762 = vld [vmem:[%s1544 + $0xc60] sm:$0xff]
                  %1763 = vst [vmem:[%s1545 + $0x360] sm:$0xff] %v1762
                  %v1764 = vld [vmem:[%s1544 + $0xc68] sm:$0xff]
                  %1765 = vst [vmem:[%s1545 + $0x368] sm:$0xff] %v1764
                  %v1766 = vld [vmem:[%s1544 + $0xc70] sm:$0xff]
                  %1767 = vst [vmem:[%s1545 + $0x370] sm:$0xff] %v1766
                  %v1768 = vld [vmem:[%s1544 + $0xc78] sm:$0xff]
                  %1769 = vst [vmem:[%s1545 + $0x378] sm:$0xff] %v1768
                  %v1770 = vld [vmem:[%s1544 + $0xc80] sm:$0xff]
                  %1771 = vst [vmem:[%s1545 + $0x380] sm:$0xff] %v1770
                  %v1772 = vld [vmem:[%s1544 + $0xc88] sm:$0xff]
                  %1773 = vst [vmem:[%s1545 + $0x388] sm:$0xff] %v1772
                  %v1774 = vld [vmem:[%s1544 + $0xc90] sm:$0xff]
                  %1775 = vst [vmem:[%s1545 + $0x390] sm:$0xff] %v1774
                  %v1776 = vld [vmem:[%s1544 + $0xc98] sm:$0xff]
                  %1777 = vst [vmem:[%s1545 + $0x398] sm:$0xff] %v1776
                  %v1778 = vld [vmem:[%s1544 + $0xca0] sm:$0xff]
                  %1779 = vst [vmem:[%s1545 + $0x3a0] sm:$0xff] %v1778
                  %v1780 = vld [vmem:[%s1544 + $0xca8] sm:$0xff]
                  %1781 = vst [vmem:[%s1545 + $0x3a8] sm:$0xff] %v1780
                  %v1782 = vld [vmem:[%s1544 + $0xcb0] sm:$0xff]
                  %1783 = vst [vmem:[%s1545 + $0x3b0] sm:$0xff] %v1782
                  %v1784 = vld [vmem:[%s1544 + $0xcb8] sm:$0xff]
                  %1785 = vst [vmem:[%s1545 + $0x3b8] sm:$0xff] %v1784
                  %v1786 = vld [vmem:[%s1544 + $0xcc0] sm:$0xff]
                  %1787 = vst [vmem:[%s1545 + $0x3c0] sm:$0xff] %v1786
                  %v1788 = vld [vmem:[%s1544 + $0xcc8] sm:$0xff]
                  %1789 = vst [vmem:[%s1545 + $0x3c8] sm:$0xff] %v1788
                  %v1790 = vld [vmem:[%s1544 + $0xcd0] sm:$0xff]
                  %1791 = vst [vmem:[%s1545 + $0x3d0] sm:$0xff] %v1790
                  %v1792 = vld [vmem:[%s1544 + $0xcd8] sm:$0xff]
                  %1793 = vst [vmem:[%s1545 + $0x3d8] sm:$0xff] %v1792
                  %v1794 = vld [vmem:[%s1544 + $0xce0] sm:$0xff]
                  %1795 = vst [vmem:[%s1545 + $0x3e0] sm:$0xff] %v1794
                  %v1796 = vld [vmem:[%s1544 + $0xce8] sm:$0xff]
                  %1797 = vst [vmem:[%s1545 + $0x3e8] sm:$0xff] %v1796
                  %v1798 = vld [vmem:[%s1544 + $0xcf0] sm:$0xff]
                  %1799 = vst [vmem:[%s1545 + $0x3f0] sm:$0xff] %v1798
                  %v1800 = vld [vmem:[%s1544 + $0xcf8] sm:$0xff]
                  %1801 = vst [vmem:[%s1545 + $0x3f8] sm:$0xff] %v1800
                  %v1802 = vld [vmem:[%s1544 + $0xd00] sm:$0xff]
                  %1803 = vst [vmem:[%s1545 + $0x400] sm:$0xff] %v1802
                  %v1804 = vld [vmem:[%s1544 + $0xd08] sm:$0xff]
                  %1805 = vst [vmem:[%s1545 + $0x408] sm:$0xff] %v1804
                  %v1806 = vld [vmem:[%s1544 + $0xd10] sm:$0xff]
                  %1807 = vst [vmem:[%s1545 + $0x410] sm:$0xff] %v1806
                  %v1808 = vld [vmem:[%s1544 + $0xd18] sm:$0xff]
                  %1809 = vst [vmem:[%s1545 + $0x418] sm:$0xff] %v1808
                  %v1810 = vld [vmem:[%s1544 + $0xd20] sm:$0xff]
                  %1811 = vst [vmem:[%s1545 + $0x420] sm:$0xff] %v1810
                  %v1812 = vld [vmem:[%s1544 + $0xd28] sm:$0xff]
                  %1813 = vst [vmem:[%s1545 + $0x428] sm:$0xff] %v1812
                  %v1814 = vld [vmem:[%s1544 + $0xd30] sm:$0xff]
                  %1815 = vst [vmem:[%s1545 + $0x430] sm:$0xff] %v1814
                  %v1816 = vld [vmem:[%s1544 + $0xd38] sm:$0xff]
                  %1817 = vst [vmem:[%s1545 + $0x438] sm:$0xff] %v1816
                  %v1818 = vld [vmem:[%s1544 + $0xd40] sm:$0xff]
                  %1819 = vst [vmem:[%s1545 + $0x440] sm:$0xff] %v1818
                  %v1820 = vld [vmem:[%s1544 + $0xd48] sm:$0xff]
                  %1821 = vst [vmem:[%s1545 + $0x448] sm:$0xff] %v1820
                  %v1822 = vld [vmem:[%s1544 + $0xd50] sm:$0xff]
                  %1823 = vst [vmem:[%s1545 + $0x450] sm:$0xff] %v1822
                  %v1824 = vld [vmem:[%s1544 + $0xd58] sm:$0xff]
                  %1825 = vst [vmem:[%s1545 + $0x458] sm:$0xff] %v1824
                  %v1826 = vld [vmem:[%s1544 + $0xd60] sm:$0xff]
                  %1827 = vst [vmem:[%s1545 + $0x460] sm:$0xff] %v1826
                  %v1828 = vld [vmem:[%s1544 + $0xd68] sm:$0xff]
                  %1829 = vst [vmem:[%s1545 + $0x468] sm:$0xff] %v1828
                  %v1830 = vld [vmem:[%s1544 + $0xd70] sm:$0xff]
                  %1831 = vst [vmem:[%s1545 + $0x470] sm:$0xff] %v1830
                  %v1832 = vld [vmem:[%s1544 + $0xd78] sm:$0xff]
                  %1833 = vst [vmem:[%s1545 + $0x478] sm:$0xff] %v1832
                  %v1834 = vld [vmem:[%s1544 + $0x1200] sm:$0xff]
                  %1835 = vst [vmem:[%s1545 + $0x480] sm:$0xff] %v1834
                  %v1836 = vld [vmem:[%s1544 + $0x1208] sm:$0xff]
                  %1837 = vst [vmem:[%s1545 + $0x488] sm:$0xff] %v1836
                  %v1838 = vld [vmem:[%s1544 + $0x1210] sm:$0xff]
                  %1839 = vst [vmem:[%s1545 + $0x490] sm:$0xff] %v1838
                  %v1840 = vld [vmem:[%s1544 + $0x1218] sm:$0xff]
                  %1841 = vst [vmem:[%s1545 + $0x498] sm:$0xff] %v1840
                  %v1842 = vld [vmem:[%s1544 + $0x1220] sm:$0xff]
                  %1843 = vst [vmem:[%s1545 + $0x4a0] sm:$0xff] %v1842
                  %v1844 = vld [vmem:[%s1544 + $0x1228] sm:$0xff]
                  %1845 = vst [vmem:[%s1545 + $0x4a8] sm:$0xff] %v1844
                  %v1846 = vld [vmem:[%s1544 + $0x1230] sm:$0xff]
                  %1847 = vst [vmem:[%s1545 + $0x4b0] sm:$0xff] %v1846
                  %v1848 = vld [vmem:[%s1544 + $0x1238] sm:$0xff]
                  %1849 = vst [vmem:[%s1545 + $0x4b8] sm:$0xff] %v1848
                  %v1850 = vld [vmem:[%s1544 + $0x1240] sm:$0xff]
                  %1851 = vst [vmem:[%s1545 + $0x4c0] sm:$0xff] %v1850
                  %v1852 = vld [vmem:[%s1544 + $0x1248] sm:$0xff]
                  %1853 = vst [vmem:[%s1545 + $0x4c8] sm:$0xff] %v1852
                  %v1854 = vld [vmem:[%s1544 + $0x1250] sm:$0xff]
                  %1855 = vst [vmem:[%s1545 + $0x4d0] sm:$0xff] %v1854
                  %v1856 = vld [vmem:[%s1544 + $0x1258] sm:$0xff]
                  %1857 = vst [vmem:[%s1545 + $0x4d8] sm:$0xff] %v1856
                  %v1858 = vld [vmem:[%s1544 + $0x1260] sm:$0xff]
                  %1859 = vst [vmem:[%s1545 + $0x4e0] sm:$0xff] %v1858
                  %v1860 = vld [vmem:[%s1544 + $0x1268] sm:$0xff]
                  %1861 = vst [vmem:[%s1545 + $0x4e8] sm:$0xff] %v1860
                  %v1862 = vld [vmem:[%s1544 + $0x1270] sm:$0xff]
                  %1863 = vst [vmem:[%s1545 + $0x4f0] sm:$0xff] %v1862
                  %v1864 = vld [vmem:[%s1544 + $0x1278] sm:$0xff]
                  %1865 = vst [vmem:[%s1545 + $0x4f8] sm:$0xff] %v1864
                  %v1866 = vld [vmem:[%s1544 + $0x1280] sm:$0xff]
                  %1867 = vst [vmem:[%s1545 + $0x500] sm:$0xff] %v1866
                  %v1868 = vld [vmem:[%s1544 + $0x1288] sm:$0xff]
                  %1869 = vst [vmem:[%s1545 + $0x508] sm:$0xff] %v1868
                  %v1870 = vld [vmem:[%s1544 + $0x1290] sm:$0xff]
                  %1871 = vst [vmem:[%s1545 + $0x510] sm:$0xff] %v1870
                  %v1872 = vld [vmem:[%s1544 + $0x1298] sm:$0xff]
                  %1873 = vst [vmem:[%s1545 + $0x518] sm:$0xff] %v1872
                  %v1874 = vld [vmem:[%s1544 + $0x12a0] sm:$0xff]
                  %1875 = vst [vmem:[%s1545 + $0x520] sm:$0xff] %v1874
                  %v1876 = vld [vmem:[%s1544 + $0x12a8] sm:$0xff]
                  %1877 = vst [vmem:[%s1545 + $0x528] sm:$0xff] %v1876
                  %v1878 = vld [vmem:[%s1544 + $0x12b0] sm:$0xff]
                  %1879 = vst [vmem:[%s1545 + $0x530] sm:$0xff] %v1878
                  %v1880 = vld [vmem:[%s1544 + $0x12b8] sm:$0xff]
                  %1881 = vst [vmem:[%s1545 + $0x538] sm:$0xff] %v1880
                  %v1882 = vld [vmem:[%s1544 + $0x12c0] sm:$0xff]
                  %1883 = vst [vmem:[%s1545 + $0x540] sm:$0xff] %v1882
                  %v1884 = vld [vmem:[%s1544 + $0x12c8] sm:$0xff]
                  %1885 = vst [vmem:[%s1545 + $0x548] sm:$0xff] %v1884
                  %v1886 = vld [vmem:[%s1544 + $0x12d0] sm:$0xff]
                  %1887 = vst [vmem:[%s1545 + $0x550] sm:$0xff] %v1886
                  %v1888 = vld [vmem:[%s1544 + $0x12d8] sm:$0xff]
                  %1889 = vst [vmem:[%s1545 + $0x558] sm:$0xff] %v1888
                  %v1890 = vld [vmem:[%s1544 + $0x12e0] sm:$0xff]
                  %1891 = vst [vmem:[%s1545 + $0x560] sm:$0xff] %v1890
                  %v1892 = vld [vmem:[%s1544 + $0x12e8] sm:$0xff]
                  %1893 = vst [vmem:[%s1545 + $0x568] sm:$0xff] %v1892
                  %v1894 = vld [vmem:[%s1544 + $0x12f0] sm:$0xff]
                  %1895 = vst [vmem:[%s1545 + $0x570] sm:$0xff] %v1894
                  %v1896 = vld [vmem:[%s1544 + $0x12f8] sm:$0xff]
                  %1897 = vst [vmem:[%s1545 + $0x578] sm:$0xff] %v1896
                  %v1898 = vld [vmem:[%s1544 + $0x1300] sm:$0xff]
                  %1899 = vst [vmem:[%s1545 + $0x580] sm:$0xff] %v1898
                  %v1900 = vld [vmem:[%s1544 + $0x1308] sm:$0xff]
                  %1901 = vst [vmem:[%s1545 + $0x588] sm:$0xff] %v1900
                  %v1902 = vld [vmem:[%s1544 + $0x1310] sm:$0xff]
                  %1903 = vst [vmem:[%s1545 + $0x590] sm:$0xff] %v1902
                  %v1904 = vld [vmem:[%s1544 + $0x1318] sm:$0xff]
                  %1905 = vst [vmem:[%s1545 + $0x598] sm:$0xff] %v1904
                  %v1906 = vld [vmem:[%s1544 + $0x1320] sm:$0xff]
                  %1907 = vst [vmem:[%s1545 + $0x5a0] sm:$0xff] %v1906
                  %v1908 = vld [vmem:[%s1544 + $0x1328] sm:$0xff]
                  %1909 = vst [vmem:[%s1545 + $0x5a8] sm:$0xff] %v1908
                  %v1910 = vld [vmem:[%s1544 + $0x1330] sm:$0xff]
                  %1911 = vst [vmem:[%s1545 + $0x5b0] sm:$0xff] %v1910
                  %v1912 = vld [vmem:[%s1544 + $0x1338] sm:$0xff]
                  %1913 = vst [vmem:[%s1545 + $0x5b8] sm:$0xff] %v1912
                  %v1914 = vld [vmem:[%s1544 + $0x1340] sm:$0xff]
                  %1915 = vst [vmem:[%s1545 + $0x5c0] sm:$0xff] %v1914
                  %v1916 = vld [vmem:[%s1544 + $0x1348] sm:$0xff]
                  %1917 = vst [vmem:[%s1545 + $0x5c8] sm:$0xff] %v1916
                  %v1918 = vld [vmem:[%s1544 + $0x1350] sm:$0xff]
                  %1919 = vst [vmem:[%s1545 + $0x5d0] sm:$0xff] %v1918
                  %v1920 = vld [vmem:[%s1544 + $0x1358] sm:$0xff]
                  %1921 = vst [vmem:[%s1545 + $0x5d8] sm:$0xff] %v1920
                  %v1922 = vld [vmem:[%s1544 + $0x1360] sm:$0xff]
                  %1923 = vst [vmem:[%s1545 + $0x5e0] sm:$0xff] %v1922
                  %v1924 = vld [vmem:[%s1544 + $0x1368] sm:$0xff]
                  %1925 = vst [vmem:[%s1545 + $0x5e8] sm:$0xff] %v1924
                  %v1926 = vld [vmem:[%s1544 + $0x1370] sm:$0xff]
                  %1927 = vst [vmem:[%s1545 + $0x5f0] sm:$0xff] %v1926
                  %v1928 = vld [vmem:[%s1544 + $0x1378] sm:$0xff]
                  %1929 = vst [vmem:[%s1545 + $0x5f8] sm:$0xff] %v1928
                  %v1930 = vld [vmem:[%s1544 + $0x1800] sm:$0xff]
                  %1931 = vst [vmem:[%s1545 + $0x600] sm:$0xff] %v1930
                  %v1932 = vld [vmem:[%s1544 + $0x1808] sm:$0xff]
                  %1933 = vst [vmem:[%s1545 + $0x608] sm:$0xff] %v1932
                  %v1934 = vld [vmem:[%s1544 + $0x1810] sm:$0xff]
                  %1935 = vst [vmem:[%s1545 + $0x610] sm:$0xff] %v1934
                  %v1936 = vld [vmem:[%s1544 + $0x1818] sm:$0xff]
                  %1937 = vst [vmem:[%s1545 + $0x618] sm:$0xff] %v1936
                  %v1938 = vld [vmem:[%s1544 + $0x1820] sm:$0xff]
                  %1939 = vst [vmem:[%s1545 + $0x620] sm:$0xff] %v1938
                  %v1940 = vld [vmem:[%s1544 + $0x1828] sm:$0xff]
                  %1941 = vst [vmem:[%s1545 + $0x628] sm:$0xff] %v1940
                  %v1942 = vld [vmem:[%s1544 + $0x1830] sm:$0xff]
                  %1943 = vst [vmem:[%s1545 + $0x630] sm:$0xff] %v1942
                  %v1944 = vld [vmem:[%s1544 + $0x1838] sm:$0xff]
                  %1945 = vst [vmem:[%s1545 + $0x638] sm:$0xff] %v1944
                  %v1946 = vld [vmem:[%s1544 + $0x1840] sm:$0xff]
                  %1947 = vst [vmem:[%s1545 + $0x640] sm:$0xff] %v1946
                  %v1948 = vld [vmem:[%s1544 + $0x1848] sm:$0xff]
                  %1949 = vst [vmem:[%s1545 + $0x648] sm:$0xff] %v1948
                  %v1950 = vld [vmem:[%s1544 + $0x1850] sm:$0xff]
                  %1951 = vst [vmem:[%s1545 + $0x650] sm:$0xff] %v1950
                  %v1952 = vld [vmem:[%s1544 + $0x1858] sm:$0xff]
                  %1953 = vst [vmem:[%s1545 + $0x658] sm:$0xff] %v1952
                  %v1954 = vld [vmem:[%s1544 + $0x1860] sm:$0xff]
                  %1955 = vst [vmem:[%s1545 + $0x660] sm:$0xff] %v1954
                  %v1956 = vld [vmem:[%s1544 + $0x1868] sm:$0xff]
                  %1957 = vst [vmem:[%s1545 + $0x668] sm:$0xff] %v1956
                  %v1958 = vld [vmem:[%s1544 + $0x1870] sm:$0xff]
                  %1959 = vst [vmem:[%s1545 + $0x670] sm:$0xff] %v1958
                  %v1960 = vld [vmem:[%s1544 + $0x1878] sm:$0xff]
                  %1961 = vst [vmem:[%s1545 + $0x678] sm:$0xff] %v1960
                  %v1962 = vld [vmem:[%s1544 + $0x1880] sm:$0xff]
                  %1963 = vst [vmem:[%s1545 + $0x680] sm:$0xff] %v1962
                  %v1964 = vld [vmem:[%s1544 + $0x1888] sm:$0xff]
                  %1965 = vst [vmem:[%s1545 + $0x688] sm:$0xff] %v1964
                  %v1966 = vld [vmem:[%s1544 + $0x1890] sm:$0xff]
                  %1967 = vst [vmem:[%s1545 + $0x690] sm:$0xff] %v1966
                  %v1968 = vld [vmem:[%s1544 + $0x1898] sm:$0xff]
                  %1969 = vst [vmem:[%s1545 + $0x698] sm:$0xff] %v1968
                  %v1970 = vld [vmem:[%s1544 + $0x18a0] sm:$0xff]
                  %1971 = vst [vmem:[%s1545 + $0x6a0] sm:$0xff] %v1970
                  %v1972 = vld [vmem:[%s1544 + $0x18a8] sm:$0xff]
                  %1973 = vst [vmem:[%s1545 + $0x6a8] sm:$0xff] %v1972
                  %v1974 = vld [vmem:[%s1544 + $0x18b0] sm:$0xff]
                  %1975 = vst [vmem:[%s1545 + $0x6b0] sm:$0xff] %v1974
                  %v1976 = vld [vmem:[%s1544 + $0x18b8] sm:$0xff]
                  %1977 = vst [vmem:[%s1545 + $0x6b8] sm:$0xff] %v1976
                  %v1978 = vld [vmem:[%s1544 + $0x18c0] sm:$0xff]
                  %1979 = vst [vmem:[%s1545 + $0x6c0] sm:$0xff] %v1978
                  %v1980 = vld [vmem:[%s1544 + $0x18c8] sm:$0xff]
                  %1981 = vst [vmem:[%s1545 + $0x6c8] sm:$0xff] %v1980
                  %v1982 = vld [vmem:[%s1544 + $0x18d0] sm:$0xff]
                  %1983 = vst [vmem:[%s1545 + $0x6d0] sm:$0xff] %v1982
                  %v1984 = vld [vmem:[%s1544 + $0x18d8] sm:$0xff]
                  %1985 = vst [vmem:[%s1545 + $0x6d8] sm:$0xff] %v1984
                  %v1986 = vld [vmem:[%s1544 + $0x18e0] sm:$0xff]
                  %1987 = vst [vmem:[%s1545 + $0x6e0] sm:$0xff] %v1986
                  %v1988 = vld [vmem:[%s1544 + $0x18e8] sm:$0xff]
                  %1989 = vst [vmem:[%s1545 + $0x6e8] sm:$0xff] %v1988
                  %v1990 = vld [vmem:[%s1544 + $0x18f0] sm:$0xff]
                  %1991 = vst [vmem:[%s1545 + $0x6f0] sm:$0xff] %v1990
                  %v1992 = vld [vmem:[%s1544 + $0x18f8] sm:$0xff]
                  %1993 = vst [vmem:[%s1545 + $0x6f8] sm:$0xff] %v1992
                  %v1994 = vld [vmem:[%s1544 + $0x1900] sm:$0xff]
                  %1995 = vst [vmem:[%s1545 + $0x700] sm:$0xff] %v1994
                  %v1996 = vld [vmem:[%s1544 + $0x1908] sm:$0xff]
                  %1997 = vst [vmem:[%s1545 + $0x708] sm:$0xff] %v1996
                  %v1998 = vld [vmem:[%s1544 + $0x1910] sm:$0xff]
                  %1999 = vst [vmem:[%s1545 + $0x710] sm:$0xff] %v1998
                  %v2000 = vld [vmem:[%s1544 + $0x1918] sm:$0xff]
                  %2001 = vst [vmem:[%s1545 + $0x718] sm:$0xff] %v2000
                  %v2002 = vld [vmem:[%s1544 + $0x1920] sm:$0xff]
                  %2003 = vst [vmem:[%s1545 + $0x720] sm:$0xff] %v2002
                  %v2004 = vld [vmem:[%s1544 + $0x1928] sm:$0xff]
                  %2005 = vst [vmem:[%s1545 + $0x728] sm:$0xff] %v2004
                  %v2006 = vld [vmem:[%s1544 + $0x1930] sm:$0xff]
                  %2007 = vst [vmem:[%s1545 + $0x730] sm:$0xff] %v2006
                  %v2008 = vld [vmem:[%s1544 + $0x1938] sm:$0xff]
                  %2009 = vst [vmem:[%s1545 + $0x738] sm:$0xff] %v2008
                  %v2010 = vld [vmem:[%s1544 + $0x1940] sm:$0xff]
                  %2011 = vst [vmem:[%s1545 + $0x740] sm:$0xff] %v2010
                  %v2012 = vld [vmem:[%s1544 + $0x1948] sm:$0xff]
                  %2013 = vst [vmem:[%s1545 + $0x748] sm:$0xff] %v2012
                  %v2014 = vld [vmem:[%s1544 + $0x1950] sm:$0xff]
                  %2015 = vst [vmem:[%s1545 + $0x750] sm:$0xff] %v2014
                  %v2016 = vld [vmem:[%s1544 + $0x1958] sm:$0xff]
                  %2017 = vst [vmem:[%s1545 + $0x758] sm:$0xff] %v2016
                  %v2018 = vld [vmem:[%s1544 + $0x1960] sm:$0xff]
                  %2019 = vst [vmem:[%s1545 + $0x760] sm:$0xff] %v2018
                  %v2020 = vld [vmem:[%s1544 + $0x1968] sm:$0xff]
                  %2021 = vst [vmem:[%s1545 + $0x768] sm:$0xff] %v2020
                  %v2022 = vld [vmem:[%s1544 + $0x1970] sm:$0xff]
                  %2023 = vst [vmem:[%s1545 + $0x770] sm:$0xff] %v2022
                  %v2024 = vld [vmem:[%s1544 + $0x1978] sm:$0xff]
                  %2025 = vst [vmem:[%s1545 + $0x778] sm:$0xff] %v2024
                  %v2026 = vld [vmem:[%s1544 + $0x1e00] sm:$0xff]
                  %2027 = vst [vmem:[%s1545 + $0x780] sm:$0xff] %v2026
                  %v2028 = vld [vmem:[%s1544 + $0x1e08] sm:$0xff]
                  %2029 = vst [vmem:[%s1545 + $0x788] sm:$0xff] %v2028
                  %v2030 = vld [vmem:[%s1544 + $0x1e10] sm:$0xff]
                  %2031 = vst [vmem:[%s1545 + $0x790] sm:$0xff] %v2030
                  %v2032 = vld [vmem:[%s1544 + $0x1e18] sm:$0xff]
                  %2033 = vst [vmem:[%s1545 + $0x798] sm:$0xff] %v2032
                  %v2034 = vld [vmem:[%s1544 + $0x1e20] sm:$0xff]
                  %2035 = vst [vmem:[%s1545 + $0x7a0] sm:$0xff] %v2034
                  %v2036 = vld [vmem:[%s1544 + $0x1e28] sm:$0xff]
                  %2037 = vst [vmem:[%s1545 + $0x7a8] sm:$0xff] %v2036
                  %v2038 = vld [vmem:[%s1544 + $0x1e30] sm:$0xff]
                  %2039 = vst [vmem:[%s1545 + $0x7b0] sm:$0xff] %v2038
                  %v2040 = vld [vmem:[%s1544 + $0x1e38] sm:$0xff]
                  %2041 = vst [vmem:[%s1545 + $0x7b8] sm:$0xff] %v2040
                  %v2042 = vld [vmem:[%s1544 + $0x1e40] sm:$0xff]
                  %2043 = vst [vmem:[%s1545 + $0x7c0] sm:$0xff] %v2042
                  %v2044 = vld [vmem:[%s1544 + $0x1e48] sm:$0xff]
                  %2045 = vst [vmem:[%s1545 + $0x7c8] sm:$0xff] %v2044
                  %v2046 = vld [vmem:[%s1544 + $0x1e50] sm:$0xff]
                  %2047 = vst [vmem:[%s1545 + $0x7d0] sm:$0xff] %v2046
                  %v2048 = vld [vmem:[%s1544 + $0x1e58] sm:$0xff]
                  %2049 = vst [vmem:[%s1545 + $0x7d8] sm:$0xff] %v2048
                  %v2050 = vld [vmem:[%s1544 + $0x1e60] sm:$0xff]
                  %2051 = vst [vmem:[%s1545 + $0x7e0] sm:$0xff] %v2050
                  %v2052 = vld [vmem:[%s1544 + $0x1e68] sm:$0xff]
                  %2053 = vst [vmem:[%s1545 + $0x7e8] sm:$0xff] %v2052
                  %v2054 = vld [vmem:[%s1544 + $0x1e70] sm:$0xff]
                  %2055 = vst [vmem:[%s1545 + $0x7f0] sm:$0xff] %v2054
                  %v2056 = vld [vmem:[%s1544 + $0x1e78] sm:$0xff]
                  %2057 = vst [vmem:[%s1545 + $0x7f8] sm:$0xff] %v2056
                  %v2058 = vld [vmem:[%s1544 + $0x1e80] sm:$0xff]
                  %2059 = vst [vmem:[%s1545 + $0x800] sm:$0xff] %v2058
                  %v2060 = vld [vmem:[%s1544 + $0x1e88] sm:$0xff]
                  %2061 = vst [vmem:[%s1545 + $0x808] sm:$0xff] %v2060
                  %v2062 = vld [vmem:[%s1544 + $0x1e90] sm:$0xff]
                  %2063 = vst [vmem:[%s1545 + $0x810] sm:$0xff] %v2062
                  %v2064 = vld [vmem:[%s1544 + $0x1e98] sm:$0xff]
                  %2065 = vst [vmem:[%s1545 + $0x818] sm:$0xff] %v2064
                  %v2066 = vld [vmem:[%s1544 + $0x1ea0] sm:$0xff]
                  %2067 = vst [vmem:[%s1545 + $0x820] sm:$0xff] %v2066
                  %v2068 = vld [vmem:[%s1544 + $0x1ea8] sm:$0xff]
                  %2069 = vst [vmem:[%s1545 + $0x828] sm:$0xff] %v2068
                  %v2070 = vld [vmem:[%s1544 + $0x1eb0] sm:$0xff]
                  %2071 = vst [vmem:[%s1545 + $0x830] sm:$0xff] %v2070
                  %v2072 = vld [vmem:[%s1544 + $0x1eb8] sm:$0xff]
                  %2073 = vst [vmem:[%s1545 + $0x838] sm:$0xff] %v2072
                  %v2074 = vld [vmem:[%s1544 + $0x1ec0] sm:$0xff]
                  %2075 = vst [vmem:[%s1545 + $0x840] sm:$0xff] %v2074
                  %v2076 = vld [vmem:[%s1544 + $0x1ec8] sm:$0xff]
                  %2077 = vst [vmem:[%s1545 + $0x848] sm:$0xff] %v2076
                  %v2078 = vld [vmem:[%s1544 + $0x1ed0] sm:$0xff]
                  %2079 = vst [vmem:[%s1545 + $0x850] sm:$0xff] %v2078
                  %v2080 = vld [vmem:[%s1544 + $0x1ed8] sm:$0xff]
                  %2081 = vst [vmem:[%s1545 + $0x858] sm:$0xff] %v2080
                  %v2082 = vld [vmem:[%s1544 + $0x1ee0] sm:$0xff]
                  %2083 = vst [vmem:[%s1545 + $0x860] sm:$0xff] %v2082
                  %v2084 = vld [vmem:[%s1544 + $0x1ee8] sm:$0xff]
                  %2085 = vst [vmem:[%s1545 + $0x868] sm:$0xff] %v2084
                  %v2086 = vld [vmem:[%s1544 + $0x1ef0] sm:$0xff]
                  %2087 = vst [vmem:[%s1545 + $0x870] sm:$0xff] %v2086
                  %v2088 = vld [vmem:[%s1544 + $0x1ef8] sm:$0xff]
                  %2089 = vst [vmem:[%s1545 + $0x878] sm:$0xff] %v2088
                  %v2090 = vld [vmem:[%s1544 + $0x1f00] sm:$0xff]
                  %2091 = vst [vmem:[%s1545 + $0x880] sm:$0xff] %v2090
                  %v2092 = vld [vmem:[%s1544 + $0x1f08] sm:$0xff]
                  %2093 = vst [vmem:[%s1545 + $0x888] sm:$0xff] %v2092
                  %v2094 = vld [vmem:[%s1544 + $0x1f10] sm:$0xff]
                  %2095 = vst [vmem:[%s1545 + $0x890] sm:$0xff] %v2094
                  %v2096 = vld [vmem:[%s1544 + $0x1f18] sm:$0xff]
                  %2097 = vst [vmem:[%s1545 + $0x898] sm:$0xff] %v2096
                  %v2098 = vld [vmem:[%s1544 + $0x1f20] sm:$0xff]
                  %2099 = vst [vmem:[%s1545 + $0x8a0] sm:$0xff] %v2098
                  %v2100 = vld [vmem:[%s1544 + $0x1f28] sm:$0xff]
                  %2101 = vst [vmem:[%s1545 + $0x8a8] sm:$0xff] %v2100
                  %v2102 = vld [vmem:[%s1544 + $0x1f30] sm:$0xff]
                  %2103 = vst [vmem:[%s1545 + $0x8b0] sm:$0xff] %v2102
                  %v2104 = vld [vmem:[%s1544 + $0x1f38] sm:$0xff]
                  %2105 = vst [vmem:[%s1545 + $0x8b8] sm:$0xff] %v2104
                  %v2106 = vld [vmem:[%s1544 + $0x1f40] sm:$0xff]
                  %2107 = vst [vmem:[%s1545 + $0x8c0] sm:$0xff] %v2106
                  %v2108 = vld [vmem:[%s1544 + $0x1f48] sm:$0xff]
                  %2109 = vst [vmem:[%s1545 + $0x8c8] sm:$0xff] %v2108
                  %v2110 = vld [vmem:[%s1544 + $0x1f50] sm:$0xff]
                  %2111 = vst [vmem:[%s1545 + $0x8d0] sm:$0xff] %v2110
                  %v2112 = vld [vmem:[%s1544 + $0x1f58] sm:$0xff]
                  %2113 = vst [vmem:[%s1545 + $0x8d8] sm:$0xff] %v2112
                  %v2114 = vld [vmem:[%s1544 + $0x1f60] sm:$0xff]
                  %2115 = vst [vmem:[%s1545 + $0x8e0] sm:$0xff] %v2114
                  %v2116 = vld [vmem:[%s1544 + $0x1f68] sm:$0xff]
                  %2117 = vst [vmem:[%s1545 + $0x8e8] sm:$0xff] %v2116
                  %v2118 = vld [vmem:[%s1544 + $0x1f70] sm:$0xff]
                  %2119 = vst [vmem:[%s1545 + $0x8f0] sm:$0xff] %v2118
                  %v2120 = vld [vmem:[%s1544 + $0x1f78] sm:$0xff]
                  %2121 = vst [vmem:[%s1545 + $0x8f8] sm:$0xff] %v2120
                  %v2122 = vld [vmem:[%s1544 + $0x2400] sm:$0xff]
                  %2123 = vst [vmem:[%s1545 + $0x900] sm:$0xff] %v2122
                  %v2124 = vld [vmem:[%s1544 + $0x2408] sm:$0xff]
                  %2125 = vst [vmem:[%s1545 + $0x908] sm:$0xff] %v2124
                  %v2126 = vld [vmem:[%s1544 + $0x2410] sm:$0xff]
                  %2127 = vst [vmem:[%s1545 + $0x910] sm:$0xff] %v2126
                  %v2128 = vld [vmem:[%s1544 + $0x2418] sm:$0xff]
                  %2129 = vst [vmem:[%s1545 + $0x918] sm:$0xff] %v2128
                  %v2130 = vld [vmem:[%s1544 + $0x2420] sm:$0xff]
                  %2131 = vst [vmem:[%s1545 + $0x920] sm:$0xff] %v2130
                  %v2132 = vld [vmem:[%s1544 + $0x2428] sm:$0xff]
                  %2133 = vst [vmem:[%s1545 + $0x928] sm:$0xff] %v2132
                  %v2134 = vld [vmem:[%s1544 + $0x2430] sm:$0xff]
                  %2135 = vst [vmem:[%s1545 + $0x930] sm:$0xff] %v2134
                  %v2136 = vld [vmem:[%s1544 + $0x2438] sm:$0xff]
                  %2137 = vst [vmem:[%s1545 + $0x938] sm:$0xff] %v2136
                  %v2138 = vld [vmem:[%s1544 + $0x2440] sm:$0xff]
                  %2139 = vst [vmem:[%s1545 + $0x940] sm:$0xff] %v2138
                  %v2140 = vld [vmem:[%s1544 + $0x2448] sm:$0xff]
                  %2141 = vst [vmem:[%s1545 + $0x948] sm:$0xff] %v2140
                  %v2142 = vld [vmem:[%s1544 + $0x2450] sm:$0xff]
                  %2143 = vst [vmem:[%s1545 + $0x950] sm:$0xff] %v2142
                  %v2144 = vld [vmem:[%s1544 + $0x2458] sm:$0xff]
                  %2145 = vst [vmem:[%s1545 + $0x958] sm:$0xff] %v2144
                  %v2146 = vld [vmem:[%s1544 + $0x2460] sm:$0xff]
                  %2147 = vst [vmem:[%s1545 + $0x960] sm:$0xff] %v2146
                  %v2148 = vld [vmem:[%s1544 + $0x2468] sm:$0xff]
                  %2149 = vst [vmem:[%s1545 + $0x968] sm:$0xff] %v2148
                  %v2150 = vld [vmem:[%s1544 + $0x2470] sm:$0xff]
                  %2151 = vst [vmem:[%s1545 + $0x970] sm:$0xff] %v2150
                  %v2152 = vld [vmem:[%s1544 + $0x2478] sm:$0xff]
                  %2153 = vst [vmem:[%s1545 + $0x978] sm:$0xff] %v2152
                  %v2154 = vld [vmem:[%s1544 + $0x2480] sm:$0xff]
                  %2155 = vst [vmem:[%s1545 + $0x980] sm:$0xff] %v2154
                  %v2156 = vld [vmem:[%s1544 + $0x2488] sm:$0xff]
                  %2157 = vst [vmem:[%s1545 + $0x988] sm:$0xff] %v2156
                  %v2158 = vld [vmem:[%s1544 + $0x2490] sm:$0xff]
                  %2159 = vst [vmem:[%s1545 + $0x990] sm:$0xff] %v2158
                  %v2160 = vld [vmem:[%s1544 + $0x2498] sm:$0xff]
                  %2161 = vst [vmem:[%s1545 + $0x998] sm:$0xff] %v2160
                  %v2162 = vld [vmem:[%s1544 + $0x24a0] sm:$0xff]
                  %2163 = vst [vmem:[%s1545 + $0x9a0] sm:$0xff] %v2162
                  %v2164 = vld [vmem:[%s1544 + $0x24a8] sm:$0xff]
                  %2165 = vst [vmem:[%s1545 + $0x9a8] sm:$0xff] %v2164
                  %v2166 = vld [vmem:[%s1544 + $0x24b0] sm:$0xff]
                  %2167 = vst [vmem:[%s1545 + $0x9b0] sm:$0xff] %v2166
                  %v2168 = vld [vmem:[%s1544 + $0x24b8] sm:$0xff]
                  %2169 = vst [vmem:[%s1545 + $0x9b8] sm:$0xff] %v2168
                  %v2170 = vld [vmem:[%s1544 + $0x24c0] sm:$0xff]
                  %2171 = vst [vmem:[%s1545 + $0x9c0] sm:$0xff] %v2170
                  %v2172 = vld [vmem:[%s1544 + $0x24c8] sm:$0xff]
                  %2173 = vst [vmem:[%s1545 + $0x9c8] sm:$0xff] %v2172
                  %v2174 = vld [vmem:[%s1544 + $0x24d0] sm:$0xff]
                  %2175 = vst [vmem:[%s1545 + $0x9d0] sm:$0xff] %v2174
                  %v2176 = vld [vmem:[%s1544 + $0x24d8] sm:$0xff]
                  %2177 = vst [vmem:[%s1545 + $0x9d8] sm:$0xff] %v2176
                  %v2178 = vld [vmem:[%s1544 + $0x24e0] sm:$0xff]
                  %2179 = vst [vmem:[%s1545 + $0x9e0] sm:$0xff] %v2178
                  %v2180 = vld [vmem:[%s1544 + $0x24e8] sm:$0xff]
                  %2181 = vst [vmem:[%s1545 + $0x9e8] sm:$0xff] %v2180
                  %v2182 = vld [vmem:[%s1544 + $0x24f0] sm:$0xff]
                  %2183 = vst [vmem:[%s1545 + $0x9f0] sm:$0xff] %v2182
                  %v2184 = vld [vmem:[%s1544 + $0x24f8] sm:$0xff]
                  %2185 = vst [vmem:[%s1545 + $0x9f8] sm:$0xff] %v2184
                  %v2186 = vld [vmem:[%s1544 + $0x2500] sm:$0xff]
                  %2187 = vst [vmem:[%s1545 + $0xa00] sm:$0xff] %v2186
                  %v2188 = vld [vmem:[%s1544 + $0x2508] sm:$0xff]
                  %2189 = vst [vmem:[%s1545 + $0xa08] sm:$0xff] %v2188
                  %v2190 = vld [vmem:[%s1544 + $0x2510] sm:$0xff]
                  %2191 = vst [vmem:[%s1545 + $0xa10] sm:$0xff] %v2190
                  %v2192 = vld [vmem:[%s1544 + $0x2518] sm:$0xff]
                  %2193 = vst [vmem:[%s1545 + $0xa18] sm:$0xff] %v2192
                  %v2194 = vld [vmem:[%s1544 + $0x2520] sm:$0xff]
                  %2195 = vst [vmem:[%s1545 + $0xa20] sm:$0xff] %v2194
                  %v2196 = vld [vmem:[%s1544 + $0x2528] sm:$0xff]
                  %2197 = vst [vmem:[%s1545 + $0xa28] sm:$0xff] %v2196
                  %v2198 = vld [vmem:[%s1544 + $0x2530] sm:$0xff]
                  %2199 = vst [vmem:[%s1545 + $0xa30] sm:$0xff] %v2198
                  %v2200 = vld [vmem:[%s1544 + $0x2538] sm:$0xff]
                  %2201 = vst [vmem:[%s1545 + $0xa38] sm:$0xff] %v2200
                  %v2202 = vld [vmem:[%s1544 + $0x2540] sm:$0xff]
                  %2203 = vst [vmem:[%s1545 + $0xa40] sm:$0xff] %v2202
                  %v2204 = vld [vmem:[%s1544 + $0x2548] sm:$0xff]
                  %2205 = vst [vmem:[%s1545 + $0xa48] sm:$0xff] %v2204
                  %v2206 = vld [vmem:[%s1544 + $0x2550] sm:$0xff]
                  %2207 = vst [vmem:[%s1545 + $0xa50] sm:$0xff] %v2206
                  %v2208 = vld [vmem:[%s1544 + $0x2558] sm:$0xff]
                  %2209 = vst [vmem:[%s1545 + $0xa58] sm:$0xff] %v2208
                  %v2210 = vld [vmem:[%s1544 + $0x2560] sm:$0xff]
                  %2211 = vst [vmem:[%s1545 + $0xa60] sm:$0xff] %v2210
                  %v2212 = vld [vmem:[%s1544 + $0x2568] sm:$0xff]
                  %2213 = vst [vmem:[%s1545 + $0xa68] sm:$0xff] %v2212
                  %v2214 = vld [vmem:[%s1544 + $0x2570] sm:$0xff]
                  %2215 = vst [vmem:[%s1545 + $0xa70] sm:$0xff] %v2214
                  %v2216 = vld [vmem:[%s1544 + $0x2578] sm:$0xff]
                  %2217 = vst [vmem:[%s1545 + $0xa78] sm:$0xff] %v2216
                  %v2218 = vld [vmem:[%s1544 + $0x2a00] sm:$0xff]
                  %2219 = vst [vmem:[%s1545 + $0xa80] sm:$0xff] %v2218
                  %v2220 = vld [vmem:[%s1544 + $0x2a08] sm:$0xff]
                  %2221 = vst [vmem:[%s1545 + $0xa88] sm:$0xff] %v2220
                  %v2222 = vld [vmem:[%s1544 + $0x2a10] sm:$0xff]
                  %2223 = vst [vmem:[%s1545 + $0xa90] sm:$0xff] %v2222
                  %v2224 = vld [vmem:[%s1544 + $0x2a18] sm:$0xff]
                  %2225 = vst [vmem:[%s1545 + $0xa98] sm:$0xff] %v2224
                  %v2226 = vld [vmem:[%s1544 + $0x2a20] sm:$0xff]
                  %2227 = vst [vmem:[%s1545 + $0xaa0] sm:$0xff] %v2226
                  %v2228 = vld [vmem:[%s1544 + $0x2a28] sm:$0xff]
                  %2229 = vst [vmem:[%s1545 + $0xaa8] sm:$0xff] %v2228
                  %v2230 = vld [vmem:[%s1544 + $0x2a30] sm:$0xff]
                  %2231 = vst [vmem:[%s1545 + $0xab0] sm:$0xff] %v2230
                  %v2232 = vld [vmem:[%s1544 + $0x2a38] sm:$0xff]
                  %2233 = vst [vmem:[%s1545 + $0xab8] sm:$0xff] %v2232
                  %v2234 = vld [vmem:[%s1544 + $0x2a40] sm:$0xff]
                  %2235 = vst [vmem:[%s1545 + $0xac0] sm:$0xff] %v2234
                  %v2236 = vld [vmem:[%s1544 + $0x2a48] sm:$0xff]
                  %2237 = vst [vmem:[%s1545 + $0xac8] sm:$0xff] %v2236
                  %v2238 = vld [vmem:[%s1544 + $0x2a50] sm:$0xff]
                  %2239 = vst [vmem:[%s1545 + $0xad0] sm:$0xff] %v2238
                  %v2240 = vld [vmem:[%s1544 + $0x2a58] sm:$0xff]
                  %2241 = vst [vmem:[%s1545 + $0xad8] sm:$0xff] %v2240
                  %v2242 = vld [vmem:[%s1544 + $0x2a60] sm:$0xff]
                  %2243 = vst [vmem:[%s1545 + $0xae0] sm:$0xff] %v2242
                  %v2244 = vld [vmem:[%s1544 + $0x2a68] sm:$0xff]
                  %2245 = vst [vmem:[%s1545 + $0xae8] sm:$0xff] %v2244
                  %v2246 = vld [vmem:[%s1544 + $0x2a70] sm:$0xff]
                  %2247 = vst [vmem:[%s1545 + $0xaf0] sm:$0xff] %v2246
                  %v2248 = vld [vmem:[%s1544 + $0x2a78] sm:$0xff]
                  %2249 = vst [vmem:[%s1545 + $0xaf8] sm:$0xff] %v2248
                  %v2250 = vld [vmem:[%s1544 + $0x2a80] sm:$0xff]
                  %2251 = vst [vmem:[%s1545 + $0xb00] sm:$0xff] %v2250
                  %v2252 = vld [vmem:[%s1544 + $0x2a88] sm:$0xff]
                  %2253 = vst [vmem:[%s1545 + $0xb08] sm:$0xff] %v2252
                  %v2254 = vld [vmem:[%s1544 + $0x2a90] sm:$0xff]
                  %2255 = vst [vmem:[%s1545 + $0xb10] sm:$0xff] %v2254
                  %v2256 = vld [vmem:[%s1544 + $0x2a98] sm:$0xff]
                  %2257 = vst [vmem:[%s1545 + $0xb18] sm:$0xff] %v2256
                  %v2258 = vld [vmem:[%s1544 + $0x2aa0] sm:$0xff]
                  %2259 = vst [vmem:[%s1545 + $0xb20] sm:$0xff] %v2258
                  %v2260 = vld [vmem:[%s1544 + $0x2aa8] sm:$0xff]
                  %2261 = vst [vmem:[%s1545 + $0xb28] sm:$0xff] %v2260
                  %v2262 = vld [vmem:[%s1544 + $0x2ab0] sm:$0xff]
                  %2263 = vst [vmem:[%s1545 + $0xb30] sm:$0xff] %v2262
                  %v2264 = vld [vmem:[%s1544 + $0x2ab8] sm:$0xff]
                  %2265 = vst [vmem:[%s1545 + $0xb38] sm:$0xff] %v2264
                  %v2266 = vld [vmem:[%s1544 + $0x2ac0] sm:$0xff]
                  %2267 = vst [vmem:[%s1545 + $0xb40] sm:$0xff] %v2266
                  %v2268 = vld [vmem:[%s1544 + $0x2ac8] sm:$0xff]
                  %2269 = vst [vmem:[%s1545 + $0xb48] sm:$0xff] %v2268
                  %v2270 = vld [vmem:[%s1544 + $0x2ad0] sm:$0xff]
                  %2271 = vst [vmem:[%s1545 + $0xb50] sm:$0xff] %v2270
                  %v2272 = vld [vmem:[%s1544 + $0x2ad8] sm:$0xff]
                  %2273 = vst [vmem:[%s1545 + $0xb58] sm:$0xff] %v2272
                  %v2274 = vld [vmem:[%s1544 + $0x2ae0] sm:$0xff]
                  %2275 = vst [vmem:[%s1545 + $0xb60] sm:$0xff] %v2274
                  %v2276 = vld [vmem:[%s1544 + $0x2ae8] sm:$0xff]
                  %2277 = vst [vmem:[%s1545 + $0xb68] sm:$0xff] %v2276
                  %v2278 = vld [vmem:[%s1544 + $0x2af0] sm:$0xff]
                  %2279 = vst [vmem:[%s1545 + $0xb70] sm:$0xff] %v2278
                  %v2280 = vld [vmem:[%s1544 + $0x2af8] sm:$0xff]
                  %2281 = vst [vmem:[%s1545 + $0xb78] sm:$0xff] %v2280
                  %v2282 = vld [vmem:[%s1544 + $0x2b00] sm:$0xff]
                  %2283 = vst [vmem:[%s1545 + $0xb80] sm:$0xff] %v2282
                  %v2284 = vld [vmem:[%s1544 + $0x2b08] sm:$0xff]
                  %2285 = vst [vmem:[%s1545 + $0xb88] sm:$0xff] %v2284
                  %v2286 = vld [vmem:[%s1544 + $0x2b10] sm:$0xff]
                  %2287 = vst [vmem:[%s1545 + $0xb90] sm:$0xff] %v2286
                  %v2288 = vld [vmem:[%s1544 + $0x2b18] sm:$0xff]
                  %2289 = vst [vmem:[%s1545 + $0xb98] sm:$0xff] %v2288
                  %v2290 = vld [vmem:[%s1544 + $0x2b20] sm:$0xff]
                  %2291 = vst [vmem:[%s1545 + $0xba0] sm:$0xff] %v2290
                  %v2292 = vld [vmem:[%s1544 + $0x2b28] sm:$0xff]
                  %2293 = vst [vmem:[%s1545 + $0xba8] sm:$0xff] %v2292
                  %v2294 = vld [vmem:[%s1544 + $0x2b30] sm:$0xff]
                  %2295 = vst [vmem:[%s1545 + $0xbb0] sm:$0xff] %v2294
                  %v2296 = vld [vmem:[%s1544 + $0x2b38] sm:$0xff]
                  %2297 = vst [vmem:[%s1545 + $0xbb8] sm:$0xff] %v2296
                  %v2298 = vld [vmem:[%s1544 + $0x2b40] sm:$0xff]
                  %2299 = vst [vmem:[%s1545 + $0xbc0] sm:$0xff] %v2298
                  %v2300 = vld [vmem:[%s1544 + $0x2b48] sm:$0xff]
                  %2301 = vst [vmem:[%s1545 + $0xbc8] sm:$0xff] %v2300
                  %v2302 = vld [vmem:[%s1544 + $0x2b50] sm:$0xff]
                  %2303 = vst [vmem:[%s1545 + $0xbd0] sm:$0xff] %v2302
                  %v2304 = vld [vmem:[%s1544 + $0x2b58] sm:$0xff]
                  %2305 = vst [vmem:[%s1545 + $0xbd8] sm:$0xff] %v2304
                  %v2306 = vld [vmem:[%s1544 + $0x2b60] sm:$0xff]
                  %2307 = vst [vmem:[%s1545 + $0xbe0] sm:$0xff] %v2306
                  %v2308 = vld [vmem:[%s1544 + $0x2b68] sm:$0xff]
                  %2309 = vst [vmem:[%s1545 + $0xbe8] sm:$0xff] %v2308
                  %v2310 = vld [vmem:[%s1544 + $0x2b70] sm:$0xff]
                  %2311 = vst [vmem:[%s1545 + $0xbf0] sm:$0xff] %v2310
                  %v2312 = vld [vmem:[%s1544 + $0x2b78] sm:$0xff]
                  %2313 = vst [vmem:[%s1545 + $0xbf8] sm:$0xff] %v2312
                  %v2314 = vld [vmem:[%s1544 + $0x3000] sm:$0xff]
                  %2315 = vst [vmem:[%s1545 + $0xc00] sm:$0xff] %v2314
                  %v2316 = vld [vmem:[%s1544 + $0x3008] sm:$0xff]
                  %2317 = vst [vmem:[%s1545 + $0xc08] sm:$0xff] %v2316
                  %v2318 = vld [vmem:[%s1544 + $0x3010] sm:$0xff]
                  %2319 = vst [vmem:[%s1545 + $0xc10] sm:$0xff] %v2318
                  %v2320 = vld [vmem:[%s1544 + $0x3018] sm:$0xff]
                  %2321 = vst [vmem:[%s1545 + $0xc18] sm:$0xff] %v2320
                  %v2322 = vld [vmem:[%s1544 + $0x3020] sm:$0xff]
                  %2323 = vst [vmem:[%s1545 + $0xc20] sm:$0xff] %v2322
                  %v2324 = vld [vmem:[%s1544 + $0x3028] sm:$0xff]
                  %2325 = vst [vmem:[%s1545 + $0xc28] sm:$0xff] %v2324
                  %v2326 = vld [vmem:[%s1544 + $0x3030] sm:$0xff]
                  %2327 = vst [vmem:[%s1545 + $0xc30] sm:$0xff] %v2326
                  %v2328 = vld [vmem:[%s1544 + $0x3038] sm:$0xff]
                  %2329 = vst [vmem:[%s1545 + $0xc38] sm:$0xff] %v2328
                  %v2330 = vld [vmem:[%s1544 + $0x3040] sm:$0xff]
                  %2331 = vst [vmem:[%s1545 + $0xc40] sm:$0xff] %v2330
                  %v2332 = vld [vmem:[%s1544 + $0x3048] sm:$0xff]
                  %2333 = vst [vmem:[%s1545 + $0xc48] sm:$0xff] %v2332
                  %v2334 = vld [vmem:[%s1544 + $0x3050] sm:$0xff]
                  %2335 = vst [vmem:[%s1545 + $0xc50] sm:$0xff] %v2334
                  %v2336 = vld [vmem:[%s1544 + $0x3058] sm:$0xff]
                  %2337 = vst [vmem:[%s1545 + $0xc58] sm:$0xff] %v2336
                  %v2338 = vld [vmem:[%s1544 + $0x3060] sm:$0xff]
                  %2339 = vst [vmem:[%s1545 + $0xc60] sm:$0xff] %v2338
                  %v2340 = vld [vmem:[%s1544 + $0x3068] sm:$0xff]
                  %2341 = vst [vmem:[%s1545 + $0xc68] sm:$0xff] %v2340
                  %v2342 = vld [vmem:[%s1544 + $0x3070] sm:$0xff]
                  %2343 = vst [vmem:[%s1545 + $0xc70] sm:$0xff] %v2342
                  %v2344 = vld [vmem:[%s1544 + $0x3078] sm:$0xff]
                  %2345 = vst [vmem:[%s1545 + $0xc78] sm:$0xff] %v2344
                  %v2346 = vld [vmem:[%s1544 + $0x3080] sm:$0xff]
                  %2347 = vst [vmem:[%s1545 + $0xc80] sm:$0xff] %v2346
                  %v2348 = vld [vmem:[%s1544 + $0x3088] sm:$0xff]
                  %2349 = vst [vmem:[%s1545 + $0xc88] sm:$0xff] %v2348
                  %v2350 = vld [vmem:[%s1544 + $0x3090] sm:$0xff]
                  %2351 = vst [vmem:[%s1545 + $0xc90] sm:$0xff] %v2350
                  %v2352 = vld [vmem:[%s1544 + $0x3098] sm:$0xff]
                  %2353 = vst [vmem:[%s1545 + $0xc98] sm:$0xff] %v2352
                  %v2354 = vld [vmem:[%s1544 + $0x30a0] sm:$0xff]
                  %2355 = vst [vmem:[%s1545 + $0xca0] sm:$0xff] %v2354
                  %v2356 = vld [vmem:[%s1544 + $0x30a8] sm:$0xff]
                  %2357 = vst [vmem:[%s1545 + $0xca8] sm:$0xff] %v2356
                  %v2358 = vld [vmem:[%s1544 + $0x30b0] sm:$0xff]
                  %2359 = vst [vmem:[%s1545 + $0xcb0] sm:$0xff] %v2358
                  %v2360 = vld [vmem:[%s1544 + $0x30b8] sm:$0xff]
                  %2361 = vst [vmem:[%s1545 + $0xcb8] sm:$0xff] %v2360
                  %v2362 = vld [vmem:[%s1544 + $0x30c0] sm:$0xff]
                  %2363 = vst [vmem:[%s1545 + $0xcc0] sm:$0xff] %v2362
                  %v2364 = vld [vmem:[%s1544 + $0x30c8] sm:$0xff]
                  %2365 = vst [vmem:[%s1545 + $0xcc8] sm:$0xff] %v2364
                  %v2366 = vld [vmem:[%s1544 + $0x30d0] sm:$0xff]
                  %2367 = vst [vmem:[%s1545 + $0xcd0] sm:$0xff] %v2366
                  %v2368 = vld [vmem:[%s1544 + $0x30d8] sm:$0xff]
                  %2369 = vst [vmem:[%s1545 + $0xcd8] sm:$0xff] %v2368
                  %v2370 = vld [vmem:[%s1544 + $0x30e0] sm:$0xff]
                  %2371 = vst [vmem:[%s1545 + $0xce0] sm:$0xff] %v2370
                  %v2372 = vld [vmem:[%s1544 + $0x30e8] sm:$0xff]
                  %2373 = vst [vmem:[%s1545 + $0xce8] sm:$0xff] %v2372
                  %v2374 = vld [vmem:[%s1544 + $0x30f0] sm:$0xff]
                  %2375 = vst [vmem:[%s1545 + $0xcf0] sm:$0xff] %v2374
                  %v2376 = vld [vmem:[%s1544 + $0x30f8] sm:$0xff]
                  %2377 = vst [vmem:[%s1545 + $0xcf8] sm:$0xff] %v2376
                  %v2378 = vld [vmem:[%s1544 + $0x3100] sm:$0xff]
                  %2379 = vst [vmem:[%s1545 + $0xd00] sm:$0xff] %v2378
                  %v2380 = vld [vmem:[%s1544 + $0x3108] sm:$0xff]
                  %2381 = vst [vmem:[%s1545 + $0xd08] sm:$0xff] %v2380
                  %v2382 = vld [vmem:[%s1544 + $0x3110] sm:$0xff]
                  %2383 = vst [vmem:[%s1545 + $0xd10] sm:$0xff] %v2382
                  %v2384 = vld [vmem:[%s1544 + $0x3118] sm:$0xff]
                  %2385 = vst [vmem:[%s1545 + $0xd18] sm:$0xff] %v2384
                  %v2386 = vld [vmem:[%s1544 + $0x3120] sm:$0xff]
                  %2387 = vst [vmem:[%s1545 + $0xd20] sm:$0xff] %v2386
                  %v2388 = vld [vmem:[%s1544 + $0x3128] sm:$0xff]
                  %2389 = vst [vmem:[%s1545 + $0xd28] sm:$0xff] %v2388
                  %v2390 = vld [vmem:[%s1544 + $0x3130] sm:$0xff]
                  %2391 = vst [vmem:[%s1545 + $0xd30] sm:$0xff] %v2390
                  %v2392 = vld [vmem:[%s1544 + $0x3138] sm:$0xff]
                  %2393 = vst [vmem:[%s1545 + $0xd38] sm:$0xff] %v2392
                  %v2394 = vld [vmem:[%s1544 + $0x3140] sm:$0xff]
                  %2395 = vst [vmem:[%s1545 + $0xd40] sm:$0xff] %v2394
                  %v2396 = vld [vmem:[%s1544 + $0x3148] sm:$0xff]
                  %2397 = vst [vmem:[%s1545 + $0xd48] sm:$0xff] %v2396
                  %v2398 = vld [vmem:[%s1544 + $0x3150] sm:$0xff]
                  %2399 = vst [vmem:[%s1545 + $0xd50] sm:$0xff] %v2398
                  %v2400 = vld [vmem:[%s1544 + $0x3158] sm:$0xff]
                  %2401 = vst [vmem:[%s1545 + $0xd58] sm:$0xff] %v2400
                  %v2402 = vld [vmem:[%s1544 + $0x3160] sm:$0xff]
                  %2403 = vst [vmem:[%s1545 + $0xd60] sm:$0xff] %v2402
                  %v2404 = vld [vmem:[%s1544 + $0x3168] sm:$0xff]
                  %2405 = vst [vmem:[%s1545 + $0xd68] sm:$0xff] %v2404
                  %v2406 = vld [vmem:[%s1544 + $0x3170] sm:$0xff]
                  %2407 = vst [vmem:[%s1545 + $0xd70] sm:$0xff] %v2406
                  %v2408 = vld [vmem:[%s1544 + $0x3178] sm:$0xff]
                  %2409 = vst [vmem:[%s1545 + $0xd78] sm:$0xff] %v2408
                  %v2410 = vld [vmem:[%s1544 + $0x3600] sm:$0xff]
                  %2411 = vst [vmem:[%s1545 + $0xd80] sm:$0xff] %v2410
                  %v2412 = vld [vmem:[%s1544 + $0x3608] sm:$0xff]
                  %2413 = vst [vmem:[%s1545 + $0xd88] sm:$0xff] %v2412
                  %v2414 = vld [vmem:[%s1544 + $0x3610] sm:$0xff]
                  %2415 = vst [vmem:[%s1545 + $0xd90] sm:$0xff] %v2414
                  %v2416 = vld [vmem:[%s1544 + $0x3618] sm:$0xff]
                  %2417 = vst [vmem:[%s1545 + $0xd98] sm:$0xff] %v2416
                  %v2418 = vld [vmem:[%s1544 + $0x3620] sm:$0xff]
                  %2419 = vst [vmem:[%s1545 + $0xda0] sm:$0xff] %v2418
                  %v2420 = vld [vmem:[%s1544 + $0x3628] sm:$0xff]
                  %2421 = vst [vmem:[%s1545 + $0xda8] sm:$0xff] %v2420
                  %v2422 = vld [vmem:[%s1544 + $0x3630] sm:$0xff]
                  %2423 = vst [vmem:[%s1545 + $0xdb0] sm:$0xff] %v2422
                  %v2424 = vld [vmem:[%s1544 + $0x3638] sm:$0xff]
                  %2425 = vst [vmem:[%s1545 + $0xdb8] sm:$0xff] %v2424
                  %v2426 = vld [vmem:[%s1544 + $0x3640] sm:$0xff]
                  %2427 = vst [vmem:[%s1545 + $0xdc0] sm:$0xff] %v2426
                  %v2428 = vld [vmem:[%s1544 + $0x3648] sm:$0xff]
                  %2429 = vst [vmem:[%s1545 + $0xdc8] sm:$0xff] %v2428
                  %v2430 = vld [vmem:[%s1544 + $0x3650] sm:$0xff]
                  %2431 = vst [vmem:[%s1545 + $0xdd0] sm:$0xff] %v2430
                  %v2432 = vld [vmem:[%s1544 + $0x3658] sm:$0xff]
                  %2433 = vst [vmem:[%s1545 + $0xdd8] sm:$0xff] %v2432
                  %v2434 = vld [vmem:[%s1544 + $0x3660] sm:$0xff]
                  %2435 = vst [vmem:[%s1545 + $0xde0] sm:$0xff] %v2434
                  %v2436 = vld [vmem:[%s1544 + $0x3668] sm:$0xff]
                  %2437 = vst [vmem:[%s1545 + $0xde8] sm:$0xff] %v2436
                  %v2438 = vld [vmem:[%s1544 + $0x3670] sm:$0xff]
                  %2439 = vst [vmem:[%s1545 + $0xdf0] sm:$0xff] %v2438
                  %v2440 = vld [vmem:[%s1544 + $0x3678] sm:$0xff]
                  %2441 = vst [vmem:[%s1545 + $0xdf8] sm:$0xff] %v2440
                  %v2442 = vld [vmem:[%s1544 + $0x3680] sm:$0xff]
                  %2443 = vst [vmem:[%s1545 + $0xe00] sm:$0xff] %v2442
                  %v2444 = vld [vmem:[%s1544 + $0x3688] sm:$0xff]
                  %2445 = vst [vmem:[%s1545 + $0xe08] sm:$0xff] %v2444
                  %v2446 = vld [vmem:[%s1544 + $0x3690] sm:$0xff]
                  %2447 = vst [vmem:[%s1545 + $0xe10] sm:$0xff] %v2446
                  %v2448 = vld [vmem:[%s1544 + $0x3698] sm:$0xff]
                  %2449 = vst [vmem:[%s1545 + $0xe18] sm:$0xff] %v2448
                  %v2450 = vld [vmem:[%s1544 + $0x36a0] sm:$0xff]
                  %2451 = vst [vmem:[%s1545 + $0xe20] sm:$0xff] %v2450
                  %v2452 = vld [vmem:[%s1544 + $0x36a8] sm:$0xff]
                  %2453 = vst [vmem:[%s1545 + $0xe28] sm:$0xff] %v2452
                  %v2454 = vld [vmem:[%s1544 + $0x36b0] sm:$0xff]
                  %2455 = vst [vmem:[%s1545 + $0xe30] sm:$0xff] %v2454
                  %v2456 = vld [vmem:[%s1544 + $0x36b8] sm:$0xff]
                  %2457 = vst [vmem:[%s1545 + $0xe38] sm:$0xff] %v2456
                  %v2458 = vld [vmem:[%s1544 + $0x36c0] sm:$0xff]
                  %2459 = vst [vmem:[%s1545 + $0xe40] sm:$0xff] %v2458
                  %v2460 = vld [vmem:[%s1544 + $0x36c8] sm:$0xff]
                  %2461 = vst [vmem:[%s1545 + $0xe48] sm:$0xff] %v2460
                  %v2462 = vld [vmem:[%s1544 + $0x36d0] sm:$0xff]
                  %2463 = vst [vmem:[%s1545 + $0xe50] sm:$0xff] %v2462
                  %v2464 = vld [vmem:[%s1544 + $0x36d8] sm:$0xff]
                  %2465 = vst [vmem:[%s1545 + $0xe58] sm:$0xff] %v2464
                  %v2466 = vld [vmem:[%s1544 + $0x36e0] sm:$0xff]
                  %2467 = vst [vmem:[%s1545 + $0xe60] sm:$0xff] %v2466
                  %v2468 = vld [vmem:[%s1544 + $0x36e8] sm:$0xff]
                  %2469 = vst [vmem:[%s1545 + $0xe68] sm:$0xff] %v2468
                  %v2470 = vld [vmem:[%s1544 + $0x36f0] sm:$0xff]
                  %2471 = vst [vmem:[%s1545 + $0xe70] sm:$0xff] %v2470
                  %v2472 = vld [vmem:[%s1544 + $0x36f8] sm:$0xff]
                  %2473 = vst [vmem:[%s1545 + $0xe78] sm:$0xff] %v2472
                  %v2474 = vld [vmem:[%s1544 + $0x3700] sm:$0xff]
                  %2475 = vst [vmem:[%s1545 + $0xe80] sm:$0xff] %v2474
                  %v2476 = vld [vmem:[%s1544 + $0x3708] sm:$0xff]
                  %2477 = vst [vmem:[%s1545 + $0xe88] sm:$0xff] %v2476
                  %v2478 = vld [vmem:[%s1544 + $0x3710] sm:$0xff]
                  %2479 = vst [vmem:[%s1545 + $0xe90] sm:$0xff] %v2478
                  %v2480 = vld [vmem:[%s1544 + $0x3718] sm:$0xff]
                  %2481 = vst [vmem:[%s1545 + $0xe98] sm:$0xff] %v2480
                  %v2482 = vld [vmem:[%s1544 + $0x3720] sm:$0xff]
                  %2483 = vst [vmem:[%s1545 + $0xea0] sm:$0xff] %v2482
                  %v2484 = vld [vmem:[%s1544 + $0x3728] sm:$0xff]
                  %2485 = vst [vmem:[%s1545 + $0xea8] sm:$0xff] %v2484
                  %v2486 = vld [vmem:[%s1544 + $0x3730] sm:$0xff]
                  %2487 = vst [vmem:[%s1545 + $0xeb0] sm:$0xff] %v2486
                  %v2488 = vld [vmem:[%s1544 + $0x3738] sm:$0xff]
                  %2489 = vst [vmem:[%s1545 + $0xeb8] sm:$0xff] %v2488
                  %v2490 = vld [vmem:[%s1544 + $0x3740] sm:$0xff]
                  %2491 = vst [vmem:[%s1545 + $0xec0] sm:$0xff] %v2490
                  %v2492 = vld [vmem:[%s1544 + $0x3748] sm:$0xff]
                  %2493 = vst [vmem:[%s1545 + $0xec8] sm:$0xff] %v2492
                  %v2494 = vld [vmem:[%s1544 + $0x3750] sm:$0xff]
                  %2495 = vst [vmem:[%s1545 + $0xed0] sm:$0xff] %v2494
                  %v2496 = vld [vmem:[%s1544 + $0x3758] sm:$0xff]
                  %2497 = vst [vmem:[%s1545 + $0xed8] sm:$0xff] %v2496
                  %v2498 = vld [vmem:[%s1544 + $0x3760] sm:$0xff]
                  %2499 = vst [vmem:[%s1545 + $0xee0] sm:$0xff] %v2498
                  %v2500 = vld [vmem:[%s1544 + $0x3768] sm:$0xff]
                  %2501 = vst [vmem:[%s1545 + $0xee8] sm:$0xff] %v2500
                  %v2502 = vld [vmem:[%s1544 + $0x3770] sm:$0xff]
                  %2503 = vst [vmem:[%s1545 + $0xef0] sm:$0xff] %v2502
                  %v2504 = vld [vmem:[%s1544 + $0x3778] sm:$0xff]
                  %2505 = vst [vmem:[%s1545 + $0xef8] sm:$0xff] %v2504
                $region86: #{linear_pallas.1} parent=80 // loop_footer
                  %s1543 = sadd.s32 1, %s1539
                $region87: #{linear_pallas.1} parent=80 // loop_footer_branch
                  %1538 = sbr.rel target = $region83
                $region88: #{linear_pallas.1} parent=80 // loop_exit
                  _
              $region81: #{linear_pallas.1} parent=65 // pred_fallthru
                _
              // Predicated region
              $region89: #{linear_pallas.1} parent=65 // pred_check
                _
              $region90: #{linear_pallas.1} parent=65 // pred_check_branch
                %2507 = sbr.rel target = $region92
              $region91: #{linear_pallas.1} parent=65 // pred_region
                _
              $region92: #{linear_pallas.1} parent=65 // pred_fallthru
                _
            $region66: #{linear_pallas.1} parent=61 // pred_fallthru
              _
            // Predicated region
            $region67: #{linear_pallas.1} parent=61 // pred_check
              _
            $region68: #{linear_pallas.1} parent=61 // pred_check_branch
              %566 = sbr.rel target = $region70
            $region69: #{linear_pallas.1} parent=61 // pred_region
              loop: start=0, step=1, limit=1
              $region71: #{linear_pallas.1} parent=69 // loop_pre_header
                _
              $region72: #{linear_pallas.1} parent=69 // loop_header
                %s569 = sphi 0, %s573
                %p570 = scmp.ge.s32.totalorder %s569, 1
                %s574 = sphi %s560, %s560
                %s575 = sphi %s555, %s555
              $region73: #{linear_pallas.1} parent=69 // loop_header_branch
                %572 = sbr.rel (%p570) target = $region77
              $region74: #{linear_pallas.1} parent=69 // loop_body
                %v576 = vld [vmem:[%s574] sm:$0xff]
                %577 = vst [vmem:[%s575] sm:$0xff] %v576
                %v578 = vld [vmem:[%s574 + $0x8] sm:$0xff]
                %579 = vst [vmem:[%s575 + $0x8] sm:$0xff] %v578
                %v580 = vld [vmem:[%s574 + $0x10] sm:$0xff]
                %581 = vst [vmem:[%s575 + $0x10] sm:$0xff] %v580
                %v582 = vld [vmem:[%s574 + $0x18] sm:$0xff]
                %583 = vst [vmem:[%s575 + $0x18] sm:$0xff] %v582
                %v584 = vld [vmem:[%s574 + $0x20] sm:$0xff]
                %585 = vst [vmem:[%s575 + $0x20] sm:$0xff] %v584
                %v586 = vld [vmem:[%s574 + $0x28] sm:$0xff]
                %587 = vst [vmem:[%s575 + $0x28] sm:$0xff] %v586
                %v588 = vld [vmem:[%s574 + $0x30] sm:$0xff]
                %589 = vst [vmem:[%s575 + $0x30] sm:$0xff] %v588
                %v590 = vld [vmem:[%s574 + $0x38] sm:$0xff]
                %591 = vst [vmem:[%s575 + $0x38] sm:$0xff] %v590
                %v592 = vld [vmem:[%s574 + $0x40] sm:$0xff]
                %593 = vst [vmem:[%s575 + $0x40] sm:$0xff] %v592
                %v594 = vld [vmem:[%s574 + $0x48] sm:$0xff]
                %595 = vst [vmem:[%s575 + $0x48] sm:$0xff] %v594
                %v596 = vld [vmem:[%s574 + $0x50] sm:$0xff]
                %597 = vst [vmem:[%s575 + $0x50] sm:$0xff] %v596
                %v598 = vld [vmem:[%s574 + $0x58] sm:$0xff]
                %599 = vst [vmem:[%s575 + $0x58] sm:$0xff] %v598
                %v600 = vld [vmem:[%s574 + $0x60] sm:$0xff]
                %601 = vst [vmem:[%s575 + $0x60] sm:$0xff] %v600
                %v602 = vld [vmem:[%s574 + $0x68] sm:$0xff]
                %603 = vst [vmem:[%s575 + $0x68] sm:$0xff] %v602
                %v604 = vld [vmem:[%s574 + $0x70] sm:$0xff]
                %605 = vst [vmem:[%s575 + $0x70] sm:$0xff] %v604
                %v606 = vld [vmem:[%s574 + $0x78] sm:$0xff]
                %607 = vst [vmem:[%s575 + $0x78] sm:$0xff] %v606
                %v608 = vld [vmem:[%s574 + $0x80] sm:$0xff]
                %609 = vst [vmem:[%s575 + $0x80] sm:$0xff] %v608
                %v610 = vld [vmem:[%s574 + $0x88] sm:$0xff]
                %611 = vst [vmem:[%s575 + $0x88] sm:$0xff] %v610
                %v612 = vld [vmem:[%s574 + $0x90] sm:$0xff]
                %613 = vst [vmem:[%s575 + $0x90] sm:$0xff] %v612
                %v614 = vld [vmem:[%s574 + $0x98] sm:$0xff]
                %615 = vst [vmem:[%s575 + $0x98] sm:$0xff] %v614
                %v616 = vld [vmem:[%s574 + $0xa0] sm:$0xff]
                %617 = vst [vmem:[%s575 + $0xa0] sm:$0xff] %v616
                %v618 = vld [vmem:[%s574 + $0xa8] sm:$0xff]
                %619 = vst [vmem:[%s575 + $0xa8] sm:$0xff] %v618
                %v620 = vld [vmem:[%s574 + $0xb0] sm:$0xff]
                %621 = vst [vmem:[%s575 + $0xb0] sm:$0xff] %v620
                %v622 = vld [vmem:[%s574 + $0xb8] sm:$0xff]
                %623 = vst [vmem:[%s575 + $0xb8] sm:$0xff] %v622
                %v624 = vld [vmem:[%s574 + $0xc0] sm:$0xff]
                %625 = vst [vmem:[%s575 + $0xc0] sm:$0xff] %v624
                %v626 = vld [vmem:[%s574 + $0xc8] sm:$0xff]
                %627 = vst [vmem:[%s575 + $0xc8] sm:$0xff] %v626
                %v628 = vld [vmem:[%s574 + $0xd0] sm:$0xff]
                %629 = vst [vmem:[%s575 + $0xd0] sm:$0xff] %v628
                %v630 = vld [vmem:[%s574 + $0xd8] sm:$0xff]
                %631 = vst [vmem:[%s575 + $0xd8] sm:$0xff] %v630
                %v632 = vld [vmem:[%s574 + $0xe0] sm:$0xff]
                %633 = vst [vmem:[%s575 + $0xe0] sm:$0xff] %v632
                %v634 = vld [vmem:[%s574 + $0xe8] sm:$0xff]
                %635 = vst [vmem:[%s575 + $0xe8] sm:$0xff] %v634
                %v636 = vld [vmem:[%s574 + $0xf0] sm:$0xff]
                %637 = vst [vmem:[%s575 + $0xf0] sm:$0xff] %v636
                %v638 = vld [vmem:[%s574 + $0xf8] sm:$0xff]
                %639 = vst [vmem:[%s575 + $0xf8] sm:$0xff] %v638
                %v640 = vld [vmem:[%s574 + $0x100] sm:$0xff]
                %641 = vst [vmem:[%s575 + $0x100] sm:$0xff] %v640
                %v642 = vld [vmem:[%s574 + $0x108] sm:$0xff]
                %643 = vst [vmem:[%s575 + $0x108] sm:$0xff] %v642
                %v644 = vld [vmem:[%s574 + $0x110] sm:$0xff]
                %645 = vst [vmem:[%s575 + $0x110] sm:$0xff] %v644
                %v646 = vld [vmem:[%s574 + $0x118] sm:$0xff]
                %647 = vst [vmem:[%s575 + $0x118] sm:$0xff] %v646
                %v648 = vld [vmem:[%s574 + $0x120] sm:$0xff]
                %649 = vst [vmem:[%s575 + $0x120] sm:$0xff] %v648
                %v650 = vld [vmem:[%s574 + $0x128] sm:$0xff]
                %651 = vst [vmem:[%s575 + $0x128] sm:$0xff] %v650
                %v652 = vld [vmem:[%s574 + $0x130] sm:$0xff]
                %653 = vst [vmem:[%s575 + $0x130] sm:$0xff] %v652
                %v654 = vld [vmem:[%s574 + $0x138] sm:$0xff]
                %655 = vst [vmem:[%s575 + $0x138] sm:$0xff] %v654
                %v656 = vld [vmem:[%s574 + $0x140] sm:$0xff]
                %657 = vst [vmem:[%s575 + $0x140] sm:$0xff] %v656
                %v658 = vld [vmem:[%s574 + $0x148] sm:$0xff]
                %659 = vst [vmem:[%s575 + $0x148] sm:$0xff] %v658
                %v660 = vld [vmem:[%s574 + $0x150] sm:$0xff]
                %661 = vst [vmem:[%s575 + $0x150] sm:$0xff] %v660
                %v662 = vld [vmem:[%s574 + $0x158] sm:$0xff]
                %663 = vst [vmem:[%s575 + $0x158] sm:$0xff] %v662
                %v664 = vld [vmem:[%s574 + $0x160] sm:$0xff]
                %665 = vst [vmem:[%s575 + $0x160] sm:$0xff] %v664
                %v666 = vld [vmem:[%s574 + $0x168] sm:$0xff]
                %667 = vst [vmem:[%s575 + $0x168] sm:$0xff] %v666
                %v668 = vld [vmem:[%s574 + $0x170] sm:$0xff]
                %669 = vst [vmem:[%s575 + $0x170] sm:$0xff] %v668
                %v670 = vld [vmem:[%s574 + $0x178] sm:$0xff]
                %671 = vst [vmem:[%s575 + $0x178] sm:$0xff] %v670
                %v672 = vld [vmem:[%s574 + $0x600] sm:$0xff]
                %673 = vst [vmem:[%s575 + $0x180] sm:$0xff] %v672
                %v674 = vld [vmem:[%s574 + $0x608] sm:$0xff]
                %675 = vst [vmem:[%s575 + $0x188] sm:$0xff] %v674
                %v676 = vld [vmem:[%s574 + $0x610] sm:$0xff]
                %677 = vst [vmem:[%s575 + $0x190] sm:$0xff] %v676
                %v678 = vld [vmem:[%s574 + $0x618] sm:$0xff]
                %679 = vst [vmem:[%s575 + $0x198] sm:$0xff] %v678
                %v680 = vld [vmem:[%s574 + $0x620] sm:$0xff]
                %681 = vst [vmem:[%s575 + $0x1a0] sm:$0xff] %v680
                %v682 = vld [vmem:[%s574 + $0x628] sm:$0xff]
                %683 = vst [vmem:[%s575 + $0x1a8] sm:$0xff] %v682
                %v684 = vld [vmem:[%s574 + $0x630] sm:$0xff]
                %685 = vst [vmem:[%s575 + $0x1b0] sm:$0xff] %v684
                %v686 = vld [vmem:[%s574 + $0x638] sm:$0xff]
                %687 = vst [vmem:[%s575 + $0x1b8] sm:$0xff] %v686
                %v688 = vld [vmem:[%s574 + $0x640] sm:$0xff]
                %689 = vst [vmem:[%s575 + $0x1c0] sm:$0xff] %v688
                %v690 = vld [vmem:[%s574 + $0x648] sm:$0xff]
                %691 = vst [vmem:[%s575 + $0x1c8] sm:$0xff] %v690
                %v692 = vld [vmem:[%s574 + $0x650] sm:$0xff]
                %693 = vst [vmem:[%s575 + $0x1d0] sm:$0xff] %v692
                %v694 = vld [vmem:[%s574 + $0x658] sm:$0xff]
                %695 = vst [vmem:[%s575 + $0x1d8] sm:$0xff] %v694
                %v696 = vld [vmem:[%s574 + $0x660] sm:$0xff]
                %697 = vst [vmem:[%s575 + $0x1e0] sm:$0xff] %v696
                %v698 = vld [vmem:[%s574 + $0x668] sm:$0xff]
                %699 = vst [vmem:[%s575 + $0x1e8] sm:$0xff] %v698
                %v700 = vld [vmem:[%s574 + $0x670] sm:$0xff]
                %701 = vst [vmem:[%s575 + $0x1f0] sm:$0xff] %v700
                %v702 = vld [vmem:[%s574 + $0x678] sm:$0xff]
                %703 = vst [vmem:[%s575 + $0x1f8] sm:$0xff] %v702
                %v704 = vld [vmem:[%s574 + $0x680] sm:$0xff]
                %705 = vst [vmem:[%s575 + $0x200] sm:$0xff] %v704
                %v706 = vld [vmem:[%s574 + $0x688] sm:$0xff]
                %707 = vst [vmem:[%s575 + $0x208] sm:$0xff] %v706
                %v708 = vld [vmem:[%s574 + $0x690] sm:$0xff]
                %709 = vst [vmem:[%s575 + $0x210] sm:$0xff] %v708
                %v710 = vld [vmem:[%s574 + $0x698] sm:$0xff]
                %711 = vst [vmem:[%s575 + $0x218] sm:$0xff] %v710
                %v712 = vld [vmem:[%s574 + $0x6a0] sm:$0xff]
                %713 = vst [vmem:[%s575 + $0x220] sm:$0xff] %v712
                %v714 = vld [vmem:[%s574 + $0x6a8] sm:$0xff]
                %715 = vst [vmem:[%s575 + $0x228] sm:$0xff] %v714
                %v716 = vld [vmem:[%s574 + $0x6b0] sm:$0xff]
                %717 = vst [vmem:[%s575 + $0x230] sm:$0xff] %v716
                %v718 = vld [vmem:[%s574 + $0x6b8] sm:$0xff]
                %719 = vst [vmem:[%s575 + $0x238] sm:$0xff] %v718
                %v720 = vld [vmem:[%s574 + $0x6c0] sm:$0xff]
                %721 = vst [vmem:[%s575 + $0x240] sm:$0xff] %v720
                %v722 = vld [vmem:[%s574 + $0x6c8] sm:$0xff]
                %723 = vst [vmem:[%s575 + $0x248] sm:$0xff] %v722
                %v724 = vld [vmem:[%s574 + $0x6d0] sm:$0xff]
                %725 = vst [vmem:[%s575 + $0x250] sm:$0xff] %v724
                %v726 = vld [vmem:[%s574 + $0x6d8] sm:$0xff]
                %727 = vst [vmem:[%s575 + $0x258] sm:$0xff] %v726
                %v728 = vld [vmem:[%s574 + $0x6e0] sm:$0xff]
                %729 = vst [vmem:[%s575 + $0x260] sm:$0xff] %v728
                %v730 = vld [vmem:[%s574 + $0x6e8] sm:$0xff]
                %731 = vst [vmem:[%s575 + $0x268] sm:$0xff] %v730
                %v732 = vld [vmem:[%s574 + $0x6f0] sm:$0xff]
                %733 = vst [vmem:[%s575 + $0x270] sm:$0xff] %v732
                %v734 = vld [vmem:[%s574 + $0x6f8] sm:$0xff]
                %735 = vst [vmem:[%s575 + $0x278] sm:$0xff] %v734
                %v736 = vld [vmem:[%s574 + $0x700] sm:$0xff]
                %737 = vst [vmem:[%s575 + $0x280] sm:$0xff] %v736
                %v738 = vld [vmem:[%s574 + $0x708] sm:$0xff]
                %739 = vst [vmem:[%s575 + $0x288] sm:$0xff] %v738
                %v740 = vld [vmem:[%s574 + $0x710] sm:$0xff]
                %741 = vst [vmem:[%s575 + $0x290] sm:$0xff] %v740
                %v742 = vld [vmem:[%s574 + $0x718] sm:$0xff]
                %743 = vst [vmem:[%s575 + $0x298] sm:$0xff] %v742
                %v744 = vld [vmem:[%s574 + $0x720] sm:$0xff]
                %745 = vst [vmem:[%s575 + $0x2a0] sm:$0xff] %v744
                %v746 = vld [vmem:[%s574 + $0x728] sm:$0xff]
                %747 = vst [vmem:[%s575 + $0x2a8] sm:$0xff] %v746
                %v748 = vld [vmem:[%s574 + $0x730] sm:$0xff]
                %749 = vst [vmem:[%s575 + $0x2b0] sm:$0xff] %v748
                %v750 = vld [vmem:[%s574 + $0x738] sm:$0xff]
                %751 = vst [vmem:[%s575 + $0x2b8] sm:$0xff] %v750
                %v752 = vld [vmem:[%s574 + $0x740] sm:$0xff]
                %753 = vst [vmem:[%s575 + $0x2c0] sm:$0xff] %v752
                %v754 = vld [vmem:[%s574 + $0x748] sm:$0xff]
                %755 = vst [vmem:[%s575 + $0x2c8] sm:$0xff] %v754
                %v756 = vld [vmem:[%s574 + $0x750] sm:$0xff]
                %757 = vst [vmem:[%s575 + $0x2d0] sm:$0xff] %v756
                %v758 = vld [vmem:[%s574 + $0x758] sm:$0xff]
                %759 = vst [vmem:[%s575 + $0x2d8] sm:$0xff] %v758
                %v760 = vld [vmem:[%s574 + $0x760] sm:$0xff]
                %761 = vst [vmem:[%s575 + $0x2e0] sm:$0xff] %v760
                %v762 = vld [vmem:[%s574 + $0x768] sm:$0xff]
                %763 = vst [vmem:[%s575 + $0x2e8] sm:$0xff] %v762
                %v764 = vld [vmem:[%s574 + $0x770] sm:$0xff]
                %765 = vst [vmem:[%s575 + $0x2f0] sm:$0xff] %v764
                %v766 = vld [vmem:[%s574 + $0x778] sm:$0xff]
                %767 = vst [vmem:[%s575 + $0x2f8] sm:$0xff] %v766
                %v768 = vld [vmem:[%s574 + $0xc00] sm:$0xff]
                %769 = vst [vmem:[%s575 + $0x300] sm:$0xff] %v768
                %v770 = vld [vmem:[%s574 + $0xc08] sm:$0xff]
                %771 = vst [vmem:[%s575 + $0x308] sm:$0xff] %v770
                %v772 = vld [vmem:[%s574 + $0xc10] sm:$0xff]
                %773 = vst [vmem:[%s575 + $0x310] sm:$0xff] %v772
                %v774 = vld [vmem:[%s574 + $0xc18] sm:$0xff]
                %775 = vst [vmem:[%s575 + $0x318] sm:$0xff] %v774
                %v776 = vld [vmem:[%s574 + $0xc20] sm:$0xff]
                %777 = vst [vmem:[%s575 + $0x320] sm:$0xff] %v776
                %v778 = vld [vmem:[%s574 + $0xc28] sm:$0xff]
                %779 = vst [vmem:[%s575 + $0x328] sm:$0xff] %v778
                %v780 = vld [vmem:[%s574 + $0xc30] sm:$0xff]
                %781 = vst [vmem:[%s575 + $0x330] sm:$0xff] %v780
                %v782 = vld [vmem:[%s574 + $0xc38] sm:$0xff]
                %783 = vst [vmem:[%s575 + $0x338] sm:$0xff] %v782
                %v784 = vld [vmem:[%s574 + $0xc40] sm:$0xff]
                %785 = vst [vmem:[%s575 + $0x340] sm:$0xff] %v784
                %v786 = vld [vmem:[%s574 + $0xc48] sm:$0xff]
                %787 = vst [vmem:[%s575 + $0x348] sm:$0xff] %v786
                %v788 = vld [vmem:[%s574 + $0xc50] sm:$0xff]
                %789 = vst [vmem:[%s575 + $0x350] sm:$0xff] %v788
                %v790 = vld [vmem:[%s574 + $0xc58] sm:$0xff]
                %791 = vst [vmem:[%s575 + $0x358] sm:$0xff] %v790
                %v792 = vld [vmem:[%s574 + $0xc60] sm:$0xff]
                %793 = vst [vmem:[%s575 + $0x360] sm:$0xff] %v792
                %v794 = vld [vmem:[%s574 + $0xc68] sm:$0xff]
                %795 = vst [vmem:[%s575 + $0x368] sm:$0xff] %v794
                %v796 = vld [vmem:[%s574 + $0xc70] sm:$0xff]
                %797 = vst [vmem:[%s575 + $0x370] sm:$0xff] %v796
                %v798 = vld [vmem:[%s574 + $0xc78] sm:$0xff]
                %799 = vst [vmem:[%s575 + $0x378] sm:$0xff] %v798
                %v800 = vld [vmem:[%s574 + $0xc80] sm:$0xff]
                %801 = vst [vmem:[%s575 + $0x380] sm:$0xff] %v800
                %v802 = vld [vmem:[%s574 + $0xc88] sm:$0xff]
                %803 = vst [vmem:[%s575 + $0x388] sm:$0xff] %v802
                %v804 = vld [vmem:[%s574 + $0xc90] sm:$0xff]
                %805 = vst [vmem:[%s575 + $0x390] sm:$0xff] %v804
                %v806 = vld [vmem:[%s574 + $0xc98] sm:$0xff]
                %807 = vst [vmem:[%s575 + $0x398] sm:$0xff] %v806
                %v808 = vld [vmem:[%s574 + $0xca0] sm:$0xff]
                %809 = vst [vmem:[%s575 + $0x3a0] sm:$0xff] %v808
                %v810 = vld [vmem:[%s574 + $0xca8] sm:$0xff]
                %811 = vst [vmem:[%s575 + $0x3a8] sm:$0xff] %v810
                %v812 = vld [vmem:[%s574 + $0xcb0] sm:$0xff]
                %813 = vst [vmem:[%s575 + $0x3b0] sm:$0xff] %v812
                %v814 = vld [vmem:[%s574 + $0xcb8] sm:$0xff]
                %815 = vst [vmem:[%s575 + $0x3b8] sm:$0xff] %v814
                %v816 = vld [vmem:[%s574 + $0xcc0] sm:$0xff]
                %817 = vst [vmem:[%s575 + $0x3c0] sm:$0xff] %v816
                %v818 = vld [vmem:[%s574 + $0xcc8] sm:$0xff]
                %819 = vst [vmem:[%s575 + $0x3c8] sm:$0xff] %v818
                %v820 = vld [vmem:[%s574 + $0xcd0] sm:$0xff]
                %821 = vst [vmem:[%s575 + $0x3d0] sm:$0xff] %v820
                %v822 = vld [vmem:[%s574 + $0xcd8] sm:$0xff]
                %823 = vst [vmem:[%s575 + $0x3d8] sm:$0xff] %v822
                %v824 = vld [vmem:[%s574 + $0xce0] sm:$0xff]
                %825 = vst [vmem:[%s575 + $0x3e0] sm:$0xff] %v824
                %v826 = vld [vmem:[%s574 + $0xce8] sm:$0xff]
                %827 = vst [vmem:[%s575 + $0x3e8] sm:$0xff] %v826
                %v828 = vld [vmem:[%s574 + $0xcf0] sm:$0xff]
                %829 = vst [vmem:[%s575 + $0x3f0] sm:$0xff] %v828
                %v830 = vld [vmem:[%s574 + $0xcf8] sm:$0xff]
                %831 = vst [vmem:[%s575 + $0x3f8] sm:$0xff] %v830
                %v832 = vld [vmem:[%s574 + $0xd00] sm:$0xff]
                %833 = vst [vmem:[%s575 + $0x400] sm:$0xff] %v832
                %v834 = vld [vmem:[%s574 + $0xd08] sm:$0xff]
                %835 = vst [vmem:[%s575 + $0x408] sm:$0xff] %v834
                %v836 = vld [vmem:[%s574 + $0xd10] sm:$0xff]
                %837 = vst [vmem:[%s575 + $0x410] sm:$0xff] %v836
                %v838 = vld [vmem:[%s574 + $0xd18] sm:$0xff]
                %839 = vst [vmem:[%s575 + $0x418] sm:$0xff] %v838
                %v840 = vld [vmem:[%s574 + $0xd20] sm:$0xff]
                %841 = vst [vmem:[%s575 + $0x420] sm:$0xff] %v840
                %v842 = vld [vmem:[%s574 + $0xd28] sm:$0xff]
                %843 = vst [vmem:[%s575 + $0x428] sm:$0xff] %v842
                %v844 = vld [vmem:[%s574 + $0xd30] sm:$0xff]
                %845 = vst [vmem:[%s575 + $0x430] sm:$0xff] %v844
                %v846 = vld [vmem:[%s574 + $0xd38] sm:$0xff]
                %847 = vst [vmem:[%s575 + $0x438] sm:$0xff] %v846
                %v848 = vld [vmem:[%s574 + $0xd40] sm:$0xff]
                %849 = vst [vmem:[%s575 + $0x440] sm:$0xff] %v848
                %v850 = vld [vmem:[%s574 + $0xd48] sm:$0xff]
                %851 = vst [vmem:[%s575 + $0x448] sm:$0xff] %v850
                %v852 = vld [vmem:[%s574 + $0xd50] sm:$0xff]
                %853 = vst [vmem:[%s575 + $0x450] sm:$0xff] %v852
                %v854 = vld [vmem:[%s574 + $0xd58] sm:$0xff]
                %855 = vst [vmem:[%s575 + $0x458] sm:$0xff] %v854
                %v856 = vld [vmem:[%s574 + $0xd60] sm:$0xff]
                %857 = vst [vmem:[%s575 + $0x460] sm:$0xff] %v856
                %v858 = vld [vmem:[%s574 + $0xd68] sm:$0xff]
                %859 = vst [vmem:[%s575 + $0x468] sm:$0xff] %v858
                %v860 = vld [vmem:[%s574 + $0xd70] sm:$0xff]
                %861 = vst [vmem:[%s575 + $0x470] sm:$0xff] %v860
                %v862 = vld [vmem:[%s574 + $0xd78] sm:$0xff]
                %863 = vst [vmem:[%s575 + $0x478] sm:$0xff] %v862
                %v864 = vld [vmem:[%s574 + $0x1200] sm:$0xff]
                %865 = vst [vmem:[%s575 + $0x480] sm:$0xff] %v864
                %v866 = vld [vmem:[%s574 + $0x1208] sm:$0xff]
                %867 = vst [vmem:[%s575 + $0x488] sm:$0xff] %v866
                %v868 = vld [vmem:[%s574 + $0x1210] sm:$0xff]
                %869 = vst [vmem:[%s575 + $0x490] sm:$0xff] %v868
                %v870 = vld [vmem:[%s574 + $0x1218] sm:$0xff]
                %871 = vst [vmem:[%s575 + $0x498] sm:$0xff] %v870
                %v872 = vld [vmem:[%s574 + $0x1220] sm:$0xff]
                %873 = vst [vmem:[%s575 + $0x4a0] sm:$0xff] %v872
                %v874 = vld [vmem:[%s574 + $0x1228] sm:$0xff]
                %875 = vst [vmem:[%s575 + $0x4a8] sm:$0xff] %v874
                %v876 = vld [vmem:[%s574 + $0x1230] sm:$0xff]
                %877 = vst [vmem:[%s575 + $0x4b0] sm:$0xff] %v876
                %v878 = vld [vmem:[%s574 + $0x1238] sm:$0xff]
                %879 = vst [vmem:[%s575 + $0x4b8] sm:$0xff] %v878
                %v880 = vld [vmem:[%s574 + $0x1240] sm:$0xff]
                %881 = vst [vmem:[%s575 + $0x4c0] sm:$0xff] %v880
                %v882 = vld [vmem:[%s574 + $0x1248] sm:$0xff]
                %883 = vst [vmem:[%s575 + $0x4c8] sm:$0xff] %v882
                %v884 = vld [vmem:[%s574 + $0x1250] sm:$0xff]
                %885 = vst [vmem:[%s575 + $0x4d0] sm:$0xff] %v884
                %v886 = vld [vmem:[%s574 + $0x1258] sm:$0xff]
                %887 = vst [vmem:[%s575 + $0x4d8] sm:$0xff] %v886
                %v888 = vld [vmem:[%s574 + $0x1260] sm:$0xff]
                %889 = vst [vmem:[%s575 + $0x4e0] sm:$0xff] %v888
                %v890 = vld [vmem:[%s574 + $0x1268] sm:$0xff]
                %891 = vst [vmem:[%s575 + $0x4e8] sm:$0xff] %v890
                %v892 = vld [vmem:[%s574 + $0x1270] sm:$0xff]
                %893 = vst [vmem:[%s575 + $0x4f0] sm:$0xff] %v892
                %v894 = vld [vmem:[%s574 + $0x1278] sm:$0xff]
                %895 = vst [vmem:[%s575 + $0x4f8] sm:$0xff] %v894
                %v896 = vld [vmem:[%s574 + $0x1280] sm:$0xff]
                %897 = vst [vmem:[%s575 + $0x500] sm:$0xff] %v896
                %v898 = vld [vmem:[%s574 + $0x1288] sm:$0xff]
                %899 = vst [vmem:[%s575 + $0x508] sm:$0xff] %v898
                %v900 = vld [vmem:[%s574 + $0x1290] sm:$0xff]
                %901 = vst [vmem:[%s575 + $0x510] sm:$0xff] %v900
                %v902 = vld [vmem:[%s574 + $0x1298] sm:$0xff]
                %903 = vst [vmem:[%s575 + $0x518] sm:$0xff] %v902
                %v904 = vld [vmem:[%s574 + $0x12a0] sm:$0xff]
                %905 = vst [vmem:[%s575 + $0x520] sm:$0xff] %v904
                %v906 = vld [vmem:[%s574 + $0x12a8] sm:$0xff]
                %907 = vst [vmem:[%s575 + $0x528] sm:$0xff] %v906
                %v908 = vld [vmem:[%s574 + $0x12b0] sm:$0xff]
                %909 = vst [vmem:[%s575 + $0x530] sm:$0xff] %v908
                %v910 = vld [vmem:[%s574 + $0x12b8] sm:$0xff]
                %911 = vst [vmem:[%s575 + $0x538] sm:$0xff] %v910
                %v912 = vld [vmem:[%s574 + $0x12c0] sm:$0xff]
                %913 = vst [vmem:[%s575 + $0x540] sm:$0xff] %v912
                %v914 = vld [vmem:[%s574 + $0x12c8] sm:$0xff]
                %915 = vst [vmem:[%s575 + $0x548] sm:$0xff] %v914
                %v916 = vld [vmem:[%s574 + $0x12d0] sm:$0xff]
                %917 = vst [vmem:[%s575 + $0x550] sm:$0xff] %v916
                %v918 = vld [vmem:[%s574 + $0x12d8] sm:$0xff]
                %919 = vst [vmem:[%s575 + $0x558] sm:$0xff] %v918
                %v920 = vld [vmem:[%s574 + $0x12e0] sm:$0xff]
                %921 = vst [vmem:[%s575 + $0x560] sm:$0xff] %v920
                %v922 = vld [vmem:[%s574 + $0x12e8] sm:$0xff]
                %923 = vst [vmem:[%s575 + $0x568] sm:$0xff] %v922
                %v924 = vld [vmem:[%s574 + $0x12f0] sm:$0xff]
                %925 = vst [vmem:[%s575 + $0x570] sm:$0xff] %v924
                %v926 = vld [vmem:[%s574 + $0x12f8] sm:$0xff]
                %927 = vst [vmem:[%s575 + $0x578] sm:$0xff] %v926
                %v928 = vld [vmem:[%s574 + $0x1300] sm:$0xff]
                %929 = vst [vmem:[%s575 + $0x580] sm:$0xff] %v928
                %v930 = vld [vmem:[%s574 + $0x1308] sm:$0xff]
                %931 = vst [vmem:[%s575 + $0x588] sm:$0xff] %v930
                %v932 = vld [vmem:[%s574 + $0x1310] sm:$0xff]
                %933 = vst [vmem:[%s575 + $0x590] sm:$0xff] %v932
                %v934 = vld [vmem:[%s574 + $0x1318] sm:$0xff]
                %935 = vst [vmem:[%s575 + $0x598] sm:$0xff] %v934
                %v936 = vld [vmem:[%s574 + $0x1320] sm:$0xff]
                %937 = vst [vmem:[%s575 + $0x5a0] sm:$0xff] %v936
                %v938 = vld [vmem:[%s574 + $0x1328] sm:$0xff]
                %939 = vst [vmem:[%s575 + $0x5a8] sm:$0xff] %v938
                %v940 = vld [vmem:[%s574 + $0x1330] sm:$0xff]
                %941 = vst [vmem:[%s575 + $0x5b0] sm:$0xff] %v940
                %v942 = vld [vmem:[%s574 + $0x1338] sm:$0xff]
                %943 = vst [vmem:[%s575 + $0x5b8] sm:$0xff] %v942
                %v944 = vld [vmem:[%s574 + $0x1340] sm:$0xff]
                %945 = vst [vmem:[%s575 + $0x5c0] sm:$0xff] %v944
                %v946 = vld [vmem:[%s574 + $0x1348] sm:$0xff]
                %947 = vst [vmem:[%s575 + $0x5c8] sm:$0xff] %v946
                %v948 = vld [vmem:[%s574 + $0x1350] sm:$0xff]
                %949 = vst [vmem:[%s575 + $0x5d0] sm:$0xff] %v948
                %v950 = vld [vmem:[%s574 + $0x1358] sm:$0xff]
                %951 = vst [vmem:[%s575 + $0x5d8] sm:$0xff] %v950
                %v952 = vld [vmem:[%s574 + $0x1360] sm:$0xff]
                %953 = vst [vmem:[%s575 + $0x5e0] sm:$0xff] %v952
                %v954 = vld [vmem:[%s574 + $0x1368] sm:$0xff]
                %955 = vst [vmem:[%s575 + $0x5e8] sm:$0xff] %v954
                %v956 = vld [vmem:[%s574 + $0x1370] sm:$0xff]
                %957 = vst [vmem:[%s575 + $0x5f0] sm:$0xff] %v956
                %v958 = vld [vmem:[%s574 + $0x1378] sm:$0xff]
                %959 = vst [vmem:[%s575 + $0x5f8] sm:$0xff] %v958
                %v960 = vld [vmem:[%s574 + $0x1800] sm:$0xff]
                %961 = vst [vmem:[%s575 + $0x600] sm:$0xff] %v960
                %v962 = vld [vmem:[%s574 + $0x1808] sm:$0xff]
                %963 = vst [vmem:[%s575 + $0x608] sm:$0xff] %v962
                %v964 = vld [vmem:[%s574 + $0x1810] sm:$0xff]
                %965 = vst [vmem:[%s575 + $0x610] sm:$0xff] %v964
                %v966 = vld [vmem:[%s574 + $0x1818] sm:$0xff]
                %967 = vst [vmem:[%s575 + $0x618] sm:$0xff] %v966
                %v968 = vld [vmem:[%s574 + $0x1820] sm:$0xff]
                %969 = vst [vmem:[%s575 + $0x620] sm:$0xff] %v968
                %v970 = vld [vmem:[%s574 + $0x1828] sm:$0xff]
                %971 = vst [vmem:[%s575 + $0x628] sm:$0xff] %v970
                %v972 = vld [vmem:[%s574 + $0x1830] sm:$0xff]
                %973 = vst [vmem:[%s575 + $0x630] sm:$0xff] %v972
                %v974 = vld [vmem:[%s574 + $0x1838] sm:$0xff]
                %975 = vst [vmem:[%s575 + $0x638] sm:$0xff] %v974
                %v976 = vld [vmem:[%s574 + $0x1840] sm:$0xff]
                %977 = vst [vmem:[%s575 + $0x640] sm:$0xff] %v976
                %v978 = vld [vmem:[%s574 + $0x1848] sm:$0xff]
                %979 = vst [vmem:[%s575 + $0x648] sm:$0xff] %v978
                %v980 = vld [vmem:[%s574 + $0x1850] sm:$0xff]
                %981 = vst [vmem:[%s575 + $0x650] sm:$0xff] %v980
                %v982 = vld [vmem:[%s574 + $0x1858] sm:$0xff]
                %983 = vst [vmem:[%s575 + $0x658] sm:$0xff] %v982
                %v984 = vld [vmem:[%s574 + $0x1860] sm:$0xff]
                %985 = vst [vmem:[%s575 + $0x660] sm:$0xff] %v984
                %v986 = vld [vmem:[%s574 + $0x1868] sm:$0xff]
                %987 = vst [vmem:[%s575 + $0x668] sm:$0xff] %v986
                %v988 = vld [vmem:[%s574 + $0x1870] sm:$0xff]
                %989 = vst [vmem:[%s575 + $0x670] sm:$0xff] %v988
                %v990 = vld [vmem:[%s574 + $0x1878] sm:$0xff]
                %991 = vst [vmem:[%s575 + $0x678] sm:$0xff] %v990
                %v992 = vld [vmem:[%s574 + $0x1880] sm:$0xff]
                %993 = vst [vmem:[%s575 + $0x680] sm:$0xff] %v992
                %v994 = vld [vmem:[%s574 + $0x1888] sm:$0xff]
                %995 = vst [vmem:[%s575 + $0x688] sm:$0xff] %v994
                %v996 = vld [vmem:[%s574 + $0x1890] sm:$0xff]
                %997 = vst [vmem:[%s575 + $0x690] sm:$0xff] %v996
                %v998 = vld [vmem:[%s574 + $0x1898] sm:$0xff]
                %999 = vst [vmem:[%s575 + $0x698] sm:$0xff] %v998
                %v1000 = vld [vmem:[%s574 + $0x18a0] sm:$0xff]
                %1001 = vst [vmem:[%s575 + $0x6a0] sm:$0xff] %v1000
                %v1002 = vld [vmem:[%s574 + $0x18a8] sm:$0xff]
                %1003 = vst [vmem:[%s575 + $0x6a8] sm:$0xff] %v1002
                %v1004 = vld [vmem:[%s574 + $0x18b0] sm:$0xff]
                %1005 = vst [vmem:[%s575 + $0x6b0] sm:$0xff] %v1004
                %v1006 = vld [vmem:[%s574 + $0x18b8] sm:$0xff]
                %1007 = vst [vmem:[%s575 + $0x6b8] sm:$0xff] %v1006
                %v1008 = vld [vmem:[%s574 + $0x18c0] sm:$0xff]
                %1009 = vst [vmem:[%s575 + $0x6c0] sm:$0xff] %v1008
                %v1010 = vld [vmem:[%s574 + $0x18c8] sm:$0xff]
                %1011 = vst [vmem:[%s575 + $0x6c8] sm:$0xff] %v1010
                %v1012 = vld [vmem:[%s574 + $0x18d0] sm:$0xff]
                %1013 = vst [vmem:[%s575 + $0x6d0] sm:$0xff] %v1012
                %v1014 = vld [vmem:[%s574 + $0x18d8] sm:$0xff]
                %1015 = vst [vmem:[%s575 + $0x6d8] sm:$0xff] %v1014
                %v1016 = vld [vmem:[%s574 + $0x18e0] sm:$0xff]
                %1017 = vst [vmem:[%s575 + $0x6e0] sm:$0xff] %v1016
                %v1018 = vld [vmem:[%s574 + $0x18e8] sm:$0xff]
                %1019 = vst [vmem:[%s575 + $0x6e8] sm:$0xff] %v1018
                %v1020 = vld [vmem:[%s574 + $0x18f0] sm:$0xff]
                %1021 = vst [vmem:[%s575 + $0x6f0] sm:$0xff] %v1020
                %v1022 = vld [vmem:[%s574 + $0x18f8] sm:$0xff]
                %1023 = vst [vmem:[%s575 + $0x6f8] sm:$0xff] %v1022
                %v1024 = vld [vmem:[%s574 + $0x1900] sm:$0xff]
                %1025 = vst [vmem:[%s575 + $0x700] sm:$0xff] %v1024
                %v1026 = vld [vmem:[%s574 + $0x1908] sm:$0xff]
                %1027 = vst [vmem:[%s575 + $0x708] sm:$0xff] %v1026
                %v1028 = vld [vmem:[%s574 + $0x1910] sm:$0xff]
                %1029 = vst [vmem:[%s575 + $0x710] sm:$0xff] %v1028
                %v1030 = vld [vmem:[%s574 + $0x1918] sm:$0xff]
                %1031 = vst [vmem:[%s575 + $0x718] sm:$0xff] %v1030
                %v1032 = vld [vmem:[%s574 + $0x1920] sm:$0xff]
                %1033 = vst [vmem:[%s575 + $0x720] sm:$0xff] %v1032
                %v1034 = vld [vmem:[%s574 + $0x1928] sm:$0xff]
                %1035 = vst [vmem:[%s575 + $0x728] sm:$0xff] %v1034
                %v1036 = vld [vmem:[%s574 + $0x1930] sm:$0xff]
                %1037 = vst [vmem:[%s575 + $0x730] sm:$0xff] %v1036
                %v1038 = vld [vmem:[%s574 + $0x1938] sm:$0xff]
                %1039 = vst [vmem:[%s575 + $0x738] sm:$0xff] %v1038
                %v1040 = vld [vmem:[%s574 + $0x1940] sm:$0xff]
                %1041 = vst [vmem:[%s575 + $0x740] sm:$0xff] %v1040
                %v1042 = vld [vmem:[%s574 + $0x1948] sm:$0xff]
                %1043 = vst [vmem:[%s575 + $0x748] sm:$0xff] %v1042
                %v1044 = vld [vmem:[%s574 + $0x1950] sm:$0xff]
                %1045 = vst [vmem:[%s575 + $0x750] sm:$0xff] %v1044
                %v1046 = vld [vmem:[%s574 + $0x1958] sm:$0xff]
                %1047 = vst [vmem:[%s575 + $0x758] sm:$0xff] %v1046
                %v1048 = vld [vmem:[%s574 + $0x1960] sm:$0xff]
                %1049 = vst [vmem:[%s575 + $0x760] sm:$0xff] %v1048
                %v1050 = vld [vmem:[%s574 + $0x1968] sm:$0xff]
                %1051 = vst [vmem:[%s575 + $0x768] sm:$0xff] %v1050
                %v1052 = vld [vmem:[%s574 + $0x1970] sm:$0xff]
                %1053 = vst [vmem:[%s575 + $0x770] sm:$0xff] %v1052
                %v1054 = vld [vmem:[%s574 + $0x1978] sm:$0xff]
                %1055 = vst [vmem:[%s575 + $0x778] sm:$0xff] %v1054
                %v1056 = vld [vmem:[%s574 + $0x1e00] sm:$0xff]
                %1057 = vst [vmem:[%s575 + $0x780] sm:$0xff] %v1056
                %v1058 = vld [vmem:[%s574 + $0x1e08] sm:$0xff]
                %1059 = vst [vmem:[%s575 + $0x788] sm:$0xff] %v1058
                %v1060 = vld [vmem:[%s574 + $0x1e10] sm:$0xff]
                %1061 = vst [vmem:[%s575 + $0x790] sm:$0xff] %v1060
                %v1062 = vld [vmem:[%s574 + $0x1e18] sm:$0xff]
                %1063 = vst [vmem:[%s575 + $0x798] sm:$0xff] %v1062
                %v1064 = vld [vmem:[%s574 + $0x1e20] sm:$0xff]
                %1065 = vst [vmem:[%s575 + $0x7a0] sm:$0xff] %v1064
                %v1066 = vld [vmem:[%s574 + $0x1e28] sm:$0xff]
                %1067 = vst [vmem:[%s575 + $0x7a8] sm:$0xff] %v1066
                %v1068 = vld [vmem:[%s574 + $0x1e30] sm:$0xff]
                %1069 = vst [vmem:[%s575 + $0x7b0] sm:$0xff] %v1068
                %v1070 = vld [vmem:[%s574 + $0x1e38] sm:$0xff]
                %1071 = vst [vmem:[%s575 + $0x7b8] sm:$0xff] %v1070
                %v1072 = vld [vmem:[%s574 + $0x1e40] sm:$0xff]
                %1073 = vst [vmem:[%s575 + $0x7c0] sm:$0xff] %v1072
                %v1074 = vld [vmem:[%s574 + $0x1e48] sm:$0xff]
                %1075 = vst [vmem:[%s575 + $0x7c8] sm:$0xff] %v1074
                %v1076 = vld [vmem:[%s574 + $0x1e50] sm:$0xff]
                %1077 = vst [vmem:[%s575 + $0x7d0] sm:$0xff] %v1076
                %v1078 = vld [vmem:[%s574 + $0x1e58] sm:$0xff]
                %1079 = vst [vmem:[%s575 + $0x7d8] sm:$0xff] %v1078
                %v1080 = vld [vmem:[%s574 + $0x1e60] sm:$0xff]
                %1081 = vst [vmem:[%s575 + $0x7e0] sm:$0xff] %v1080
                %v1082 = vld [vmem:[%s574 + $0x1e68] sm:$0xff]
                %1083 = vst [vmem:[%s575 + $0x7e8] sm:$0xff] %v1082
                %v1084 = vld [vmem:[%s574 + $0x1e70] sm:$0xff]
                %1085 = vst [vmem:[%s575 + $0x7f0] sm:$0xff] %v1084
                %v1086 = vld [vmem:[%s574 + $0x1e78] sm:$0xff]
                %1087 = vst [vmem:[%s575 + $0x7f8] sm:$0xff] %v1086
                %v1088 = vld [vmem:[%s574 + $0x1e80] sm:$0xff]
                %1089 = vst [vmem:[%s575 + $0x800] sm:$0xff] %v1088
                %v1090 = vld [vmem:[%s574 + $0x1e88] sm:$0xff]
                %1091 = vst [vmem:[%s575 + $0x808] sm:$0xff] %v1090
                %v1092 = vld [vmem:[%s574 + $0x1e90] sm:$0xff]
                %1093 = vst [vmem:[%s575 + $0x810] sm:$0xff] %v1092
                %v1094 = vld [vmem:[%s574 + $0x1e98] sm:$0xff]
                %1095 = vst [vmem:[%s575 + $0x818] sm:$0xff] %v1094
                %v1096 = vld [vmem:[%s574 + $0x1ea0] sm:$0xff]
                %1097 = vst [vmem:[%s575 + $0x820] sm:$0xff] %v1096
                %v1098 = vld [vmem:[%s574 + $0x1ea8] sm:$0xff]
                %1099 = vst [vmem:[%s575 + $0x828] sm:$0xff] %v1098
                %v1100 = vld [vmem:[%s574 + $0x1eb0] sm:$0xff]
                %1101 = vst [vmem:[%s575 + $0x830] sm:$0xff] %v1100
                %v1102 = vld [vmem:[%s574 + $0x1eb8] sm:$0xff]
                %1103 = vst [vmem:[%s575 + $0x838] sm:$0xff] %v1102
                %v1104 = vld [vmem:[%s574 + $0x1ec0] sm:$0xff]
                %1105 = vst [vmem:[%s575 + $0x840] sm:$0xff] %v1104
                %v1106 = vld [vmem:[%s574 + $0x1ec8] sm:$0xff]
                %1107 = vst [vmem:[%s575 + $0x848] sm:$0xff] %v1106
                %v1108 = vld [vmem:[%s574 + $0x1ed0] sm:$0xff]
                %1109 = vst [vmem:[%s575 + $0x850] sm:$0xff] %v1108
                %v1110 = vld [vmem:[%s574 + $0x1ed8] sm:$0xff]
                %1111 = vst [vmem:[%s575 + $0x858] sm:$0xff] %v1110
                %v1112 = vld [vmem:[%s574 + $0x1ee0] sm:$0xff]
                %1113 = vst [vmem:[%s575 + $0x860] sm:$0xff] %v1112
                %v1114 = vld [vmem:[%s574 + $0x1ee8] sm:$0xff]
                %1115 = vst [vmem:[%s575 + $0x868] sm:$0xff] %v1114
                %v1116 = vld [vmem:[%s574 + $0x1ef0] sm:$0xff]
                %1117 = vst [vmem:[%s575 + $0x870] sm:$0xff] %v1116
                %v1118 = vld [vmem:[%s574 + $0x1ef8] sm:$0xff]
                %1119 = vst [vmem:[%s575 + $0x878] sm:$0xff] %v1118
                %v1120 = vld [vmem:[%s574 + $0x1f00] sm:$0xff]
                %1121 = vst [vmem:[%s575 + $0x880] sm:$0xff] %v1120
                %v1122 = vld [vmem:[%s574 + $0x1f08] sm:$0xff]
                %1123 = vst [vmem:[%s575 + $0x888] sm:$0xff] %v1122
                %v1124 = vld [vmem:[%s574 + $0x1f10] sm:$0xff]
                %1125 = vst [vmem:[%s575 + $0x890] sm:$0xff] %v1124
                %v1126 = vld [vmem:[%s574 + $0x1f18] sm:$0xff]
                %1127 = vst [vmem:[%s575 + $0x898] sm:$0xff] %v1126
                %v1128 = vld [vmem:[%s574 + $0x1f20] sm:$0xff]
                %1129 = vst [vmem:[%s575 + $0x8a0] sm:$0xff] %v1128
                %v1130 = vld [vmem:[%s574 + $0x1f28] sm:$0xff]
                %1131 = vst [vmem:[%s575 + $0x8a8] sm:$0xff] %v1130
                %v1132 = vld [vmem:[%s574 + $0x1f30] sm:$0xff]
                %1133 = vst [vmem:[%s575 + $0x8b0] sm:$0xff] %v1132
                %v1134 = vld [vmem:[%s574 + $0x1f38] sm:$0xff]
                %1135 = vst [vmem:[%s575 + $0x8b8] sm:$0xff] %v1134
                %v1136 = vld [vmem:[%s574 + $0x1f40] sm:$0xff]
                %1137 = vst [vmem:[%s575 + $0x8c0] sm:$0xff] %v1136
                %v1138 = vld [vmem:[%s574 + $0x1f48] sm:$0xff]
                %1139 = vst [vmem:[%s575 + $0x8c8] sm:$0xff] %v1138
                %v1140 = vld [vmem:[%s574 + $0x1f50] sm:$0xff]
                %1141 = vst [vmem:[%s575 + $0x8d0] sm:$0xff] %v1140
                %v1142 = vld [vmem:[%s574 + $0x1f58] sm:$0xff]
                %1143 = vst [vmem:[%s575 + $0x8d8] sm:$0xff] %v1142
                %v1144 = vld [vmem:[%s574 + $0x1f60] sm:$0xff]
                %1145 = vst [vmem:[%s575 + $0x8e0] sm:$0xff] %v1144
                %v1146 = vld [vmem:[%s574 + $0x1f68] sm:$0xff]
                %1147 = vst [vmem:[%s575 + $0x8e8] sm:$0xff] %v1146
                %v1148 = vld [vmem:[%s574 + $0x1f70] sm:$0xff]
                %1149 = vst [vmem:[%s575 + $0x8f0] sm:$0xff] %v1148
                %v1150 = vld [vmem:[%s574 + $0x1f78] sm:$0xff]
                %1151 = vst [vmem:[%s575 + $0x8f8] sm:$0xff] %v1150
                %v1152 = vld [vmem:[%s574 + $0x2400] sm:$0xff]
                %1153 = vst [vmem:[%s575 + $0x900] sm:$0xff] %v1152
                %v1154 = vld [vmem:[%s574 + $0x2408] sm:$0xff]
                %1155 = vst [vmem:[%s575 + $0x908] sm:$0xff] %v1154
                %v1156 = vld [vmem:[%s574 + $0x2410] sm:$0xff]
                %1157 = vst [vmem:[%s575 + $0x910] sm:$0xff] %v1156
                %v1158 = vld [vmem:[%s574 + $0x2418] sm:$0xff]
                %1159 = vst [vmem:[%s575 + $0x918] sm:$0xff] %v1158
                %v1160 = vld [vmem:[%s574 + $0x2420] sm:$0xff]
                %1161 = vst [vmem:[%s575 + $0x920] sm:$0xff] %v1160
                %v1162 = vld [vmem:[%s574 + $0x2428] sm:$0xff]
                %1163 = vst [vmem:[%s575 + $0x928] sm:$0xff] %v1162
                %v1164 = vld [vmem:[%s574 + $0x2430] sm:$0xff]
                %1165 = vst [vmem:[%s575 + $0x930] sm:$0xff] %v1164
                %v1166 = vld [vmem:[%s574 + $0x2438] sm:$0xff]
                %1167 = vst [vmem:[%s575 + $0x938] sm:$0xff] %v1166
                %v1168 = vld [vmem:[%s574 + $0x2440] sm:$0xff]
                %1169 = vst [vmem:[%s575 + $0x940] sm:$0xff] %v1168
                %v1170 = vld [vmem:[%s574 + $0x2448] sm:$0xff]
                %1171 = vst [vmem:[%s575 + $0x948] sm:$0xff] %v1170
                %v1172 = vld [vmem:[%s574 + $0x2450] sm:$0xff]
                %1173 = vst [vmem:[%s575 + $0x950] sm:$0xff] %v1172
                %v1174 = vld [vmem:[%s574 + $0x2458] sm:$0xff]
                %1175 = vst [vmem:[%s575 + $0x958] sm:$0xff] %v1174
                %v1176 = vld [vmem:[%s574 + $0x2460] sm:$0xff]
                %1177 = vst [vmem:[%s575 + $0x960] sm:$0xff] %v1176
                %v1178 = vld [vmem:[%s574 + $0x2468] sm:$0xff]
                %1179 = vst [vmem:[%s575 + $0x968] sm:$0xff] %v1178
                %v1180 = vld [vmem:[%s574 + $0x2470] sm:$0xff]
                %1181 = vst [vmem:[%s575 + $0x970] sm:$0xff] %v1180
                %v1182 = vld [vmem:[%s574 + $0x2478] sm:$0xff]
                %1183 = vst [vmem:[%s575 + $0x978] sm:$0xff] %v1182
                %v1184 = vld [vmem:[%s574 + $0x2480] sm:$0xff]
                %1185 = vst [vmem:[%s575 + $0x980] sm:$0xff] %v1184
                %v1186 = vld [vmem:[%s574 + $0x2488] sm:$0xff]
                %1187 = vst [vmem:[%s575 + $0x988] sm:$0xff] %v1186
                %v1188 = vld [vmem:[%s574 + $0x2490] sm:$0xff]
                %1189 = vst [vmem:[%s575 + $0x990] sm:$0xff] %v1188
                %v1190 = vld [vmem:[%s574 + $0x2498] sm:$0xff]
                %1191 = vst [vmem:[%s575 + $0x998] sm:$0xff] %v1190
                %v1192 = vld [vmem:[%s574 + $0x24a0] sm:$0xff]
                %1193 = vst [vmem:[%s575 + $0x9a0] sm:$0xff] %v1192
                %v1194 = vld [vmem:[%s574 + $0x24a8] sm:$0xff]
                %1195 = vst [vmem:[%s575 + $0x9a8] sm:$0xff] %v1194
                %v1196 = vld [vmem:[%s574 + $0x24b0] sm:$0xff]
                %1197 = vst [vmem:[%s575 + $0x9b0] sm:$0xff] %v1196
                %v1198 = vld [vmem:[%s574 + $0x24b8] sm:$0xff]
                %1199 = vst [vmem:[%s575 + $0x9b8] sm:$0xff] %v1198
                %v1200 = vld [vmem:[%s574 + $0x24c0] sm:$0xff]
                %1201 = vst [vmem:[%s575 + $0x9c0] sm:$0xff] %v1200
                %v1202 = vld [vmem:[%s574 + $0x24c8] sm:$0xff]
                %1203 = vst [vmem:[%s575 + $0x9c8] sm:$0xff] %v1202
                %v1204 = vld [vmem:[%s574 + $0x24d0] sm:$0xff]
                %1205 = vst [vmem:[%s575 + $0x9d0] sm:$0xff] %v1204
                %v1206 = vld [vmem:[%s574 + $0x24d8] sm:$0xff]
                %1207 = vst [vmem:[%s575 + $0x9d8] sm:$0xff] %v1206
                %v1208 = vld [vmem:[%s574 + $0x24e0] sm:$0xff]
                %1209 = vst [vmem:[%s575 + $0x9e0] sm:$0xff] %v1208
                %v1210 = vld [vmem:[%s574 + $0x24e8] sm:$0xff]
                %1211 = vst [vmem:[%s575 + $0x9e8] sm:$0xff] %v1210
                %v1212 = vld [vmem:[%s574 + $0x24f0] sm:$0xff]
                %1213 = vst [vmem:[%s575 + $0x9f0] sm:$0xff] %v1212
                %v1214 = vld [vmem:[%s574 + $0x24f8] sm:$0xff]
                %1215 = vst [vmem:[%s575 + $0x9f8] sm:$0xff] %v1214
                %v1216 = vld [vmem:[%s574 + $0x2500] sm:$0xff]
                %1217 = vst [vmem:[%s575 + $0xa00] sm:$0xff] %v1216
                %v1218 = vld [vmem:[%s574 + $0x2508] sm:$0xff]
                %1219 = vst [vmem:[%s575 + $0xa08] sm:$0xff] %v1218
                %v1220 = vld [vmem:[%s574 + $0x2510] sm:$0xff]
                %1221 = vst [vmem:[%s575 + $0xa10] sm:$0xff] %v1220
                %v1222 = vld [vmem:[%s574 + $0x2518] sm:$0xff]
                %1223 = vst [vmem:[%s575 + $0xa18] sm:$0xff] %v1222
                %v1224 = vld [vmem:[%s574 + $0x2520] sm:$0xff]
                %1225 = vst [vmem:[%s575 + $0xa20] sm:$0xff] %v1224
                %v1226 = vld [vmem:[%s574 + $0x2528] sm:$0xff]
                %1227 = vst [vmem:[%s575 + $0xa28] sm:$0xff] %v1226
                %v1228 = vld [vmem:[%s574 + $0x2530] sm:$0xff]
                %1229 = vst [vmem:[%s575 + $0xa30] sm:$0xff] %v1228
                %v1230 = vld [vmem:[%s574 + $0x2538] sm:$0xff]
                %1231 = vst [vmem:[%s575 + $0xa38] sm:$0xff] %v1230
                %v1232 = vld [vmem:[%s574 + $0x2540] sm:$0xff]
                %1233 = vst [vmem:[%s575 + $0xa40] sm:$0xff] %v1232
                %v1234 = vld [vmem:[%s574 + $0x2548] sm:$0xff]
                %1235 = vst [vmem:[%s575 + $0xa48] sm:$0xff] %v1234
                %v1236 = vld [vmem:[%s574 + $0x2550] sm:$0xff]
                %1237 = vst [vmem:[%s575 + $0xa50] sm:$0xff] %v1236
                %v1238 = vld [vmem:[%s574 + $0x2558] sm:$0xff]
                %1239 = vst [vmem:[%s575 + $0xa58] sm:$0xff] %v1238
                %v1240 = vld [vmem:[%s574 + $0x2560] sm:$0xff]
                %1241 = vst [vmem:[%s575 + $0xa60] sm:$0xff] %v1240
                %v1242 = vld [vmem:[%s574 + $0x2568] sm:$0xff]
                %1243 = vst [vmem:[%s575 + $0xa68] sm:$0xff] %v1242
                %v1244 = vld [vmem:[%s574 + $0x2570] sm:$0xff]
                %1245 = vst [vmem:[%s575 + $0xa70] sm:$0xff] %v1244
                %v1246 = vld [vmem:[%s574 + $0x2578] sm:$0xff]
                %1247 = vst [vmem:[%s575 + $0xa78] sm:$0xff] %v1246
                %v1248 = vld [vmem:[%s574 + $0x2a00] sm:$0xff]
                %1249 = vst [vmem:[%s575 + $0xa80] sm:$0xff] %v1248
                %v1250 = vld [vmem:[%s574 + $0x2a08] sm:$0xff]
                %1251 = vst [vmem:[%s575 + $0xa88] sm:$0xff] %v1250
                %v1252 = vld [vmem:[%s574 + $0x2a10] sm:$0xff]
                %1253 = vst [vmem:[%s575 + $0xa90] sm:$0xff] %v1252
                %v1254 = vld [vmem:[%s574 + $0x2a18] sm:$0xff]
                %1255 = vst [vmem:[%s575 + $0xa98] sm:$0xff] %v1254
                %v1256 = vld [vmem:[%s574 + $0x2a20] sm:$0xff]
                %1257 = vst [vmem:[%s575 + $0xaa0] sm:$0xff] %v1256
                %v1258 = vld [vmem:[%s574 + $0x2a28] sm:$0xff]
                %1259 = vst [vmem:[%s575 + $0xaa8] sm:$0xff] %v1258
                %v1260 = vld [vmem:[%s574 + $0x2a30] sm:$0xff]
                %1261 = vst [vmem:[%s575 + $0xab0] sm:$0xff] %v1260
                %v1262 = vld [vmem:[%s574 + $0x2a38] sm:$0xff]
                %1263 = vst [vmem:[%s575 + $0xab8] sm:$0xff] %v1262
                %v1264 = vld [vmem:[%s574 + $0x2a40] sm:$0xff]
                %1265 = vst [vmem:[%s575 + $0xac0] sm:$0xff] %v1264
                %v1266 = vld [vmem:[%s574 + $0x2a48] sm:$0xff]
                %1267 = vst [vmem:[%s575 + $0xac8] sm:$0xff] %v1266
                %v1268 = vld [vmem:[%s574 + $0x2a50] sm:$0xff]
                %1269 = vst [vmem:[%s575 + $0xad0] sm:$0xff] %v1268
                %v1270 = vld [vmem:[%s574 + $0x2a58] sm:$0xff]
                %1271 = vst [vmem:[%s575 + $0xad8] sm:$0xff] %v1270
                %v1272 = vld [vmem:[%s574 + $0x2a60] sm:$0xff]
                %1273 = vst [vmem:[%s575 + $0xae0] sm:$0xff] %v1272
                %v1274 = vld [vmem:[%s574 + $0x2a68] sm:$0xff]
                %1275 = vst [vmem:[%s575 + $0xae8] sm:$0xff] %v1274
                %v1276 = vld [vmem:[%s574 + $0x2a70] sm:$0xff]
                %1277 = vst [vmem:[%s575 + $0xaf0] sm:$0xff] %v1276
                %v1278 = vld [vmem:[%s574 + $0x2a78] sm:$0xff]
                %1279 = vst [vmem:[%s575 + $0xaf8] sm:$0xff] %v1278
                %v1280 = vld [vmem:[%s574 + $0x2a80] sm:$0xff]
                %1281 = vst [vmem:[%s575 + $0xb00] sm:$0xff] %v1280
                %v1282 = vld [vmem:[%s574 + $0x2a88] sm:$0xff]
                %1283 = vst [vmem:[%s575 + $0xb08] sm:$0xff] %v1282
                %v1284 = vld [vmem:[%s574 + $0x2a90] sm:$0xff]
                %1285 = vst [vmem:[%s575 + $0xb10] sm:$0xff] %v1284
                %v1286 = vld [vmem:[%s574 + $0x2a98] sm:$0xff]
                %1287 = vst [vmem:[%s575 + $0xb18] sm:$0xff] %v1286
                %v1288 = vld [vmem:[%s574 + $0x2aa0] sm:$0xff]
                %1289 = vst [vmem:[%s575 + $0xb20] sm:$0xff] %v1288
                %v1290 = vld [vmem:[%s574 + $0x2aa8] sm:$0xff]
                %1291 = vst [vmem:[%s575 + $0xb28] sm:$0xff] %v1290
                %v1292 = vld [vmem:[%s574 + $0x2ab0] sm:$0xff]
                %1293 = vst [vmem:[%s575 + $0xb30] sm:$0xff] %v1292
                %v1294 = vld [vmem:[%s574 + $0x2ab8] sm:$0xff]
                %1295 = vst [vmem:[%s575 + $0xb38] sm:$0xff] %v1294
                %v1296 = vld [vmem:[%s574 + $0x2ac0] sm:$0xff]
                %1297 = vst [vmem:[%s575 + $0xb40] sm:$0xff] %v1296
                %v1298 = vld [vmem:[%s574 + $0x2ac8] sm:$0xff]
                %1299 = vst [vmem:[%s575 + $0xb48] sm:$0xff] %v1298
                %v1300 = vld [vmem:[%s574 + $0x2ad0] sm:$0xff]
                %1301 = vst [vmem:[%s575 + $0xb50] sm:$0xff] %v1300
                %v1302 = vld [vmem:[%s574 + $0x2ad8] sm:$0xff]
                %1303 = vst [vmem:[%s575 + $0xb58] sm:$0xff] %v1302
                %v1304 = vld [vmem:[%s574 + $0x2ae0] sm:$0xff]
                %1305 = vst [vmem:[%s575 + $0xb60] sm:$0xff] %v1304
                %v1306 = vld [vmem:[%s574 + $0x2ae8] sm:$0xff]
                %1307 = vst [vmem:[%s575 + $0xb68] sm:$0xff] %v1306
                %v1308 = vld [vmem:[%s574 + $0x2af0] sm:$0xff]
                %1309 = vst [vmem:[%s575 + $0xb70] sm:$0xff] %v1308
                %v1310 = vld [vmem:[%s574 + $0x2af8] sm:$0xff]
                %1311 = vst [vmem:[%s575 + $0xb78] sm:$0xff] %v1310
                %v1312 = vld [vmem:[%s574 + $0x2b00] sm:$0xff]
                %1313 = vst [vmem:[%s575 + $0xb80] sm:$0xff] %v1312
                %v1314 = vld [vmem:[%s574 + $0x2b08] sm:$0xff]
                %1315 = vst [vmem:[%s575 + $0xb88] sm:$0xff] %v1314
                %v1316 = vld [vmem:[%s574 + $0x2b10] sm:$0xff]
                %1317 = vst [vmem:[%s575 + $0xb90] sm:$0xff] %v1316
                %v1318 = vld [vmem:[%s574 + $0x2b18] sm:$0xff]
                %1319 = vst [vmem:[%s575 + $0xb98] sm:$0xff] %v1318
                %v1320 = vld [vmem:[%s574 + $0x2b20] sm:$0xff]
                %1321 = vst [vmem:[%s575 + $0xba0] sm:$0xff] %v1320
                %v1322 = vld [vmem:[%s574 + $0x2b28] sm:$0xff]
                %1323 = vst [vmem:[%s575 + $0xba8] sm:$0xff] %v1322
                %v1324 = vld [vmem:[%s574 + $0x2b30] sm:$0xff]
                %1325 = vst [vmem:[%s575 + $0xbb0] sm:$0xff] %v1324
                %v1326 = vld [vmem:[%s574 + $0x2b38] sm:$0xff]
                %1327 = vst [vmem:[%s575 + $0xbb8] sm:$0xff] %v1326
                %v1328 = vld [vmem:[%s574 + $0x2b40] sm:$0xff]
                %1329 = vst [vmem:[%s575 + $0xbc0] sm:$0xff] %v1328
                %v1330 = vld [vmem:[%s574 + $0x2b48] sm:$0xff]
                %1331 = vst [vmem:[%s575 + $0xbc8] sm:$0xff] %v1330
                %v1332 = vld [vmem:[%s574 + $0x2b50] sm:$0xff]
                %1333 = vst [vmem:[%s575 + $0xbd0] sm:$0xff] %v1332
                %v1334 = vld [vmem:[%s574 + $0x2b58] sm:$0xff]
                %1335 = vst [vmem:[%s575 + $0xbd8] sm:$0xff] %v1334
                %v1336 = vld [vmem:[%s574 + $0x2b60] sm:$0xff]
                %1337 = vst [vmem:[%s575 + $0xbe0] sm:$0xff] %v1336
                %v1338 = vld [vmem:[%s574 + $0x2b68] sm:$0xff]
                %1339 = vst [vmem:[%s575 + $0xbe8] sm:$0xff] %v1338
                %v1340 = vld [vmem:[%s574 + $0x2b70] sm:$0xff]
                %1341 = vst [vmem:[%s575 + $0xbf0] sm:$0xff] %v1340
                %v1342 = vld [vmem:[%s574 + $0x2b78] sm:$0xff]
                %1343 = vst [vmem:[%s575 + $0xbf8] sm:$0xff] %v1342
                %v1344 = vld [vmem:[%s574 + $0x3000] sm:$0xff]
                %1345 = vst [vmem:[%s575 + $0xc00] sm:$0xff] %v1344
                %v1346 = vld [vmem:[%s574 + $0x3008] sm:$0xff]
                %1347 = vst [vmem:[%s575 + $0xc08] sm:$0xff] %v1346
                %v1348 = vld [vmem:[%s574 + $0x3010] sm:$0xff]
                %1349 = vst [vmem:[%s575 + $0xc10] sm:$0xff] %v1348
                %v1350 = vld [vmem:[%s574 + $0x3018] sm:$0xff]
                %1351 = vst [vmem:[%s575 + $0xc18] sm:$0xff] %v1350
                %v1352 = vld [vmem:[%s574 + $0x3020] sm:$0xff]
                %1353 = vst [vmem:[%s575 + $0xc20] sm:$0xff] %v1352
                %v1354 = vld [vmem:[%s574 + $0x3028] sm:$0xff]
                %1355 = vst [vmem:[%s575 + $0xc28] sm:$0xff] %v1354
                %v1356 = vld [vmem:[%s574 + $0x3030] sm:$0xff]
                %1357 = vst [vmem:[%s575 + $0xc30] sm:$0xff] %v1356
                %v1358 = vld [vmem:[%s574 + $0x3038] sm:$0xff]
                %1359 = vst [vmem:[%s575 + $0xc38] sm:$0xff] %v1358
                %v1360 = vld [vmem:[%s574 + $0x3040] sm:$0xff]
                %1361 = vst [vmem:[%s575 + $0xc40] sm:$0xff] %v1360
                %v1362 = vld [vmem:[%s574 + $0x3048] sm:$0xff]
                %1363 = vst [vmem:[%s575 + $0xc48] sm:$0xff] %v1362
                %v1364 = vld [vmem:[%s574 + $0x3050] sm:$0xff]
                %1365 = vst [vmem:[%s575 + $0xc50] sm:$0xff] %v1364
                %v1366 = vld [vmem:[%s574 + $0x3058] sm:$0xff]
                %1367 = vst [vmem:[%s575 + $0xc58] sm:$0xff] %v1366
                %v1368 = vld [vmem:[%s574 + $0x3060] sm:$0xff]
                %1369 = vst [vmem:[%s575 + $0xc60] sm:$0xff] %v1368
                %v1370 = vld [vmem:[%s574 + $0x3068] sm:$0xff]
                %1371 = vst [vmem:[%s575 + $0xc68] sm:$0xff] %v1370
                %v1372 = vld [vmem:[%s574 + $0x3070] sm:$0xff]
                %1373 = vst [vmem:[%s575 + $0xc70] sm:$0xff] %v1372
                %v1374 = vld [vmem:[%s574 + $0x3078] sm:$0xff]
                %1375 = vst [vmem:[%s575 + $0xc78] sm:$0xff] %v1374
                %v1376 = vld [vmem:[%s574 + $0x3080] sm:$0xff]
                %1377 = vst [vmem:[%s575 + $0xc80] sm:$0xff] %v1376
                %v1378 = vld [vmem:[%s574 + $0x3088] sm:$0xff]
                %1379 = vst [vmem:[%s575 + $0xc88] sm:$0xff] %v1378
                %v1380 = vld [vmem:[%s574 + $0x3090] sm:$0xff]
                %1381 = vst [vmem:[%s575 + $0xc90] sm:$0xff] %v1380
                %v1382 = vld [vmem:[%s574 + $0x3098] sm:$0xff]
                %1383 = vst [vmem:[%s575 + $0xc98] sm:$0xff] %v1382
                %v1384 = vld [vmem:[%s574 + $0x30a0] sm:$0xff]
                %1385 = vst [vmem:[%s575 + $0xca0] sm:$0xff] %v1384
                %v1386 = vld [vmem:[%s574 + $0x30a8] sm:$0xff]
                %1387 = vst [vmem:[%s575 + $0xca8] sm:$0xff] %v1386
                %v1388 = vld [vmem:[%s574 + $0x30b0] sm:$0xff]
                %1389 = vst [vmem:[%s575 + $0xcb0] sm:$0xff] %v1388
                %v1390 = vld [vmem:[%s574 + $0x30b8] sm:$0xff]
                %1391 = vst [vmem:[%s575 + $0xcb8] sm:$0xff] %v1390
                %v1392 = vld [vmem:[%s574 + $0x30c0] sm:$0xff]
                %1393 = vst [vmem:[%s575 + $0xcc0] sm:$0xff] %v1392
                %v1394 = vld [vmem:[%s574 + $0x30c8] sm:$0xff]
                %1395 = vst [vmem:[%s575 + $0xcc8] sm:$0xff] %v1394
                %v1396 = vld [vmem:[%s574 + $0x30d0] sm:$0xff]
                %1397 = vst [vmem:[%s575 + $0xcd0] sm:$0xff] %v1396
                %v1398 = vld [vmem:[%s574 + $0x30d8] sm:$0xff]
                %1399 = vst [vmem:[%s575 + $0xcd8] sm:$0xff] %v1398
                %v1400 = vld [vmem:[%s574 + $0x30e0] sm:$0xff]
                %1401 = vst [vmem:[%s575 + $0xce0] sm:$0xff] %v1400
                %v1402 = vld [vmem:[%s574 + $0x30e8] sm:$0xff]
                %1403 = vst [vmem:[%s575 + $0xce8] sm:$0xff] %v1402
                %v1404 = vld [vmem:[%s574 + $0x30f0] sm:$0xff]
                %1405 = vst [vmem:[%s575 + $0xcf0] sm:$0xff] %v1404
                %v1406 = vld [vmem:[%s574 + $0x30f8] sm:$0xff]
                %1407 = vst [vmem:[%s575 + $0xcf8] sm:$0xff] %v1406
                %v1408 = vld [vmem:[%s574 + $0x3100] sm:$0xff]
                %1409 = vst [vmem:[%s575 + $0xd00] sm:$0xff] %v1408
                %v1410 = vld [vmem:[%s574 + $0x3108] sm:$0xff]
                %1411 = vst [vmem:[%s575 + $0xd08] sm:$0xff] %v1410
                %v1412 = vld [vmem:[%s574 + $0x3110] sm:$0xff]
                %1413 = vst [vmem:[%s575 + $0xd10] sm:$0xff] %v1412
                %v1414 = vld [vmem:[%s574 + $0x3118] sm:$0xff]
                %1415 = vst [vmem:[%s575 + $0xd18] sm:$0xff] %v1414
                %v1416 = vld [vmem:[%s574 + $0x3120] sm:$0xff]
                %1417 = vst [vmem:[%s575 + $0xd20] sm:$0xff] %v1416
                %v1418 = vld [vmem:[%s574 + $0x3128] sm:$0xff]
                %1419 = vst [vmem:[%s575 + $0xd28] sm:$0xff] %v1418
                %v1420 = vld [vmem:[%s574 + $0x3130] sm:$0xff]
                %1421 = vst [vmem:[%s575 + $0xd30] sm:$0xff] %v1420
                %v1422 = vld [vmem:[%s574 + $0x3138] sm:$0xff]
                %1423 = vst [vmem:[%s575 + $0xd38] sm:$0xff] %v1422
                %v1424 = vld [vmem:[%s574 + $0x3140] sm:$0xff]
                %1425 = vst [vmem:[%s575 + $0xd40] sm:$0xff] %v1424
                %v1426 = vld [vmem:[%s574 + $0x3148] sm:$0xff]
                %1427 = vst [vmem:[%s575 + $0xd48] sm:$0xff] %v1426
                %v1428 = vld [vmem:[%s574 + $0x3150] sm:$0xff]
                %1429 = vst [vmem:[%s575 + $0xd50] sm:$0xff] %v1428
                %v1430 = vld [vmem:[%s574 + $0x3158] sm:$0xff]
                %1431 = vst [vmem:[%s575 + $0xd58] sm:$0xff] %v1430
                %v1432 = vld [vmem:[%s574 + $0x3160] sm:$0xff]
                %1433 = vst [vmem:[%s575 + $0xd60] sm:$0xff] %v1432
                %v1434 = vld [vmem:[%s574 + $0x3168] sm:$0xff]
                %1435 = vst [vmem:[%s575 + $0xd68] sm:$0xff] %v1434
                %v1436 = vld [vmem:[%s574 + $0x3170] sm:$0xff]
                %1437 = vst [vmem:[%s575 + $0xd70] sm:$0xff] %v1436
                %v1438 = vld [vmem:[%s574 + $0x3178] sm:$0xff]
                %1439 = vst [vmem:[%s575 + $0xd78] sm:$0xff] %v1438
                %v1440 = vld [vmem:[%s574 + $0x3600] sm:$0xff]
                %1441 = vst [vmem:[%s575 + $0xd80] sm:$0xff] %v1440
                %v1442 = vld [vmem:[%s574 + $0x3608] sm:$0xff]
                %1443 = vst [vmem:[%s575 + $0xd88] sm:$0xff] %v1442
                %v1444 = vld [vmem:[%s574 + $0x3610] sm:$0xff]
                %1445 = vst [vmem:[%s575 + $0xd90] sm:$0xff] %v1444
                %v1446 = vld [vmem:[%s574 + $0x3618] sm:$0xff]
                %1447 = vst [vmem:[%s575 + $0xd98] sm:$0xff] %v1446
                %v1448 = vld [vmem:[%s574 + $0x3620] sm:$0xff]
                %1449 = vst [vmem:[%s575 + $0xda0] sm:$0xff] %v1448
                %v1450 = vld [vmem:[%s574 + $0x3628] sm:$0xff]
                %1451 = vst [vmem:[%s575 + $0xda8] sm:$0xff] %v1450
                %v1452 = vld [vmem:[%s574 + $0x3630] sm:$0xff]
                %1453 = vst [vmem:[%s575 + $0xdb0] sm:$0xff] %v1452
                %v1454 = vld [vmem:[%s574 + $0x3638] sm:$0xff]
                %1455 = vst [vmem:[%s575 + $0xdb8] sm:$0xff] %v1454
                %v1456 = vld [vmem:[%s574 + $0x3640] sm:$0xff]
                %1457 = vst [vmem:[%s575 + $0xdc0] sm:$0xff] %v1456
                %v1458 = vld [vmem:[%s574 + $0x3648] sm:$0xff]
                %1459 = vst [vmem:[%s575 + $0xdc8] sm:$0xff] %v1458
                %v1460 = vld [vmem:[%s574 + $0x3650] sm:$0xff]
                %1461 = vst [vmem:[%s575 + $0xdd0] sm:$0xff] %v1460
                %v1462 = vld [vmem:[%s574 + $0x3658] sm:$0xff]
                %1463 = vst [vmem:[%s575 + $0xdd8] sm:$0xff] %v1462
                %v1464 = vld [vmem:[%s574 + $0x3660] sm:$0xff]
                %1465 = vst [vmem:[%s575 + $0xde0] sm:$0xff] %v1464
                %v1466 = vld [vmem:[%s574 + $0x3668] sm:$0xff]
                %1467 = vst [vmem:[%s575 + $0xde8] sm:$0xff] %v1466
                %v1468 = vld [vmem:[%s574 + $0x3670] sm:$0xff]
                %1469 = vst [vmem:[%s575 + $0xdf0] sm:$0xff] %v1468
                %v1470 = vld [vmem:[%s574 + $0x3678] sm:$0xff]
                %1471 = vst [vmem:[%s575 + $0xdf8] sm:$0xff] %v1470
                %v1472 = vld [vmem:[%s574 + $0x3680] sm:$0xff]
                %1473 = vst [vmem:[%s575 + $0xe00] sm:$0xff] %v1472
                %v1474 = vld [vmem:[%s574 + $0x3688] sm:$0xff]
                %1475 = vst [vmem:[%s575 + $0xe08] sm:$0xff] %v1474
                %v1476 = vld [vmem:[%s574 + $0x3690] sm:$0xff]
                %1477 = vst [vmem:[%s575 + $0xe10] sm:$0xff] %v1476
                %v1478 = vld [vmem:[%s574 + $0x3698] sm:$0xff]
                %1479 = vst [vmem:[%s575 + $0xe18] sm:$0xff] %v1478
                %v1480 = vld [vmem:[%s574 + $0x36a0] sm:$0xff]
                %1481 = vst [vmem:[%s575 + $0xe20] sm:$0xff] %v1480
                %v1482 = vld [vmem:[%s574 + $0x36a8] sm:$0xff]
                %1483 = vst [vmem:[%s575 + $0xe28] sm:$0xff] %v1482
                %v1484 = vld [vmem:[%s574 + $0x36b0] sm:$0xff]
                %1485 = vst [vmem:[%s575 + $0xe30] sm:$0xff] %v1484
                %v1486 = vld [vmem:[%s574 + $0x36b8] sm:$0xff]
                %1487 = vst [vmem:[%s575 + $0xe38] sm:$0xff] %v1486
                %v1488 = vld [vmem:[%s574 + $0x36c0] sm:$0xff]
                %1489 = vst [vmem:[%s575 + $0xe40] sm:$0xff] %v1488
                %v1490 = vld [vmem:[%s574 + $0x36c8] sm:$0xff]
                %1491 = vst [vmem:[%s575 + $0xe48] sm:$0xff] %v1490
                %v1492 = vld [vmem:[%s574 + $0x36d0] sm:$0xff]
                %1493 = vst [vmem:[%s575 + $0xe50] sm:$0xff] %v1492
                %v1494 = vld [vmem:[%s574 + $0x36d8] sm:$0xff]
                %1495 = vst [vmem:[%s575 + $0xe58] sm:$0xff] %v1494
                %v1496 = vld [vmem:[%s574 + $0x36e0] sm:$0xff]
                %1497 = vst [vmem:[%s575 + $0xe60] sm:$0xff] %v1496
                %v1498 = vld [vmem:[%s574 + $0x36e8] sm:$0xff]
                %1499 = vst [vmem:[%s575 + $0xe68] sm:$0xff] %v1498
                %v1500 = vld [vmem:[%s574 + $0x36f0] sm:$0xff]
                %1501 = vst [vmem:[%s575 + $0xe70] sm:$0xff] %v1500
                %v1502 = vld [vmem:[%s574 + $0x36f8] sm:$0xff]
                %1503 = vst [vmem:[%s575 + $0xe78] sm:$0xff] %v1502
                %v1504 = vld [vmem:[%s574 + $0x3700] sm:$0xff]
                %1505 = vst [vmem:[%s575 + $0xe80] sm:$0xff] %v1504
                %v1506 = vld [vmem:[%s574 + $0x3708] sm:$0xff]
                %1507 = vst [vmem:[%s575 + $0xe88] sm:$0xff] %v1506
                %v1508 = vld [vmem:[%s574 + $0x3710] sm:$0xff]
                %1509 = vst [vmem:[%s575 + $0xe90] sm:$0xff] %v1508
                %v1510 = vld [vmem:[%s574 + $0x3718] sm:$0xff]
                %1511 = vst [vmem:[%s575 + $0xe98] sm:$0xff] %v1510
                %v1512 = vld [vmem:[%s574 + $0x3720] sm:$0xff]
                %1513 = vst [vmem:[%s575 + $0xea0] sm:$0xff] %v1512
                %v1514 = vld [vmem:[%s574 + $0x3728] sm:$0xff]
                %1515 = vst [vmem:[%s575 + $0xea8] sm:$0xff] %v1514
                %v1516 = vld [vmem:[%s574 + $0x3730] sm:$0xff]
                %1517 = vst [vmem:[%s575 + $0xeb0] sm:$0xff] %v1516
                %v1518 = vld [vmem:[%s574 + $0x3738] sm:$0xff]
                %1519 = vst [vmem:[%s575 + $0xeb8] sm:$0xff] %v1518
                %v1520 = vld [vmem:[%s574 + $0x3740] sm:$0xff]
                %1521 = vst [vmem:[%s575 + $0xec0] sm:$0xff] %v1520
                %v1522 = vld [vmem:[%s574 + $0x3748] sm:$0xff]
                %1523 = vst [vmem:[%s575 + $0xec8] sm:$0xff] %v1522
                %v1524 = vld [vmem:[%s574 + $0x3750] sm:$0xff]
                %1525 = vst [vmem:[%s575 + $0xed0] sm:$0xff] %v1524
                %v1526 = vld [vmem:[%s574 + $0x3758] sm:$0xff]
                %1527 = vst [vmem:[%s575 + $0xed8] sm:$0xff] %v1526
                %v1528 = vld [vmem:[%s574 + $0x3760] sm:$0xff]
                %1529 = vst [vmem:[%s575 + $0xee0] sm:$0xff] %v1528
                %v1530 = vld [vmem:[%s574 + $0x3768] sm:$0xff]
                %1531 = vst [vmem:[%s575 + $0xee8] sm:$0xff] %v1530
                %v1532 = vld [vmem:[%s574 + $0x3770] sm:$0xff]
                %1533 = vst [vmem:[%s575 + $0xef0] sm:$0xff] %v1532
                %v1534 = vld [vmem:[%s574 + $0x3778] sm:$0xff]
                %1535 = vst [vmem:[%s575 + $0xef8] sm:$0xff] %v1534
              $region75: #{linear_pallas.1} parent=69 // loop_footer
                %s573 = sadd.s32 1, %s569
              $region76: #{linear_pallas.1} parent=69 // loop_footer_branch
                %568 = sbr.rel target = $region72
              $region77: #{linear_pallas.1} parent=69 // loop_exit
                _
            $region70: #{linear_pallas.1} parent=61 // pred_fallthru
              _
          $region62: #{linear_pallas.1} parent=57 // pred_fallthru
            _
          %2508 = vnop
        $region58: #{linear_pallas.1} parent=15 // pred_fallthru
          _
      $region16: #{linear_pallas.1} parent=5 // pred_fallthru
        _
      %p2509 = scmp.le.s32.totalorder 1, %s8
      %p2510 = scmp.lt.s32.totalorder %s8, 5
      %p2511 = pnand %p2509, %p2510
      %p2512 = pneg %p2511
      // Predicated region
      $region93: #{linear_pallas.1} parent=5 // pred_check
        _
      $region94: #{linear_pallas.1} parent=5 // pred_check_branch
        %2514 = sbr.rel (%p2511) target = $region96
      $region95: #{linear_pallas.1} parent=5 // pred_region
        %s2515 = ssub.s32 %s8, 1
        %s2516 = sand.u32 %s37, 1
        %s2517 = sand.u32 %s37, 1
        %s2518 = smul.addr %s2517, 768
        %s2519 = scalar_lea.vmem [#allocation3], %s2518
        // Predicated region
        $region97: #{linear_pallas.1} parent=95 // pred_check
          %p2520 = pneg %p50
        $region98: #{linear_pallas.1} parent=95 // pred_check_branch
          %2522 = sbr.rel (%p2520) target = $region100
        $region99: #{linear_pallas.1} parent=95 // pred_region
          _
        $region100: #{linear_pallas.1} parent=95 // pred_fallthru
          _
        %s2523 = sand.u32 %s67, 1
        %s2524 = sand.u32 %s67, 1
        %s2525 = smul.addr %s2524, 3840
        %s2526 = scalar_lea.vmem [#allocation4], %s2525
        // Predicated region
        $region101: #{linear_pallas.1} parent=95 // pred_check
          %p2527 = pneg %p80
        $region102: #{linear_pallas.1} parent=95 // pred_check_branch
          %2529 = sbr.rel (%p2527) target = $region104
        $region103: #{linear_pallas.1} parent=95 // pred_region
          _
        $region104: #{linear_pallas.1} parent=95 // pred_fallthru
          _
        %s2530 = sand.u32 %s37, 1
        %s2531 = sand.u32 %s37, 1
        %s2532 = smul.addr %s2531, 768
        %s2533 = scalar_lea.vmem [#allocation3], %s2532
        %p2534 = pneg %p50
        %p2535 = pneg %p47
        %s2536 = sand.u32 %s67, 1
        %s2537 = sand.u32 %s67, 1
        %s2538 = smul.addr %s2537, 3840
        %s2539 = scalar_lea.vmem [#allocation4], %s2538
        %p2540 = pneg %p80
        %p2541 = pneg %p77
        %p2542 = pneg %p106
        %p2543 = pneg %p103
        %p2544 = scmp.lt.s32.totalorder %s17, 0
        %s2545 = scalar_select %p2544, %s17, 0
        %s2546 = smul.addr %s2545, 2
        %s2547 = scalar_lea.vmem %s2, %s2546
        %s2548 = smul.u32 %s17, 4
        %s2549 = sadd.s32 %s2548, %s18
        %s2550 = smul.u32 48, %s2549
        %s2551 = smul.u32 %s17, 4
        %s2552 = sadd.s32 %s2551, %s18
        %s2553 = smul.u32 48, %s2552
        %p2554 = scmp.lt.s32.totalorder %s17, 0
        %s2555 = scalar_select %p2554, %s17, 0
        %s2556 = smul.addr %s2555, 2
        %s2557 = scalar_lea.vmem %s2, %s2556
        %p2558 = scmp.eq.s32.totalorder %s18, 0
        // Predicated region
        $region105: #{linear_pallas.1} parent=95 // pred_check
          %p2559 = pneg %p2558
        $region106: #{linear_pallas.1} parent=95 // pred_check_branch
          %2561 = sbr.rel (%p2559) target = $region108
        $region107: #{linear_pallas.1} parent=95 // pred_region
          %2562 = vst [vmem:[#allocation2] sm:$0xff] 0.0
          %2563 = vst [vmem:[#allocation2 + $0x8] sm:$0xff] 0.0
          %2564 = vst [vmem:[#allocation2 + $0x10] sm:$0xff] 0.0
          %2565 = vst [vmem:[#allocation2 + $0x18] sm:$0xff] 0.0
          %2566 = vst [vmem:[#allocation2 + $0x20] sm:$0xff] 0.0
          %2567 = vst [vmem:[#allocation2 + $0x28] sm:$0xff] 0.0
          %2568 = vst [vmem:[#allocation2 + $0x30] sm:$0xff] 0.0
          %2569 = vst [vmem:[#allocation2 + $0x38] sm:$0xff] 0.0
          %2570 = vst [vmem:[#allocation2 + $0x40] sm:$0xff] 0.0
          %2571 = vst [vmem:[#allocation2 + $0x48] sm:$0xff] 0.0
          %2572 = vst [vmem:[#allocation2 + $0x50] sm:$0xff] 0.0
          %2573 = vst [vmem:[#allocation2 + $0x58] sm:$0xff] 0.0
          %2574 = vst [vmem:[#allocation2 + $0x60] sm:$0xff] 0.0
          %2575 = vst [vmem:[#allocation2 + $0x68] sm:$0xff] 0.0
          %2576 = vst [vmem:[#allocation2 + $0x70] sm:$0xff] 0.0
          %2577 = vst [vmem:[#allocation2 + $0x78] sm:$0xff] 0.0
          %2578 = vst [vmem:[#allocation2 + $0x80] sm:$0xff] 0.0
          %2579 = vst [vmem:[#allocation2 + $0x88] sm:$0xff] 0.0
          %2580 = vst [vmem:[#allocation2 + $0x90] sm:$0xff] 0.0
          %2581 = vst [vmem:[#allocation2 + $0x98] sm:$0xff] 0.0
        $region108: #{linear_pallas.1} parent=95 // pred_fallthru
          _
        %v2582 = vld [vmem:[%s2519] sm:$0xff]
        %v2583 = vld [vmem:[%s2519 + $0x8] sm:$0xff]
        %v2584 = vld [vmem:[%s2519 + $0x10] sm:$0xff]
        %v2585 = vld [vmem:[%s2519 + $0x18] sm:$0xff]
        %v2586 = vld [vmem:[%s2519 + $0x20] sm:$0xff]
        %v2587 = vld [vmem:[%s2519 + $0x28] sm:$0xff]
        %v2588 = vld [vmem:[%s2519 + $0x30] sm:$0xff]
        %v2589 = vld [vmem:[%s2519 + $0x38] sm:$0xff]
        %v2590 = vld [vmem:[%s2519 + $0x40] sm:$0xff]
        %v2591 = vld [vmem:[%s2519 + $0x48] sm:$0xff]
        %v2592 = vld [vmem:[%s2519 + $0x50] sm:$0xff]
        %v2593 = vld [vmem:[%s2519 + $0x58] sm:$0xff]
        %v2594 = vld [vmem:[%s2519 + $0x60] sm:$0xff]
        %v2595 = vld [vmem:[%s2519 + $0x68] sm:$0xff]
        %v2596 = vld [vmem:[%s2519 + $0x70] sm:$0xff]
        %v2597 = vld [vmem:[%s2519 + $0x78] sm:$0xff]
        %v2598 = vld [vmem:[%s2519 + $0x80] sm:$0xff]
        %v2599 = vld [vmem:[%s2519 + $0x88] sm:$0xff]
        %v2600 = vld [vmem:[%s2519 + $0x90] sm:$0xff]
        %v2601 = vld [vmem:[%s2519 + $0x98] sm:$0xff]
        %v2602 = vld [vmem:[%s2519 + $0xa0] sm:$0xff]
        %v2603 = vld [vmem:[%s2519 + $0xa8] sm:$0xff]
        %v2604 = vld [vmem:[%s2519 + $0xb0] sm:$0xff]
        %v2605 = vld [vmem:[%s2519 + $0xb8] sm:$0xff]
        %v2606 = vld [vmem:[%s2519 + $0xc0] sm:$0xff]
        %v2607 = vld [vmem:[%s2519 + $0xc8] sm:$0xff]
        %v2608 = vld [vmem:[%s2519 + $0xd0] sm:$0xff]
        %v2609 = vld [vmem:[%s2519 + $0xd8] sm:$0xff]
        %v2610 = vld [vmem:[%s2519 + $0xe0] sm:$0xff]
        %v2611 = vld [vmem:[%s2519 + $0xe8] sm:$0xff]
        %v2612 = vld [vmem:[%s2519 + $0xf0] sm:$0xff]
        %v2613 = vld [vmem:[%s2519 + $0xf8] sm:$0xff]
        %v2614 = vld [vmem:[%s2519 + $0x100] sm:$0xff]
        %v2615 = vld [vmem:[%s2519 + $0x108] sm:$0xff]
        %v2616 = vld [vmem:[%s2519 + $0x110] sm:$0xff]
        %v2617 = vld [vmem:[%s2519 + $0x118] sm:$0xff]
        %v2618 = vld [vmem:[%s2519 + $0x120] sm:$0xff]
        %v2619 = vld [vmem:[%s2519 + $0x128] sm:$0xff]
        %v2620 = vld [vmem:[%s2519 + $0x130] sm:$0xff]
        %v2621 = vld [vmem:[%s2519 + $0x138] sm:$0xff]
        %v2622 = vld [vmem:[%s2519 + $0x140] sm:$0xff]
        %v2623 = vld [vmem:[%s2519 + $0x148] sm:$0xff]
        %v2624 = vld [vmem:[%s2519 + $0x150] sm:$0xff]
        %v2625 = vld [vmem:[%s2519 + $0x158] sm:$0xff]
        %v2626 = vld [vmem:[%s2519 + $0x160] sm:$0xff]
        %v2627 = vld [vmem:[%s2519 + $0x168] sm:$0xff]
        %v2628 = vld [vmem:[%s2519 + $0x170] sm:$0xff]
        %v2629 = vld [vmem:[%s2519 + $0x178] sm:$0xff]
        %v2630 = vld [vmem:[%s2519 + $0x180] sm:$0xff]
        %v2631 = vld [vmem:[%s2519 + $0x188] sm:$0xff]
        %v2632 = vld [vmem:[%s2519 + $0x190] sm:$0xff]
        %v2633 = vld [vmem:[%s2519 + $0x198] sm:$0xff]
        %v2634 = vld [vmem:[%s2519 + $0x1a0] sm:$0xff]
        %v2635 = vld [vmem:[%s2519 + $0x1a8] sm:$0xff]
        %v2636 = vld [vmem:[%s2519 + $0x1b0] sm:$0xff]
        %v2637 = vld [vmem:[%s2519 + $0x1b8] sm:$0xff]
        %v2638 = vld [vmem:[%s2519 + $0x1c0] sm:$0xff]
        %v2639 = vld [vmem:[%s2519 + $0x1c8] sm:$0xff]
        %v2640 = vld [vmem:[%s2519 + $0x1d0] sm:$0xff]
        %v2641 = vld [vmem:[%s2519 + $0x1d8] sm:$0xff]
        %v2642 = vld [vmem:[%s2519 + $0x1e0] sm:$0xff]
        %v2643 = vld [vmem:[%s2519 + $0x1e8] sm:$0xff]
        %v2644 = vld [vmem:[%s2519 + $0x1f0] sm:$0xff]
        %v2645 = vld [vmem:[%s2519 + $0x1f8] sm:$0xff]
        %v2646 = vld [vmem:[%s2519 + $0x200] sm:$0xff]
        %v2647 = vld [vmem:[%s2519 + $0x208] sm:$0xff]
        %v2648 = vld [vmem:[%s2519 + $0x210] sm:$0xff]
        %v2649 = vld [vmem:[%s2519 + $0x218] sm:$0xff]
        %v2650 = vld [vmem:[%s2519 + $0x220] sm:$0xff]
        %v2651 = vld [vmem:[%s2519 + $0x228] sm:$0xff]
        %v2652 = vld [vmem:[%s2519 + $0x230] sm:$0xff]
        %v2653 = vld [vmem:[%s2519 + $0x238] sm:$0xff]
        %v2654 = vld [vmem:[%s2519 + $0x240] sm:$0xff]
        %v2655 = vld [vmem:[%s2519 + $0x248] sm:$0xff]
        %v2656 = vld [vmem:[%s2519 + $0x250] sm:$0xff]
        %v2657 = vld [vmem:[%s2519 + $0x258] sm:$0xff]
        %v2658 = vld [vmem:[%s2519 + $0x260] sm:$0xff]
        %v2659 = vld [vmem:[%s2519 + $0x268] sm:$0xff]
        %v2660 = vld [vmem:[%s2519 + $0x270] sm:$0xff]
        %v2661 = vld [vmem:[%s2519 + $0x278] sm:$0xff]
        %v2662 = vld [vmem:[%s2519 + $0x280] sm:$0xff]
        %v2663 = vld [vmem:[%s2519 + $0x288] sm:$0xff]
        %v2664 = vld [vmem:[%s2519 + $0x290] sm:$0xff]
        %v2665 = vld [vmem:[%s2519 + $0x298] sm:$0xff]
        %v2666 = vld [vmem:[%s2519 + $0x2a0] sm:$0xff]
        %v2667 = vld [vmem:[%s2519 + $0x2a8] sm:$0xff]
        %v2668 = vld [vmem:[%s2519 + $0x2b0] sm:$0xff]
        %v2669 = vld [vmem:[%s2519 + $0x2b8] sm:$0xff]
        %v2670 = vld [vmem:[%s2519 + $0x2c0] sm:$0xff]
        %v2671 = vld [vmem:[%s2519 + $0x2c8] sm:$0xff]
        %v2672 = vld [vmem:[%s2519 + $0x2d0] sm:$0xff]
        %v2673 = vld [vmem:[%s2519 + $0x2d8] sm:$0xff]
        %v2674 = vld [vmem:[%s2519 + $0x2e0] sm:$0xff]
        %v2675 = vld [vmem:[%s2519 + $0x2e8] sm:$0xff]
        %v2676 = vld [vmem:[%s2519 + $0x2f0] sm:$0xff]
        %v2677 = vld [vmem:[%s2519 + $0x2f8] sm:$0xff]
        %v2678 = vld [vmem:[%s2526] sm:$0xff]
        %v2679 = vld [vmem:[%s2526 + $0x8] sm:$0xff]
        %v2680 = vld [vmem:[%s2526 + $0x10] sm:$0xff]
        %v2681 = vld [vmem:[%s2526 + $0x18] sm:$0xff]
        %v2682 = vld [vmem:[%s2526 + $0x20] sm:$0xff]
        %v2683 = vld [vmem:[%s2526 + $0x28] sm:$0xff]
        %v2684 = vld [vmem:[%s2526 + $0x30] sm:$0xff]
        %v2685 = vld [vmem:[%s2526 + $0x38] sm:$0xff]
        %v2686 = vld [vmem:[%s2526 + $0x40] sm:$0xff]
        %v2687 = vld [vmem:[%s2526 + $0x48] sm:$0xff]
        %v2688 = vld [vmem:[%s2526 + $0x50] sm:$0xff]
        %v2689 = vld [vmem:[%s2526 + $0x58] sm:$0xff]
        %v2690 = vld [vmem:[%s2526 + $0x60] sm:$0xff]
        %v2691 = vld [vmem:[%s2526 + $0x68] sm:$0xff]
        %v2692 = vld [vmem:[%s2526 + $0x70] sm:$0xff]
        %v2693 = vld [vmem:[%s2526 + $0x78] sm:$0xff]
        %v2694 = vld [vmem:[%s2526 + $0x80] sm:$0xff]
        %v2695 = vld [vmem:[%s2526 + $0x88] sm:$0xff]
        %v2696 = vld [vmem:[%s2526 + $0x90] sm:$0xff]
        %v2697 = vld [vmem:[%s2526 + $0x98] sm:$0xff]
        %v2698 = vld [vmem:[%s2526 + $0xa0] sm:$0xff]
        %v2699 = vld [vmem:[%s2526 + $0xa8] sm:$0xff]
        %v2700 = vld [vmem:[%s2526 + $0xb0] sm:$0xff]
        %v2701 = vld [vmem:[%s2526 + $0xb8] sm:$0xff]
        %v2702 = vld [vmem:[%s2526 + $0xc0] sm:$0xff]
        %v2703 = vld [vmem:[%s2526 + $0xc8] sm:$0xff]
        %v2704 = vld [vmem:[%s2526 + $0xd0] sm:$0xff]
        %v2705 = vld [vmem:[%s2526 + $0xd8] sm:$0xff]
        %v2706 = vld [vmem:[%s2526 + $0xe0] sm:$0xff]
        %v2707 = vld [vmem:[%s2526 + $0xe8] sm:$0xff]
        %v2708 = vld [vmem:[%s2526 + $0xf0] sm:$0xff]
        %v2709 = vld [vmem:[%s2526 + $0xf8] sm:$0xff]
        %v2710 = vld [vmem:[%s2526 + $0x100] sm:$0xff]
        %v2711 = vld [vmem:[%s2526 + $0x108] sm:$0xff]
        %v2712 = vld [vmem:[%s2526 + $0x110] sm:$0xff]
        %v2713 = vld [vmem:[%s2526 + $0x118] sm:$0xff]
        %v2714 = vld [vmem:[%s2526 + $0x120] sm:$0xff]
        %v2715 = vld [vmem:[%s2526 + $0x128] sm:$0xff]
        %v2716 = vld [vmem:[%s2526 + $0x130] sm:$0xff]
        %v2717 = vld [vmem:[%s2526 + $0x138] sm:$0xff]
        %v2718 = vld [vmem:[%s2526 + $0x140] sm:$0xff]
        %v2719 = vld [vmem:[%s2526 + $0x148] sm:$0xff]
        %v2720 = vld [vmem:[%s2526 + $0x150] sm:$0xff]
        %v2721 = vld [vmem:[%s2526 + $0x158] sm:$0xff]
        %v2722 = vld [vmem:[%s2526 + $0x160] sm:$0xff]
        %v2723 = vld [vmem:[%s2526 + $0x168] sm:$0xff]
        %v2724 = vld [vmem:[%s2526 + $0x170] sm:$0xff]
        %v2725 = vld [vmem:[%s2526 + $0x178] sm:$0xff]
        %v2726 = vld [vmem:[%s2526 + $0x180] sm:$0xff]
        %v2727 = vld [vmem:[%s2526 + $0x188] sm:$0xff]
        %v2728 = vld [vmem:[%s2526 + $0x190] sm:$0xff]
        %v2729 = vld [vmem:[%s2526 + $0x198] sm:$0xff]
        %v2730 = vld [vmem:[%s2526 + $0x1a0] sm:$0xff]
        %v2731 = vld [vmem:[%s2526 + $0x1a8] sm:$0xff]
        %v2732 = vld [vmem:[%s2526 + $0x1b0] sm:$0xff]
        %v2733 = vld [vmem:[%s2526 + $0x1b8] sm:$0xff]
        %v2734 = vld [vmem:[%s2526 + $0x1c0] sm:$0xff]
        %v2735 = vld [vmem:[%s2526 + $0x1c8] sm:$0xff]
        %v2736 = vld [vmem:[%s2526 + $0x1d0] sm:$0xff]
        %v2737 = vld [vmem:[%s2526 + $0x1d8] sm:$0xff]
        %v2738 = vld [vmem:[%s2526 + $0x1e0] sm:$0xff]
        %v2739 = vld [vmem:[%s2526 + $0x1e8] sm:$0xff]
        %v2740 = vld [vmem:[%s2526 + $0x1f0] sm:$0xff]
        %v2741 = vld [vmem:[%s2526 + $0x1f8] sm:$0xff]
        %v2742 = vld [vmem:[%s2526 + $0x200] sm:$0xff]
        %v2743 = vld [vmem:[%s2526 + $0x208] sm:$0xff]
        %v2744 = vld [vmem:[%s2526 + $0x210] sm:$0xff]
        %v2745 = vld [vmem:[%s2526 + $0x218] sm:$0xff]
        %v2746 = vld [vmem:[%s2526 + $0x220] sm:$0xff]
        %v2747 = vld [vmem:[%s2526 + $0x228] sm:$0xff]
        %v2748 = vld [vmem:[%s2526 + $0x230] sm:$0xff]
        %v2749 = vld [vmem:[%s2526 + $0x238] sm:$0xff]
        %v2750 = vld [vmem:[%s2526 + $0x240] sm:$0xff]
        %v2751 = vld [vmem:[%s2526 + $0x248] sm:$0xff]
        %v2752 = vld [vmem:[%s2526 + $0x250] sm:$0xff]
        %v2753 = vld [vmem:[%s2526 + $0x258] sm:$0xff]
        %v2754 = vld [vmem:[%s2526 + $0x260] sm:$0xff]
        %v2755 = vld [vmem:[%s2526 + $0x268] sm:$0xff]
        %v2756 = vld [vmem:[%s2526 + $0x270] sm:$0xff]
        %v2757 = vld [vmem:[%s2526 + $0x278] sm:$0xff]
        %v2758 = vld [vmem:[%s2526 + $0x280] sm:$0xff]
        %v2759 = vld [vmem:[%s2526 + $0x288] sm:$0xff]
        %v2760 = vld [vmem:[%s2526 + $0x290] sm:$0xff]
        %v2761 = vld [vmem:[%s2526 + $0x298] sm:$0xff]
        %v2762 = vld [vmem:[%s2526 + $0x2a0] sm:$0xff]
        %v2763 = vld [vmem:[%s2526 + $0x2a8] sm:$0xff]
        %v2764 = vld [vmem:[%s2526 + $0x2b0] sm:$0xff]
        %v2765 = vld [vmem:[%s2526 + $0x2b8] sm:$0xff]
        %v2766 = vld [vmem:[%s2526 + $0x2c0] sm:$0xff]
        %v2767 = vld [vmem:[%s2526 + $0x2c8] sm:$0xff]
        %v2768 = vld [vmem:[%s2526 + $0x2d0] sm:$0xff]
        %v2769 = vld [vmem:[%s2526 + $0x2d8] sm:$0xff]
        %v2770 = vld [vmem:[%s2526 + $0x2e0] sm:$0xff]
        %v2771 = vld [vmem:[%s2526 + $0x2e8] sm:$0xff]
        %v2772 = vld [vmem:[%s2526 + $0x2f0] sm:$0xff]
        %v2773 = vld [vmem:[%s2526 + $0x2f8] sm:$0xff]
        %v2774 = vld [vmem:[%s2526 + $0x300] sm:$0xff]
        %v2775 = vld [vmem:[%s2526 + $0x308] sm:$0xff]
        %v2776 = vld [vmem:[%s2526 + $0x310] sm:$0xff]
        %v2777 = vld [vmem:[%s2526 + $0x318] sm:$0xff]
        %v2778 = vld [vmem:[%s2526 + $0x320] sm:$0xff]
        %v2779 = vld [vmem:[%s2526 + $0x328] sm:$0xff]
        %v2780 = vld [vmem:[%s2526 + $0x330] sm:$0xff]
        %v2781 = vld [vmem:[%s2526 + $0x338] sm:$0xff]
        %v2782 = vld [vmem:[%s2526 + $0x340] sm:$0xff]
        %v2783 = vld [vmem:[%s2526 + $0x348] sm:$0xff]
        %v2784 = vld [vmem:[%s2526 + $0x350] sm:$0xff]
        %v2785 = vld [vmem:[%s2526 + $0x358] sm:$0xff]
        %v2786 = vld [vmem:[%s2526 + $0x360] sm:$0xff]
        %v2787 = vld [vmem:[%s2526 + $0x368] sm:$0xff]
        %v2788 = vld [vmem:[%s2526 + $0x370] sm:$0xff]
        %v2789 = vld [vmem:[%s2526 + $0x378] sm:$0xff]
        %v2790 = vld [vmem:[%s2526 + $0x380] sm:$0xff]
        %v2791 = vld [vmem:[%s2526 + $0x388] sm:$0xff]
        %v2792 = vld [vmem:[%s2526 + $0x390] sm:$0xff]
        %v2793 = vld [vmem:[%s2526 + $0x398] sm:$0xff]
        %v2794 = vld [vmem:[%s2526 + $0x3a0] sm:$0xff]
        %v2795 = vld [vmem:[%s2526 + $0x3a8] sm:$0xff]
        %v2796 = vld [vmem:[%s2526 + $0x3b0] sm:$0xff]
        %v2797 = vld [vmem:[%s2526 + $0x3b8] sm:$0xff]
        %v2798 = vld [vmem:[%s2526 + $0x3c0] sm:$0xff]
        %v2799 = vld [vmem:[%s2526 + $0x3c8] sm:$0xff]
        %v2800 = vld [vmem:[%s2526 + $0x3d0] sm:$0xff]
        %v2801 = vld [vmem:[%s2526 + $0x3d8] sm:$0xff]
        %v2802 = vld [vmem:[%s2526 + $0x3e0] sm:$0xff]
        %v2803 = vld [vmem:[%s2526 + $0x3e8] sm:$0xff]
        %v2804 = vld [vmem:[%s2526 + $0x3f0] sm:$0xff]
        %v2805 = vld [vmem:[%s2526 + $0x3f8] sm:$0xff]
        %v2806 = vld [vmem:[%s2526 + $0x400] sm:$0xff]
        %v2807 = vld [vmem:[%s2526 + $0x408] sm:$0xff]
        %v2808 = vld [vmem:[%s2526 + $0x410] sm:$0xff]
        %v2809 = vld [vmem:[%s2526 + $0x418] sm:$0xff]
        %v2810 = vld [vmem:[%s2526 + $0x420] sm:$0xff]
        %v2811 = vld [vmem:[%s2526 + $0x428] sm:$0xff]
        %v2812 = vld [vmem:[%s2526 + $0x430] sm:$0xff]
        %v2813 = vld [vmem:[%s2526 + $0x438] sm:$0xff]
        %v2814 = vld [vmem:[%s2526 + $0x440] sm:$0xff]
        %v2815 = vld [vmem:[%s2526 + $0x448] sm:$0xff]
        %v2816 = vld [vmem:[%s2526 + $0x450] sm:$0xff]
        %v2817 = vld [vmem:[%s2526 + $0x458] sm:$0xff]
        %v2818 = vld [vmem:[%s2526 + $0x460] sm:$0xff]
        %v2819 = vld [vmem:[%s2526 + $0x468] sm:$0xff]
        %v2820 = vld [vmem:[%s2526 + $0x470] sm:$0xff]
        %v2821 = vld [vmem:[%s2526 + $0x478] sm:$0xff]
        %v2822 = vld [vmem:[%s2526 + $0x480] sm:$0xff]
        %v2823 = vld [vmem:[%s2526 + $0x488] sm:$0xff]
        %v2824 = vld [vmem:[%s2526 + $0x490] sm:$0xff]
        %v2825 = vld [vmem:[%s2526 + $0x498] sm:$0xff]
        %v2826 = vld [vmem:[%s2526 + $0x4a0] sm:$0xff]
        %v2827 = vld [vmem:[%s2526 + $0x4a8] sm:$0xff]
        %v2828 = vld [vmem:[%s2526 + $0x4b0] sm:$0xff]
        %v2829 = vld [vmem:[%s2526 + $0x4b8] sm:$0xff]
        %v2830 = vld [vmem:[%s2526 + $0x4c0] sm:$0xff]
        %v2831 = vld [vmem:[%s2526 + $0x4c8] sm:$0xff]
        %v2832 = vld [vmem:[%s2526 + $0x4d0] sm:$0xff]
        %v2833 = vld [vmem:[%s2526 + $0x4d8] sm:$0xff]
        %v2834 = vld [vmem:[%s2526 + $0x4e0] sm:$0xff]
        %v2835 = vld [vmem:[%s2526 + $0x4e8] sm:$0xff]
        %v2836 = vld [vmem:[%s2526 + $0x4f0] sm:$0xff]
        %v2837 = vld [vmem:[%s2526 + $0x4f8] sm:$0xff]
        %v2838 = vld [vmem:[%s2526 + $0x500] sm:$0xff]
        %v2839 = vld [vmem:[%s2526 + $0x508] sm:$0xff]
        %v2840 = vld [vmem:[%s2526 + $0x510] sm:$0xff]
        %v2841 = vld [vmem:[%s2526 + $0x518] sm:$0xff]
        %v2842 = vld [vmem:[%s2526 + $0x520] sm:$0xff]
        %v2843 = vld [vmem:[%s2526 + $0x528] sm:$0xff]
        %v2844 = vld [vmem:[%s2526 + $0x530] sm:$0xff]
        %v2845 = vld [vmem:[%s2526 + $0x538] sm:$0xff]
        %v2846 = vld [vmem:[%s2526 + $0x540] sm:$0xff]
        %v2847 = vld [vmem:[%s2526 + $0x548] sm:$0xff]
        %v2848 = vld [vmem:[%s2526 + $0x550] sm:$0xff]
        %v2849 = vld [vmem:[%s2526 + $0x558] sm:$0xff]
        %v2850 = vld [vmem:[%s2526 + $0x560] sm:$0xff]
        %v2851 = vld [vmem:[%s2526 + $0x568] sm:$0xff]
        %v2852 = vld [vmem:[%s2526 + $0x570] sm:$0xff]
        %v2853 = vld [vmem:[%s2526 + $0x578] sm:$0xff]
        %v2854 = vld [vmem:[%s2526 + $0x580] sm:$0xff]
        %v2855 = vld [vmem:[%s2526 + $0x588] sm:$0xff]
        %v2856 = vld [vmem:[%s2526 + $0x590] sm:$0xff]
        %v2857 = vld [vmem:[%s2526 + $0x598] sm:$0xff]
        %v2858 = vld [vmem:[%s2526 + $0x5a0] sm:$0xff]
        %v2859 = vld [vmem:[%s2526 + $0x5a8] sm:$0xff]
        %v2860 = vld [vmem:[%s2526 + $0x5b0] sm:$0xff]
        %v2861 = vld [vmem:[%s2526 + $0x5b8] sm:$0xff]
        %v2862 = vld [vmem:[%s2526 + $0x5c0] sm:$0xff]
        %v2863 = vld [vmem:[%s2526 + $0x5c8] sm:$0xff]
        %v2864 = vld [vmem:[%s2526 + $0x5d0] sm:$0xff]
        %v2865 = vld [vmem:[%s2526 + $0x5d8] sm:$0xff]
        %v2866 = vld [vmem:[%s2526 + $0x5e0] sm:$0xff]
        %v2867 = vld [vmem:[%s2526 + $0x5e8] sm:$0xff]
        %v2868 = vld [vmem:[%s2526 + $0x5f0] sm:$0xff]
        %v2869 = vld [vmem:[%s2526 + $0x5f8] sm:$0xff]
        %v2870 = vld [vmem:[%s2526 + $0x600] sm:$0xff]
        %v2871 = vld [vmem:[%s2526 + $0x608] sm:$0xff]
        %v2872 = vld [vmem:[%s2526 + $0x610] sm:$0xff]
        %v2873 = vld [vmem:[%s2526 + $0x618] sm:$0xff]
        %v2874 = vld [vmem:[%s2526 + $0x620] sm:$0xff]
        %v2875 = vld [vmem:[%s2526 + $0x628] sm:$0xff]
        %v2876 = vld [vmem:[%s2526 + $0x630] sm:$0xff]
        %v2877 = vld [vmem:[%s2526 + $0x638] sm:$0xff]
        %v2878 = vld [vmem:[%s2526 + $0x640] sm:$0xff]
        %v2879 = vld [vmem:[%s2526 + $0x648] sm:$0xff]
        %v2880 = vld [vmem:[%s2526 + $0x650] sm:$0xff]
        %v2881 = vld [vmem:[%s2526 + $0x658] sm:$0xff]
        %v2882 = vld [vmem:[%s2526 + $0x660] sm:$0xff]
        %v2883 = vld [vmem:[%s2526 + $0x668] sm:$0xff]
        %v2884 = vld [vmem:[%s2526 + $0x670] sm:$0xff]
        %v2885 = vld [vmem:[%s2526 + $0x678] sm:$0xff]
        %v2886 = vld [vmem:[%s2526 + $0x680] sm:$0xff]
        %v2887 = vld [vmem:[%s2526 + $0x688] sm:$0xff]
        %v2888 = vld [vmem:[%s2526 + $0x690] sm:$0xff]
        %v2889 = vld [vmem:[%s2526 + $0x698] sm:$0xff]
        %v2890 = vld [vmem:[%s2526 + $0x6a0] sm:$0xff]
        %v2891 = vld [vmem:[%s2526 + $0x6a8] sm:$0xff]
        %v2892 = vld [vmem:[%s2526 + $0x6b0] sm:$0xff]
        %v2893 = vld [vmem:[%s2526 + $0x6b8] sm:$0xff]
        %v2894 = vld [vmem:[%s2526 + $0x6c0] sm:$0xff]
        %v2895 = vld [vmem:[%s2526 + $0x6c8] sm:$0xff]
        %v2896 = vld [vmem:[%s2526 + $0x6d0] sm:$0xff]
        %v2897 = vld [vmem:[%s2526 + $0x6d8] sm:$0xff]
        %v2898 = vld [vmem:[%s2526 + $0x6e0] sm:$0xff]
        %v2899 = vld [vmem:[%s2526 + $0x6e8] sm:$0xff]
        %v2900 = vld [vmem:[%s2526 + $0x6f0] sm:$0xff]
        %v2901 = vld [vmem:[%s2526 + $0x6f8] sm:$0xff]
        %v2902 = vld [vmem:[%s2526 + $0x700] sm:$0xff]
        %v2903 = vld [vmem:[%s2526 + $0x708] sm:$0xff]
        %v2904 = vld [vmem:[%s2526 + $0x710] sm:$0xff]
        %v2905 = vld [vmem:[%s2526 + $0x718] sm:$0xff]
        %v2906 = vld [vmem:[%s2526 + $0x720] sm:$0xff]
        %v2907 = vld [vmem:[%s2526 + $0x728] sm:$0xff]
        %v2908 = vld [vmem:[%s2526 + $0x730] sm:$0xff]
        %v2909 = vld [vmem:[%s2526 + $0x738] sm:$0xff]
        %v2910 = vld [vmem:[%s2526 + $0x740] sm:$0xff]
        %v2911 = vld [vmem:[%s2526 + $0x748] sm:$0xff]
        %v2912 = vld [vmem:[%s2526 + $0x750] sm:$0xff]
        %v2913 = vld [vmem:[%s2526 + $0x758] sm:$0xff]
        %v2914 = vld [vmem:[%s2526 + $0x760] sm:$0xff]
        %v2915 = vld [vmem:[%s2526 + $0x768] sm:$0xff]
        %v2916 = vld [vmem:[%s2526 + $0x770] sm:$0xff]
        %v2917 = vld [vmem:[%s2526 + $0x778] sm:$0xff]
        %v2918 = vld [vmem:[%s2526 + $0x780] sm:$0xff]
        %v2919 = vld [vmem:[%s2526 + $0x788] sm:$0xff]
        %v2920 = vld [vmem:[%s2526 + $0x790] sm:$0xff]
        %v2921 = vld [vmem:[%s2526 + $0x798] sm:$0xff]
        %v2922 = vld [vmem:[%s2526 + $0x7a0] sm:$0xff]
        %v2923 = vld [vmem:[%s2526 + $0x7a8] sm:$0xff]
        %v2924 = vld [vmem:[%s2526 + $0x7b0] sm:$0xff]
        %v2925 = vld [vmem:[%s2526 + $0x7b8] sm:$0xff]
        %v2926 = vld [vmem:[%s2526 + $0x7c0] sm:$0xff]
        %v2927 = vld [vmem:[%s2526 + $0x7c8] sm:$0xff]
        %v2928 = vld [vmem:[%s2526 + $0x7d0] sm:$0xff]
        %v2929 = vld [vmem:[%s2526 + $0x7d8] sm:$0xff]
        %v2930 = vld [vmem:[%s2526 + $0x7e0] sm:$0xff]
        %v2931 = vld [vmem:[%s2526 + $0x7e8] sm:$0xff]
        %v2932 = vld [vmem:[%s2526 + $0x7f0] sm:$0xff]
        %v2933 = vld [vmem:[%s2526 + $0x7f8] sm:$0xff]
        %v2934 = vld [vmem:[%s2526 + $0x800] sm:$0xff]
        %v2935 = vld [vmem:[%s2526 + $0x808] sm:$0xff]
        %v2936 = vld [vmem:[%s2526 + $0x810] sm:$0xff]
        %v2937 = vld [vmem:[%s2526 + $0x818] sm:$0xff]
        %v2938 = vld [vmem:[%s2526 + $0x820] sm:$0xff]
        %v2939 = vld [vmem:[%s2526 + $0x828] sm:$0xff]
        %v2940 = vld [vmem:[%s2526 + $0x830] sm:$0xff]
        %v2941 = vld [vmem:[%s2526 + $0x838] sm:$0xff]
        %v2942 = vld [vmem:[%s2526 + $0x840] sm:$0xff]
        %v2943 = vld [vmem:[%s2526 + $0x848] sm:$0xff]
        %v2944 = vld [vmem:[%s2526 + $0x850] sm:$0xff]
        %v2945 = vld [vmem:[%s2526 + $0x858] sm:$0xff]
        %v2946 = vld [vmem:[%s2526 + $0x860] sm:$0xff]
        %v2947 = vld [vmem:[%s2526 + $0x868] sm:$0xff]
        %v2948 = vld [vmem:[%s2526 + $0x870] sm:$0xff]
        %v2949 = vld [vmem:[%s2526 + $0x878] sm:$0xff]
        %v2950 = vld [vmem:[%s2526 + $0x880] sm:$0xff]
        %v2951 = vld [vmem:[%s2526 + $0x888] sm:$0xff]
        %v2952 = vld [vmem:[%s2526 + $0x890] sm:$0xff]
        %v2953 = vld [vmem:[%s2526 + $0x898] sm:$0xff]
        %v2954 = vld [vmem:[%s2526 + $0x8a0] sm:$0xff]
        %v2955 = vld [vmem:[%s2526 + $0x8a8] sm:$0xff]
        %v2956 = vld [vmem:[%s2526 + $0x8b0] sm:$0xff]
        %v2957 = vld [vmem:[%s2526 + $0x8b8] sm:$0xff]
        %v2958 = vld [vmem:[%s2526 + $0x8c0] sm:$0xff]
        %v2959 = vld [vmem:[%s2526 + $0x8c8] sm:$0xff]
        %v2960 = vld [vmem:[%s2526 + $0x8d0] sm:$0xff]
        %v2961 = vld [vmem:[%s2526 + $0x8d8] sm:$0xff]
        %v2962 = vld [vmem:[%s2526 + $0x8e0] sm:$0xff]
        %v2963 = vld [vmem:[%s2526 + $0x8e8] sm:$0xff]
        %v2964 = vld [vmem:[%s2526 + $0x8f0] sm:$0xff]
        %v2965 = vld [vmem:[%s2526 + $0x8f8] sm:$0xff]
        %v2966 = vld [vmem:[%s2526 + $0x900] sm:$0xff]
        %v2967 = vld [vmem:[%s2526 + $0x908] sm:$0xff]
        %v2968 = vld [vmem:[%s2526 + $0x910] sm:$0xff]
        %v2969 = vld [vmem:[%s2526 + $0x918] sm:$0xff]
        %v2970 = vld [vmem:[%s2526 + $0x920] sm:$0xff]
        %v2971 = vld [vmem:[%s2526 + $0x928] sm:$0xff]
        %v2972 = vld [vmem:[%s2526 + $0x930] sm:$0xff]
        %v2973 = vld [vmem:[%s2526 + $0x938] sm:$0xff]
        %v2974 = vld [vmem:[%s2526 + $0x940] sm:$0xff]
        %v2975 = vld [vmem:[%s2526 + $0x948] sm:$0xff]
        %v2976 = vld [vmem:[%s2526 + $0x950] sm:$0xff]
        %v2977 = vld [vmem:[%s2526 + $0x958] sm:$0xff]
        %v2978 = vld [vmem:[%s2526 + $0x960] sm:$0xff]
        %v2979 = vld [vmem:[%s2526 + $0x968] sm:$0xff]
        %v2980 = vld [vmem:[%s2526 + $0x970] sm:$0xff]
        %v2981 = vld [vmem:[%s2526 + $0x978] sm:$0xff]
        %v2982 = vld [vmem:[%s2526 + $0x980] sm:$0xff]
        %v2983 = vld [vmem:[%s2526 + $0x988] sm:$0xff]
        %v2984 = vld [vmem:[%s2526 + $0x990] sm:$0xff]
        %v2985 = vld [vmem:[%s2526 + $0x998] sm:$0xff]
        %v2986 = vld [vmem:[%s2526 + $0x9a0] sm:$0xff]
        %v2987 = vld [vmem:[%s2526 + $0x9a8] sm:$0xff]
        %v2988 = vld [vmem:[%s2526 + $0x9b0] sm:$0xff]
        %v2989 = vld [vmem:[%s2526 + $0x9b8] sm:$0xff]
        %v2990 = vld [vmem:[%s2526 + $0x9c0] sm:$0xff]
        %v2991 = vld [vmem:[%s2526 + $0x9c8] sm:$0xff]
        %v2992 = vld [vmem:[%s2526 + $0x9d0] sm:$0xff]
        %v2993 = vld [vmem:[%s2526 + $0x9d8] sm:$0xff]
        %v2994 = vld [vmem:[%s2526 + $0x9e0] sm:$0xff]
        %v2995 = vld [vmem:[%s2526 + $0x9e8] sm:$0xff]
        %v2996 = vld [vmem:[%s2526 + $0x9f0] sm:$0xff]
        %v2997 = vld [vmem:[%s2526 + $0x9f8] sm:$0xff]
        %v2998 = vld [vmem:[%s2526 + $0xa00] sm:$0xff]
        %v2999 = vld [vmem:[%s2526 + $0xa08] sm:$0xff]
        %v3000 = vld [vmem:[%s2526 + $0xa10] sm:$0xff]
        %v3001 = vld [vmem:[%s2526 + $0xa18] sm:$0xff]
        %v3002 = vld [vmem:[%s2526 + $0xa20] sm:$0xff]
        %v3003 = vld [vmem:[%s2526 + $0xa28] sm:$0xff]
        %v3004 = vld [vmem:[%s2526 + $0xa30] sm:$0xff]
        %v3005 = vld [vmem:[%s2526 + $0xa38] sm:$0xff]
        %v3006 = vld [vmem:[%s2526 + $0xa40] sm:$0xff]
        %v3007 = vld [vmem:[%s2526 + $0xa48] sm:$0xff]
        %v3008 = vld [vmem:[%s2526 + $0xa50] sm:$0xff]
        %v3009 = vld [vmem:[%s2526 + $0xa58] sm:$0xff]
        %v3010 = vld [vmem:[%s2526 + $0xa60] sm:$0xff]
        %v3011 = vld [vmem:[%s2526 + $0xa68] sm:$0xff]
        %v3012 = vld [vmem:[%s2526 + $0xa70] sm:$0xff]
        %v3013 = vld [vmem:[%s2526 + $0xa78] sm:$0xff]
        %v3014 = vld [vmem:[%s2526 + $0xa80] sm:$0xff]
        %v3015 = vld [vmem:[%s2526 + $0xa88] sm:$0xff]
        %v3016 = vld [vmem:[%s2526 + $0xa90] sm:$0xff]
        %v3017 = vld [vmem:[%s2526 + $0xa98] sm:$0xff]
        %v3018 = vld [vmem:[%s2526 + $0xaa0] sm:$0xff]
        %v3019 = vld [vmem:[%s2526 + $0xaa8] sm:$0xff]
        %v3020 = vld [vmem:[%s2526 + $0xab0] sm:$0xff]
        %v3021 = vld [vmem:[%s2526 + $0xab8] sm:$0xff]
        %v3022 = vld [vmem:[%s2526 + $0xac0] sm:$0xff]
        %v3023 = vld [vmem:[%s2526 + $0xac8] sm:$0xff]
        %v3024 = vld [vmem:[%s2526 + $0xad0] sm:$0xff]
        %v3025 = vld [vmem:[%s2526 + $0xad8] sm:$0xff]
        %v3026 = vld [vmem:[%s2526 + $0xae0] sm:$0xff]
        %v3027 = vld [vmem:[%s2526 + $0xae8] sm:$0xff]
        %v3028 = vld [vmem:[%s2526 + $0xaf0] sm:$0xff]
        %v3029 = vld [vmem:[%s2526 + $0xaf8] sm:$0xff]
        %v3030 = vld [vmem:[%s2526 + $0xb00] sm:$0xff]
        %v3031 = vld [vmem:[%s2526 + $0xb08] sm:$0xff]
        %v3032 = vld [vmem:[%s2526 + $0xb10] sm:$0xff]
        %v3033 = vld [vmem:[%s2526 + $0xb18] sm:$0xff]
        %v3034 = vld [vmem:[%s2526 + $0xb20] sm:$0xff]
        %v3035 = vld [vmem:[%s2526 + $0xb28] sm:$0xff]
        %v3036 = vld [vmem:[%s2526 + $0xb30] sm:$0xff]
        %v3037 = vld [vmem:[%s2526 + $0xb38] sm:$0xff]
        %v3038 = vld [vmem:[%s2526 + $0xb40] sm:$0xff]
        %v3039 = vld [vmem:[%s2526 + $0xb48] sm:$0xff]
        %v3040 = vld [vmem:[%s2526 + $0xb50] sm:$0xff]
        %v3041 = vld [vmem:[%s2526 + $0xb58] sm:$0xff]
        %v3042 = vld [vmem:[%s2526 + $0xb60] sm:$0xff]
        %v3043 = vld [vmem:[%s2526 + $0xb68] sm:$0xff]
        %v3044 = vld [vmem:[%s2526 + $0xb70] sm:$0xff]
        %v3045 = vld [vmem:[%s2526 + $0xb78] sm:$0xff]
        %v3046 = vld [vmem:[%s2526 + $0xb80] sm:$0xff]
        %v3047 = vld [vmem:[%s2526 + $0xb88] sm:$0xff]
        %v3048 = vld [vmem:[%s2526 + $0xb90] sm:$0xff]
        %v3049 = vld [vmem:[%s2526 + $0xb98] sm:$0xff]
        %v3050 = vld [vmem:[%s2526 + $0xba0] sm:$0xff]
        %v3051 = vld [vmem:[%s2526 + $0xba8] sm:$0xff]
        %v3052 = vld [vmem:[%s2526 + $0xbb0] sm:$0xff]
        %v3053 = vld [vmem:[%s2526 + $0xbb8] sm:$0xff]
        %v3054 = vld [vmem:[%s2526 + $0xbc0] sm:$0xff]
        %v3055 = vld [vmem:[%s2526 + $0xbc8] sm:$0xff]
        %v3056 = vld [vmem:[%s2526 + $0xbd0] sm:$0xff]
        %v3057 = vld [vmem:[%s2526 + $0xbd8] sm:$0xff]
        %v3058 = vld [vmem:[%s2526 + $0xbe0] sm:$0xff]
        %v3059 = vld [vmem:[%s2526 + $0xbe8] sm:$0xff]
        %v3060 = vld [vmem:[%s2526 + $0xbf0] sm:$0xff]
        %v3061 = vld [vmem:[%s2526 + $0xbf8] sm:$0xff]
        %v3062 = vld [vmem:[%s2526 + $0xc00] sm:$0xff]
        %v3063 = vld [vmem:[%s2526 + $0xc08] sm:$0xff]
        %v3064 = vld [vmem:[%s2526 + $0xc10] sm:$0xff]
        %v3065 = vld [vmem:[%s2526 + $0xc18] sm:$0xff]
        %v3066 = vld [vmem:[%s2526 + $0xc20] sm:$0xff]
        %v3067 = vld [vmem:[%s2526 + $0xc28] sm:$0xff]
        %v3068 = vld [vmem:[%s2526 + $0xc30] sm:$0xff]
        %v3069 = vld [vmem:[%s2526 + $0xc38] sm:$0xff]
        %v3070 = vld [vmem:[%s2526 + $0xc40] sm:$0xff]
        %v3071 = vld [vmem:[%s2526 + $0xc48] sm:$0xff]
        %v3072 = vld [vmem:[%s2526 + $0xc50] sm:$0xff]
        %v3073 = vld [vmem:[%s2526 + $0xc58] sm:$0xff]
        %v3074 = vld [vmem:[%s2526 + $0xc60] sm:$0xff]
        %v3075 = vld [vmem:[%s2526 + $0xc68] sm:$0xff]
        %v3076 = vld [vmem:[%s2526 + $0xc70] sm:$0xff]
        %v3077 = vld [vmem:[%s2526 + $0xc78] sm:$0xff]
        %v3078 = vld [vmem:[%s2526 + $0xc80] sm:$0xff]
        %v3079 = vld [vmem:[%s2526 + $0xc88] sm:$0xff]
        %v3080 = vld [vmem:[%s2526 + $0xc90] sm:$0xff]
        %v3081 = vld [vmem:[%s2526 + $0xc98] sm:$0xff]
        %v3082 = vld [vmem:[%s2526 + $0xca0] sm:$0xff]
        %v3083 = vld [vmem:[%s2526 + $0xca8] sm:$0xff]
        %v3084 = vld [vmem:[%s2526 + $0xcb0] sm:$0xff]
        %v3085 = vld [vmem:[%s2526 + $0xcb8] sm:$0xff]
        %v3086 = vld [vmem:[%s2526 + $0xcc0] sm:$0xff]
        %v3087 = vld [vmem:[%s2526 + $0xcc8] sm:$0xff]
        %v3088 = vld [vmem:[%s2526 + $0xcd0] sm:$0xff]
        %v3089 = vld [vmem:[%s2526 + $0xcd8] sm:$0xff]
        %v3090 = vld [vmem:[%s2526 + $0xce0] sm:$0xff]
        %v3091 = vld [vmem:[%s2526 + $0xce8] sm:$0xff]
        %v3092 = vld [vmem:[%s2526 + $0xcf0] sm:$0xff]
        %v3093 = vld [vmem:[%s2526 + $0xcf8] sm:$0xff]
        %v3094 = vld [vmem:[%s2526 + $0xd00] sm:$0xff]
        %v3095 = vld [vmem:[%s2526 + $0xd08] sm:$0xff]
        %v3096 = vld [vmem:[%s2526 + $0xd10] sm:$0xff]
        %v3097 = vld [vmem:[%s2526 + $0xd18] sm:$0xff]
        %v3098 = vld [vmem:[%s2526 + $0xd20] sm:$0xff]
        %v3099 = vld [vmem:[%s2526 + $0xd28] sm:$0xff]
        %v3100 = vld [vmem:[%s2526 + $0xd30] sm:$0xff]
        %v3101 = vld [vmem:[%s2526 + $0xd38] sm:$0xff]
        %v3102 = vld [vmem:[%s2526 + $0xd40] sm:$0xff]
        %v3103 = vld [vmem:[%s2526 + $0xd48] sm:$0xff]
        %v3104 = vld [vmem:[%s2526 + $0xd50] sm:$0xff]
        %v3105 = vld [vmem:[%s2526 + $0xd58] sm:$0xff]
        %v3106 = vld [vmem:[%s2526 + $0xd60] sm:$0xff]
        %v3107 = vld [vmem:[%s2526 + $0xd68] sm:$0xff]
        %v3108 = vld [vmem:[%s2526 + $0xd70] sm:$0xff]
        %v3109 = vld [vmem:[%s2526 + $0xd78] sm:$0xff]
        %v3110 = vld [vmem:[%s2526 + $0xd80] sm:$0xff]
        %v3111 = vld [vmem:[%s2526 + $0xd88] sm:$0xff]
        %v3112 = vld [vmem:[%s2526 + $0xd90] sm:$0xff]
        %v3113 = vld [vmem:[%s2526 + $0xd98] sm:$0xff]
        %v3114 = vld [vmem:[%s2526 + $0xda0] sm:$0xff]
        %v3115 = vld [vmem:[%s2526 + $0xda8] sm:$0xff]
        %v3116 = vld [vmem:[%s2526 + $0xdb0] sm:$0xff]
        %v3117 = vld [vmem:[%s2526 + $0xdb8] sm:$0xff]
        %v3118 = vld [vmem:[%s2526 + $0xdc0] sm:$0xff]
        %v3119 = vld [vmem:[%s2526 + $0xdc8] sm:$0xff]
        %v3120 = vld [vmem:[%s2526 + $0xdd0] sm:$0xff]
        %v3121 = vld [vmem:[%s2526 + $0xdd8] sm:$0xff]
        %v3122 = vld [vmem:[%s2526 + $0xde0] sm:$0xff]
        %v3123 = vld [vmem:[%s2526 + $0xde8] sm:$0xff]
        %v3124 = vld [vmem:[%s2526 + $0xdf0] sm:$0xff]
        %v3125 = vld [vmem:[%s2526 + $0xdf8] sm:$0xff]
        %v3126 = vld [vmem:[%s2526 + $0xe00] sm:$0xff]
        %v3127 = vld [vmem:[%s2526 + $0xe08] sm:$0xff]
        %v3128 = vld [vmem:[%s2526 + $0xe10] sm:$0xff]
        %v3129 = vld [vmem:[%s2526 + $0xe18] sm:$0xff]
        %v3130 = vld [vmem:[%s2526 + $0xe20] sm:$0xff]
        %v3131 = vld [vmem:[%s2526 + $0xe28] sm:$0xff]
        %v3132 = vld [vmem:[%s2526 + $0xe30] sm:$0xff]
        %v3133 = vld [vmem:[%s2526 + $0xe38] sm:$0xff]
        %v3134 = vld [vmem:[%s2526 + $0xe40] sm:$0xff]
        %v3135 = vld [vmem:[%s2526 + $0xe48] sm:$0xff]
        %v3136 = vld [vmem:[%s2526 + $0xe50] sm:$0xff]
        %v3137 = vld [vmem:[%s2526 + $0xe58] sm:$0xff]
        %v3138 = vld [vmem:[%s2526 + $0xe60] sm:$0xff]
        %v3139 = vld [vmem:[%s2526 + $0xe68] sm:$0xff]
        %v3140 = vld [vmem:[%s2526 + $0xe70] sm:$0xff]
        %v3141 = vld [vmem:[%s2526 + $0xe78] sm:$0xff]
        %v3142 = vld [vmem:[%s2526 + $0xe80] sm:$0xff]
        %v3143 = vld [vmem:[%s2526 + $0xe88] sm:$0xff]
        %v3144 = vld [vmem:[%s2526 + $0xe90] sm:$0xff]
        %v3145 = vld [vmem:[%s2526 + $0xe98] sm:$0xff]
        %v3146 = vld [vmem:[%s2526 + $0xea0] sm:$0xff]
        %v3147 = vld [vmem:[%s2526 + $0xea8] sm:$0xff]
        %v3148 = vld [vmem:[%s2526 + $0xeb0] sm:$0xff]
        %v3149 = vld [vmem:[%s2526 + $0xeb8] sm:$0xff]
        %v3150 = vld [vmem:[%s2526 + $0xec0] sm:$0xff]
        %v3151 = vld [vmem:[%s2526 + $0xec8] sm:$0xff]
        %v3152 = vld [vmem:[%s2526 + $0xed0] sm:$0xff]
        %v3153 = vld [vmem:[%s2526 + $0xed8] sm:$0xff]
        %v3154 = vld [vmem:[%s2526 + $0xee0] sm:$0xff]
        %v3155 = vld [vmem:[%s2526 + $0xee8] sm:$0xff]
        %v3156 = vld [vmem:[%s2526 + $0xef0] sm:$0xff]
        %v3157 = vld [vmem:[%s2526 + $0xef8] sm:$0xff]
        %v3158 = vld [vmem:[#allocation2] sm:$0xff]
        %v3159 = vld [vmem:[#allocation2 + $0x8] sm:$0xff]
        %v3160 = vld [vmem:[#allocation2 + $0x10] sm:$0xff]
        %v3161 = vld [vmem:[#allocation2 + $0x18] sm:$0xff]
        %v3162 = vld [vmem:[#allocation2 + $0x20] sm:$0xff]
        %v3163 = vld [vmem:[#allocation2 + $0x28] sm:$0xff]
        %v3164 = vld [vmem:[#allocation2 + $0x30] sm:$0xff]
        %v3165 = vld [vmem:[#allocation2 + $0x38] sm:$0xff]
        %v3166 = vld [vmem:[#allocation2 + $0x40] sm:$0xff]
        %v3167 = vld [vmem:[#allocation2 + $0x48] sm:$0xff]
        %v3168 = vld [vmem:[#allocation2 + $0x50] sm:$0xff]
        %v3169 = vld [vmem:[#allocation2 + $0x58] sm:$0xff]
        %v3170 = vld [vmem:[#allocation2 + $0x60] sm:$0xff]
        %v3171 = vld [vmem:[#allocation2 + $0x68] sm:$0xff]
        %v3172 = vld [vmem:[#allocation2 + $0x70] sm:$0xff]
        %v3173 = vld [vmem:[#allocation2 + $0x78] sm:$0xff]
        %v3174 = vld [vmem:[#allocation2 + $0x80] sm:$0xff]
        %v3175 = vld [vmem:[#allocation2 + $0x88] sm:$0xff]
        %v3176 = vld [vmem:[#allocation2 + $0x90] sm:$0xff]
        %v3177 = vld [vmem:[#allocation2 + $0x98] sm:$0xff]
        %v3178 = vmul.f32 %v2582, %v2678
        %v3179 = vmul.f32 %v2583, %v2679
        %v3180 = vmul.f32 %v2584, %v2680
        %v3181 = vmul.f32 %v2585, %v2681
        %v3182 = vmul.f32 %v2586, %v2682
        %v3183 = vmul.f32 %v2587, %v2683
        %v3184 = vmul.f32 %v2588, %v2684
        %v3185 = vmul.f32 %v2589, %v2685
        %v3186 = vmul.f32 %v2590, %v2686
        %v3187 = vmul.f32 %v2591, %v2687
        %v3188 = vmul.f32 %v2592, %v2688
        %v3189 = vmul.f32 %v2593, %v2689
        %v3190 = vmul.f32 %v2594, %v2690
        %v3191 = vmul.f32 %v2595, %v2691
        %v3192 = vmul.f32 %v2596, %v2692
        %v3193 = vmul.f32 %v2597, %v2693
        %v3194 = vmul.f32 %v2598, %v2694
        %v3195 = vmul.f32 %v2599, %v2695
        %v3196 = vmul.f32 %v2600, %v2696
        %v3197 = vmul.f32 %v2601, %v2697
        %v3198 = vmul.f32 %v2602, %v2698
        %v3199 = vmul.f32 %v2603, %v2699
        %v3200 = vmul.f32 %v2604, %v2700
        %v3201 = vmul.f32 %v2605, %v2701
        %v3202 = vmul.f32 %v2606, %v2702
        %v3203 = vmul.f32 %v2607, %v2703
        %v3204 = vmul.f32 %v2608, %v2704
        %v3205 = vmul.f32 %v2609, %v2705
        %v3206 = vmul.f32 %v2610, %v2706
        %v3207 = vmul.f32 %v2611, %v2707
        %v3208 = vmul.f32 %v2612, %v2708
        %v3209 = vmul.f32 %v2613, %v2709
        %v3210 = vmul.f32 %v2614, %v2710
        %v3211 = vmul.f32 %v2615, %v2711
        %v3212 = vmul.f32 %v2616, %v2712
        %v3213 = vmul.f32 %v2617, %v2713
        %v3214 = vmul.f32 %v2618, %v2714
        %v3215 = vmul.f32 %v2619, %v2715
        %v3216 = vmul.f32 %v2620, %v2716
        %v3217 = vmul.f32 %v2621, %v2717
        %v3218 = vmul.f32 %v2622, %v2718
        %v3219 = vmul.f32 %v2623, %v2719
        %v3220 = vmul.f32 %v2624, %v2720
        %v3221 = vmul.f32 %v2625, %v2721
        %v3222 = vmul.f32 %v2626, %v2722
        %v3223 = vmul.f32 %v2627, %v2723
        %v3224 = vmul.f32 %v2628, %v2724
        %v3225 = vmul.f32 %v2629, %v2725
        %v3226 = vmul.f32 %v2582, %v2726
        %v3227 = vmul.f32 %v2583, %v2727
        %v3228 = vmul.f32 %v2584, %v2728
        %v3229 = vmul.f32 %v2585, %v2729
        %v3230 = vmul.f32 %v2586, %v2730
        %v3231 = vmul.f32 %v2587, %v2731
        %v3232 = vmul.f32 %v2588, %v2732
        %v3233 = vmul.f32 %v2589, %v2733
        %v3234 = vmul.f32 %v2590, %v2734
        %v3235 = vmul.f32 %v2591, %v2735
        %v3236 = vmul.f32 %v2592, %v2736
        %v3237 = vmul.f32 %v2593, %v2737
        %v3238 = vmul.f32 %v2594, %v2738
        %v3239 = vmul.f32 %v2595, %v2739
        %v3240 = vmul.f32 %v2596, %v2740
        %v3241 = vmul.f32 %v2597, %v2741
        %v3242 = vmul.f32 %v2598, %v2742
        %v3243 = vmul.f32 %v2599, %v2743
        %v3244 = vmul.f32 %v2600, %v2744
        %v3245 = vmul.f32 %v2601, %v2745
        %v3246 = vmul.f32 %v2602, %v2746
        %v3247 = vmul.f32 %v2603, %v2747
        %v3248 = vmul.f32 %v2604, %v2748
        %v3249 = vmul.f32 %v2605, %v2749
        %v3250 = vmul.f32 %v2606, %v2750
        %v3251 = vmul.f32 %v2607, %v2751
        %v3252 = vmul.f32 %v2608, %v2752
        %v3253 = vmul.f32 %v2609, %v2753
        %v3254 = vmul.f32 %v2610, %v2754
        %v3255 = vmul.f32 %v2611, %v2755
        %v3256 = vmul.f32 %v2612, %v2756
        %v3257 = vmul.f32 %v2613, %v2757
        %v3258 = vmul.f32 %v2614, %v2758
        %v3259 = vmul.f32 %v2615, %v2759
        %v3260 = vmul.f32 %v2616, %v2760
        %v3261 = vmul.f32 %v2617, %v2761
        %v3262 = vmul.f32 %v2618, %v2762
        %v3263 = vmul.f32 %v2619, %v2763
        %v3264 = vmul.f32 %v2620, %v2764
        %v3265 = vmul.f32 %v2621, %v2765
        %v3266 = vmul.f32 %v2622, %v2766
        %v3267 = vmul.f32 %v2623, %v2767
        %v3268 = vmul.f32 %v2624, %v2768
        %v3269 = vmul.f32 %v2625, %v2769
        %v3270 = vmul.f32 %v2626, %v2770
        %v3271 = vmul.f32 %v2627, %v2771
        %v3272 = vmul.f32 %v2628, %v2772
        %v3273 = vmul.f32 %v2629, %v2773
        %v3274 = vmul.f32 %v2582, %v2774
        %v3275 = vmul.f32 %v2583, %v2775
        %v3276 = vmul.f32 %v2584, %v2776
        %v3277 = vmul.f32 %v2585, %v2777
        %v3278 = vmul.f32 %v2586, %v2778
        %v3279 = vmul.f32 %v2587, %v2779
        %v3280 = vmul.f32 %v2588, %v2780
        %v3281 = vmul.f32 %v2589, %v2781
        %v3282 = vmul.f32 %v2590, %v2782
        %v3283 = vmul.f32 %v2591, %v2783
        %v3284 = vmul.f32 %v2592, %v2784
        %v3285 = vmul.f32 %v2593, %v2785
        %v3286 = vmul.f32 %v2594, %v2786
        %v3287 = vmul.f32 %v2595, %v2787
        %v3288 = vmul.f32 %v2596, %v2788
        %v3289 = vmul.f32 %v2597, %v2789
        %v3290 = vmul.f32 %v2598, %v2790
        %v3291 = vmul.f32 %v2599, %v2791
        %v3292 = vmul.f32 %v2600, %v2792
        %v3293 = vmul.f32 %v2601, %v2793
        %v3294 = vmul.f32 %v2602, %v2794
        %v3295 = vmul.f32 %v2603, %v2795
        %v3296 = vmul.f32 %v2604, %v2796
        %v3297 = vmul.f32 %v2605, %v2797
        %v3298 = vmul.f32 %v2606, %v2798
        %v3299 = vmul.f32 %v2607, %v2799
        %v3300 = vmul.f32 %v2608, %v2800
        %v3301 = vmul.f32 %v2609, %v2801
        %v3302 = vmul.f32 %v2610, %v2802
        %v3303 = vmul.f32 %v2611, %v2803
        %v3304 = vmul.f32 %v2612, %v2804
        %v3305 = vmul.f32 %v2613, %v2805
        %v3306 = vmul.f32 %v2614, %v2806
        %v3307 = vmul.f32 %v2615, %v2807
        %v3308 = vmul.f32 %v2616, %v2808
        %v3309 = vmul.f32 %v2617, %v2809
        %v3310 = vmul.f32 %v2618, %v2810
        %v3311 = vmul.f32 %v2619, %v2811
        %v3312 = vmul.f32 %v2620, %v2812
        %v3313 = vmul.f32 %v2621, %v2813
        %v3314 = vmul.f32 %v2622, %v2814
        %v3315 = vmul.f32 %v2623, %v2815
        %v3316 = vmul.f32 %v2624, %v2816
        %v3317 = vmul.f32 %v2625, %v2817
        %v3318 = vmul.f32 %v2626, %v2818
        %v3319 = vmul.f32 %v2627, %v2819
        %v3320 = vmul.f32 %v2628, %v2820
        %v3321 = vmul.f32 %v2629, %v2821
        %v3322 = vmul.f32 %v2582, %v2822
        %v3323 = vmul.f32 %v2583, %v2823
        %v3324 = vmul.f32 %v2584, %v2824
        %v3325 = vmul.f32 %v2585, %v2825
        %v3326 = vmul.f32 %v2586, %v2826
        %v3327 = vmul.f32 %v2587, %v2827
        %v3328 = vmul.f32 %v2588, %v2828
        %v3329 = vmul.f32 %v2589, %v2829
        %v3330 = vmul.f32 %v2590, %v2830
        %v3331 = vmul.f32 %v2591, %v2831
        %v3332 = vmul.f32 %v2592, %v2832
        %v3333 = vmul.f32 %v2593, %v2833
        %v3334 = vmul.f32 %v2594, %v2834
        %v3335 = vmul.f32 %v2595, %v2835
        %v3336 = vmul.f32 %v2596, %v2836
        %v3337 = vmul.f32 %v2597, %v2837
        %v3338 = vmul.f32 %v2598, %v2838
        %v3339 = vmul.f32 %v2599, %v2839
        %v3340 = vmul.f32 %v2600, %v2840
        %v3341 = vmul.f32 %v2601, %v2841
        %v3342 = vmul.f32 %v2602, %v2842
        %v3343 = vmul.f32 %v2603, %v2843
        %v3344 = vmul.f32 %v2604, %v2844
        %v3345 = vmul.f32 %v2605, %v2845
        %v3346 = vmul.f32 %v2606, %v2846
        %v3347 = vmul.f32 %v2607, %v2847
        %v3348 = vmul.f32 %v2608, %v2848
        %v3349 = vmul.f32 %v2609, %v2849
        %v3350 = vmul.f32 %v2610, %v2850
        %v3351 = vmul.f32 %v2611, %v2851
        %v3352 = vmul.f32 %v2612, %v2852
        %v3353 = vmul.f32 %v2613, %v2853
        %v3354 = vmul.f32 %v2614, %v2854
        %v3355 = vmul.f32 %v2615, %v2855
        %v3356 = vmul.f32 %v2616, %v2856
        %v3357 = vmul.f32 %v2617, %v2857
        %v3358 = vmul.f32 %v2618, %v2858
        %v3359 = vmul.f32 %v2619, %v2859
        %v3360 = vmul.f32 %v2620, %v2860
        %v3361 = vmul.f32 %v2621, %v2861
        %v3362 = vmul.f32 %v2622, %v2862
        %v3363 = vmul.f32 %v2623, %v2863
        %v3364 = vmul.f32 %v2624, %v2864
        %v3365 = vmul.f32 %v2625, %v2865
        %v3366 = vmul.f32 %v2626, %v2866
        %v3367 = vmul.f32 %v2627, %v2867
        %v3368 = vmul.f32 %v2628, %v2868
        %v3369 = vmul.f32 %v2629, %v2869
        %v3370 = vmul.f32 %v2582, %v2870
        %v3371 = vmul.f32 %v2583, %v2871
        %v3372 = vmul.f32 %v2584, %v2872
        %v3373 = vmul.f32 %v2585, %v2873
        %v3374 = vmul.f32 %v2586, %v2874
        %v3375 = vmul.f32 %v2587, %v2875
        %v3376 = vmul.f32 %v2588, %v2876
        %v3377 = vmul.f32 %v2589, %v2877
        %v3378 = vmul.f32 %v2590, %v2878
        %v3379 = vmul.f32 %v2591, %v2879
        %v3380 = vmul.f32 %v2592, %v2880
        %v3381 = vmul.f32 %v2593, %v2881
        %v3382 = vmul.f32 %v2594, %v2882
        %v3383 = vmul.f32 %v2595, %v2883
        %v3384 = vmul.f32 %v2596, %v2884
        %v3385 = vmul.f32 %v2597, %v2885
        %v3386 = vmul.f32 %v2598, %v2886
        %v3387 = vmul.f32 %v2599, %v2887
        %v3388 = vmul.f32 %v2600, %v2888
        %v3389 = vmul.f32 %v2601, %v2889
        %v3390 = vmul.f32 %v2602, %v2890
        %v3391 = vmul.f32 %v2603, %v2891
        %v3392 = vmul.f32 %v2604, %v2892
        %v3393 = vmul.f32 %v2605, %v2893
        %v3394 = vmul.f32 %v2606, %v2894
        %v3395 = vmul.f32 %v2607, %v2895
        %v3396 = vmul.f32 %v2608, %v2896
        %v3397 = vmul.f32 %v2609, %v2897
        %v3398 = vmul.f32 %v2610, %v2898
        %v3399 = vmul.f32 %v2611, %v2899
        %v3400 = vmul.f32 %v2612, %v2900
        %v3401 = vmul.f32 %v2613, %v2901
        %v3402 = vmul.f32 %v2614, %v2902
        %v3403 = vmul.f32 %v2615, %v2903
        %v3404 = vmul.f32 %v2616, %v2904
        %v3405 = vmul.f32 %v2617, %v2905
        %v3406 = vmul.f32 %v2618, %v2906
        %v3407 = vmul.f32 %v2619, %v2907
        %v3408 = vmul.f32 %v2620, %v2908
        %v3409 = vmul.f32 %v2621, %v2909
        %v3410 = vmul.f32 %v2622, %v2910
        %v3411 = vmul.f32 %v2623, %v2911
        %v3412 = vmul.f32 %v2624, %v2912
        %v3413 = vmul.f32 %v2625, %v2913
        %v3414 = vmul.f32 %v2626, %v2914
        %v3415 = vmul.f32 %v2627, %v2915
        %v3416 = vmul.f32 %v2628, %v2916
        %v3417 = vmul.f32 %v2629, %v2917
        %v3418 = vmul.f32 %v2582, %v2918
        %v3419 = vmul.f32 %v2583, %v2919
        %v3420 = vmul.f32 %v2584, %v2920
        %v3421 = vmul.f32 %v2585, %v2921
        %v3422 = vmul.f32 %v2586, %v2922
        %v3423 = vmul.f32 %v2587, %v2923
        %v3424 = vmul.f32 %v2588, %v2924
        %v3425 = vmul.f32 %v2589, %v2925
        %v3426 = vmul.f32 %v2590, %v2926
        %v3427 = vmul.f32 %v2591, %v2927
        %v3428 = vmul.f32 %v2592, %v2928
        %v3429 = vmul.f32 %v2593, %v2929
        %v3430 = vmul.f32 %v2594, %v2930
        %v3431 = vmul.f32 %v2595, %v2931
        %v3432 = vmul.f32 %v2596, %v2932
        %v3433 = vmul.f32 %v2597, %v2933
        %v3434 = vmul.f32 %v2598, %v2934
        %v3435 = vmul.f32 %v2599, %v2935
        %v3436 = vmul.f32 %v2600, %v2936
        %v3437 = vmul.f32 %v2601, %v2937
        %v3438 = vmul.f32 %v2602, %v2938
        %v3439 = vmul.f32 %v2603, %v2939
        %v3440 = vmul.f32 %v2604, %v2940
        %v3441 = vmul.f32 %v2605, %v2941
        %v3442 = vmul.f32 %v2606, %v2942
        %v3443 = vmul.f32 %v2607, %v2943
        %v3444 = vmul.f32 %v2608, %v2944
        %v3445 = vmul.f32 %v2609, %v2945
        %v3446 = vmul.f32 %v2610, %v2946
        %v3447 = vmul.f32 %v2611, %v2947
        %v3448 = vmul.f32 %v2612, %v2948
        %v3449 = vmul.f32 %v2613, %v2949
        %v3450 = vmul.f32 %v2614, %v2950
        %v3451 = vmul.f32 %v2615, %v2951
        %v3452 = vmul.f32 %v2616, %v2952
        %v3453 = vmul.f32 %v2617, %v2953
        %v3454 = vmul.f32 %v2618, %v2954
        %v3455 = vmul.f32 %v2619, %v2955
        %v3456 = vmul.f32 %v2620, %v2956
        %v3457 = vmul.f32 %v2621, %v2957
        %v3458 = vmul.f32 %v2622, %v2958
        %v3459 = vmul.f32 %v2623, %v2959
        %v3460 = vmul.f32 %v2624, %v2960
        %v3461 = vmul.f32 %v2625, %v2961
        %v3462 = vmul.f32 %v2626, %v2962
        %v3463 = vmul.f32 %v2627, %v2963
        %v3464 = vmul.f32 %v2628, %v2964
        %v3465 = vmul.f32 %v2629, %v2965
        %v3466 = vmul.f32 %v2582, %v2966
        %v3467 = vmul.f32 %v2583, %v2967
        %v3468 = vmul.f32 %v2584, %v2968
        %v3469 = vmul.f32 %v2585, %v2969
        %v3470 = vmul.f32 %v2586, %v2970
        %v3471 = vmul.f32 %v2587, %v2971
        %v3472 = vmul.f32 %v2588, %v2972
        %v3473 = vmul.f32 %v2589, %v2973
        %v3474 = vmul.f32 %v2590, %v2974
        %v3475 = vmul.f32 %v2591, %v2975
        %v3476 = vmul.f32 %v2592, %v2976
        %v3477 = vmul.f32 %v2593, %v2977
        %v3478 = vmul.f32 %v2594, %v2978
        %v3479 = vmul.f32 %v2595, %v2979
        %v3480 = vmul.f32 %v2596, %v2980
        %v3481 = vmul.f32 %v2597, %v2981
        %v3482 = vmul.f32 %v2598, %v2982
        %v3483 = vmul.f32 %v2599, %v2983
        %v3484 = vmul.f32 %v2600, %v2984
        %v3485 = vmul.f32 %v2601, %v2985
        %v3486 = vmul.f32 %v2602, %v2986
        %v3487 = vmul.f32 %v2603, %v2987
        %v3488 = vmul.f32 %v2604, %v2988
        %v3489 = vmul.f32 %v2605, %v2989
        %v3490 = vmul.f32 %v2606, %v2990
        %v3491 = vmul.f32 %v2607, %v2991
        %v3492 = vmul.f32 %v2608, %v2992
        %v3493 = vmul.f32 %v2609, %v2993
        %v3494 = vmul.f32 %v2610, %v2994
        %v3495 = vmul.f32 %v2611, %v2995
        %v3496 = vmul.f32 %v2612, %v2996
        %v3497 = vmul.f32 %v2613, %v2997
        %v3498 = vmul.f32 %v2614, %v2998
        %v3499 = vmul.f32 %v2615, %v2999
        %v3500 = vmul.f32 %v2616, %v3000
        %v3501 = vmul.f32 %v2617, %v3001
        %v3502 = vmul.f32 %v2618, %v3002
        %v3503 = vmul.f32 %v2619, %v3003
        %v3504 = vmul.f32 %v2620, %v3004
        %v3505 = vmul.f32 %v2621, %v3005
        %v3506 = vmul.f32 %v2622, %v3006
        %v3507 = vmul.f32 %v2623, %v3007
        %v3508 = vmul.f32 %v2624, %v3008
        %v3509 = vmul.f32 %v2625, %v3009
        %v3510 = vmul.f32 %v2626, %v3010
        %v3511 = vmul.f32 %v2627, %v3011
        %v3512 = vmul.f32 %v2628, %v3012
        %v3513 = vmul.f32 %v2629, %v3013
        %v3514 = vmul.f32 %v2582, %v3014
        %v3515 = vmul.f32 %v2583, %v3015
        %v3516 = vmul.f32 %v2584, %v3016
        %v3517 = vmul.f32 %v2585, %v3017
        %v3518 = vmul.f32 %v2586, %v3018
        %v3519 = vmul.f32 %v2587, %v3019
        %v3520 = vmul.f32 %v2588, %v3020
        %v3521 = vmul.f32 %v2589, %v3021
        %v3522 = vmul.f32 %v2590, %v3022
        %v3523 = vmul.f32 %v2591, %v3023
        %v3524 = vmul.f32 %v2592, %v3024
        %v3525 = vmul.f32 %v2593, %v3025
        %v3526 = vmul.f32 %v2594, %v3026
        %v3527 = vmul.f32 %v2595, %v3027
        %v3528 = vmul.f32 %v2596, %v3028
        %v3529 = vmul.f32 %v2597, %v3029
        %v3530 = vmul.f32 %v2598, %v3030
        %v3531 = vmul.f32 %v2599, %v3031
        %v3532 = vmul.f32 %v2600, %v3032
        %v3533 = vmul.f32 %v2601, %v3033
        %v3534 = vmul.f32 %v2602, %v3034
        %v3535 = vmul.f32 %v2603, %v3035
        %v3536 = vmul.f32 %v2604, %v3036
        %v3537 = vmul.f32 %v2605, %v3037
        %v3538 = vmul.f32 %v2606, %v3038
        %v3539 = vmul.f32 %v2607, %v3039
        %v3540 = vmul.f32 %v2608, %v3040
        %v3541 = vmul.f32 %v2609, %v3041
        %v3542 = vmul.f32 %v2610, %v3042
        %v3543 = vmul.f32 %v2611, %v3043
        %v3544 = vmul.f32 %v2612, %v3044
        %v3545 = vmul.f32 %v2613, %v3045
        %v3546 = vmul.f32 %v2614, %v3046
        %v3547 = vmul.f32 %v2615, %v3047
        %v3548 = vmul.f32 %v2616, %v3048
        %v3549 = vmul.f32 %v2617, %v3049
        %v3550 = vmul.f32 %v2618, %v3050
        %v3551 = vmul.f32 %v2619, %v3051
        %v3552 = vmul.f32 %v2620, %v3052
        %v3553 = vmul.f32 %v2621, %v3053
        %v3554 = vmul.f32 %v2622, %v3054
        %v3555 = vmul.f32 %v2623, %v3055
        %v3556 = vmul.f32 %v2624, %v3056
        %v3557 = vmul.f32 %v2625, %v3057
        %v3558 = vmul.f32 %v2626, %v3058
        %v3559 = vmul.f32 %v2627, %v3059
        %v3560 = vmul.f32 %v2628, %v3060
        %v3561 = vmul.f32 %v2629, %v3061
        %v3562 = vmul.f32 %v2582, %v3062
        %v3563 = vmul.f32 %v2583, %v3063
        %v3564 = vmul.f32 %v2584, %v3064
        %v3565 = vmul.f32 %v2585, %v3065
        %v3566 = vmul.f32 %v2586, %v3066
        %v3567 = vmul.f32 %v2587, %v3067
        %v3568 = vmul.f32 %v2588, %v3068
        %v3569 = vmul.f32 %v2589, %v3069
        %v3570 = vmul.f32 %v2590, %v3070
        %v3571 = vmul.f32 %v2591, %v3071
        %v3572 = vmul.f32 %v2592, %v3072
        %v3573 = vmul.f32 %v2593, %v3073
        %v3574 = vmul.f32 %v2594, %v3074
        %v3575 = vmul.f32 %v2595, %v3075
        %v3576 = vmul.f32 %v2596, %v3076
        %v3577 = vmul.f32 %v2597, %v3077
        %v3578 = vmul.f32 %v2598, %v3078
        %v3579 = vmul.f32 %v2599, %v3079
        %v3580 = vmul.f32 %v2600, %v3080
        %v3581 = vmul.f32 %v2601, %v3081
        %v3582 = vmul.f32 %v2602, %v3082
        %v3583 = vmul.f32 %v2603, %v3083
        %v3584 = vmul.f32 %v2604, %v3084
        %v3585 = vmul.f32 %v2605, %v3085
        %v3586 = vmul.f32 %v2606, %v3086
        %v3587 = vmul.f32 %v2607, %v3087
        %v3588 = vmul.f32 %v2608, %v3088
        %v3589 = vmul.f32 %v2609, %v3089
        %v3590 = vmul.f32 %v2610, %v3090
        %v3591 = vmul.f32 %v2611, %v3091
        %v3592 = vmul.f32 %v2612, %v3092
        %v3593 = vmul.f32 %v2613, %v3093
        %v3594 = vmul.f32 %v2614, %v3094
        %v3595 = vmul.f32 %v2615, %v3095
        %v3596 = vmul.f32 %v2616, %v3096
        %v3597 = vmul.f32 %v2617, %v3097
        %v3598 = vmul.f32 %v2618, %v3098
        %v3599 = vmul.f32 %v2619, %v3099
        %v3600 = vmul.f32 %v2620, %v3100
        %v3601 = vmul.f32 %v2621, %v3101
        %v3602 = vmul.f32 %v2622, %v3102
        %v3603 = vmul.f32 %v2623, %v3103
        %v3604 = vmul.f32 %v2624, %v3104
        %v3605 = vmul.f32 %v2625, %v3105
        %v3606 = vmul.f32 %v2626, %v3106
        %v3607 = vmul.f32 %v2627, %v3107
        %v3608 = vmul.f32 %v2628, %v3108
        %v3609 = vmul.f32 %v2629, %v3109
        %v3610 = vmul.f32 %v2582, %v3110
        %v3611 = vmul.f32 %v2583, %v3111
        %v3612 = vmul.f32 %v2584, %v3112
        %v3613 = vmul.f32 %v2585, %v3113
        %v3614 = vmul.f32 %v2586, %v3114
        %v3615 = vmul.f32 %v2587, %v3115
        %v3616 = vmul.f32 %v2588, %v3116
        %v3617 = vmul.f32 %v2589, %v3117
        %v3618 = vmul.f32 %v2590, %v3118
        %v3619 = vmul.f32 %v2591, %v3119
        %v3620 = vmul.f32 %v2592, %v3120
        %v3621 = vmul.f32 %v2593, %v3121
        %v3622 = vmul.f32 %v2594, %v3122
        %v3623 = vmul.f32 %v2595, %v3123
        %v3624 = vmul.f32 %v2596, %v3124
        %v3625 = vmul.f32 %v2597, %v3125
        %v3626 = vmul.f32 %v2598, %v3126
        %v3627 = vmul.f32 %v2599, %v3127
        %v3628 = vmul.f32 %v2600, %v3128
        %v3629 = vmul.f32 %v2601, %v3129
        %v3630 = vmul.f32 %v2602, %v3130
        %v3631 = vmul.f32 %v2603, %v3131
        %v3632 = vmul.f32 %v2604, %v3132
        %v3633 = vmul.f32 %v2605, %v3133
        %v3634 = vmul.f32 %v2606, %v3134
        %v3635 = vmul.f32 %v2607, %v3135
        %v3636 = vmul.f32 %v2608, %v3136
        %v3637 = vmul.f32 %v2609, %v3137
        %v3638 = vmul.f32 %v2610, %v3138
        %v3639 = vmul.f32 %v2611, %v3139
        %v3640 = vmul.f32 %v2612, %v3140
        %v3641 = vmul.f32 %v2613, %v3141
        %v3642 = vmul.f32 %v2614, %v3142
        %v3643 = vmul.f32 %v2615, %v3143
        %v3644 = vmul.f32 %v2616, %v3144
        %v3645 = vmul.f32 %v2617, %v3145
        %v3646 = vmul.f32 %v2618, %v3146
        %v3647 = vmul.f32 %v2619, %v3147
        %v3648 = vmul.f32 %v2620, %v3148
        %v3649 = vmul.f32 %v2621, %v3149
        %v3650 = vmul.f32 %v2622, %v3150
        %v3651 = vmul.f32 %v2623, %v3151
        %v3652 = vmul.f32 %v2624, %v3152
        %v3653 = vmul.f32 %v2625, %v3153
        %v3654 = vmul.f32 %v2626, %v3154
        %v3655 = vmul.f32 %v2627, %v3155
        %v3656 = vmul.f32 %v2628, %v3156
        %v3657 = vmul.f32 %v2629, %v3157
        %v3658 = vmul.f32 %v2630, %v2678
        %v3659 = vmul.f32 %v2631, %v2679
        %v3660 = vmul.f32 %v2632, %v2680
        %v3661 = vmul.f32 %v2633, %v2681
        %v3662 = vmul.f32 %v2634, %v2682
        %v3663 = vmul.f32 %v2635, %v2683
        %v3664 = vmul.f32 %v2636, %v2684
        %v3665 = vmul.f32 %v2637, %v2685
        %v3666 = vmul.f32 %v2638, %v2686
        %v3667 = vmul.f32 %v2639, %v2687
        %v3668 = vmul.f32 %v2640, %v2688
        %v3669 = vmul.f32 %v2641, %v2689
        %v3670 = vmul.f32 %v2642, %v2690
        %v3671 = vmul.f32 %v2643, %v2691
        %v3672 = vmul.f32 %v2644, %v2692
        %v3673 = vmul.f32 %v2645, %v2693
        %v3674 = vmul.f32 %v2646, %v2694
        %v3675 = vmul.f32 %v2647, %v2695
        %v3676 = vmul.f32 %v2648, %v2696
        %v3677 = vmul.f32 %v2649, %v2697
        %v3678 = vmul.f32 %v2650, %v2698
        %v3679 = vmul.f32 %v2651, %v2699
        %v3680 = vmul.f32 %v2652, %v2700
        %v3681 = vmul.f32 %v2653, %v2701
        %v3682 = vmul.f32 %v2654, %v2702
        %v3683 = vmul.f32 %v2655, %v2703
        %v3684 = vmul.f32 %v2656, %v2704
        %v3685 = vmul.f32 %v2657, %v2705
        %v3686 = vmul.f32 %v2658, %v2706
        %v3687 = vmul.f32 %v2659, %v2707
        %v3688 = vmul.f32 %v2660, %v2708
        %v3689 = vmul.f32 %v2661, %v2709
        %v3690 = vmul.f32 %v2662, %v2710
        %v3691 = vmul.f32 %v2663, %v2711
        %v3692 = vmul.f32 %v2664, %v2712
        %v3693 = vmul.f32 %v2665, %v2713
        %v3694 = vmul.f32 %v2666, %v2714
        %v3695 = vmul.f32 %v2667, %v2715
        %v3696 = vmul.f32 %v2668, %v2716
        %v3697 = vmul.f32 %v2669, %v2717
        %v3698 = vmul.f32 %v2670, %v2718
        %v3699 = vmul.f32 %v2671, %v2719
        %v3700 = vmul.f32 %v2672, %v2720
        %v3701 = vmul.f32 %v2673, %v2721
        %v3702 = vmul.f32 %v2674, %v2722
        %v3703 = vmul.f32 %v2675, %v2723
        %v3704 = vmul.f32 %v2676, %v2724
        %v3705 = vmul.f32 %v2677, %v2725
        %v3706 = vmul.f32 %v2630, %v2726
        %v3707 = vmul.f32 %v2631, %v2727
        %v3708 = vmul.f32 %v2632, %v2728
        %v3709 = vmul.f32 %v2633, %v2729
        %v3710 = vmul.f32 %v2634, %v2730
        %v3711 = vmul.f32 %v2635, %v2731
        %v3712 = vmul.f32 %v2636, %v2732
        %v3713 = vmul.f32 %v2637, %v2733
        %v3714 = vmul.f32 %v2638, %v2734
        %v3715 = vmul.f32 %v2639, %v2735
        %v3716 = vmul.f32 %v2640, %v2736
        %v3717 = vmul.f32 %v2641, %v2737
        %v3718 = vmul.f32 %v2642, %v2738
        %v3719 = vmul.f32 %v2643, %v2739
        %v3720 = vmul.f32 %v2644, %v2740
        %v3721 = vmul.f32 %v2645, %v2741
        %v3722 = vmul.f32 %v2646, %v2742
        %v3723 = vmul.f32 %v2647, %v2743
        %v3724 = vmul.f32 %v2648, %v2744
        %v3725 = vmul.f32 %v2649, %v2745
        %v3726 = vmul.f32 %v2650, %v2746
        %v3727 = vmul.f32 %v2651, %v2747
        %v3728 = vmul.f32 %v2652, %v2748
        %v3729 = vmul.f32 %v2653, %v2749
        %v3730 = vmul.f32 %v2654, %v2750
        %v3731 = vmul.f32 %v2655, %v2751
        %v3732 = vmul.f32 %v2656, %v2752
        %v3733 = vmul.f32 %v2657, %v2753
        %v3734 = vmul.f32 %v2658, %v2754
        %v3735 = vmul.f32 %v2659, %v2755
        %v3736 = vmul.f32 %v2660, %v2756
        %v3737 = vmul.f32 %v2661, %v2757
        %v3738 = vmul.f32 %v2662, %v2758
        %v3739 = vmul.f32 %v2663, %v2759
        %v3740 = vmul.f32 %v2664, %v2760
        %v3741 = vmul.f32 %v2665, %v2761
        %v3742 = vmul.f32 %v2666, %v2762
        %v3743 = vmul.f32 %v2667, %v2763
        %v3744 = vmul.f32 %v2668, %v2764
        %v3745 = vmul.f32 %v2669, %v2765
        %v3746 = vmul.f32 %v2670, %v2766
        %v3747 = vmul.f32 %v2671, %v2767
        %v3748 = vmul.f32 %v2672, %v2768
        %v3749 = vmul.f32 %v2673, %v2769
        %v3750 = vmul.f32 %v2674, %v2770
        %v3751 = vmul.f32 %v2675, %v2771
        %v3752 = vmul.f32 %v2676, %v2772
        %v3753 = vmul.f32 %v2677, %v2773
        %v3754 = vmul.f32 %v2630, %v2774
        %v3755 = vmul.f32 %v2631, %v2775
        %v3756 = vmul.f32 %v2632, %v2776
        %v3757 = vmul.f32 %v2633, %v2777
        %v3758 = vmul.f32 %v2634, %v2778
        %v3759 = vmul.f32 %v2635, %v2779
        %v3760 = vmul.f32 %v2636, %v2780
        %v3761 = vmul.f32 %v2637, %v2781
        %v3762 = vmul.f32 %v2638, %v2782
        %v3763 = vmul.f32 %v2639, %v2783
        %v3764 = vmul.f32 %v2640, %v2784
        %v3765 = vmul.f32 %v2641, %v2785
        %v3766 = vmul.f32 %v2642, %v2786
        %v3767 = vmul.f32 %v2643, %v2787
        %v3768 = vmul.f32 %v2644, %v2788
        %v3769 = vmul.f32 %v2645, %v2789
        %v3770 = vmul.f32 %v2646, %v2790
        %v3771 = vmul.f32 %v2647, %v2791
        %v3772 = vmul.f32 %v2648, %v2792
        %v3773 = vmul.f32 %v2649, %v2793
        %v3774 = vmul.f32 %v2650, %v2794
        %v3775 = vmul.f32 %v2651, %v2795
        %v3776 = vmul.f32 %v2652, %v2796
        %v3777 = vmul.f32 %v2653, %v2797
        %v3778 = vmul.f32 %v2654, %v2798
        %v3779 = vmul.f32 %v2655, %v2799
        %v3780 = vmul.f32 %v2656, %v2800
        %v3781 = vmul.f32 %v2657, %v2801
        %v3782 = vmul.f32 %v2658, %v2802
        %v3783 = vmul.f32 %v2659, %v2803
        %v3784 = vmul.f32 %v2660, %v2804
        %v3785 = vmul.f32 %v2661, %v2805
        %v3786 = vmul.f32 %v2662, %v2806
        %v3787 = vmul.f32 %v2663, %v2807
        %v3788 = vmul.f32 %v2664, %v2808
        %v3789 = vmul.f32 %v2665, %v2809
        %v3790 = vmul.f32 %v2666, %v2810
        %v3791 = vmul.f32 %v2667, %v2811
        %v3792 = vmul.f32 %v2668, %v2812
        %v3793 = vmul.f32 %v2669, %v2813
        %v3794 = vmul.f32 %v2670, %v2814
        %v3795 = vmul.f32 %v2671, %v2815
        %v3796 = vmul.f32 %v2672, %v2816
        %v3797 = vmul.f32 %v2673, %v2817
        %v3798 = vmul.f32 %v2674, %v2818
        %v3799 = vmul.f32 %v2675, %v2819
        %v3800 = vmul.f32 %v2676, %v2820
        %v3801 = vmul.f32 %v2677, %v2821
        %v3802 = vmul.f32 %v2630, %v2822
        %v3803 = vmul.f32 %v2631, %v2823
        %v3804 = vmul.f32 %v2632, %v2824
        %v3805 = vmul.f32 %v2633, %v2825
        %v3806 = vmul.f32 %v2634, %v2826
        %v3807 = vmul.f32 %v2635, %v2827
        %v3808 = vmul.f32 %v2636, %v2828
        %v3809 = vmul.f32 %v2637, %v2829
        %v3810 = vmul.f32 %v2638, %v2830
        %v3811 = vmul.f32 %v2639, %v2831
        %v3812 = vmul.f32 %v2640, %v2832
        %v3813 = vmul.f32 %v2641, %v2833
        %v3814 = vmul.f32 %v2642, %v2834
        %v3815 = vmul.f32 %v2643, %v2835
        %v3816 = vmul.f32 %v2644, %v2836
        %v3817 = vmul.f32 %v2645, %v2837
        %v3818 = vmul.f32 %v2646, %v2838
        %v3819 = vmul.f32 %v2647, %v2839
        %v3820 = vmul.f32 %v2648, %v2840
        %v3821 = vmul.f32 %v2649, %v2841
        %v3822 = vmul.f32 %v2650, %v2842
        %v3823 = vmul.f32 %v2651, %v2843
        %v3824 = vmul.f32 %v2652, %v2844
        %v3825 = vmul.f32 %v2653, %v2845
        %v3826 = vmul.f32 %v2654, %v2846
        %v3827 = vmul.f32 %v2655, %v2847
        %v3828 = vmul.f32 %v2656, %v2848
        %v3829 = vmul.f32 %v2657, %v2849
        %v3830 = vmul.f32 %v2658, %v2850
        %v3831 = vmul.f32 %v2659, %v2851
        %v3832 = vmul.f32 %v2660, %v2852
        %v3833 = vmul.f32 %v2661, %v2853
        %v3834 = vmul.f32 %v2662, %v2854
        %v3835 = vmul.f32 %v2663, %v2855
        %v3836 = vmul.f32 %v2664, %v2856
        %v3837 = vmul.f32 %v2665, %v2857
        %v3838 = vmul.f32 %v2666, %v2858
        %v3839 = vmul.f32 %v2667, %v2859
        %v3840 = vmul.f32 %v2668, %v2860
        %v3841 = vmul.f32 %v2669, %v2861
        %v3842 = vmul.f32 %v2670, %v2862
        %v3843 = vmul.f32 %v2671, %v2863
        %v3844 = vmul.f32 %v2672, %v2864
        %v3845 = vmul.f32 %v2673, %v2865
        %v3846 = vmul.f32 %v2674, %v2866
        %v3847 = vmul.f32 %v2675, %v2867
        %v3848 = vmul.f32 %v2676, %v2868
        %v3849 = vmul.f32 %v2677, %v2869
        %v3850 = vmul.f32 %v2630, %v2870
        %v3851 = vmul.f32 %v2631, %v2871
        %v3852 = vmul.f32 %v2632, %v2872
        %v3853 = vmul.f32 %v2633, %v2873
        %v3854 = vmul.f32 %v2634, %v2874
        %v3855 = vmul.f32 %v2635, %v2875
        %v3856 = vmul.f32 %v2636, %v2876
        %v3857 = vmul.f32 %v2637, %v2877
        %v3858 = vmul.f32 %v2638, %v2878
        %v3859 = vmul.f32 %v2639, %v2879
        %v3860 = vmul.f32 %v2640, %v2880
        %v3861 = vmul.f32 %v2641, %v2881
        %v3862 = vmul.f32 %v2642, %v2882
        %v3863 = vmul.f32 %v2643, %v2883
        %v3864 = vmul.f32 %v2644, %v2884
        %v3865 = vmul.f32 %v2645, %v2885
        %v3866 = vmul.f32 %v2646, %v2886
        %v3867 = vmul.f32 %v2647, %v2887
        %v3868 = vmul.f32 %v2648, %v2888
        %v3869 = vmul.f32 %v2649, %v2889
        %v3870 = vmul.f32 %v2650, %v2890
        %v3871 = vmul.f32 %v2651, %v2891
        %v3872 = vmul.f32 %v2652, %v2892
        %v3873 = vmul.f32 %v2653, %v2893
        %v3874 = vmul.f32 %v2654, %v2894
        %v3875 = vmul.f32 %v2655, %v2895
        %v3876 = vmul.f32 %v2656, %v2896
        %v3877 = vmul.f32 %v2657, %v2897
        %v3878 = vmul.f32 %v2658, %v2898
        %v3879 = vmul.f32 %v2659, %v2899
        %v3880 = vmul.f32 %v2660, %v2900
        %v3881 = vmul.f32 %v2661, %v2901
        %v3882 = vmul.f32 %v2662, %v2902
        %v3883 = vmul.f32 %v2663, %v2903
        %v3884 = vmul.f32 %v2664, %v2904
        %v3885 = vmul.f32 %v2665, %v2905
        %v3886 = vmul.f32 %v2666, %v2906
        %v3887 = vmul.f32 %v2667, %v2907
        %v3888 = vmul.f32 %v2668, %v2908
        %v3889 = vmul.f32 %v2669, %v2909
        %v3890 = vmul.f32 %v2670, %v2910
        %v3891 = vmul.f32 %v2671, %v2911
        %v3892 = vmul.f32 %v2672, %v2912
        %v3893 = vmul.f32 %v2673, %v2913
        %v3894 = vmul.f32 %v2674, %v2914
        %v3895 = vmul.f32 %v2675, %v2915
        %v3896 = vmul.f32 %v2676, %v2916
        %v3897 = vmul.f32 %v2677, %v2917
        %v3898 = vmul.f32 %v2630, %v2918
        %v3899 = vmul.f32 %v2631, %v2919
        %v3900 = vmul.f32 %v2632, %v2920
        %v3901 = vmul.f32 %v2633, %v2921
        %v3902 = vmul.f32 %v2634, %v2922
        %v3903 = vmul.f32 %v2635, %v2923
        %v3904 = vmul.f32 %v2636, %v2924
        %v3905 = vmul.f32 %v2637, %v2925
        %v3906 = vmul.f32 %v2638, %v2926
        %v3907 = vmul.f32 %v2639, %v2927
        %v3908 = vmul.f32 %v2640, %v2928
        %v3909 = vmul.f32 %v2641, %v2929
        %v3910 = vmul.f32 %v2642, %v2930
        %v3911 = vmul.f32 %v2643, %v2931
        %v3912 = vmul.f32 %v2644, %v2932
        %v3913 = vmul.f32 %v2645, %v2933
        %v3914 = vmul.f32 %v2646, %v2934
        %v3915 = vmul.f32 %v2647, %v2935
        %v3916 = vmul.f32 %v2648, %v2936
        %v3917 = vmul.f32 %v2649, %v2937
        %v3918 = vmul.f32 %v2650, %v2938
        %v3919 = vmul.f32 %v2651, %v2939
        %v3920 = vmul.f32 %v2652, %v2940
        %v3921 = vmul.f32 %v2653, %v2941
        %v3922 = vmul.f32 %v2654, %v2942
        %v3923 = vmul.f32 %v2655, %v2943
        %v3924 = vmul.f32 %v2656, %v2944
        %v3925 = vmul.f32 %v2657, %v2945
        %v3926 = vmul.f32 %v2658, %v2946
        %v3927 = vmul.f32 %v2659, %v2947
        %v3928 = vmul.f32 %v2660, %v2948
        %v3929 = vmul.f32 %v2661, %v2949
        %v3930 = vmul.f32 %v2662, %v2950
        %v3931 = vmul.f32 %v2663, %v2951
        %v3932 = vmul.f32 %v2664, %v2952
        %v3933 = vmul.f32 %v2665, %v2953
        %v3934 = vmul.f32 %v2666, %v2954
        %v3935 = vmul.f32 %v2667, %v2955
        %v3936 = vmul.f32 %v2668, %v2956
        %v3937 = vmul.f32 %v2669, %v2957
        %v3938 = vmul.f32 %v2670, %v2958
        %v3939 = vmul.f32 %v2671, %v2959
        %v3940 = vmul.f32 %v2672, %v2960
        %v3941 = vmul.f32 %v2673, %v2961
        %v3942 = vmul.f32 %v2674, %v2962
        %v3943 = vmul.f32 %v2675, %v2963
        %v3944 = vmul.f32 %v2676, %v2964
        %v3945 = vmul.f32 %v2677, %v2965
        %v3946 = vmul.f32 %v2630, %v2966
        %v3947 = vmul.f32 %v2631, %v2967
        %v3948 = vmul.f32 %v2632, %v2968
        %v3949 = vmul.f32 %v2633, %v2969
        %v3950 = vmul.f32 %v2634, %v2970
        %v3951 = vmul.f32 %v2635, %v2971
        %v3952 = vmul.f32 %v2636, %v2972
        %v3953 = vmul.f32 %v2637, %v2973
        %v3954 = vmul.f32 %v2638, %v2974
        %v3955 = vmul.f32 %v2639, %v2975
        %v3956 = vmul.f32 %v2640, %v2976
        %v3957 = vmul.f32 %v2641, %v2977
        %v3958 = vmul.f32 %v2642, %v2978
        %v3959 = vmul.f32 %v2643, %v2979
        %v3960 = vmul.f32 %v2644, %v2980
        %v3961 = vmul.f32 %v2645, %v2981
        %v3962 = vmul.f32 %v2646, %v2982
        %v3963 = vmul.f32 %v2647, %v2983
        %v3964 = vmul.f32 %v2648, %v2984
        %v3965 = vmul.f32 %v2649, %v2985
        %v3966 = vmul.f32 %v2650, %v2986
        %v3967 = vmul.f32 %v2651, %v2987
        %v3968 = vmul.f32 %v2652, %v2988
        %v3969 = vmul.f32 %v2653, %v2989
        %v3970 = vmul.f32 %v2654, %v2990
        %v3971 = vmul.f32 %v2655, %v2991
        %v3972 = vmul.f32 %v2656, %v2992
        %v3973 = vmul.f32 %v2657, %v2993
        %v3974 = vmul.f32 %v2658, %v2994
        %v3975 = vmul.f32 %v2659, %v2995
        %v3976 = vmul.f32 %v2660, %v2996
        %v3977 = vmul.f32 %v2661, %v2997
        %v3978 = vmul.f32 %v2662, %v2998
        %v3979 = vmul.f32 %v2663, %v2999
        %v3980 = vmul.f32 %v2664, %v3000
        %v3981 = vmul.f32 %v2665, %v3001
        %v3982 = vmul.f32 %v2666, %v3002
        %v3983 = vmul.f32 %v2667, %v3003
        %v3984 = vmul.f32 %v2668, %v3004
        %v3985 = vmul.f32 %v2669, %v3005
        %v3986 = vmul.f32 %v2670, %v3006
        %v3987 = vmul.f32 %v2671, %v3007
        %v3988 = vmul.f32 %v2672, %v3008
        %v3989 = vmul.f32 %v2673, %v3009
        %v3990 = vmul.f32 %v2674, %v3010
        %v3991 = vmul.f32 %v2675, %v3011
        %v3992 = vmul.f32 %v2676, %v3012
        %v3993 = vmul.f32 %v2677, %v3013
        %v3994 = vmul.f32 %v2630, %v3014
        %v3995 = vmul.f32 %v2631, %v3015
        %v3996 = vmul.f32 %v2632, %v3016
        %v3997 = vmul.f32 %v2633, %v3017
        %v3998 = vmul.f32 %v2634, %v3018
        %v3999 = vmul.f32 %v2635, %v3019
        %v4000 = vmul.f32 %v2636, %v3020
        %v4001 = vmul.f32 %v2637, %v3021
        %v4002 = vmul.f32 %v2638, %v3022
        %v4003 = vmul.f32 %v2639, %v3023
        %v4004 = vmul.f32 %v2640, %v3024
        %v4005 = vmul.f32 %v2641, %v3025
        %v4006 = vmul.f32 %v2642, %v3026
        %v4007 = vmul.f32 %v2643, %v3027
        %v4008 = vmul.f32 %v2644, %v3028
        %v4009 = vmul.f32 %v2645, %v3029
        %v4010 = vmul.f32 %v2646, %v3030
        %v4011 = vmul.f32 %v2647, %v3031
        %v4012 = vmul.f32 %v2648, %v3032
        %v4013 = vmul.f32 %v2649, %v3033
        %v4014 = vmul.f32 %v2650, %v3034
        %v4015 = vmul.f32 %v2651, %v3035
        %v4016 = vmul.f32 %v2652, %v3036
        %v4017 = vmul.f32 %v2653, %v3037
        %v4018 = vmul.f32 %v2654, %v3038
        %v4019 = vmul.f32 %v2655, %v3039
        %v4020 = vmul.f32 %v2656, %v3040
        %v4021 = vmul.f32 %v2657, %v3041
        %v4022 = vmul.f32 %v2658, %v3042
        %v4023 = vmul.f32 %v2659, %v3043
        %v4024 = vmul.f32 %v2660, %v3044
        %v4025 = vmul.f32 %v2661, %v3045
        %v4026 = vmul.f32 %v2662, %v3046
        %v4027 = vmul.f32 %v2663, %v3047
        %v4028 = vmul.f32 %v2664, %v3048
        %v4029 = vmul.f32 %v2665, %v3049
        %v4030 = vmul.f32 %v2666, %v3050
        %v4031 = vmul.f32 %v2667, %v3051
        %v4032 = vmul.f32 %v2668, %v3052
        %v4033 = vmul.f32 %v2669, %v3053
        %v4034 = vmul.f32 %v2670, %v3054
        %v4035 = vmul.f32 %v2671, %v3055
        %v4036 = vmul.f32 %v2672, %v3056
        %v4037 = vmul.f32 %v2673, %v3057
        %v4038 = vmul.f32 %v2674, %v3058
        %v4039 = vmul.f32 %v2675, %v3059
        %v4040 = vmul.f32 %v2676, %v3060
        %v4041 = vmul.f32 %v2677, %v3061
        %v4042 = vmul.f32 %v2630, %v3062
        %v4043 = vmul.f32 %v2631, %v3063
        %v4044 = vmul.f32 %v2632, %v3064
        %v4045 = vmul.f32 %v2633, %v3065
        %v4046 = vmul.f32 %v2634, %v3066
        %v4047 = vmul.f32 %v2635, %v3067
        %v4048 = vmul.f32 %v2636, %v3068
        %v4049 = vmul.f32 %v2637, %v3069
        %v4050 = vmul.f32 %v2638, %v3070
        %v4051 = vmul.f32 %v2639, %v3071
        %v4052 = vmul.f32 %v2640, %v3072
        %v4053 = vmul.f32 %v2641, %v3073
        %v4054 = vmul.f32 %v2642, %v3074
        %v4055 = vmul.f32 %v2643, %v3075
        %v4056 = vmul.f32 %v2644, %v3076
        %v4057 = vmul.f32 %v2645, %v3077
        %v4058 = vmul.f32 %v2646, %v3078
        %v4059 = vmul.f32 %v2647, %v3079
        %v4060 = vmul.f32 %v2648, %v3080
        %v4061 = vmul.f32 %v2649, %v3081
        %v4062 = vmul.f32 %v2650, %v3082
        %v4063 = vmul.f32 %v2651, %v3083
        %v4064 = vmul.f32 %v2652, %v3084
        %v4065 = vmul.f32 %v2653, %v3085
        %v4066 = vmul.f32 %v2654, %v3086
        %v4067 = vmul.f32 %v2655, %v3087
        %v4068 = vmul.f32 %v2656, %v3088
        %v4069 = vmul.f32 %v2657, %v3089
        %v4070 = vmul.f32 %v2658, %v3090
        %v4071 = vmul.f32 %v2659, %v3091
        %v4072 = vmul.f32 %v2660, %v3092
        %v4073 = vmul.f32 %v2661, %v3093
        %v4074 = vmul.f32 %v2662, %v3094
        %v4075 = vmul.f32 %v2663, %v3095
        %v4076 = vmul.f32 %v2664, %v3096
        %v4077 = vmul.f32 %v2665, %v3097
        %v4078 = vmul.f32 %v2666, %v3098
        %v4079 = vmul.f32 %v2667, %v3099
        %v4080 = vmul.f32 %v2668, %v3100
        %v4081 = vmul.f32 %v2669, %v3101
        %v4082 = vmul.f32 %v2670, %v3102
        %v4083 = vmul.f32 %v2671, %v3103
        %v4084 = vmul.f32 %v2672, %v3104
        %v4085 = vmul.f32 %v2673, %v3105
        %v4086 = vmul.f32 %v2674, %v3106
        %v4087 = vmul.f32 %v2675, %v3107
        %v4088 = vmul.f32 %v2676, %v3108
        %v4089 = vmul.f32 %v2677, %v3109
        %v4090 = vmul.f32 %v2630, %v3110
        %v4091 = vmul.f32 %v2631, %v3111
        %v4092 = vmul.f32 %v2632, %v3112
        %v4093 = vmul.f32 %v2633, %v3113
        %v4094 = vmul.f32 %v2634, %v3114
        %v4095 = vmul.f32 %v2635, %v3115
        %v4096 = vmul.f32 %v2636, %v3116
        %v4097 = vmul.f32 %v2637, %v3117
        %v4098 = vmul.f32 %v2638, %v3118
        %v4099 = vmul.f32 %v2639, %v3119
        %v4100 = vmul.f32 %v2640, %v3120
        %v4101 = vmul.f32 %v2641, %v3121
        %v4102 = vmul.f32 %v2642, %v3122
        %v4103 = vmul.f32 %v2643, %v3123
        %v4104 = vmul.f32 %v2644, %v3124
        %v4105 = vmul.f32 %v2645, %v3125
        %v4106 = vmul.f32 %v2646, %v3126
        %v4107 = vmul.f32 %v2647, %v3127
        %v4108 = vmul.f32 %v2648, %v3128
        %v4109 = vmul.f32 %v2649, %v3129
        %v4110 = vmul.f32 %v2650, %v3130
        %v4111 = vmul.f32 %v2651, %v3131
        %v4112 = vmul.f32 %v2652, %v3132
        %v4113 = vmul.f32 %v2653, %v3133
        %v4114 = vmul.f32 %v2654, %v3134
        %v4115 = vmul.f32 %v2655, %v3135
        %v4116 = vmul.f32 %v2656, %v3136
        %v4117 = vmul.f32 %v2657, %v3137
        %v4118 = vmul.f32 %v2658, %v3138
        %v4119 = vmul.f32 %v2659, %v3139
        %v4120 = vmul.f32 %v2660, %v3140
        %v4121 = vmul.f32 %v2661, %v3141
        %v4122 = vmul.f32 %v2662, %v3142
        %v4123 = vmul.f32 %v2663, %v3143
        %v4124 = vmul.f32 %v2664, %v3144
        %v4125 = vmul.f32 %v2665, %v3145
        %v4126 = vmul.f32 %v2666, %v3146
        %v4127 = vmul.f32 %v2667, %v3147
        %v4128 = vmul.f32 %v2668, %v3148
        %v4129 = vmul.f32 %v2669, %v3149
        %v4130 = vmul.f32 %v2670, %v3150
        %v4131 = vmul.f32 %v2671, %v3151
        %v4132 = vmul.f32 %v2672, %v3152
        %v4133 = vmul.f32 %v2673, %v3153
        %v4134 = vmul.f32 %v2674, %v3154
        %v4135 = vmul.f32 %v2675, %v3155
        %v4136 = vmul.f32 %v2676, %v3156
        %v4137 = vmul.f32 %v2677, %v3157
        %v4138 = vadd.f32 %v3178, %v3179
        %v4139 = vadd.f32 %v4138, %v3180
        %v4140 = vadd.f32 %v4139, %v3181
        %v4141 = vadd.f32 %v4140, %v3182
        %v4142 = vadd.f32 %v4141, %v3183
        %v4143 = vadd.f32 %v4142, %v3184
        %v4144 = vadd.f32 %v4143, %v3185
        %v4145 = vadd.f32 %v4144, %v3186
        %v4146 = vadd.f32 %v4145, %v3187
        %v4147 = vadd.f32 %v4146, %v3188
        %v4148 = vadd.f32 %v4147, %v3189
        %v4149 = vadd.f32 %v4148, %v3190
        %v4150 = vadd.f32 %v4149, %v3191
        %v4151 = vadd.f32 %v4150, %v3192
        %v4152 = vadd.f32 %v4151, %v3193
        %v4153 = vadd.f32 %v4152, %v3194
        %v4154 = vadd.f32 %v4153, %v3195
        %v4155 = vadd.f32 %v4154, %v3196
        %v4156 = vadd.f32 %v4155, %v3197
        %v4157 = vadd.f32 %v4156, %v3198
        %v4158 = vadd.f32 %v4157, %v3199
        %v4159 = vadd.f32 %v4158, %v3200
        %v4160 = vadd.f32 %v4159, %v3201
        %v4161 = vadd.f32 %v4160, %v3202
        %v4162 = vadd.f32 %v4161, %v3203
        %v4163 = vadd.f32 %v4162, %v3204
        %v4164 = vadd.f32 %v4163, %v3205
        %v4165 = vadd.f32 %v4164, %v3206
        %v4166 = vadd.f32 %v4165, %v3207
        %v4167 = vadd.f32 %v4166, %v3208
        %v4168 = vadd.f32 %v4167, %v3209
        %v4169 = vadd.f32 %v4168, %v3210
        %v4170 = vadd.f32 %v4169, %v3211
        %v4171 = vadd.f32 %v4170, %v3212
        %v4172 = vadd.f32 %v4171, %v3213
        %v4173 = vadd.f32 %v4172, %v3214
        %v4174 = vadd.f32 %v4173, %v3215
        %v4175 = vadd.f32 %v4174, %v3216
        %v4176 = vadd.f32 %v4175, %v3217
        %v4177 = vadd.f32 %v4176, %v3218
        %v4178 = vadd.f32 %v4177, %v3219
        %v4179 = vadd.f32 %v4178, %v3220
        %v4180 = vadd.f32 %v4179, %v3221
        %v4181 = vadd.f32 %v4180, %v3222
        %v4182 = vadd.f32 %v4181, %v3223
        %v4183 = vadd.f32 %v4182, %v3224
        %v4184 = vadd.f32 %v4183, %v3225
        %v4185 = vadd.f32 %v3226, %v3227
        %v4186 = vadd.f32 %v4185, %v3228
        %v4187 = vadd.f32 %v4186, %v3229
        %v4188 = vadd.f32 %v4187, %v3230
        %v4189 = vadd.f32 %v4188, %v3231
        %v4190 = vadd.f32 %v4189, %v3232
        %v4191 = vadd.f32 %v4190, %v3233
        %v4192 = vadd.f32 %v4191, %v3234
        %v4193 = vadd.f32 %v4192, %v3235
        %v4194 = vadd.f32 %v4193, %v3236
        %v4195 = vadd.f32 %v4194, %v3237
        %v4196 = vadd.f32 %v4195, %v3238
        %v4197 = vadd.f32 %v4196, %v3239
        %v4198 = vadd.f32 %v4197, %v3240
        %v4199 = vadd.f32 %v4198, %v3241
        %v4200 = vadd.f32 %v4199, %v3242
        %v4201 = vadd.f32 %v4200, %v3243
        %v4202 = vadd.f32 %v4201, %v3244
        %v4203 = vadd.f32 %v4202, %v3245
        %v4204 = vadd.f32 %v4203, %v3246
        %v4205 = vadd.f32 %v4204, %v3247
        %v4206 = vadd.f32 %v4205, %v3248
        %v4207 = vadd.f32 %v4206, %v3249
        %v4208 = vadd.f32 %v4207, %v3250
        %v4209 = vadd.f32 %v4208, %v3251
        %v4210 = vadd.f32 %v4209, %v3252
        %v4211 = vadd.f32 %v4210, %v3253
        %v4212 = vadd.f32 %v4211, %v3254
        %v4213 = vadd.f32 %v4212, %v3255
        %v4214 = vadd.f32 %v4213, %v3256
        %v4215 = vadd.f32 %v4214, %v3257
        %v4216 = vadd.f32 %v4215, %v3258
        %v4217 = vadd.f32 %v4216, %v3259
        %v4218 = vadd.f32 %v4217, %v3260
        %v4219 = vadd.f32 %v4218, %v3261
        %v4220 = vadd.f32 %v4219, %v3262
        %v4221 = vadd.f32 %v4220, %v3263
        %v4222 = vadd.f32 %v4221, %v3264
        %v4223 = vadd.f32 %v4222, %v3265
        %v4224 = vadd.f32 %v4223, %v3266
        %v4225 = vadd.f32 %v4224, %v3267
        %v4226 = vadd.f32 %v4225, %v3268
        %v4227 = vadd.f32 %v4226, %v3269
        %v4228 = vadd.f32 %v4227, %v3270
        %v4229 = vadd.f32 %v4228, %v3271
        %v4230 = vadd.f32 %v4229, %v3272
        %v4231 = vadd.f32 %v4230, %v3273
        %v4232 = vadd.f32 %v3274, %v3275
        %v4233 = vadd.f32 %v4232, %v3276
        %v4234 = vadd.f32 %v4233, %v3277
        %v4235 = vadd.f32 %v4234, %v3278
        %v4236 = vadd.f32 %v4235, %v3279
        %v4237 = vadd.f32 %v4236, %v3280
        %v4238 = vadd.f32 %v4237, %v3281
        %v4239 = vadd.f32 %v4238, %v3282
        %v4240 = vadd.f32 %v4239, %v3283
        %v4241 = vadd.f32 %v4240, %v3284
        %v4242 = vadd.f32 %v4241, %v3285
        %v4243 = vadd.f32 %v4242, %v3286
        %v4244 = vadd.f32 %v4243, %v3287
        %v4245 = vadd.f32 %v4244, %v3288
        %v4246 = vadd.f32 %v4245, %v3289
        %v4247 = vadd.f32 %v4246, %v3290
        %v4248 = vadd.f32 %v4247, %v3291
        %v4249 = vadd.f32 %v4248, %v3292
        %v4250 = vadd.f32 %v4249, %v3293
        %v4251 = vadd.f32 %v4250, %v3294
        %v4252 = vadd.f32 %v4251, %v3295
        %v4253 = vadd.f32 %v4252, %v3296
        %v4254 = vadd.f32 %v4253, %v3297
        %v4255 = vadd.f32 %v4254, %v3298
        %v4256 = vadd.f32 %v4255, %v3299
        %v4257 = vadd.f32 %v4256, %v3300
        %v4258 = vadd.f32 %v4257, %v3301
        %v4259 = vadd.f32 %v4258, %v3302
        %v4260 = vadd.f32 %v4259, %v3303
        %v4261 = vadd.f32 %v4260, %v3304
        %v4262 = vadd.f32 %v4261, %v3305
        %v4263 = vadd.f32 %v4262, %v3306
        %v4264 = vadd.f32 %v4263, %v3307
        %v4265 = vadd.f32 %v4264, %v3308
        %v4266 = vadd.f32 %v4265, %v3309
        %v4267 = vadd.f32 %v4266, %v3310
        %v4268 = vadd.f32 %v4267, %v3311
        %v4269 = vadd.f32 %v4268, %v3312
        %v4270 = vadd.f32 %v4269, %v3313
        %v4271 = vadd.f32 %v4270, %v3314
        %v4272 = vadd.f32 %v4271, %v3315
        %v4273 = vadd.f32 %v4272, %v3316
        %v4274 = vadd.f32 %v4273, %v3317
        %v4275 = vadd.f32 %v4274, %v3318
        %v4276 = vadd.f32 %v4275, %v3319
        %v4277 = vadd.f32 %v4276, %v3320
        %v4278 = vadd.f32 %v4277, %v3321
        %v4279 = vadd.f32 %v3322, %v3323
        %v4280 = vadd.f32 %v4279, %v3324
        %v4281 = vadd.f32 %v4280, %v3325
        %v4282 = vadd.f32 %v4281, %v3326
        %v4283 = vadd.f32 %v4282, %v3327
        %v4284 = vadd.f32 %v4283, %v3328
        %v4285 = vadd.f32 %v4284, %v3329
        %v4286 = vadd.f32 %v4285, %v3330
        %v4287 = vadd.f32 %v4286, %v3331
        %v4288 = vadd.f32 %v4287, %v3332
        %v4289 = vadd.f32 %v4288, %v3333
        %v4290 = vadd.f32 %v4289, %v3334
        %v4291 = vadd.f32 %v4290, %v3335
        %v4292 = vadd.f32 %v4291, %v3336
        %v4293 = vadd.f32 %v4292, %v3337
        %v4294 = vadd.f32 %v4293, %v3338
        %v4295 = vadd.f32 %v4294, %v3339
        %v4296 = vadd.f32 %v4295, %v3340
        %v4297 = vadd.f32 %v4296, %v3341
        %v4298 = vadd.f32 %v4297, %v3342
        %v4299 = vadd.f32 %v4298, %v3343
        %v4300 = vadd.f32 %v4299, %v3344
        %v4301 = vadd.f32 %v4300, %v3345
        %v4302 = vadd.f32 %v4301, %v3346
        %v4303 = vadd.f32 %v4302, %v3347
        %v4304 = vadd.f32 %v4303, %v3348
        %v4305 = vadd.f32 %v4304, %v3349
        %v4306 = vadd.f32 %v4305, %v3350
        %v4307 = vadd.f32 %v4306, %v3351
        %v4308 = vadd.f32 %v4307, %v3352
        %v4309 = vadd.f32 %v4308, %v3353
        %v4310 = vadd.f32 %v4309, %v3354
        %v4311 = vadd.f32 %v4310, %v3355
        %v4312 = vadd.f32 %v4311, %v3356
        %v4313 = vadd.f32 %v4312, %v3357
        %v4314 = vadd.f32 %v4313, %v3358
        %v4315 = vadd.f32 %v4314, %v3359
        %v4316 = vadd.f32 %v4315, %v3360
        %v4317 = vadd.f32 %v4316, %v3361
        %v4318 = vadd.f32 %v4317, %v3362
        %v4319 = vadd.f32 %v4318, %v3363
        %v4320 = vadd.f32 %v4319, %v3364
        %v4321 = vadd.f32 %v4320, %v3365
        %v4322 = vadd.f32 %v4321, %v3366
        %v4323 = vadd.f32 %v4322, %v3367
        %v4324 = vadd.f32 %v4323, %v3368
        %v4325 = vadd.f32 %v4324, %v3369
        %v4326 = vadd.f32 %v3370, %v3371
        %v4327 = vadd.f32 %v4326, %v3372
        %v4328 = vadd.f32 %v4327, %v3373
        %v4329 = vadd.f32 %v4328, %v3374
        %v4330 = vadd.f32 %v4329, %v3375
        %v4331 = vadd.f32 %v4330, %v3376
        %v4332 = vadd.f32 %v4331, %v3377
        %v4333 = vadd.f32 %v4332, %v3378
        %v4334 = vadd.f32 %v4333, %v3379
        %v4335 = vadd.f32 %v4334, %v3380
        %v4336 = vadd.f32 %v4335, %v3381
        %v4337 = vadd.f32 %v4336, %v3382
        %v4338 = vadd.f32 %v4337, %v3383
        %v4339 = vadd.f32 %v4338, %v3384
        %v4340 = vadd.f32 %v4339, %v3385
        %v4341 = vadd.f32 %v4340, %v3386
        %v4342 = vadd.f32 %v4341, %v3387
        %v4343 = vadd.f32 %v4342, %v3388
        %v4344 = vadd.f32 %v4343, %v3389
        %v4345 = vadd.f32 %v4344, %v3390
        %v4346 = vadd.f32 %v4345, %v3391
        %v4347 = vadd.f32 %v4346, %v3392
        %v4348 = vadd.f32 %v4347, %v3393
        %v4349 = vadd.f32 %v4348, %v3394
        %v4350 = vadd.f32 %v4349, %v3395
        %v4351 = vadd.f32 %v4350, %v3396
        %v4352 = vadd.f32 %v4351, %v3397
        %v4353 = vadd.f32 %v4352, %v3398
        %v4354 = vadd.f32 %v4353, %v3399
        %v4355 = vadd.f32 %v4354, %v3400
        %v4356 = vadd.f32 %v4355, %v3401
        %v4357 = vadd.f32 %v4356, %v3402
        %v4358 = vadd.f32 %v4357, %v3403
        %v4359 = vadd.f32 %v4358, %v3404
        %v4360 = vadd.f32 %v4359, %v3405
        %v4361 = vadd.f32 %v4360, %v3406
        %v4362 = vadd.f32 %v4361, %v3407
        %v4363 = vadd.f32 %v4362, %v3408
        %v4364 = vadd.f32 %v4363, %v3409
        %v4365 = vadd.f32 %v4364, %v3410
        %v4366 = vadd.f32 %v4365, %v3411
        %v4367 = vadd.f32 %v4366, %v3412
        %v4368 = vadd.f32 %v4367, %v3413
        %v4369 = vadd.f32 %v4368, %v3414
        %v4370 = vadd.f32 %v4369, %v3415
        %v4371 = vadd.f32 %v4370, %v3416
        %v4372 = vadd.f32 %v4371, %v3417
        %v4373 = vadd.f32 %v3418, %v3419
        %v4374 = vadd.f32 %v4373, %v3420
        %v4375 = vadd.f32 %v4374, %v3421
        %v4376 = vadd.f32 %v4375, %v3422
        %v4377 = vadd.f32 %v4376, %v3423
        %v4378 = vadd.f32 %v4377, %v3424
        %v4379 = vadd.f32 %v4378, %v3425
        %v4380 = vadd.f32 %v4379, %v3426
        %v4381 = vadd.f32 %v4380, %v3427
        %v4382 = vadd.f32 %v4381, %v3428
        %v4383 = vadd.f32 %v4382, %v3429
        %v4384 = vadd.f32 %v4383, %v3430
        %v4385 = vadd.f32 %v4384, %v3431
        %v4386 = vadd.f32 %v4385, %v3432
        %v4387 = vadd.f32 %v4386, %v3433
        %v4388 = vadd.f32 %v4387, %v3434
        %v4389 = vadd.f32 %v4388, %v3435
        %v4390 = vadd.f32 %v4389, %v3436
        %v4391 = vadd.f32 %v4390, %v3437
        %v4392 = vadd.f32 %v4391, %v3438
        %v4393 = vadd.f32 %v4392, %v3439
        %v4394 = vadd.f32 %v4393, %v3440
        %v4395 = vadd.f32 %v4394, %v3441
        %v4396 = vadd.f32 %v4395, %v3442
        %v4397 = vadd.f32 %v4396, %v3443
        %v4398 = vadd.f32 %v4397, %v3444
        %v4399 = vadd.f32 %v4398, %v3445
        %v4400 = vadd.f32 %v4399, %v3446
        %v4401 = vadd.f32 %v4400, %v3447
        %v4402 = vadd.f32 %v4401, %v3448
        %v4403 = vadd.f32 %v4402, %v3449
        %v4404 = vadd.f32 %v4403, %v3450
        %v4405 = vadd.f32 %v4404, %v3451
        %v4406 = vadd.f32 %v4405, %v3452
        %v4407 = vadd.f32 %v4406, %v3453
        %v4408 = vadd.f32 %v4407, %v3454
        %v4409 = vadd.f32 %v4408, %v3455
        %v4410 = vadd.f32 %v4409, %v3456
        %v4411 = vadd.f32 %v4410, %v3457
        %v4412 = vadd.f32 %v4411, %v3458
        %v4413 = vadd.f32 %v4412, %v3459
        %v4414 = vadd.f32 %v4413, %v3460
        %v4415 = vadd.f32 %v4414, %v3461
        %v4416 = vadd.f32 %v4415, %v3462
        %v4417 = vadd.f32 %v4416, %v3463
        %v4418 = vadd.f32 %v4417, %v3464
        %v4419 = vadd.f32 %v4418, %v3465
        %v4420 = vadd.f32 %v3466, %v3467
        %v4421 = vadd.f32 %v4420, %v3468
        %v4422 = vadd.f32 %v4421, %v3469
        %v4423 = vadd.f32 %v4422, %v3470
        %v4424 = vadd.f32 %v4423, %v3471
        %v4425 = vadd.f32 %v4424, %v3472
        %v4426 = vadd.f32 %v4425, %v3473
        %v4427 = vadd.f32 %v4426, %v3474
        %v4428 = vadd.f32 %v4427, %v3475
        %v4429 = vadd.f32 %v4428, %v3476
        %v4430 = vadd.f32 %v4429, %v3477
        %v4431 = vadd.f32 %v4430, %v3478
        %v4432 = vadd.f32 %v4431, %v3479
        %v4433 = vadd.f32 %v4432, %v3480
        %v4434 = vadd.f32 %v4433, %v3481
        %v4435 = vadd.f32 %v4434, %v3482
        %v4436 = vadd.f32 %v4435, %v3483
        %v4437 = vadd.f32 %v4436, %v3484
        %v4438 = vadd.f32 %v4437, %v3485
        %v4439 = vadd.f32 %v4438, %v3486
        %v4440 = vadd.f32 %v4439, %v3487
        %v4441 = vadd.f32 %v4440, %v3488
        %v4442 = vadd.f32 %v4441, %v3489
        %v4443 = vadd.f32 %v4442, %v3490
        %v4444 = vadd.f32 %v4443, %v3491
        %v4445 = vadd.f32 %v4444, %v3492
        %v4446 = vadd.f32 %v4445, %v3493
        %v4447 = vadd.f32 %v4446, %v3494
        %v4448 = vadd.f32 %v4447, %v3495
        %v4449 = vadd.f32 %v4448, %v3496
        %v4450 = vadd.f32 %v4449, %v3497
        %v4451 = vadd.f32 %v4450, %v3498
        %v4452 = vadd.f32 %v4451, %v3499
        %v4453 = vadd.f32 %v4452, %v3500
        %v4454 = vadd.f32 %v4453, %v3501
        %v4455 = vadd.f32 %v4454, %v3502
        %v4456 = vadd.f32 %v4455, %v3503
        %v4457 = vadd.f32 %v4456, %v3504
        %v4458 = vadd.f32 %v4457, %v3505
        %v4459 = vadd.f32 %v4458, %v3506
        %v4460 = vadd.f32 %v4459, %v3507
        %v4461 = vadd.f32 %v4460, %v3508
        %v4462 = vadd.f32 %v4461, %v3509
        %v4463 = vadd.f32 %v4462, %v3510
        %v4464 = vadd.f32 %v4463, %v3511
        %v4465 = vadd.f32 %v4464, %v3512
        %v4466 = vadd.f32 %v4465, %v3513
        %v4467 = vadd.f32 %v3514, %v3515
        %v4468 = vadd.f32 %v4467, %v3516
        %v4469 = vadd.f32 %v4468, %v3517
        %v4470 = vadd.f32 %v4469, %v3518
        %v4471 = vadd.f32 %v4470, %v3519
        %v4472 = vadd.f32 %v4471, %v3520
        %v4473 = vadd.f32 %v4472, %v3521
        %v4474 = vadd.f32 %v4473, %v3522
        %v4475 = vadd.f32 %v4474, %v3523
        %v4476 = vadd.f32 %v4475, %v3524
        %v4477 = vadd.f32 %v4476, %v3525
        %v4478 = vadd.f32 %v4477, %v3526
        %v4479 = vadd.f32 %v4478, %v3527
        %v4480 = vadd.f32 %v4479, %v3528
        %v4481 = vadd.f32 %v4480, %v3529
        %v4482 = vadd.f32 %v4481, %v3530
        %v4483 = vadd.f32 %v4482, %v3531
        %v4484 = vadd.f32 %v4483, %v3532
        %v4485 = vadd.f32 %v4484, %v3533
        %v4486 = vadd.f32 %v4485, %v3534
        %v4487 = vadd.f32 %v4486, %v3535
        %v4488 = vadd.f32 %v4487, %v3536
        %v4489 = vadd.f32 %v4488, %v3537
        %v4490 = vadd.f32 %v4489, %v3538
        %v4491 = vadd.f32 %v4490, %v3539
        %v4492 = vadd.f32 %v4491, %v3540
        %v4493 = vadd.f32 %v4492, %v3541
        %v4494 = vadd.f32 %v4493, %v3542
        %v4495 = vadd.f32 %v4494, %v3543
        %v4496 = vadd.f32 %v4495, %v3544
        %v4497 = vadd.f32 %v4496, %v3545
        %v4498 = vadd.f32 %v4497, %v3546
        %v4499 = vadd.f32 %v4498, %v3547
        %v4500 = vadd.f32 %v4499, %v3548
        %v4501 = vadd.f32 %v4500, %v3549
        %v4502 = vadd.f32 %v4501, %v3550
        %v4503 = vadd.f32 %v4502, %v3551
        %v4504 = vadd.f32 %v4503, %v3552
        %v4505 = vadd.f32 %v4504, %v3553
        %v4506 = vadd.f32 %v4505, %v3554
        %v4507 = vadd.f32 %v4506, %v3555
        %v4508 = vadd.f32 %v4507, %v3556
        %v4509 = vadd.f32 %v4508, %v3557
        %v4510 = vadd.f32 %v4509, %v3558
        %v4511 = vadd.f32 %v4510, %v3559
        %v4512 = vadd.f32 %v4511, %v3560
        %v4513 = vadd.f32 %v4512, %v3561
        %v4514 = vadd.f32 %v3562, %v3563
        %v4515 = vadd.f32 %v4514, %v3564
        %v4516 = vadd.f32 %v4515, %v3565
        %v4517 = vadd.f32 %v4516, %v3566
        %v4518 = vadd.f32 %v4517, %v3567
        %v4519 = vadd.f32 %v4518, %v3568
        %v4520 = vadd.f32 %v4519, %v3569
        %v4521 = vadd.f32 %v4520, %v3570
        %v4522 = vadd.f32 %v4521, %v3571
        %v4523 = vadd.f32 %v4522, %v3572
        %v4524 = vadd.f32 %v4523, %v3573
        %v4525 = vadd.f32 %v4524, %v3574
        %v4526 = vadd.f32 %v4525, %v3575
        %v4527 = vadd.f32 %v4526, %v3576
        %v4528 = vadd.f32 %v4527, %v3577
        %v4529 = vadd.f32 %v4528, %v3578
        %v4530 = vadd.f32 %v4529, %v3579
        %v4531 = vadd.f32 %v4530, %v3580
        %v4532 = vadd.f32 %v4531, %v3581
        %v4533 = vadd.f32 %v4532, %v3582
        %v4534 = vadd.f32 %v4533, %v3583
        %v4535 = vadd.f32 %v4534, %v3584
        %v4536 = vadd.f32 %v4535, %v3585
        %v4537 = vadd.f32 %v4536, %v3586
        %v4538 = vadd.f32 %v4537, %v3587
        %v4539 = vadd.f32 %v4538, %v3588
        %v4540 = vadd.f32 %v4539, %v3589
        %v4541 = vadd.f32 %v4540, %v3590
        %v4542 = vadd.f32 %v4541, %v3591
        %v4543 = vadd.f32 %v4542, %v3592
        %v4544 = vadd.f32 %v4543, %v3593
        %v4545 = vadd.f32 %v4544, %v3594
        %v4546 = vadd.f32 %v4545, %v3595
        %v4547 = vadd.f32 %v4546, %v3596
        %v4548 = vadd.f32 %v4547, %v3597
        %v4549 = vadd.f32 %v4548, %v3598
        %v4550 = vadd.f32 %v4549, %v3599
        %v4551 = vadd.f32 %v4550, %v3600
        %v4552 = vadd.f32 %v4551, %v3601
        %v4553 = vadd.f32 %v4552, %v3602
        %v4554 = vadd.f32 %v4553, %v3603
        %v4555 = vadd.f32 %v4554, %v3604
        %v4556 = vadd.f32 %v4555, %v3605
        %v4557 = vadd.f32 %v4556, %v3606
        %v4558 = vadd.f32 %v4557, %v3607
        %v4559 = vadd.f32 %v4558, %v3608
        %v4560 = vadd.f32 %v4559, %v3609
        %v4561 = vadd.f32 %v3610, %v3611
        %v4562 = vadd.f32 %v4561, %v3612
        %v4563 = vadd.f32 %v4562, %v3613
        %v4564 = vadd.f32 %v4563, %v3614
        %v4565 = vadd.f32 %v4564, %v3615
        %v4566 = vadd.f32 %v4565, %v3616
        %v4567 = vadd.f32 %v4566, %v3617
        %v4568 = vadd.f32 %v4567, %v3618
        %v4569 = vadd.f32 %v4568, %v3619
        %v4570 = vadd.f32 %v4569, %v3620
        %v4571 = vadd.f32 %v4570, %v3621
        %v4572 = vadd.f32 %v4571, %v3622
        %v4573 = vadd.f32 %v4572, %v3623
        %v4574 = vadd.f32 %v4573, %v3624
        %v4575 = vadd.f32 %v4574, %v3625
        %v4576 = vadd.f32 %v4575, %v3626
        %v4577 = vadd.f32 %v4576, %v3627
        %v4578 = vadd.f32 %v4577, %v3628
        %v4579 = vadd.f32 %v4578, %v3629
        %v4580 = vadd.f32 %v4579, %v3630
        %v4581 = vadd.f32 %v4580, %v3631
        %v4582 = vadd.f32 %v4581, %v3632
        %v4583 = vadd.f32 %v4582, %v3633
        %v4584 = vadd.f32 %v4583, %v3634
        %v4585 = vadd.f32 %v4584, %v3635
        %v4586 = vadd.f32 %v4585, %v3636
        %v4587 = vadd.f32 %v4586, %v3637
        %v4588 = vadd.f32 %v4587, %v3638
        %v4589 = vadd.f32 %v4588, %v3639
        %v4590 = vadd.f32 %v4589, %v3640
        %v4591 = vadd.f32 %v4590, %v3641
        %v4592 = vadd.f32 %v4591, %v3642
        %v4593 = vadd.f32 %v4592, %v3643
        %v4594 = vadd.f32 %v4593, %v3644
        %v4595 = vadd.f32 %v4594, %v3645
        %v4596 = vadd.f32 %v4595, %v3646
        %v4597 = vadd.f32 %v4596, %v3647
        %v4598 = vadd.f32 %v4597, %v3648
        %v4599 = vadd.f32 %v4598, %v3649
        %v4600 = vadd.f32 %v4599, %v3650
        %v4601 = vadd.f32 %v4600, %v3651
        %v4602 = vadd.f32 %v4601, %v3652
        %v4603 = vadd.f32 %v4602, %v3653
        %v4604 = vadd.f32 %v4603, %v3654
        %v4605 = vadd.f32 %v4604, %v3655
        %v4606 = vadd.f32 %v4605, %v3656
        %v4607 = vadd.f32 %v4606, %v3657
        %v4608 = vadd.f32 %v3658, %v3659
        %v4609 = vadd.f32 %v4608, %v3660
        %v4610 = vadd.f32 %v4609, %v3661
        %v4611 = vadd.f32 %v4610, %v3662
        %v4612 = vadd.f32 %v4611, %v3663
        %v4613 = vadd.f32 %v4612, %v3664
        %v4614 = vadd.f32 %v4613, %v3665
        %v4615 = vadd.f32 %v4614, %v3666
        %v4616 = vadd.f32 %v4615, %v3667
        %v4617 = vadd.f32 %v4616, %v3668
        %v4618 = vadd.f32 %v4617, %v3669
        %v4619 = vadd.f32 %v4618, %v3670
        %v4620 = vadd.f32 %v4619, %v3671
        %v4621 = vadd.f32 %v4620, %v3672
        %v4622 = vadd.f32 %v4621, %v3673
        %v4623 = vadd.f32 %v4622, %v3674
        %v4624 = vadd.f32 %v4623, %v3675
        %v4625 = vadd.f32 %v4624, %v3676
        %v4626 = vadd.f32 %v4625, %v3677
        %v4627 = vadd.f32 %v4626, %v3678
        %v4628 = vadd.f32 %v4627, %v3679
        %v4629 = vadd.f32 %v4628, %v3680
        %v4630 = vadd.f32 %v4629, %v3681
        %v4631 = vadd.f32 %v4630, %v3682
        %v4632 = vadd.f32 %v4631, %v3683
        %v4633 = vadd.f32 %v4632, %v3684
        %v4634 = vadd.f32 %v4633, %v3685
        %v4635 = vadd.f32 %v4634, %v3686
        %v4636 = vadd.f32 %v4635, %v3687
        %v4637 = vadd.f32 %v4636, %v3688
        %v4638 = vadd.f32 %v4637, %v3689
        %v4639 = vadd.f32 %v4638, %v3690
        %v4640 = vadd.f32 %v4639, %v3691
        %v4641 = vadd.f32 %v4640, %v3692
        %v4642 = vadd.f32 %v4641, %v3693
        %v4643 = vadd.f32 %v4642, %v3694
        %v4644 = vadd.f32 %v4643, %v3695
        %v4645 = vadd.f32 %v4644, %v3696
        %v4646 = vadd.f32 %v4645, %v3697
        %v4647 = vadd.f32 %v4646, %v3698
        %v4648 = vadd.f32 %v4647, %v3699
        %v4649 = vadd.f32 %v4648, %v3700
        %v4650 = vadd.f32 %v4649, %v3701
        %v4651 = vadd.f32 %v4650, %v3702
        %v4652 = vadd.f32 %v4651, %v3703
        %v4653 = vadd.f32 %v4652, %v3704
        %v4654 = vadd.f32 %v4653, %v3705
        %v4655 = vadd.f32 %v3706, %v3707
        %v4656 = vadd.f32 %v4655, %v3708
        %v4657 = vadd.f32 %v4656, %v3709
        %v4658 = vadd.f32 %v4657, %v3710
        %v4659 = vadd.f32 %v4658, %v3711
        %v4660 = vadd.f32 %v4659, %v3712
        %v4661 = vadd.f32 %v4660, %v3713
        %v4662 = vadd.f32 %v4661, %v3714
        %v4663 = vadd.f32 %v4662, %v3715
        %v4664 = vadd.f32 %v4663, %v3716
        %v4665 = vadd.f32 %v4664, %v3717
        %v4666 = vadd.f32 %v4665, %v3718
        %v4667 = vadd.f32 %v4666, %v3719
        %v4668 = vadd.f32 %v4667, %v3720
        %v4669 = vadd.f32 %v4668, %v3721
        %v4670 = vadd.f32 %v4669, %v3722
        %v4671 = vadd.f32 %v4670, %v3723
        %v4672 = vadd.f32 %v4671, %v3724
        %v4673 = vadd.f32 %v4672, %v3725
        %v4674 = vadd.f32 %v4673, %v3726
        %v4675 = vadd.f32 %v4674, %v3727
        %v4676 = vadd.f32 %v4675, %v3728
        %v4677 = vadd.f32 %v4676, %v3729
        %v4678 = vadd.f32 %v4677, %v3730
        %v4679 = vadd.f32 %v4678, %v3731
        %v4680 = vadd.f32 %v4679, %v3732
        %v4681 = vadd.f32 %v4680, %v3733
        %v4682 = vadd.f32 %v4681, %v3734
        %v4683 = vadd.f32 %v4682, %v3735
        %v4684 = vadd.f32 %v4683, %v3736
        %v4685 = vadd.f32 %v4684, %v3737
        %v4686 = vadd.f32 %v4685, %v3738
        %v4687 = vadd.f32 %v4686, %v3739
        %v4688 = vadd.f32 %v4687, %v3740
        %v4689 = vadd.f32 %v4688, %v3741
        %v4690 = vadd.f32 %v4689, %v3742
        %v4691 = vadd.f32 %v4690, %v3743
        %v4692 = vadd.f32 %v4691, %v3744
        %v4693 = vadd.f32 %v4692, %v3745
        %v4694 = vadd.f32 %v4693, %v3746
        %v4695 = vadd.f32 %v4694, %v3747
        %v4696 = vadd.f32 %v4695, %v3748
        %v4697 = vadd.f32 %v4696, %v3749
        %v4698 = vadd.f32 %v4697, %v3750
        %v4699 = vadd.f32 %v4698, %v3751
        %v4700 = vadd.f32 %v4699, %v3752
        %v4701 = vadd.f32 %v4700, %v3753
        %v4702 = vadd.f32 %v3754, %v3755
        %v4703 = vadd.f32 %v4702, %v3756
        %v4704 = vadd.f32 %v4703, %v3757
        %v4705 = vadd.f32 %v4704, %v3758
        %v4706 = vadd.f32 %v4705, %v3759
        %v4707 = vadd.f32 %v4706, %v3760
        %v4708 = vadd.f32 %v4707, %v3761
        %v4709 = vadd.f32 %v4708, %v3762
        %v4710 = vadd.f32 %v4709, %v3763
        %v4711 = vadd.f32 %v4710, %v3764
        %v4712 = vadd.f32 %v4711, %v3765
        %v4713 = vadd.f32 %v4712, %v3766
        %v4714 = vadd.f32 %v4713, %v3767
        %v4715 = vadd.f32 %v4714, %v3768
        %v4716 = vadd.f32 %v4715, %v3769
        %v4717 = vadd.f32 %v4716, %v3770
        %v4718 = vadd.f32 %v4717, %v3771
        %v4719 = vadd.f32 %v4718, %v3772
        %v4720 = vadd.f32 %v4719, %v3773
        %v4721 = vadd.f32 %v4720, %v3774
        %v4722 = vadd.f32 %v4721, %v3775
        %v4723 = vadd.f32 %v4722, %v3776
        %v4724 = vadd.f32 %v4723, %v3777
        %v4725 = vadd.f32 %v4724, %v3778
        %v4726 = vadd.f32 %v4725, %v3779
        %v4727 = vadd.f32 %v4726, %v3780
        %v4728 = vadd.f32 %v4727, %v3781
        %v4729 = vadd.f32 %v4728, %v3782
        %v4730 = vadd.f32 %v4729, %v3783
        %v4731 = vadd.f32 %v4730, %v3784
        %v4732 = vadd.f32 %v4731, %v3785
        %v4733 = vadd.f32 %v4732, %v3786
        %v4734 = vadd.f32 %v4733, %v3787
        %v4735 = vadd.f32 %v4734, %v3788
        %v4736 = vadd.f32 %v4735, %v3789
        %v4737 = vadd.f32 %v4736, %v3790
        %v4738 = vadd.f32 %v4737, %v3791
        %v4739 = vadd.f32 %v4738, %v3792
        %v4740 = vadd.f32 %v4739, %v3793
        %v4741 = vadd.f32 %v4740, %v3794
        %v4742 = vadd.f32 %v4741, %v3795
        %v4743 = vadd.f32 %v4742, %v3796
        %v4744 = vadd.f32 %v4743, %v3797
        %v4745 = vadd.f32 %v4744, %v3798
        %v4746 = vadd.f32 %v4745, %v3799
        %v4747 = vadd.f32 %v4746, %v3800
        %v4748 = vadd.f32 %v4747, %v3801
        %v4749 = vadd.f32 %v3802, %v3803
        %v4750 = vadd.f32 %v4749, %v3804
        %v4751 = vadd.f32 %v4750, %v3805
        %v4752 = vadd.f32 %v4751, %v3806
        %v4753 = vadd.f32 %v4752, %v3807
        %v4754 = vadd.f32 %v4753, %v3808
        %v4755 = vadd.f32 %v4754, %v3809
        %v4756 = vadd.f32 %v4755, %v3810
        %v4757 = vadd.f32 %v4756, %v3811
        %v4758 = vadd.f32 %v4757, %v3812
        %v4759 = vadd.f32 %v4758, %v3813
        %v4760 = vadd.f32 %v4759, %v3814
        %v4761 = vadd.f32 %v4760, %v3815
        %v4762 = vadd.f32 %v4761, %v3816
        %v4763 = vadd.f32 %v4762, %v3817
        %v4764 = vadd.f32 %v4763, %v3818
        %v4765 = vadd.f32 %v4764, %v3819
        %v4766 = vadd.f32 %v4765, %v3820
        %v4767 = vadd.f32 %v4766, %v3821
        %v4768 = vadd.f32 %v4767, %v3822
        %v4769 = vadd.f32 %v4768, %v3823
        %v4770 = vadd.f32 %v4769, %v3824
        %v4771 = vadd.f32 %v4770, %v3825
        %v4772 = vadd.f32 %v4771, %v3826
        %v4773 = vadd.f32 %v4772, %v3827
        %v4774 = vadd.f32 %v4773, %v3828
        %v4775 = vadd.f32 %v4774, %v3829
        %v4776 = vadd.f32 %v4775, %v3830
        %v4777 = vadd.f32 %v4776, %v3831
        %v4778 = vadd.f32 %v4777, %v3832
        %v4779 = vadd.f32 %v4778, %v3833
        %v4780 = vadd.f32 %v4779, %v3834
        %v4781 = vadd.f32 %v4780, %v3835
        %v4782 = vadd.f32 %v4781, %v3836
        %v4783 = vadd.f32 %v4782, %v3837
        %v4784 = vadd.f32 %v4783, %v3838
        %v4785 = vadd.f32 %v4784, %v3839
        %v4786 = vadd.f32 %v4785, %v3840
        %v4787 = vadd.f32 %v4786, %v3841
        %v4788 = vadd.f32 %v4787, %v3842
        %v4789 = vadd.f32 %v4788, %v3843
        %v4790 = vadd.f32 %v4789, %v3844
        %v4791 = vadd.f32 %v4790, %v3845
        %v4792 = vadd.f32 %v4791, %v3846
        %v4793 = vadd.f32 %v4792, %v3847
        %v4794 = vadd.f32 %v4793, %v3848
        %v4795 = vadd.f32 %v4794, %v3849
        %v4796 = vadd.f32 %v3850, %v3851
        %v4797 = vadd.f32 %v4796, %v3852
        %v4798 = vadd.f32 %v4797, %v3853
        %v4799 = vadd.f32 %v4798, %v3854
        %v4800 = vadd.f32 %v4799, %v3855
        %v4801 = vadd.f32 %v4800, %v3856
        %v4802 = vadd.f32 %v4801, %v3857
        %v4803 = vadd.f32 %v4802, %v3858
        %v4804 = vadd.f32 %v4803, %v3859
        %v4805 = vadd.f32 %v4804, %v3860
        %v4806 = vadd.f32 %v4805, %v3861
        %v4807 = vadd.f32 %v4806, %v3862
        %v4808 = vadd.f32 %v4807, %v3863
        %v4809 = vadd.f32 %v4808, %v3864
        %v4810 = vadd.f32 %v4809, %v3865
        %v4811 = vadd.f32 %v4810, %v3866
        %v4812 = vadd.f32 %v4811, %v3867
        %v4813 = vadd.f32 %v4812, %v3868
        %v4814 = vadd.f32 %v4813, %v3869
        %v4815 = vadd.f32 %v4814, %v3870
        %v4816 = vadd.f32 %v4815, %v3871
        %v4817 = vadd.f32 %v4816, %v3872
        %v4818 = vadd.f32 %v4817, %v3873
        %v4819 = vadd.f32 %v4818, %v3874
        %v4820 = vadd.f32 %v4819, %v3875
        %v4821 = vadd.f32 %v4820, %v3876
        %v4822 = vadd.f32 %v4821, %v3877
        %v4823 = vadd.f32 %v4822, %v3878
        %v4824 = vadd.f32 %v4823, %v3879
        %v4825 = vadd.f32 %v4824, %v3880
        %v4826 = vadd.f32 %v4825, %v3881
        %v4827 = vadd.f32 %v4826, %v3882
        %v4828 = vadd.f32 %v4827, %v3883
        %v4829 = vadd.f32 %v4828, %v3884
        %v4830 = vadd.f32 %v4829, %v3885
        %v4831 = vadd.f32 %v4830, %v3886
        %v4832 = vadd.f32 %v4831, %v3887
        %v4833 = vadd.f32 %v4832, %v3888
        %v4834 = vadd.f32 %v4833, %v3889
        %v4835 = vadd.f32 %v4834, %v3890
        %v4836 = vadd.f32 %v4835, %v3891
        %v4837 = vadd.f32 %v4836, %v3892
        %v4838 = vadd.f32 %v4837, %v3893
        %v4839 = vadd.f32 %v4838, %v3894
        %v4840 = vadd.f32 %v4839, %v3895
        %v4841 = vadd.f32 %v4840, %v3896
        %v4842 = vadd.f32 %v4841, %v3897
        %v4843 = vadd.f32 %v3898, %v3899
        %v4844 = vadd.f32 %v4843, %v3900
        %v4845 = vadd.f32 %v4844, %v3901
        %v4846 = vadd.f32 %v4845, %v3902
        %v4847 = vadd.f32 %v4846, %v3903
        %v4848 = vadd.f32 %v4847, %v3904
        %v4849 = vadd.f32 %v4848, %v3905
        %v4850 = vadd.f32 %v4849, %v3906
        %v4851 = vadd.f32 %v4850, %v3907
        %v4852 = vadd.f32 %v4851, %v3908
        %v4853 = vadd.f32 %v4852, %v3909
        %v4854 = vadd.f32 %v4853, %v3910
        %v4855 = vadd.f32 %v4854, %v3911
        %v4856 = vadd.f32 %v4855, %v3912
        %v4857 = vadd.f32 %v4856, %v3913
        %v4858 = vadd.f32 %v4857, %v3914
        %v4859 = vadd.f32 %v4858, %v3915
        %v4860 = vadd.f32 %v4859, %v3916
        %v4861 = vadd.f32 %v4860, %v3917
        %v4862 = vadd.f32 %v4861, %v3918
        %v4863 = vadd.f32 %v4862, %v3919
        %v4864 = vadd.f32 %v4863, %v3920
        %v4865 = vadd.f32 %v4864, %v3921
        %v4866 = vadd.f32 %v4865, %v3922
        %v4867 = vadd.f32 %v4866, %v3923
        %v4868 = vadd.f32 %v4867, %v3924
        %v4869 = vadd.f32 %v4868, %v3925
        %v4870 = vadd.f32 %v4869, %v3926
        %v4871 = vadd.f32 %v4870, %v3927
        %v4872 = vadd.f32 %v4871, %v3928
        %v4873 = vadd.f32 %v4872, %v3929
        %v4874 = vadd.f32 %v4873, %v3930
        %v4875 = vadd.f32 %v4874, %v3931
        %v4876 = vadd.f32 %v4875, %v3932
        %v4877 = vadd.f32 %v4876, %v3933
        %v4878 = vadd.f32 %v4877, %v3934
        %v4879 = vadd.f32 %v4878, %v3935
        %v4880 = vadd.f32 %v4879, %v3936
        %v4881 = vadd.f32 %v4880, %v3937
        %v4882 = vadd.f32 %v4881, %v3938
        %v4883 = vadd.f32 %v4882, %v3939
        %v4884 = vadd.f32 %v4883, %v3940
        %v4885 = vadd.f32 %v4884, %v3941
        %v4886 = vadd.f32 %v4885, %v3942
        %v4887 = vadd.f32 %v4886, %v3943
        %v4888 = vadd.f32 %v4887, %v3944
        %v4889 = vadd.f32 %v4888, %v3945
        %v4890 = vadd.f32 %v3946, %v3947
        %v4891 = vadd.f32 %v4890, %v3948
        %v4892 = vadd.f32 %v4891, %v3949
        %v4893 = vadd.f32 %v4892, %v3950
        %v4894 = vadd.f32 %v4893, %v3951
        %v4895 = vadd.f32 %v4894, %v3952
        %v4896 = vadd.f32 %v4895, %v3953
        %v4897 = vadd.f32 %v4896, %v3954
        %v4898 = vadd.f32 %v4897, %v3955
        %v4899 = vadd.f32 %v4898, %v3956
        %v4900 = vadd.f32 %v4899, %v3957
        %v4901 = vadd.f32 %v4900, %v3958
        %v4902 = vadd.f32 %v4901, %v3959
        %v4903 = vadd.f32 %v4902, %v3960
        %v4904 = vadd.f32 %v4903, %v3961
        %v4905 = vadd.f32 %v4904, %v3962
        %v4906 = vadd.f32 %v4905, %v3963
        %v4907 = vadd.f32 %v4906, %v3964
        %v4908 = vadd.f32 %v4907, %v3965
        %v4909 = vadd.f32 %v4908, %v3966
        %v4910 = vadd.f32 %v4909, %v3967
        %v4911 = vadd.f32 %v4910, %v3968
        %v4912 = vadd.f32 %v4911, %v3969
        %v4913 = vadd.f32 %v4912, %v3970
        %v4914 = vadd.f32 %v4913, %v3971
        %v4915 = vadd.f32 %v4914, %v3972
        %v4916 = vadd.f32 %v4915, %v3973
        %v4917 = vadd.f32 %v4916, %v3974
        %v4918 = vadd.f32 %v4917, %v3975
        %v4919 = vadd.f32 %v4918, %v3976
        %v4920 = vadd.f32 %v4919, %v3977
        %v4921 = vadd.f32 %v4920, %v3978
        %v4922 = vadd.f32 %v4921, %v3979
        %v4923 = vadd.f32 %v4922, %v3980
        %v4924 = vadd.f32 %v4923, %v3981
        %v4925 = vadd.f32 %v4924, %v3982
        %v4926 = vadd.f32 %v4925, %v3983
        %v4927 = vadd.f32 %v4926, %v3984
        %v4928 = vadd.f32 %v4927, %v3985
        %v4929 = vadd.f32 %v4928, %v3986
        %v4930 = vadd.f32 %v4929, %v3987
        %v4931 = vadd.f32 %v4930, %v3988
        %v4932 = vadd.f32 %v4931, %v3989
        %v4933 = vadd.f32 %v4932, %v3990
        %v4934 = vadd.f32 %v4933, %v3991
        %v4935 = vadd.f32 %v4934, %v3992
        %v4936 = vadd.f32 %v4935, %v3993
        %v4937 = vadd.f32 %v3994, %v3995
        %v4938 = vadd.f32 %v4937, %v3996
        %v4939 = vadd.f32 %v4938, %v3997
        %v4940 = vadd.f32 %v4939, %v3998
        %v4941 = vadd.f32 %v4940, %v3999
        %v4942 = vadd.f32 %v4941, %v4000
        %v4943 = vadd.f32 %v4942, %v4001
        %v4944 = vadd.f32 %v4943, %v4002
        %v4945 = vadd.f32 %v4944, %v4003
        %v4946 = vadd.f32 %v4945, %v4004
        %v4947 = vadd.f32 %v4946, %v4005
        %v4948 = vadd.f32 %v4947, %v4006
        %v4949 = vadd.f32 %v4948, %v4007
        %v4950 = vadd.f32 %v4949, %v4008
        %v4951 = vadd.f32 %v4950, %v4009
        %v4952 = vadd.f32 %v4951, %v4010
        %v4953 = vadd.f32 %v4952, %v4011
        %v4954 = vadd.f32 %v4953, %v4012
        %v4955 = vadd.f32 %v4954, %v4013
        %v4956 = vadd.f32 %v4955, %v4014
        %v4957 = vadd.f32 %v4956, %v4015
        %v4958 = vadd.f32 %v4957, %v4016
        %v4959 = vadd.f32 %v4958, %v4017
        %v4960 = vadd.f32 %v4959, %v4018
        %v4961 = vadd.f32 %v4960, %v4019
        %v4962 = vadd.f32 %v4961, %v4020
        %v4963 = vadd.f32 %v4962, %v4021
        %v4964 = vadd.f32 %v4963, %v4022
        %v4965 = vadd.f32 %v4964, %v4023
        %v4966 = vadd.f32 %v4965, %v4024
        %v4967 = vadd.f32 %v4966, %v4025
        %v4968 = vadd.f32 %v4967, %v4026
        %v4969 = vadd.f32 %v4968, %v4027
        %v4970 = vadd.f32 %v4969, %v4028
        %v4971 = vadd.f32 %v4970, %v4029
        %v4972 = vadd.f32 %v4971, %v4030
        %v4973 = vadd.f32 %v4972, %v4031
        %v4974 = vadd.f32 %v4973, %v4032
        %v4975 = vadd.f32 %v4974, %v4033
        %v4976 = vadd.f32 %v4975, %v4034
        %v4977 = vadd.f32 %v4976, %v4035
        %v4978 = vadd.f32 %v4977, %v4036
        %v4979 = vadd.f32 %v4978, %v4037
        %v4980 = vadd.f32 %v4979, %v4038
        %v4981 = vadd.f32 %v4980, %v4039
        %v4982 = vadd.f32 %v4981, %v4040
        %v4983 = vadd.f32 %v4982, %v4041
        %v4984 = vadd.f32 %v4042, %v4043
        %v4985 = vadd.f32 %v4984, %v4044
        %v4986 = vadd.f32 %v4985, %v4045
        %v4987 = vadd.f32 %v4986, %v4046
        %v4988 = vadd.f32 %v4987, %v4047
        %v4989 = vadd.f32 %v4988, %v4048
        %v4990 = vadd.f32 %v4989, %v4049
        %v4991 = vadd.f32 %v4990, %v4050
        %v4992 = vadd.f32 %v4991, %v4051
        %v4993 = vadd.f32 %v4992, %v4052
        %v4994 = vadd.f32 %v4993, %v4053
        %v4995 = vadd.f32 %v4994, %v4054
        %v4996 = vadd.f32 %v4995, %v4055
        %v4997 = vadd.f32 %v4996, %v4056
        %v4998 = vadd.f32 %v4997, %v4057
        %v4999 = vadd.f32 %v4998, %v4058
        %v5000 = vadd.f32 %v4999, %v4059
        %v5001 = vadd.f32 %v5000, %v4060
        %v5002 = vadd.f32 %v5001, %v4061
        %v5003 = vadd.f32 %v5002, %v4062
        %v5004 = vadd.f32 %v5003, %v4063
        %v5005 = vadd.f32 %v5004, %v4064
        %v5006 = vadd.f32 %v5005, %v4065
        %v5007 = vadd.f32 %v5006, %v4066
        %v5008 = vadd.f32 %v5007, %v4067
        %v5009 = vadd.f32 %v5008, %v4068
        %v5010 = vadd.f32 %v5009, %v4069
        %v5011 = vadd.f32 %v5010, %v4070
        %v5012 = vadd.f32 %v5011, %v4071
        %v5013 = vadd.f32 %v5012, %v4072
        %v5014 = vadd.f32 %v5013, %v4073
        %v5015 = vadd.f32 %v5014, %v4074
        %v5016 = vadd.f32 %v5015, %v4075
        %v5017 = vadd.f32 %v5016, %v4076
        %v5018 = vadd.f32 %v5017, %v4077
        %v5019 = vadd.f32 %v5018, %v4078
        %v5020 = vadd.f32 %v5019, %v4079
        %v5021 = vadd.f32 %v5020, %v4080
        %v5022 = vadd.f32 %v5021, %v4081
        %v5023 = vadd.f32 %v5022, %v4082
        %v5024 = vadd.f32 %v5023, %v4083
        %v5025 = vadd.f32 %v5024, %v4084
        %v5026 = vadd.f32 %v5025, %v4085
        %v5027 = vadd.f32 %v5026, %v4086
        %v5028 = vadd.f32 %v5027, %v4087
        %v5029 = vadd.f32 %v5028, %v4088
        %v5030 = vadd.f32 %v5029, %v4089
        %v5031 = vadd.f32 %v4090, %v4091
        %v5032 = vadd.f32 %v5031, %v4092
        %v5033 = vadd.f32 %v5032, %v4093
        %v5034 = vadd.f32 %v5033, %v4094
        %v5035 = vadd.f32 %v5034, %v4095
        %v5036 = vadd.f32 %v5035, %v4096
        %v5037 = vadd.f32 %v5036, %v4097
        %v5038 = vadd.f32 %v5037, %v4098
        %v5039 = vadd.f32 %v5038, %v4099
        %v5040 = vadd.f32 %v5039, %v4100
        %v5041 = vadd.f32 %v5040, %v4101
        %v5042 = vadd.f32 %v5041, %v4102
        %v5043 = vadd.f32 %v5042, %v4103
        %v5044 = vadd.f32 %v5043, %v4104
        %v5045 = vadd.f32 %v5044, %v4105
        %v5046 = vadd.f32 %v5045, %v4106
        %v5047 = vadd.f32 %v5046, %v4107
        %v5048 = vadd.f32 %v5047, %v4108
        %v5049 = vadd.f32 %v5048, %v4109
        %v5050 = vadd.f32 %v5049, %v4110
        %v5051 = vadd.f32 %v5050, %v4111
        %v5052 = vadd.f32 %v5051, %v4112
        %v5053 = vadd.f32 %v5052, %v4113
        %v5054 = vadd.f32 %v5053, %v4114
        %v5055 = vadd.f32 %v5054, %v4115
        %v5056 = vadd.f32 %v5055, %v4116
        %v5057 = vadd.f32 %v5056, %v4117
        %v5058 = vadd.f32 %v5057, %v4118
        %v5059 = vadd.f32 %v5058, %v4119
        %v5060 = vadd.f32 %v5059, %v4120
        %v5061 = vadd.f32 %v5060, %v4121
        %v5062 = vadd.f32 %v5061, %v4122
        %v5063 = vadd.f32 %v5062, %v4123
        %v5064 = vadd.f32 %v5063, %v4124
        %v5065 = vadd.f32 %v5064, %v4125
        %v5066 = vadd.f32 %v5065, %v4126
        %v5067 = vadd.f32 %v5066, %v4127
        %v5068 = vadd.f32 %v5067, %v4128
        %v5069 = vadd.f32 %v5068, %v4129
        %v5070 = vadd.f32 %v5069, %v4130
        %v5071 = vadd.f32 %v5070, %v4131
        %v5072 = vadd.f32 %v5071, %v4132
        %v5073 = vadd.f32 %v5072, %v4133
        %v5074 = vadd.f32 %v5073, %v4134
        %v5075 = vadd.f32 %v5074, %v4135
        %v5076 = vadd.f32 %v5075, %v4136
        %v5077 = vadd.f32 %v5076, %v4137
        %v5078 = vadd.f32 %v3158, %v4184
        %v5079 = vadd.f32 %v3159, %v4231
        %v5080 = vadd.f32 %v3160, %v4278
        %v5081 = vadd.f32 %v3161, %v4325
        %v5082 = vadd.f32 %v3162, %v4372
        %v5083 = vadd.f32 %v3163, %v4419
        %v5084 = vadd.f32 %v3164, %v4466
        %v5085 = vadd.f32 %v3165, %v4513
        %v5086 = vadd.f32 %v3166, %v4560
        %v5087 = vadd.f32 %v3167, %v4607
        %v5088 = vadd.f32 %v3168, %v4654
        %v5089 = vadd.f32 %v3169, %v4701
        %v5090 = vadd.f32 %v3170, %v4748
        %v5091 = vadd.f32 %v3171, %v4795
        %v5092 = vadd.f32 %v3172, %v4842
        %v5093 = vadd.f32 %v3173, %v4889
        %v5094 = vadd.f32 %v3174, %v4936
        %v5095 = vadd.f32 %v3175, %v4983
        %v5096 = vadd.f32 %v3176, %v5030
        %v5097 = vadd.f32 %v3177, %v5077
        %5098 = vst [vmem:[#allocation2] sm:$0xff] %v5078
        %5099 = vst [vmem:[#allocation2 + $0x8] sm:$0xff] %v5079
        %5100 = vst [vmem:[#allocation2 + $0x10] sm:$0xff] %v5080
        %5101 = vst [vmem:[#allocation2 + $0x18] sm:$0xff] %v5081
        %5102 = vst [vmem:[#allocation2 + $0x20] sm:$0xff] %v5082
        %5103 = vst [vmem:[#allocation2 + $0x28] sm:$0xff] %v5083
        %5104 = vst [vmem:[#allocation2 + $0x30] sm:$0xff] %v5084
        %5105 = vst [vmem:[#allocation2 + $0x38] sm:$0xff] %v5085
        %5106 = vst [vmem:[#allocation2 + $0x40] sm:$0xff] %v5086
        %5107 = vst [vmem:[#allocation2 + $0x48] sm:$0xff] %v5087
        %5108 = vst [vmem:[#allocation2 + $0x50] sm:$0xff] %v5088
        %5109 = vst [vmem:[#allocation2 + $0x58] sm:$0xff] %v5089
        %5110 = vst [vmem:[#allocation2 + $0x60] sm:$0xff] %v5090
        %5111 = vst [vmem:[#allocation2 + $0x68] sm:$0xff] %v5091
        %5112 = vst [vmem:[#allocation2 + $0x70] sm:$0xff] %v5092
        %5113 = vst [vmem:[#allocation2 + $0x78] sm:$0xff] %v5093
        %5114 = vst [vmem:[#allocation2 + $0x80] sm:$0xff] %v5094
        %5115 = vst [vmem:[#allocation2 + $0x88] sm:$0xff] %v5095
        %5116 = vst [vmem:[#allocation2 + $0x90] sm:$0xff] %v5096
        %5117 = vst [vmem:[#allocation2 + $0x98] sm:$0xff] %v5097
        %p5118 = scmp.eq.s32.totalorder %s18, 3
        // Predicated region
        $region109: #{linear_pallas.1} parent=95 // pred_check
          %p5119 = pneg %p5118
        $region110: #{linear_pallas.1} parent=95 // pred_check_branch
          %5121 = sbr.rel (%p5119) target = $region112
        $region111: #{linear_pallas.1} parent=95 // pred_region
          %v5122 = vld [vmem:[#allocation2] sm:$0xff]
          %v5123 = vld [vmem:[#allocation2 + $0x8] sm:$0xff]
          %v5124 = vld [vmem:[#allocation2 + $0x10] sm:$0xff]
          %v5125 = vld [vmem:[#allocation2 + $0x18] sm:$0xff]
          %v5126 = vld [vmem:[#allocation2 + $0x20] sm:$0xff]
          %v5127 = vld [vmem:[#allocation2 + $0x28] sm:$0xff]
          %v5128 = vld [vmem:[#allocation2 + $0x30] sm:$0xff]
          %v5129 = vld [vmem:[#allocation2 + $0x38] sm:$0xff]
          %v5130 = vld [vmem:[#allocation2 + $0x40] sm:$0xff]
          %v5131 = vld [vmem:[#allocation2 + $0x48] sm:$0xff]
          %v5132 = vld [vmem:[#allocation2 + $0x50] sm:$0xff]
          %v5133 = vld [vmem:[#allocation2 + $0x58] sm:$0xff]
          %v5134 = vld [vmem:[#allocation2 + $0x60] sm:$0xff]
          %v5135 = vld [vmem:[#allocation2 + $0x68] sm:$0xff]
          %v5136 = vld [vmem:[#allocation2 + $0x70] sm:$0xff]
          %v5137 = vld [vmem:[#allocation2 + $0x78] sm:$0xff]
          %v5138 = vld [vmem:[#allocation2 + $0x80] sm:$0xff]
          %v5139 = vld [vmem:[#allocation2 + $0x88] sm:$0xff]
          %v5140 = vld [vmem:[#allocation2 + $0x90] sm:$0xff]
          %v5141 = vld [vmem:[#allocation2 + $0x98] sm:$0xff]
          %v5142 = vrot.slane %v5122, 4
          %v5143 = vadd.f32 %v5122, %v5142
          %v5144 = vrot.slane %v5143, 2
          %v5145 = vadd.f32 %v5143, %v5144
          %v5146 = vrot.slane %v5145, 1
          %v5147 = vadd.f32 %v5145, %v5146
          %v5148 = vrot.slane %v5123, 4
          %v5149 = vadd.f32 %v5123, %v5148
          %v5150 = vrot.slane %v5149, 2
          %v5151 = vadd.f32 %v5149, %v5150
          %v5152 = vrot.slane %v5151, 1
          %v5153 = vadd.f32 %v5151, %v5152
          %v5154 = vrot.slane %v5124, 4
          %v5155 = vadd.f32 %v5124, %v5154
          %v5156 = vrot.slane %v5155, 2
          %v5157 = vadd.f32 %v5155, %v5156
          %v5158 = vrot.slane %v5157, 1
          %v5159 = vadd.f32 %v5157, %v5158
          %v5160 = vrot.slane %v5125, 4
          %v5161 = vadd.f32 %v5125, %v5160
          %v5162 = vrot.slane %v5161, 2
          %v5163 = vadd.f32 %v5161, %v5162
          %v5164 = vrot.slane %v5163, 1
          %v5165 = vadd.f32 %v5163, %v5164
          %v5166 = vrot.slane %v5126, 4
          %v5167 = vadd.f32 %v5126, %v5166
          %v5168 = vrot.slane %v5167, 2
          %v5169 = vadd.f32 %v5167, %v5168
          %v5170 = vrot.slane %v5169, 1
          %v5171 = vadd.f32 %v5169, %v5170
          %v5172 = vrot.slane %v5127, 4
          %v5173 = vadd.f32 %v5127, %v5172
          %v5174 = vrot.slane %v5173, 2
          %v5175 = vadd.f32 %v5173, %v5174
          %v5176 = vrot.slane %v5175, 1
          %v5177 = vadd.f32 %v5175, %v5176
          %v5178 = vrot.slane %v5128, 4
          %v5179 = vadd.f32 %v5128, %v5178
          %v5180 = vrot.slane %v5179, 2
          %v5181 = vadd.f32 %v5179, %v5180
          %v5182 = vrot.slane %v5181, 1
          %v5183 = vadd.f32 %v5181, %v5182
          %v5184 = vrot.slane %v5129, 4
          %v5185 = vadd.f32 %v5129, %v5184
          %v5186 = vrot.slane %v5185, 2
          %v5187 = vadd.f32 %v5185, %v5186
          %v5188 = vrot.slane %v5187, 1
          %v5189 = vadd.f32 %v5187, %v5188
          %v5190 = vrot.slane %v5130, 4
          %v5191 = vadd.f32 %v5130, %v5190
          %v5192 = vrot.slane %v5191, 2
          %v5193 = vadd.f32 %v5191, %v5192
          %v5194 = vrot.slane %v5193, 1
          %v5195 = vadd.f32 %v5193, %v5194
          %v5196 = vrot.slane %v5131, 4
          %v5197 = vadd.f32 %v5131, %v5196
          %v5198 = vrot.slane %v5197, 2
          %v5199 = vadd.f32 %v5197, %v5198
          %v5200 = vrot.slane %v5199, 1
          %v5201 = vadd.f32 %v5199, %v5200
          %v5202 = vrot.slane %v5132, 4
          %v5203 = vadd.f32 %v5132, %v5202
          %v5204 = vrot.slane %v5203, 2
          %v5205 = vadd.f32 %v5203, %v5204
          %v5206 = vrot.slane %v5205, 1
          %v5207 = vadd.f32 %v5205, %v5206
          %v5208 = vrot.slane %v5133, 4
          %v5209 = vadd.f32 %v5133, %v5208
          %v5210 = vrot.slane %v5209, 2
          %v5211 = vadd.f32 %v5209, %v5210
          %v5212 = vrot.slane %v5211, 1
          %v5213 = vadd.f32 %v5211, %v5212
          %v5214 = vrot.slane %v5134, 4
          %v5215 = vadd.f32 %v5134, %v5214
          %v5216 = vrot.slane %v5215, 2
          %v5217 = vadd.f32 %v5215, %v5216
          %v5218 = vrot.slane %v5217, 1
          %v5219 = vadd.f32 %v5217, %v5218
          %v5220 = vrot.slane %v5135, 4
          %v5221 = vadd.f32 %v5135, %v5220
          %v5222 = vrot.slane %v5221, 2
          %v5223 = vadd.f32 %v5221, %v5222
          %v5224 = vrot.slane %v5223, 1
          %v5225 = vadd.f32 %v5223, %v5224
          %v5226 = vrot.slane %v5136, 4
          %v5227 = vadd.f32 %v5136, %v5226
          %v5228 = vrot.slane %v5227, 2
          %v5229 = vadd.f32 %v5227, %v5228
          %v5230 = vrot.slane %v5229, 1
          %v5231 = vadd.f32 %v5229, %v5230
          %v5232 = vrot.slane %v5137, 4
          %v5233 = vadd.f32 %v5137, %v5232
          %v5234 = vrot.slane %v5233, 2
          %v5235 = vadd.f32 %v5233, %v5234
          %v5236 = vrot.slane %v5235, 1
          %v5237 = vadd.f32 %v5235, %v5236
          %v5238 = vrot.slane %v5138, 4
          %v5239 = vadd.f32 %v5138, %v5238
          %v5240 = vrot.slane %v5239, 2
          %v5241 = vadd.f32 %v5239, %v5240
          %v5242 = vrot.slane %v5241, 1
          %v5243 = vadd.f32 %v5241, %v5242
          %v5244 = vrot.slane %v5139, 4
          %v5245 = vadd.f32 %v5139, %v5244
          %v5246 = vrot.slane %v5245, 2
          %v5247 = vadd.f32 %v5245, %v5246
          %v5248 = vrot.slane %v5247, 1
          %v5249 = vadd.f32 %v5247, %v5248
          %v5250 = vrot.slane %v5140, 4
          %v5251 = vadd.f32 %v5140, %v5250
          %v5252 = vrot.slane %v5251, 2
          %v5253 = vadd.f32 %v5251, %v5252
          %v5254 = vrot.slane %v5253, 1
          %v5255 = vadd.f32 %v5253, %v5254
          %v5256 = vrot.slane %v5141, 4
          %v5257 = vadd.f32 %v5141, %v5256
          %v5258 = vrot.slane %v5257, 2
          %v5259 = vadd.f32 %v5257, %v5258
          %v5260 = vrot.slane %v5259, 1
          %v5261 = vadd.f32 %v5259, %v5260
          %vm5282 = vcmask 1041409
          %v5283 = vsel %vm5282, %v5153, %v5147
          %vm5284 = vcmask 1042434
          %v5285 = vsel %vm5284, %v5159, %v5283
          %vm5286 = vcmask 1043459
          %v5287 = vsel %vm5286, %v5165, %v5285
          %vm5288 = vcmask 1044484
          %v5289 = vsel %vm5288, %v5171, %v5287
          %vm5290 = vcmask 1045509
          %v5291 = vsel %vm5290, %v5177, %v5289
          %vm5292 = vcmask 1046534
          %v5293 = vsel %vm5292, %v5183, %v5291
          %vm5294 = vcmask 1047559
          %v5295 = vsel %vm5294, %v5189, %v5293
          %v5296 = vsel %vm5282, %v5201, %v5195
          %v5297 = vsel %vm5282, %v5213, %v5207
          %v5298 = vsel %vm5284, %v5219, %v5297
          %v5299 = vsel %vm5286, %v5225, %v5298
          %v5300 = vsel %vm5288, %v5231, %v5299
          %v5301 = vsel %vm5290, %v5237, %v5300
          %v5302 = vsel %vm5292, %v5243, %v5301
          %v5303 = vsel %vm5294, %v5249, %v5302
          %v5304 = vsel %vm5282, %v5261, %v5255
          %5309 = vadd.xlane.f32.xlu0 %v5295
          %v5310 = vpop.xlane.xlu0 %5309
          %vm5311 = vcmask 1041408
          %v5312 = vsel %vm5311, %v5296, 0.0
          %5313 = vadd.xlane.f32.xlu0 %v5312
          %v5314 = vpop.xlane.xlu0 %5313
          %5315 = vadd.xlane.f32.xlu0 %v5303
          %v5316 = vpop.xlane.xlu0 %5315
          %v5317 = vsel %vm5311, %v5304, 0.0
          %5318 = vadd.xlane.f32.xlu0 %v5317
          %v5319 = vpop.xlane.xlu0 %5318
          %v5324 = vlaneseq
          %v5325 = vand.u32 %v5324, 127
          %v5326 = vlaneseq
          %v5327 = vshrl.u32 %v5326, 7
          %v5328 = vsub.s32 %v5325, %v5327
          %v5329 = vrot.slane %v5310, %v5328
          %v5330 = vadd.s32 %v5325, 4294967288
          %v5331 = vlaneseq
          %v5332 = vshrl.u32 %v5331, 7
          %v5333 = vsub.s32 %v5330, %v5332
          %v5334 = vrot.slane %v5314, %v5333
          %vm5335 = vcmask 130112
          %v5336 = vsel %vm5335, %v5334, %v5329
          %v5337 = vlaneseq
          %v5338 = vshrl.u32 %v5337, 7
          %v5339 = vsub.s32 %v5325, %v5338
          %v5340 = vrot.slane %v5316, %v5339
          %v5341 = vlaneseq
          %v5342 = vshrl.u32 %v5341, 7
          %v5343 = vsub.s32 %v5330, %v5342
          %v5344 = vrot.slane %v5319, %v5343
          %v5345 = vsel %vm5335, %v5344, %v5340
          %v5346 = vsel %vm5282, %v5345, %v5336
          %vm5348 = vcmask 74752
          %5349 = vst.msk [vmem:[%s2557] sm:$0x3] %vm5348, %v5346
        $region112: #{linear_pallas.1} parent=95 // pred_fallthru
          _
        %p5350 = scmp.lt.s32.totalorder %s17, 0
        %s5351 = scalar_select %p5350, %s17, 0
        %s5352 = smul.addr %s5351, 2
        %s5353 = scalar_lea.vmem %s2, %s5352
        // Predicated region
        $region113: #{linear_pallas.1} parent=95 // pred_check
          %p5354 = pneg %p103
        $region114: #{linear_pallas.1} parent=95 // pred_check_branch
          %5356 = sbr.rel (%p5354) target = $region116
        $region115: #{linear_pallas.1} parent=95 // pred_region
          _
        $region116: #{linear_pallas.1} parent=95 // pred_fallthru
          _
        // Predicated region
        $region117: #{linear_pallas.1} parent=95 // pred_check
          %p5357 = pneg %p103
        $region118: #{linear_pallas.1} parent=95 // pred_check_branch
          %5359 = sbr.rel (%p5357) target = $region120
        $region119: #{linear_pallas.1} parent=95 // pred_region
          %p5360 = scmp.lt.s32.totalorder %s17, 0
          %s5361 = scalar_select %p5360, %s17, 0
          %s5362 = smul.addr %s5361, 2
          %s5363 = scalar_lea.vmem %s2, %s5362
        $region120: #{linear_pallas.1} parent=95 // pred_fallthru
          _
      $region96: #{linear_pallas.1} parent=5 // pred_fallthru
        _
      %p5364 = scmp.le.s32.totalorder 2, %s8
      // Predicated region
      $region121: #{linear_pallas.1} parent=5 // pred_check
        %p5365 = pneg %p5364
      $region122: #{linear_pallas.1} parent=5 // pred_check_branch
        %5367 = sbr.rel (%p5365) target = $region124
      $region123: #{linear_pallas.1} parent=5 // pred_region
        %s5368 = ssub.s32 %s8, 2
      $region124: #{linear_pallas.1} parent=5 // pred_fallthru
        _
    $region6: #{linear_pallas.1} parent=1 // loop_footer
      %s12 = sadd.s32 1, %s8
    $region7: #{linear_pallas.1} parent=1 // loop_footer_branch
      %7 = sbr.rel target = $region3
    $region8: #{linear_pallas.1} parent=1 // loop_exit
      _

</llo_original>
